<compile_context>
chip_gen: v5e
topology: v5e:2x2
jax: 0.10.0
libtpu: 0.0.40
codegen_flags: <defaults>
</compile_context>

<pallas_src>
import jax
import jax.numpy as jnp
from jax import lax
from jax.experimental import pallas as pl
from jax.experimental.pallas import tpu as pltpu

BB = 32  # images per grid step (sublane-aligned row slabs even in bf16)


# ---------------------------------------------------------------------------
# Fused kernel: whole LeNet forward for one block of BB images, all in VMEM
# ---------------------------------------------------------------------------
def _lenet_kernel(xg_ref, m1a_ref, m1b_ref, b1_ref, m2a_ref, m2b_ref, b2_ref,
                  g1_ref, fb1_ref, w2_ref, fb2_ref, o_ref):
    f32 = jnp.float32
    bf16 = jnp.bfloat16

    # ---- conv1 (5x5, 1->24) + bias + relu + 2x2 maxpool --------------------
    # LHS rows = (ph1, b); lanes = the 5 shifted 28-wide input rows (K=140).
    # One dot per (output-row parity a, W-parity band); the two W-parity band
    # outputs and the two row-parity halves form the 2x2 pool window.
    halves = []
    for a in range(2):                                  # output-row parity
        lhs = xg_ref[a, 0]                              # (12*BB, 140) bf16
        hA = jnp.dot(lhs, m1a_ref[...], preferred_element_type=f32)  # (12*BB, 384)
        hB = jnp.dot(lhs, m1b_ref[...], preferred_element_type=f32)
        halves.append(jnp.maximum(hA, hB))              # W-pool (whole arrays)
    p1 = jnp.maximum(halves[0], halves[1])              # H-pool
    p1 = jnp.maximum(p1 + b1_ref[...], 0.0)             # bias + relu (f32)
    p1b = p1.astype(bf16)                               # cast ONCE for conv2
    # p1 rows = (ph1, b); lanes = (pw1, c1_pad32) -> 384 = 3*128 lanes

    # ---- conv2 (5x5, 24->24) + bias + relu + W-pool -------------------------
    accA = jnp.zeros((8 * BB, 128), f32)
    accB = jnp.zeros((8 * BB, 128), f32)
    for i in range(5):                                   # kernel row
        lhs = p1b[i * BB:(i + 8) * BB, :]                # (8*BB, 384), aligned slab
        accA = accA + jnp.dot(lhs, m2a_ref[i], preferred_element_type=f32)
        accB = accB + jnp.dot(lhs, m2b_ref[i], preferred_element_type=f32)
    t2 = jnp.maximum(accA, accB)                         # W-pool (whole arrays)
    t2 = jnp.maximum(t2 + b2_ref[...], 0.0)              # bias + relu, (8*BB, 128)
    # t2 rows = (oh2, b); lanes = (pw2, c2_pad32) -> exactly 128 lanes

    # ---- conv2 H-pool + flatten (lane-tile aligned concat) ------------------
    pieces = []
    for ph2 in range(4):
        r0 = 2 * ph2 * BB                                # aligned row slabs
        pieces.append(jnp.maximum(t2[r0:r0 + BB, :], t2[r0 + BB:r0 + 2 * BB, :]))
    f = jnp.concatenate(pieces, axis=1).astype(bf16)     # (BB, 512)

    # ---- fc1 (384->84, padded 512->128) + relu ------------------------------
    h = jnp.dot(f, g1_ref[...], preferred_element_type=f32) + fb1_ref[...]
    h = jnp.maximum(h, 0.0).astype(bf16)                 # (BB, 128)

    # ---- fc2 (84->10, padded 128->128) + log_softmax ------------------------
    # Padded logit lanes carry a -1e9 bias -> exp underflows to 0, so the
    # softmax over all 128 lanes equals the softmax over the real 10.
    z = jnp.dot(h, w2_ref[...], preferred_element_type=f32) + fb2_ref[...]  # (BB, 128)
    m = jnp.max(z, axis=-1, keepdims=True)
    lse = m + jnp.log(jnp.sum(jnp.exp(z - m), axis=-1, keepdims=True))
    o_ref[...] = (z - lse).astype(o_ref.dtype)           # lane-dense store


# ---------------------------------------------------------------------------
# One-time parameter packing (outside the jitted forward)
# ---------------------------------------------------------------------------
def pack_params(params):
    """Repack PyTorch-layout params into banded, pool-/tile-aligned matrices."""
    w1, b1, w2, b2, fw1, fb1, fw2, fb2 = params
    f32, bf16 = jnp.float32, jnp.bfloat16

    i5 = jnp.arange(5)
    w28 = jnp.arange(28)
    pw1 = jnp.arange(12)
    pw2 = jnp.arange(4)
    co = jnp.arange(32)
    c1 = jnp.arange(32)

    # --- conv1 bands, one per W-pool parity; channels padded 24->32 ---------
    # m1_c[i*28 + w_in, pw1*32 + co] = w1[co, 0, i, w_in - (2*pw1 + c)]
    w1p = jnp.pad(w1[:, 0], ((0, 8), (0, 0), (0, 0)))            # (32, 5, 5)

    def band1(c):
        kw = w28[:, None] - (2 * pw1[None, :] + c)               # (28, 12)
        valid = (kw >= 0) & (kw <= 4)
        m = w1p[co[None, None, None, :], i5[:, None, None, None],
                jnp.clip(kw, 0, 4)[None, :, :, None]]             # (5, 28, 12, 32)
        m = jnp.where(valid[None, :, :, None], m, 0.0)
        return m.reshape(140, 384).astype(bf16)

    m1a, m1b = band1(0), band1(1)
    b1t = jnp.tile(jnp.pad(b1, (0, 8)), 12)[None, :].astype(f32)  # (1, 384)

    # --- conv2 bands per kernel row, one per W-pool parity; channels padded --
    # m2_c[i][pw1*32 + c1, pw2*32 + co] = w2[co, c1, i, pw1 - (2*pw2 + c)]
    w2p = jnp.pad(w2, ((0, 8), (0, 8), (0, 0), (0, 0)))           # (32, 32, 5, 5)

    def band2(cp):
        kw = pw1[:, None] - (2 * pw2[None, :] + cp)               # (12, 4)
        valid = (kw >= 0) & (kw <= 4)
        m = w2p[co[None, None, None, None, :], c1[None, None, :, None, None],
                i5[:, None, None, None, None],
                jnp.clip(kw, 0, 4)[None, :, None, :, None]]        # (5, 12, 32, 4, 32)
        m = jnp.where(valid[None, :, None, :, None], m, 0.0)
        return m.reshape(5, 384, 128).astype(bf16)

    m2a, m2b = band2(0), band2(1)
    b2t = jnp.tile(jnp.pad(b2, (0, 8)), 4)[None, :].astype(f32)    # (1, 128)

    # --- fc1: torch.flatten order is (c, h, w); our lane order is (ph2,pw2,c).
    #     Pad channels 24->32 (rows -> 512) and units 84->128 (cols). ---------
    g = jnp.pad(fw1.reshape(84, 24, 4, 4), ((0, 44), (0, 8), (0, 0), (0, 0)))
    g1 = jnp.transpose(g, (2, 3, 1, 0)).reshape(512, 128).astype(bf16)
    fb1p = jnp.pad(fb1, (0, 44))[None, :].astype(f32)              # (1, 128)

    # --- fc2: pad in 84->128 (zeros), out 10->128; padded logits bias -1e9 ---
    w2t = jnp.pad(fw2.T, ((0, 44), (0, 118))).astype(bf16)         # (128, 128)
    fb2p = jnp.pad(fb2, (0, 118), constant_values=-1e9)[None, :].astype(f32)

    return (m1a, m1b, b1t, m2a, m2b, b2t, g1, fb1p, w2t, fb2p)


# ---------------------------------------------------------------------------
# Forward pass (Method_MNIST.forward)
# ---------------------------------------------------------------------------
def pallas_forward(x_nchw, packed):
    m1a, m1b, b1t, m2a, m2b, b2t, g1, fb1p, w2t, fb2p = packed
    B = x_nchw.shape[0]
    nb = -(-B // BB)
    bpad = nb * BB

    x2 = x_nchw.reshape(B, 28, 28)
    if bpad != B:                                   # pad batch (zeros -> finite)
        x2 = jnp.pad(x2, ((0, bpad - B), (0, 0), (0, 0)))

    # Pool- and K-fold-friendly input packing (pure layout, ~4x input size):
    #   xg[a, n, ph1*BB + b, i*28 + w] = x[n*BB + b, 2*ph1 + a + i, w]
    ridx = (2 * jnp.arange(12)[None, :, None] + jnp.arange(2)[:, None, None]
            + jnp.arange(5)[None, None, :])                        # (2, 12, 5)
    xg = x2[:, ridx, :]                                            # (bpad,2,12,5,28)
    xg = xg.reshape(nb, BB, 2, 12, 140).transpose(2, 0, 3, 1, 4)
    xg = xg.reshape(2, nb, 12 * BB, 140).astype(jnp.bfloat16)      # cast once

    out = pl.pallas_call(
        _lenet_kernel,
        out_shape=jax.ShapeDtypeStruct((bpad, 128), jnp.float32),
        grid=(nb,),
        in_specs=[
            pl.BlockSpec((2, 1, 12 * BB, 140), lambda n: (0, n, 0, 0)),  # input
            pl.BlockSpec((140, 384), lambda n: (0, 0)),                  # M1 (c=0)
            pl.BlockSpec((140, 384), lambda n: (0, 0)),                  # M1 (c=1)
            pl.BlockSpec((1, 384), lambda n: (0, 0)),                    # b1
            pl.BlockSpec((5, 384, 128), lambda n: (0, 0, 0)),            # M2 (c=0)
            pl.BlockSpec((5, 384, 128), lambda n: (0, 0, 0)),            # M2 (c=1)
            pl.BlockSpec((1, 128), lambda n: (0, 0)),                    # b2
            pl.BlockSpec((512, 128), lambda n: (0, 0)),                  # fc1
            pl.BlockSpec((1, 128), lambda n: (0, 0)),                    # fb1
            pl.BlockSpec((128, 128), lambda n: (0, 0)),                  # fc2
            pl.BlockSpec((1, 128), lambda n: (0, 0)),                    # fb2
        ],
        out_specs=pl.BlockSpec((BB, 128), lambda n: (n, 0)),
        compiler_params=pltpu.CompilerParams(
            dimension_semantics=("parallel",),
            vmem_limit_bytes=48 * 1024 * 1024),
    )(xg, m1a, m1b, b1t, m2a, m2b, b2t, g1, fb1p, w2t, fb2p)
    return out[:B, :10]


# ---------------------------------------------------------------------------
# Pure-JAX reference (exact PyTorch semantics) for a sanity check
# ---------------------------------------------------------------------------
def reference_forward(x, params):
    w1, b1, w2, b2, fw1, fb1, fw2, fb2 = params
    dn = ('NCHW', 'OIHW', 'NCHW')

    y = lax.conv_general_dilated(x, w1, (1, 1), 'VALID', dimension_numbers=dn)
    y = jnp.maximum(y + b1[None, :, None, None], 0.0)
    y = lax.reduce_window(y, -jnp.inf, lax.max, (1, 1, 2, 2), (1, 1, 2, 2), 'VALID')

    y = lax.conv_general_dilated(y, w2, (1, 1), 'VALID', dimension_numbers=dn)
    y = jnp.maximum(y + b2[None, :, None, None], 0.0)
    y = lax.reduce_window(y, -jnp.inf, lax.max, (1, 1, 2, 2), (1, 1, 2, 2), 'VALID')

    y = y.reshape(y.shape[0], -1)
    y = jnp.maximum(y @ fw1.T + fb1, 0.0)
    z = y @ fw2.T + fb2
    return jax.nn.log_softmax(z, axis=1)


# ---------------------------------------------------------------------------
# Main
# ---------------------------------------------------------------------------
if __name__ == "__main__":
    key = jax.random.PRNGKey(0)
    ks = jax.random.split(key, 9)
    scale = 0.05

    # Deterministic synthetic parameters in PyTorch layouts:
    #   conv: (Cout, Cin, KH, KW), linear: (out, in)
    w1 = scale * jax.random.normal(ks[0], (24, 1, 5, 5), jnp.float32)
    b1 = scale * jax.random.normal(ks[1], (24,), jnp.float32)
    w2 = scale * jax.random.normal(ks[2], (24, 24, 5, 5), jnp.float32)
    b2 = scale * jax.random.normal(ks[3], (24,), jnp.float32)
    fw1 = scale * jax.random.normal(ks[4], (84, 384), jnp.float32)
    fb1 = scale * jax.random.normal(ks[5], (84,), jnp.float32)
    fw2 = scale * jax.random.normal(ks[6], (10, 84), jnp.float32)
    fb2 = scale * jax.random.normal(ks[7], (10,), jnp.float32)
    params = (w1, b1, w2, b2, fw1, fb1, fw2, fb2)

    # B > BB and not a multiple of BB: exercises batch padding, grid > 1, and
    # the out[:B] slice. Spatial size 28 is fixed by fc1's 384 input features.
    B = 70
    x = jax.random.normal(ks[8], (B, 1, 28, 28), jnp.float32)

    packed = pack_params(params)            # one-time weight repack (not in jit)
    fwd = jax.jit(pallas_forward)
    out = jax.block_until_ready(fwd(x, packed))

    ref = reference_forward(x, params)
    assert out.shape == (B, 10)
    # bf16 matmul operands (f32 accumulation) limit accuracy to ~1e-2 vs the
    # f32 PyTorch reference; acceptable for inference.
    assert bool(jnp.allclose(out, ref, atol=2e-2, rtol=2e-2)), "mismatch vs reference"
    assert bool(jnp.allclose(jnp.sum(jnp.exp(out), axis=1), 1.0, atol=1e-3))

    print("KERNEL_OK")
</pallas_src>

<mosaic_0001>
module attributes {stable_mosaic.version = 11 : i64} {
  func.func @_lenet_kernel(%arg0: i32, %arg1: memref<2x1x384x140xbf16, #tpu.memory_space<vmem>>, %arg2: memref<140x384xbf16, #tpu.memory_space<vmem>>, %arg3: memref<140x384xbf16, #tpu.memory_space<vmem>>, %arg4: memref<1x384xf32, #tpu.memory_space<vmem>>, %arg5: memref<5x384x128xbf16, #tpu.memory_space<vmem>>, %arg6: memref<5x384x128xbf16, #tpu.memory_space<vmem>>, %arg7: memref<1x128xf32, #tpu.memory_space<vmem>>, %arg8: memref<512x128xbf16, #tpu.memory_space<vmem>>, %arg9: memref<1x128xf32, #tpu.memory_space<vmem>>, %arg10: memref<128x128xbf16, #tpu.memory_space<vmem>>, %arg11: memref<1x128xf32, #tpu.memory_space<vmem>>, %arg12: memref<32x128xf32, #tpu.memory_space<vmem>>) attributes {dimension_semantics = [#tpu.dimension_semantics<parallel>], iteration_bounds = array<i64: 3>, scalar_prefetch = 0 : i64, scratch_operands = 0 : i64, tpu.core_type = #tpu.core_type<tc>, window_params = [{transform_indices = @transform_0, window_bounds = array<i64: 2, 1, 384, 140>}, {pipeline_mode = #tpu.pipeline_mode<synchronous>, transform_indices = @transform_1, window_bounds = array<i64: 140, 384>}, {pipeline_mode = #tpu.pipeline_mode<synchronous>, transform_indices = @transform_2, window_bounds = array<i64: 140, 384>}, {pipeline_mode = #tpu.pipeline_mode<synchronous>, transform_indices = @transform_3, window_bounds = array<i64: 1, 384>}, {pipeline_mode = #tpu.pipeline_mode<synchronous>, transform_indices = @transform_4, window_bounds = array<i64: 5, 384, 128>}, {pipeline_mode = #tpu.pipeline_mode<synchronous>, transform_indices = @transform_5, window_bounds = array<i64: 5, 384, 128>}, {pipeline_mode = #tpu.pipeline_mode<synchronous>, transform_indices = @transform_6, window_bounds = array<i64: 1, 128>}, {pipeline_mode = #tpu.pipeline_mode<synchronous>, transform_indices = @transform_7, window_bounds = array<i64: 512, 128>}, {pipeline_mode = #tpu.pipeline_mode<synchronous>, transform_indices = @transform_8, window_bounds = array<i64: 1, 128>}, {pipeline_mode = #tpu.pipeline_mode<synchronous>, transform_indices = @transform_9, window_bounds = array<i64: 128, 128>}, {pipeline_mode = #tpu.pipeline_mode<synchronous>, transform_indices = @transform_10, window_bounds = array<i64: 1, 128>}, {transform_indices = @transform_11, window_bounds = array<i64: 32, 128>}]} {
    %c0 = arith.constant 0 : index
    %c0_0 = arith.constant 0 : index
    %c0_1 = arith.constant 0 : index
    %c0_2 = arith.constant 0 : index
    %0 = vector.load %arg1[%c0, %c0_0, %c0_1, %c0_2] : memref<2x1x384x140xbf16, #tpu.memory_space<vmem>>, vector<1x1x384x140xbf16>
    %1 = vector.shape_cast %0 : vector<1x1x384x140xbf16> to vector<384x140xbf16>
    %c0_3 = arith.constant 0 : index
    %c0_4 = arith.constant 0 : index
    %2 = vector.load %arg2[%c0_3, %c0_4] : memref<140x384xbf16, #tpu.memory_space<vmem>>, vector<140x384xbf16>
    %cst = arith.constant dense<0.000000e+00> : vector<384x384xf32>
    %3 = tpu.matmul %1, %2, %cst {dimension_numbers = #tpu.dot_dimension_numbers<[1], [0], [0], [1], [0, 0, 1, 1], [], []>} : vector<384x140xbf16>, vector<140x384xbf16>, vector<384x384xf32> -> vector<384x384xf32>
    %c0_5 = arith.constant 0 : index
    %c0_6 = arith.constant 0 : index
    %4 = vector.load %arg3[%c0_5, %c0_6] : memref<140x384xbf16, #tpu.memory_space<vmem>>, vector<140x384xbf16>
    %cst_7 = arith.constant dense<0.000000e+00> : vector<384x384xf32>
    %5 = tpu.matmul %1, %4, %cst_7 {dimension_numbers = #tpu.dot_dimension_numbers<[1], [0], [0], [1], [0, 0, 1, 1], [], []>} : vector<384x140xbf16>, vector<140x384xbf16>, vector<384x384xf32> -> vector<384x384xf32>
    %6 = arith.maximumf %3, %5 : vector<384x384xf32>
    %c1 = arith.constant 1 : index
    %c0_8 = arith.constant 0 : index
    %c0_9 = arith.constant 0 : index
    %c0_10 = arith.constant 0 : index
    %7 = vector.load %arg1[%c1, %c0_8, %c0_9, %c0_10] : memref<2x1x384x140xbf16, #tpu.memory_space<vmem>>, vector<1x1x384x140xbf16>
    %8 = vector.shape_cast %7 : vector<1x1x384x140xbf16> to vector<384x140xbf16>
    %c0_11 = arith.constant 0 : index
    %c0_12 = arith.constant 0 : index
    %9 = vector.load %arg2[%c0_11, %c0_12] : memref<140x384xbf16, #tpu.memory_space<vmem>>, vector<140x384xbf16>
    %cst_13 = arith.constant dense<0.000000e+00> : vector<384x384xf32>
    %10 = tpu.matmul %8, %9, %cst_13 {dimension_numbers = #tpu.dot_dimension_numbers<[1], [0], [0], [1], [0, 0, 1, 1], [], []>} : vector<384x140xbf16>, vector<140x384xbf16>, vector<384x384xf32> -> vector<384x384xf32>
    %c0_14 = arith.constant 0 : index
    %c0_15 = arith.constant 0 : index
    %11 = vector.load %arg3[%c0_14, %c0_15] : memref<140x384xbf16, #tpu.memory_space<vmem>>, vector<140x384xbf16>
    %cst_16 = arith.constant dense<0.000000e+00> : vector<384x384xf32>
    %12 = tpu.matmul %8, %11, %cst_16 {dimension_numbers = #tpu.dot_dimension_numbers<[1], [0], [0], [1], [0, 0, 1, 1], [], []>} : vector<384x140xbf16>, vector<140x384xbf16>, vector<384x384xf32> -> vector<384x384xf32>
    %13 = arith.maximumf %10, %12 : vector<384x384xf32>
    %14 = arith.maximumf %6, %13 : vector<384x384xf32>
    %c0_17 = arith.constant 0 : index
    %c0_18 = arith.constant 0 : index
    %15 = vector.load %arg4[%c0_17, %c0_18] : memref<1x384xf32, #tpu.memory_space<vmem>>, vector<1x384xf32>
    %16 = vector.broadcast %15 : vector<1x384xf32> to vector<384x384xf32>
    %17 = arith.addf %14, %16 : vector<384x384xf32>
    %cst_19 = arith.constant 0.000000e+00 : f32
    %18 = vector.broadcast %cst_19 : f32 to vector<384x384xf32>
    %19 = arith.maximumf %17, %18 : vector<384x384xf32>
    %20 = arith.truncf %19 : vector<384x384xf32> to vector<384x384xbf16>
    %cst_20 = arith.constant 0.000000e+00 : f32
    %21 = vector.broadcast %cst_20 : f32 to vector<256x128xf32>
    %cst_21 = arith.constant 0.000000e+00 : f32
    %22 = vector.broadcast %cst_21 : f32 to vector<256x128xf32>
    %23 = vector.extract_strided_slice %20 {offsets = [0, 0], sizes = [256, 384], strides = [1, 1]} : vector<384x384xbf16> to vector<256x384xbf16>
    %c0_22 = arith.constant 0 : index
    %c0_23 = arith.constant 0 : index
    %c0_24 = arith.constant 0 : index
    %24 = vector.load %arg5[%c0_22, %c0_23, %c0_24] : memref<5x384x128xbf16, #tpu.memory_space<vmem>>, vector<1x384x128xbf16>
    %25 = vector.shape_cast %24 : vector<1x384x128xbf16> to vector<384x128xbf16>
    %cst_25 = arith.constant dense<0.000000e+00> : vector<256x128xf32>
    %26 = tpu.matmul %23, %25, %cst_25 {dimension_numbers = #tpu.dot_dimension_numbers<[1], [0], [0], [1], [0, 0, 1, 1], [], []>} : vector<256x384xbf16>, vector<384x128xbf16>, vector<256x128xf32> -> vector<256x128xf32>
    %27 = arith.addf %21, %26 : vector<256x128xf32>
    %c0_26 = arith.constant 0 : index
    %c0_27 = arith.constant 0 : index
    %c0_28 = arith.constant 0 : index
    %28 = vector.load %arg6[%c0_26, %c0_27, %c0_28] : memref<5x384x128xbf16, #tpu.memory_space<vmem>>, vector<1x384x128xbf16>
    %29 = vector.shape_cast %28 : vector<1x384x128xbf16> to vector<384x128xbf16>
    %cst_29 = arith.constant dense<0.000000e+00> : vector<256x128xf32>
    %30 = tpu.matmul %23, %29, %cst_29 {dimension_numbers = #tpu.dot_dimension_numbers<[1], [0], [0], [1], [0, 0, 1, 1], [], []>} : vector<256x384xbf16>, vector<384x128xbf16>, vector<256x128xf32> -> vector<256x128xf32>
    %31 = arith.addf %22, %30 : vector<256x128xf32>
    %32 = vector.extract_strided_slice %20 {offsets = [32, 0], sizes = [256, 384], strides = [1, 1]} : vector<384x384xbf16> to vector<256x384xbf16>
    %c1_30 = arith.constant 1 : index
    %c0_31 = arith.constant 0 : index
    %c0_32 = arith.constant 0 : index
    %33 = vector.load %arg5[%c1_30, %c0_31, %c0_32] : memref<5x384x128xbf16, #tpu.memory_space<vmem>>, vector<1x384x128xbf16>
    %34 = vector.shape_cast %33 : vector<1x384x128xbf16> to vector<384x128xbf16>
    %cst_33 = arith.constant dense<0.000000e+00> : vector<256x128xf32>
    %35 = tpu.matmul %32, %34, %cst_33 {dimension_numbers = #tpu.dot_dimension_numbers<[1], [0], [0], [1], [0, 0, 1, 1], [], []>} : vector<256x384xbf16>, vector<384x128xbf16>, vector<256x128xf32> -> vector<256x128xf32>
    %36 = arith.addf %27, %35 : vector<256x128xf32>
    %c1_34 = arith.constant 1 : index
    %c0_35 = arith.constant 0 : index
    %c0_36 = arith.constant 0 : index
    %37 = vector.load %arg6[%c1_34, %c0_35, %c0_36] : memref<5x384x128xbf16, #tpu.memory_space<vmem>>, vector<1x384x128xbf16>
    %38 = vector.shape_cast %37 : vector<1x384x128xbf16> to vector<384x128xbf16>
    %cst_37 = arith.constant dense<0.000000e+00> : vector<256x128xf32>
    %39 = tpu.matmul %32, %38, %cst_37 {dimension_numbers = #tpu.dot_dimension_numbers<[1], [0], [0], [1], [0, 0, 1, 1], [], []>} : vector<256x384xbf16>, vector<384x128xbf16>, vector<256x128xf32> -> vector<256x128xf32>
    %40 = arith.addf %31, %39 : vector<256x128xf32>
    %41 = vector.extract_strided_slice %20 {offsets = [64, 0], sizes = [256, 384], strides = [1, 1]} : vector<384x384xbf16> to vector<256x384xbf16>
    %c2 = arith.constant 2 : index
    %c0_38 = arith.constant 0 : index
    %c0_39 = arith.constant 0 : index
    %42 = vector.load %arg5[%c2, %c0_38, %c0_39] : memref<5x384x128xbf16, #tpu.memory_space<vmem>>, vector<1x384x128xbf16>
    %43 = vector.shape_cast %42 : vector<1x384x128xbf16> to vector<384x128xbf16>
    %cst_40 = arith.constant dense<0.000000e+00> : vector<256x128xf32>
    %44 = tpu.matmul %41, %43, %cst_40 {dimension_numbers = #tpu.dot_dimension_numbers<[1], [0], [0], [1], [0, 0, 1, 1], [], []>} : vector<256x384xbf16>, vector<384x128xbf16>, vector<256x128xf32> -> vector<256x128xf32>
    %45 = arith.addf %36, %44 : vector<256x128xf32>
    %c2_41 = arith.constant 2 : index
    %c0_42 = arith.constant 0 : index
    %c0_43 = arith.constant 0 : index
    %46 = vector.load %arg6[%c2_41, %c0_42, %c0_43] : memref<5x384x128xbf16, #tpu.memory_space<vmem>>, vector<1x384x128xbf16>
    %47 = vector.shape_cast %46 : vector<1x384x128xbf16> to vector<384x128xbf16>
    %cst_44 = arith.constant dense<0.000000e+00> : vector<256x128xf32>
    %48 = tpu.matmul %41, %47, %cst_44 {dimension_numbers = #tpu.dot_dimension_numbers<[1], [0], [0], [1], [0, 0, 1, 1], [], []>} : vector<256x384xbf16>, vector<384x128xbf16>, vector<256x128xf32> -> vector<256x128xf32>
    %49 = arith.addf %40, %48 : vector<256x128xf32>
    %50 = vector.extract_strided_slice %20 {offsets = [96, 0], sizes = [256, 384], strides = [1, 1]} : vector<384x384xbf16> to vector<256x384xbf16>
    %c3 = arith.constant 3 : index
    %c0_45 = arith.constant 0 : index
    %c0_46 = arith.constant 0 : index
    %51 = vector.load %arg5[%c3, %c0_45, %c0_46] : memref<5x384x128xbf16, #tpu.memory_space<vmem>>, vector<1x384x128xbf16>
    %52 = vector.shape_cast %51 : vector<1x384x128xbf16> to vector<384x128xbf16>
    %cst_47 = arith.constant dense<0.000000e+00> : vector<256x128xf32>
    %53 = tpu.matmul %50, %52, %cst_47 {dimension_numbers = #tpu.dot_dimension_numbers<[1], [0], [0], [1], [0, 0, 1, 1], [], []>} : vector<256x384xbf16>, vector<384x128xbf16>, vector<256x128xf32> -> vector<256x128xf32>
    %54 = arith.addf %45, %53 : vector<256x128xf32>
    %c3_48 = arith.constant 3 : index
    %c0_49 = arith.constant 0 : index
    %c0_50 = arith.constant 0 : index
    %55 = vector.load %arg6[%c3_48, %c0_49, %c0_50] : memref<5x384x128xbf16, #tpu.memory_space<vmem>>, vector<1x384x128xbf16>
    %56 = vector.shape_cast %55 : vector<1x384x128xbf16> to vector<384x128xbf16>
    %cst_51 = arith.constant dense<0.000000e+00> : vector<256x128xf32>
    %57 = tpu.matmul %50, %56, %cst_51 {dimension_numbers = #tpu.dot_dimension_numbers<[1], [0], [0], [1], [0, 0, 1, 1], [], []>} : vector<256x384xbf16>, vector<384x128xbf16>, vector<256x128xf32> -> vector<256x128xf32>
    %58 = arith.addf %49, %57 : vector<256x128xf32>
    %59 = vector.extract_strided_slice %20 {offsets = [128, 0], sizes = [256, 384], strides = [1, 1]} : vector<384x384xbf16> to vector<256x384xbf16>
    %c4 = arith.constant 4 : index
    %c0_52 = arith.constant 0 : index
    %c0_53 = arith.constant 0 : index
    %60 = vector.load %arg5[%c4, %c0_52, %c0_53] : memref<5x384x128xbf16, #tpu.memory_space<vmem>>, vector<1x384x128xbf16>
    %61 = vector.shape_cast %60 : vector<1x384x128xbf16> to vector<384x128xbf16>
    %cst_54 = arith.constant dense<0.000000e+00> : vector<256x128xf32>
    %62 = tpu.matmul %59, %61, %cst_54 {dimension_numbers = #tpu.dot_dimension_numbers<[1], [0], [0], [1], [0, 0, 1, 1], [], []>} : vector<256x384xbf16>, vector<384x128xbf16>, vector<256x128xf32> -> vector<256x128xf32>
    %63 = arith.addf %54, %62 : vector<256x128xf32>
    %c4_55 = arith.constant 4 : index
    %c0_56 = arith.constant 0 : index
    %c0_57 = arith.constant 0 : index
    %64 = vector.load %arg6[%c4_55, %c0_56, %c0_57] : memref<5x384x128xbf16, #tpu.memory_space<vmem>>, vector<1x384x128xbf16>
    %65 = vector.shape_cast %64 : vector<1x384x128xbf16> to vector<384x128xbf16>
    %cst_58 = arith.constant dense<0.000000e+00> : vector<256x128xf32>
    %66 = tpu.matmul %59, %65, %cst_58 {dimension_numbers = #tpu.dot_dimension_numbers<[1], [0], [0], [1], [0, 0, 1, 1], [], []>} : vector<256x384xbf16>, vector<384x128xbf16>, vector<256x128xf32> -> vector<256x128xf32>
    %67 = arith.addf %58, %66 : vector<256x128xf32>
    %68 = arith.maximumf %63, %67 : vector<256x128xf32>
    %c0_59 = arith.constant 0 : index
    %c0_60 = arith.constant 0 : index
    %69 = vector.load %arg7[%c0_59, %c0_60] : memref<1x128xf32, #tpu.memory_space<vmem>>, vector<1x128xf32>
    %70 = vector.broadcast %69 : vector<1x128xf32> to vector<256x128xf32>
    %71 = arith.addf %68, %70 : vector<256x128xf32>
    %cst_61 = arith.constant 0.000000e+00 : f32
    %72 = vector.broadcast %cst_61 : f32 to vector<256x128xf32>
    %73 = arith.maximumf %71, %72 : vector<256x128xf32>
    %74 = vector.extract_strided_slice %73 {offsets = [0, 0], sizes = [32, 128], strides = [1, 1]} : vector<256x128xf32> to vector<32x128xf32>
    %75 = vector.extract_strided_slice %73 {offsets = [32, 0], sizes = [32, 128], strides = [1, 1]} : vector<256x128xf32> to vector<32x128xf32>
    %76 = arith.maximumf %74, %75 : vector<32x128xf32>
    %77 = vector.extract_strided_slice %73 {offsets = [64, 0], sizes = [32, 128], strides = [1, 1]} : vector<256x128xf32> to vector<32x128xf32>
    %78 = vector.extract_strided_slice %73 {offsets = [96, 0], sizes = [32, 128], strides = [1, 1]} : vector<256x128xf32> to vector<32x128xf32>
    %79 = arith.maximumf %77, %78 : vector<32x128xf32>
    %80 = vector.extract_strided_slice %73 {offsets = [128, 0], sizes = [32, 128], strides = [1, 1]} : vector<256x128xf32> to vector<32x128xf32>
    %81 = vector.extract_strided_slice %73 {offsets = [160, 0], sizes = [32, 128], strides = [1, 1]} : vector<256x128xf32> to vector<32x128xf32>
    %82 = arith.maximumf %80, %81 : vector<32x128xf32>
    %83 = vector.extract_strided_slice %73 {offsets = [192, 0], sizes = [32, 128], strides = [1, 1]} : vector<256x128xf32> to vector<32x128xf32>
    %84 = vector.extract_strided_slice %73 {offsets = [224, 0], sizes = [32, 128], strides = [1, 1]} : vector<256x128xf32> to vector<32x128xf32>
    %85 = arith.maximumf %83, %84 : vector<32x128xf32>
    %86 = tpu.concatenate %76, %79, %82, %85 in 1 : vector<32x128xf32>, vector<32x128xf32>, vector<32x128xf32>, vector<32x128xf32> -> vector<32x512xf32>
    %87 = arith.truncf %86 : vector<32x512xf32> to vector<32x512xbf16>
    %c0_62 = arith.constant 0 : index
    %c0_63 = arith.constant 0 : index
    %88 = vector.load %arg8[%c0_62, %c0_63] : memref<512x128xbf16, #tpu.memory_space<vmem>>, vector<512x128xbf16>
    %cst_64 = arith.constant dense<0.000000e+00> : vector<32x128xf32>
    %89 = tpu.matmul %87, %88, %cst_64 {dimension_numbers = #tpu.dot_dimension_numbers<[1], [0], [0], [1], [0, 0, 1, 1], [], []>} : vector<32x512xbf16>, vector<512x128xbf16>, vector<32x128xf32> -> vector<32x128xf32>
    %c0_65 = arith.constant 0 : index
    %c0_66 = arith.constant 0 : index
    %90 = vector.load %arg9[%c0_65, %c0_66] : memref<1x128xf32, #tpu.memory_space<vmem>>, vector<1x128xf32>
    %91 = vector.broadcast %90 : vector<1x128xf32> to vector<32x128xf32>
    %92 = arith.addf %89, %91 : vector<32x128xf32>
    %cst_67 = arith.constant 0.000000e+00 : f32
    %93 = vector.broadcast %cst_67 : f32 to vector<32x128xf32>
    %94 = arith.maximumf %92, %93 : vector<32x128xf32>
    %95 = arith.truncf %94 : vector<32x128xf32> to vector<32x128xbf16>
    %c0_68 = arith.constant 0 : index
    %c0_69 = arith.constant 0 : index
    %96 = vector.load %arg10[%c0_68, %c0_69] : memref<128x128xbf16, #tpu.memory_space<vmem>>, vector<128x128xbf16>
    %cst_70 = arith.constant dense<0.000000e+00> : vector<32x128xf32>
    %97 = tpu.matmul %95, %96, %cst_70 {dimension_numbers = #tpu.dot_dimension_numbers<[1], [0], [0], [1], [0, 0, 1, 1], [], []>} : vector<32x128xbf16>, vector<128x128xbf16>, vector<32x128xf32> -> vector<32x128xf32>
    %c0_71 = arith.constant 0 : index
    %c0_72 = arith.constant 0 : index
    %98 = vector.load %arg11[%c0_71, %c0_72] : memref<1x128xf32, #tpu.memory_space<vmem>>, vector<1x128xf32>
    %99 = vector.broadcast %98 : vector<1x128xf32> to vector<32x128xf32>
    %100 = arith.addf %97, %99 : vector<32x128xf32>
    %cst_73 = arith.constant dense<0xFF800000> : vector<32xf32>
    %101 = vector.multi_reduction <maximumf>, %100, %cst_73 [1] : vector<32x128xf32> to vector<32xf32>
    %102 = vector.shape_cast %101 : vector<32xf32> to vector<32x1xf32>
    %103 = vector.broadcast %102 : vector<32x1xf32> to vector<32x128xf32>
    %104 = arith.subf %100, %103 : vector<32x128xf32>
    %105 = math.exp %104 : vector<32x128xf32>
    %cst_74 = arith.constant dense<0.000000e+00> : vector<32xf32>
    %106 = vector.multi_reduction <add>, %105, %cst_74 [1] : vector<32x128xf32> to vector<32xf32>
    %107 = vector.shape_cast %106 : vector<32xf32> to vector<32x1xf32>
    %108 = math.log %107 : vector<32x1xf32>
    %109 = arith.addf %102, %108 : vector<32x1xf32>
    %110 = vector.broadcast %109 : vector<32x1xf32> to vector<32x128xf32>
    %111 = arith.subf %100, %110 : vector<32x128xf32>
    %c0_75 = arith.constant 0 : index
    %c0_76 = arith.constant 0 : index
    %112 = vector.load %arg12[%c0_75, %c0_76] : memref<32x128xf32, #tpu.memory_space<vmem>>, vector<32x128xf32>
    tpu.vector_store %arg12[%c0_75, %c0_76], %111 {strides = array<i32>} : memref<32x128xf32, #tpu.memory_space<vmem>>, vector<32x128xf32>,
    return
  }
  func.func @transform_0(%arg0: i32) -> (i32, i32, i32, i32) {
    %c0_i32 = arith.constant 0 : i32
    %c0_i32_0 = arith.constant 0 : i32
    %c0_i32_1 = arith.constant 0 : i32
    %c0_i32_2 = arith.constant 0 : i32
    return %c0_i32, %arg0, %c0_i32_0, %c0_i32_1 : i32, i32, i32, i32
  }
  func.func @transform_1(%arg0: i32) -> (i32, i32) {
    %c0_i32 = arith.constant 0 : i32
    %c0_i32_0 = arith.constant 0 : i32
    %c0_i32_1 = arith.constant 0 : i32
    return %c0_i32, %c0_i32_0 : i32, i32
  }
  func.func @transform_2(%arg0: i32) -> (i32, i32) {
    %c0_i32 = arith.constant 0 : i32
    %c0_i32_0 = arith.constant 0 : i32
    %c0_i32_1 = arith.constant 0 : i32
    return %c0_i32, %c0_i32_0 : i32, i32
  }
  func.func @transform_3(%arg0: i32) -> (i32, i32) {
    %c0_i32 = arith.constant 0 : i32
    %c0_i32_0 = arith.constant 0 : i32
    %c0_i32_1 = arith.constant 0 : i32
    return %c0_i32, %c0_i32_0 : i32, i32
  }
  func.func @transform_4(%arg0: i32) -> (i32, i32, i32) {
    %c0_i32 = arith.constant 0 : i32
    %c0_i32_0 = arith.constant 0 : i32
    %c0_i32_1 = arith.constant 0 : i32
    %c0_i32_2 = arith.constant 0 : i32
    return %c0_i32, %c0_i32_0, %c0_i32_1 : i32, i32, i32
  }
  func.func @transform_5(%arg0: i32) -> (i32, i32, i32) {
    %c0_i32 = arith.constant 0 : i32
    %c0_i32_0 = arith.constant 0 : i32
    %c0_i32_1 = arith.constant 0 : i32
    %c0_i32_2 = arith.constant 0 : i32
    return %c0_i32, %c0_i32_0, %c0_i32_1 : i32, i32, i32
  }
  func.func @transform_6(%arg0: i32) -> (i32, i32) {
    %c0_i32 = arith.constant 0 : i32
    %c0_i32_0 = arith.constant 0 : i32
    %c0_i32_1 = arith.constant 0 : i32
    return %c0_i32, %c0_i32_0 : i32, i32
  }
  func.func @transform_7(%arg0: i32) -> (i32, i32) {
    %c0_i32 = arith.constant 0 : i32
    %c0_i32_0 = arith.constant 0 : i32
    %c0_i32_1 = arith.constant 0 : i32
    return %c0_i32, %c0_i32_0 : i32, i32
  }
  func.func @transform_8(%arg0: i32) -> (i32, i32) {
    %c0_i32 = arith.constant 0 : i32
    %c0_i32_0 = arith.constant 0 : i32
    %c0_i32_1 = arith.constant 0 : i32
    return %c0_i32, %c0_i32_0 : i32, i32
  }
  func.func @transform_9(%arg0: i32) -> (i32, i32) {
    %c0_i32 = arith.constant 0 : i32
    %c0_i32_0 = arith.constant 0 : i32
    %c0_i32_1 = arith.constant 0 : i32
    return %c0_i32, %c0_i32_0 : i32, i32
  }
  func.func @transform_10(%arg0: i32) -> (i32, i32) {
    %c0_i32 = arith.constant 0 : i32
    %c0_i32_0 = arith.constant 0 : i32
    %c0_i32_1 = arith.constant 0 : i32
    return %c0_i32, %c0_i32_0 : i32, i32
  }
  func.func @transform_11(%arg0: i32) -> (i32, i32) {
    %c0_i32 = arith.constant 0 : i32
    %c0_i32_0 = arith.constant 0 : i32
    return %arg0, %c0_i32 : i32, i32
  }
}

</mosaic_0001>

<llo_original>
// kernel: pallas_forward.1
$region0: #{pallas_forward.1}
  #allocation0 [shape = 'u32[]', space=smem, size = 0x4, offset = 0x4, fixed_abs, tag = 'smem constant byte address 0x4 - core index']
  #allocation1 [shape = 'u32[72,128]{1,0:T(1,128)}', space=vmem, size = 0x9000, scoped, tag = 'internal scratch']
  %s0 = inlined_call_operand.vmem [shape: bf16[2,3,384,140], index: 0, kind: input, shape index: {}]
  %s1 = inlined_call_operand.vmem [shape: bf16[140,384], index: 1, kind: input, shape index: {}]
  %s2 = inlined_call_operand.vmem [shape: bf16[140,384], index: 2, kind: input, shape index: {}]
  %s3 = inlined_call_operand.vmem [shape: f32[1,384], index: 3, kind: input, shape index: {}]
  %s4 = inlined_call_operand.vmem [shape: bf16[5,384,128], index: 4, kind: input, shape index: {}]
  %s5 = inlined_call_operand.vmem [shape: bf16[5,384,128], index: 5, kind: input, shape index: {}]
  %s6 = inlined_call_operand.vmem [shape: f32[1,128], index: 6, kind: input, shape index: {}]
  %s7 = inlined_call_operand.vmem [shape: bf16[512,128], index: 7, kind: input, shape index: {}]
  %s8 = inlined_call_operand.vmem [shape: f32[1,128], index: 8, kind: input, shape index: {}]
  %s9 = inlined_call_operand.vmem [shape: bf16[128,128], index: 9, kind: input, shape index: {}]
  %s10 = inlined_call_operand.vmem [shape: f32[1,128], index: 10, kind: input, shape index: {}]
  %s11 = inlined_call_operand.vmem [shape: f32[96,128], index: 11, kind: output, shape index: {}]
  %s12 = sld [smem:[#allocation0]]
  $region115: #{pallas_forward.1} parent=0
    _
  %s14 = ssub.s32 1, %s12
  %s15 = scalar_select 0, %s14, %s12
  $region1: #{pallas_forward.1} parent=0
    #allocation2 [shape = 'u8[786432]{0}', space=vmem, size = 0xc0000, scoped, tag = 'input window, operand 0']
    loop: start=0, step=1, limit=5
    $region2: #{pallas_forward.1} parent=1 // loop_pre_header
      _
    $region3: #{pallas_forward.1} parent=1 // loop_header
      %s17 = sphi 0, %s21
      %p18 = scmp.ge.s32.totalorder %s17, 5
      %s27 = sphi 0, %s29
      %s30 = sphi 0, %s27
      %s31 = sphi 0, %s30
      %s47 = sphi 0, %s31
      %s51 = sphi 0, %s51
      %s53 = sphi 0, %s51
      %s54 = sphi 0, %s53
      %s68 = sphi 0, %s54
      %s72 = sphi 0, %s72
      %s74 = sphi 0, %s72
      %s75 = sphi 0, %s74
      %s89 = sphi 0, %s75
      %s93 = sphi 0, %s93
      %s95 = sphi 0, %s93
      %s96 = sphi 0, %s95
      %s110 = sphi 0, %s96
      %s114 = sphi 0, %s114
      %s116 = sphi 0, %s114
      %s117 = sphi 0, %s116
      %s131 = sphi 0, %s117
      %s135 = sphi 0, %s135
      %s137 = sphi 0, %s135
      %s138 = sphi 0, %s137
      %s152 = sphi 0, %s138
      %s156 = sphi 0, %s156
      %s158 = sphi 0, %s156
      %s159 = sphi 0, %s158
      %s173 = sphi 0, %s159
      %s177 = sphi 0, %s177
      %s179 = sphi 0, %s177
      %s180 = sphi 0, %s179
      %s194 = sphi 0, %s180
      %s198 = sphi 0, %s198
      %s200 = sphi 0, %s198
      %s201 = sphi 0, %s200
      %s215 = sphi 0, %s201
      %s219 = sphi 0, %s219
      %s221 = sphi 0, %s219
      %s222 = sphi 0, %s221
      %s236 = sphi 0, %s222
      %s240 = sphi 0, %s240
      %s242 = sphi 0, %s240
      %s243 = sphi 0, %s242
      %s257 = sphi 0, %s243
      %s263 = sphi 0, %s265
      %s266 = sphi 0, %s263
      %s267 = sphi 0, %s266
      %s283 = sphi 0, %s267
    $region4: #{pallas_forward.1} parent=1 // loop_header_branch
      %20 = sbr.rel (%p18) target = $region8
    $region5: #{pallas_forward.1} parent=1 // loop_body
      %s22 = ssub.s32 %s17, 1
      %s23 = ssub.s32 %s17, 2
      %s24 = sadd.s32 %s17, 1
      %s25 = ssub.s32 %s17, %s24
      %p26 = scmp.eq.s32.totalorder %s25, 0
      %s28 = sadd.s32 %s27, 1
      %s29 = scalar_select %p26, %s27, %s28
      %p32 = pneg %p26
      %p33 = scmp.eq.s32.totalorder %s17, 2
      %p34 = por %p32, %p33
      %p35 = scmp.ne.s32.totalorder %s27, %s30
      %p36 = scmp.eq.s32.totalorder %s17, 0
      %p37 = por %p35, %p36
      %p38 = scmp.ne.s32.totalorder %s27, %s30
      %p39 = scmp.eq.s32.totalorder %s22, 2
      %p40 = por %p38, %p39
      %p41 = scmp.ne.s32.totalorder %s30, %s31
      %p42 = scmp.eq.s32.totalorder %s22, 0
      %p43 = por %p41, %p42
      %p44 = scmp.ne.s32.totalorder %s30, %s31
      %p45 = scmp.eq.s32.totalorder %s23, 2
      %p46 = por %p44, %p45
      %p48 = scmp.ne.s32.totalorder %s31, %s47
      %p49 = scmp.eq.s32.totalorder %s23, 0
      %p50 = por %p48, %p49
      %s52 = sadd.s32 %s51, 1
      %p55 = scmp.eq.s32.totalorder %s17, 2
      %p56 = scmp.ne.s32.totalorder %s51, %s53
      %p57 = scmp.eq.s32.totalorder %s17, 0
      %p58 = por %p56, %p57
      %p59 = scmp.ne.s32.totalorder %s51, %s53
      %p60 = scmp.eq.s32.totalorder %s22, 2
      %p61 = por %p59, %p60
      %p62 = scmp.ne.s32.totalorder %s53, %s54
      %p63 = scmp.eq.s32.totalorder %s22, 0
      %p64 = por %p62, %p63
      %p65 = scmp.ne.s32.totalorder %s53, %s54
      %p66 = scmp.eq.s32.totalorder %s23, 2
      %p67 = por %p65, %p66
      %p69 = scmp.ne.s32.totalorder %s54, %s68
      %p70 = scmp.eq.s32.totalorder %s23, 0
      %p71 = por %p69, %p70
      %s73 = sadd.s32 %s72, 1
      %p76 = scmp.eq.s32.totalorder %s17, 2
      %p77 = scmp.ne.s32.totalorder %s72, %s74
      %p78 = scmp.eq.s32.totalorder %s17, 0
      %p79 = por %p77, %p78
      %p80 = scmp.ne.s32.totalorder %s72, %s74
      %p81 = scmp.eq.s32.totalorder %s22, 2
      %p82 = por %p80, %p81
      %p83 = scmp.ne.s32.totalorder %s74, %s75
      %p84 = scmp.eq.s32.totalorder %s22, 0
      %p85 = por %p83, %p84
      %p86 = scmp.ne.s32.totalorder %s74, %s75
      %p87 = scmp.eq.s32.totalorder %s23, 2
      %p88 = por %p86, %p87
      %p90 = scmp.ne.s32.totalorder %s75, %s89
      %p91 = scmp.eq.s32.totalorder %s23, 0
      %p92 = por %p90, %p91
      %s94 = sadd.s32 %s93, 1
      %p97 = scmp.eq.s32.totalorder %s17, 2
      %p98 = scmp.ne.s32.totalorder %s93, %s95
      %p99 = scmp.eq.s32.totalorder %s17, 0
      %p100 = por %p98, %p99
      %p101 = scmp.ne.s32.totalorder %s93, %s95
      %p102 = scmp.eq.s32.totalorder %s22, 2
      %p103 = por %p101, %p102
      %p104 = scmp.ne.s32.totalorder %s95, %s96
      %p105 = scmp.eq.s32.totalorder %s22, 0
      %p106 = por %p104, %p105
      %p107 = scmp.ne.s32.totalorder %s95, %s96
      %p108 = scmp.eq.s32.totalorder %s23, 2
      %p109 = por %p107, %p108
      %p111 = scmp.ne.s32.totalorder %s96, %s110
      %p112 = scmp.eq.s32.totalorder %s23, 0
      %p113 = por %p111, %p112
      %s115 = sadd.s32 %s114, 1
      %p118 = scmp.eq.s32.totalorder %s17, 2
      %p119 = scmp.ne.s32.totalorder %s114, %s116
      %p120 = scmp.eq.s32.totalorder %s17, 0
      %p121 = por %p119, %p120
      %p122 = scmp.ne.s32.totalorder %s114, %s116
      %p123 = scmp.eq.s32.totalorder %s22, 2
      %p124 = por %p122, %p123
      %p125 = scmp.ne.s32.totalorder %s116, %s117
      %p126 = scmp.eq.s32.totalorder %s22, 0
      %p127 = por %p125, %p126
      %p128 = scmp.ne.s32.totalorder %s116, %s117
      %p129 = scmp.eq.s32.totalorder %s23, 2
      %p130 = por %p128, %p129
      %p132 = scmp.ne.s32.totalorder %s117, %s131
      %p133 = scmp.eq.s32.totalorder %s23, 0
      %p134 = por %p132, %p133
      %s136 = sadd.s32 %s135, 1
      %p139 = scmp.eq.s32.totalorder %s17, 2
      %p140 = scmp.ne.s32.totalorder %s135, %s137
      %p141 = scmp.eq.s32.totalorder %s17, 0
      %p142 = por %p140, %p141
      %p143 = scmp.ne.s32.totalorder %s135, %s137
      %p144 = scmp.eq.s32.totalorder %s22, 2
      %p145 = por %p143, %p144
      %p146 = scmp.ne.s32.totalorder %s137, %s138
      %p147 = scmp.eq.s32.totalorder %s22, 0
      %p148 = por %p146, %p147
      %p149 = scmp.ne.s32.totalorder %s137, %s138
      %p150 = scmp.eq.s32.totalorder %s23, 2
      %p151 = por %p149, %p150
      %p153 = scmp.ne.s32.totalorder %s138, %s152
      %p154 = scmp.eq.s32.totalorder %s23, 0
      %p155 = por %p153, %p154
      %s157 = sadd.s32 %s156, 1
      %p160 = scmp.eq.s32.totalorder %s17, 2
      %p161 = scmp.ne.s32.totalorder %s156, %s158
      %p162 = scmp.eq.s32.totalorder %s17, 0
      %p163 = por %p161, %p162
      %p164 = scmp.ne.s32.totalorder %s156, %s158
      %p165 = scmp.eq.s32.totalorder %s22, 2
      %p166 = por %p164, %p165
      %p167 = scmp.ne.s32.totalorder %s158, %s159
      %p168 = scmp.eq.s32.totalorder %s22, 0
      %p169 = por %p167, %p168
      %p170 = scmp.ne.s32.totalorder %s158, %s159
      %p171 = scmp.eq.s32.totalorder %s23, 2
      %p172 = por %p170, %p171
      %p174 = scmp.ne.s32.totalorder %s159, %s173
      %p175 = scmp.eq.s32.totalorder %s23, 0
      %p176 = por %p174, %p175
      %s178 = sadd.s32 %s177, 1
      %p181 = scmp.eq.s32.totalorder %s17, 2
      %p182 = scmp.ne.s32.totalorder %s177, %s179
      %p183 = scmp.eq.s32.totalorder %s17, 0
      %p184 = por %p182, %p183
      %p185 = scmp.ne.s32.totalorder %s177, %s179
      %p186 = scmp.eq.s32.totalorder %s22, 2
      %p187 = por %p185, %p186
      %p188 = scmp.ne.s32.totalorder %s179, %s180
      %p189 = scmp.eq.s32.totalorder %s22, 0
      %p190 = por %p188, %p189
      %p191 = scmp.ne.s32.totalorder %s179, %s180
      %p192 = scmp.eq.s32.totalorder %s23, 2
      %p193 = por %p191, %p192
      %p195 = scmp.ne.s32.totalorder %s180, %s194
      %p196 = scmp.eq.s32.totalorder %s23, 0
      %p197 = por %p195, %p196
      %s199 = sadd.s32 %s198, 1
      %p202 = scmp.eq.s32.totalorder %s17, 2
      %p203 = scmp.ne.s32.totalorder %s198, %s200
      %p204 = scmp.eq.s32.totalorder %s17, 0
      %p205 = por %p203, %p204
      %p206 = scmp.ne.s32.totalorder %s198, %s200
      %p207 = scmp.eq.s32.totalorder %s22, 2
      %p208 = por %p206, %p207
      %p209 = scmp.ne.s32.totalorder %s200, %s201
      %p210 = scmp.eq.s32.totalorder %s22, 0
      %p211 = por %p209, %p210
      %p212 = scmp.ne.s32.totalorder %s200, %s201
      %p213 = scmp.eq.s32.totalorder %s23, 2
      %p214 = por %p212, %p213
      %p216 = scmp.ne.s32.totalorder %s201, %s215
      %p217 = scmp.eq.s32.totalorder %s23, 0
      %p218 = por %p216, %p217
      %s220 = sadd.s32 %s219, 1
      %p223 = scmp.eq.s32.totalorder %s17, 2
      %p224 = scmp.ne.s32.totalorder %s219, %s221
      %p225 = scmp.eq.s32.totalorder %s17, 0
      %p226 = por %p224, %p225
      %p227 = scmp.ne.s32.totalorder %s219, %s221
      %p228 = scmp.eq.s32.totalorder %s22, 2
      %p229 = por %p227, %p228
      %p230 = scmp.ne.s32.totalorder %s221, %s222
      %p231 = scmp.eq.s32.totalorder %s22, 0
      %p232 = por %p230, %p231
      %p233 = scmp.ne.s32.totalorder %s221, %s222
      %p234 = scmp.eq.s32.totalorder %s23, 2
      %p235 = por %p233, %p234
      %p237 = scmp.ne.s32.totalorder %s222, %s236
      %p238 = scmp.eq.s32.totalorder %s23, 0
      %p239 = por %p237, %p238
      %s241 = sadd.s32 %s240, 1
      %p244 = scmp.eq.s32.totalorder %s17, 2
      %p245 = scmp.ne.s32.totalorder %s240, %s242
      %p246 = scmp.eq.s32.totalorder %s17, 0
      %p247 = por %p245, %p246
      %p248 = scmp.ne.s32.totalorder %s240, %s242
      %p249 = scmp.eq.s32.totalorder %s22, 2
      %p250 = por %p248, %p249
      %p251 = scmp.ne.s32.totalorder %s242, %s243
      %p252 = scmp.eq.s32.totalorder %s22, 0
      %p253 = por %p251, %p252
      %p254 = scmp.ne.s32.totalorder %s242, %s243
      %p255 = scmp.eq.s32.totalorder %s23, 2
      %p256 = por %p254, %p255
      %p258 = scmp.ne.s32.totalorder %s243, %s257
      %p259 = scmp.eq.s32.totalorder %s23, 0
      %p260 = por %p258, %p259
      %s261 = ssub.s32 %s17, %s24
      %p262 = scmp.eq.s32.totalorder %s261, 0
      %s264 = sadd.s32 %s263, 1
      %s265 = scalar_select %p262, %s263, %s264
      %p268 = pneg %p262
      %p269 = scmp.eq.s32.totalorder %s17, 2
      %p270 = por %p268, %p269
      %p271 = scmp.ne.s32.totalorder %s263, %s266
      %p272 = scmp.eq.s32.totalorder %s17, 0
      %p273 = por %p271, %p272
      %p274 = scmp.ne.s32.totalorder %s263, %s266
      %p275 = scmp.eq.s32.totalorder %s22, 2
      %p276 = por %p274, %p275
      %p277 = scmp.ne.s32.totalorder %s266, %s267
      %p278 = scmp.eq.s32.totalorder %s22, 0
      %p279 = por %p277, %p278
      %p280 = scmp.ne.s32.totalorder %s266, %s267
      %p281 = scmp.eq.s32.totalorder %s23, 2
      %p282 = por %p280, %p281
      %p284 = scmp.ne.s32.totalorder %s267, %s283
      %p285 = scmp.eq.s32.totalorder %s23, 0
      %p286 = por %p284, %p285
      %p287 = scmp.le.s32.totalorder 1, %s17
      %p288 = scmp.lt.s32.totalorder %s17, 4
      %p289 = pnand %p287, %p288
      %p290 = pneg %p289
      // Predicated region
      $region9: #{pallas_forward.1} parent=5 // pred_check
        _
      $region10: #{pallas_forward.1} parent=5 // pred_check_branch
        %292 = sbr.rel (%p289) target = $region12
      $region11: #{pallas_forward.1} parent=5 // pred_region
        %s293 = ssub.s32 %s17, 1
        // Predicated region
        $region13: #{pallas_forward.1} parent=11 // pred_check
          %p294 = pneg %p64
        $region14: #{pallas_forward.1} parent=11 // pred_check_branch
          %296 = sbr.rel (%p294) target = $region16
        $region15: #{pallas_forward.1} parent=11 // pred_region
          _
        $region16: #{pallas_forward.1} parent=11 // pred_fallthru
          _
        // Predicated region
        $region17: #{pallas_forward.1} parent=11 // pred_check
          %p297 = pneg %p85
        $region18: #{pallas_forward.1} parent=11 // pred_check_branch
          %299 = sbr.rel (%p297) target = $region20
        $region19: #{pallas_forward.1} parent=11 // pred_region
          _
        $region20: #{pallas_forward.1} parent=11 // pred_fallthru
          _
        // Predicated region
        $region21: #{pallas_forward.1} parent=11 // pred_check
          %p300 = pneg %p106
        $region22: #{pallas_forward.1} parent=11 // pred_check_branch
          %302 = sbr.rel (%p300) target = $region24
        $region23: #{pallas_forward.1} parent=11 // pred_region
          _
        $region24: #{pallas_forward.1} parent=11 // pred_fallthru
          _
        // Predicated region
        $region25: #{pallas_forward.1} parent=11 // pred_check
          %p303 = pneg %p127
        $region26: #{pallas_forward.1} parent=11 // pred_check_branch
          %305 = sbr.rel (%p303) target = $region28
        $region27: #{pallas_forward.1} parent=11 // pred_region
          _
        $region28: #{pallas_forward.1} parent=11 // pred_fallthru
          _
        // Predicated region
        $region29: #{pallas_forward.1} parent=11 // pred_check
          %p306 = pneg %p148
        $region30: #{pallas_forward.1} parent=11 // pred_check_branch
          %308 = sbr.rel (%p306) target = $region32
        $region31: #{pallas_forward.1} parent=11 // pred_region
          _
        $region32: #{pallas_forward.1} parent=11 // pred_fallthru
          _
        // Predicated region
        $region33: #{pallas_forward.1} parent=11 // pred_check
          %p309 = pneg %p169
        $region34: #{pallas_forward.1} parent=11 // pred_check_branch
          %311 = sbr.rel (%p309) target = $region36
        $region35: #{pallas_forward.1} parent=11 // pred_region
          _
        $region36: #{pallas_forward.1} parent=11 // pred_fallthru
          _
        // Predicated region
        $region37: #{pallas_forward.1} parent=11 // pred_check
          %p312 = pneg %p190
        $region38: #{pallas_forward.1} parent=11 // pred_check_branch
          %314 = sbr.rel (%p312) target = $region40
        $region39: #{pallas_forward.1} parent=11 // pred_region
          _
        $region40: #{pallas_forward.1} parent=11 // pred_fallthru
          _
        // Predicated region
        $region41: #{pallas_forward.1} parent=11 // pred_check
          %p315 = pneg %p211
        $region42: #{pallas_forward.1} parent=11 // pred_check_branch
          %317 = sbr.rel (%p315) target = $region44
        $region43: #{pallas_forward.1} parent=11 // pred_region
          _
        $region44: #{pallas_forward.1} parent=11 // pred_fallthru
          _
        // Predicated region
        $region45: #{pallas_forward.1} parent=11 // pred_check
          %p318 = pneg %p232
        $region46: #{pallas_forward.1} parent=11 // pred_check_branch
          %320 = sbr.rel (%p318) target = $region48
        $region47: #{pallas_forward.1} parent=11 // pred_region
          _
        $region48: #{pallas_forward.1} parent=11 // pred_fallthru
          _
        // Predicated region
        $region49: #{pallas_forward.1} parent=11 // pred_check
          %p321 = pneg %p253
        $region50: #{pallas_forward.1} parent=11 // pred_check_branch
          %323 = sbr.rel (%p321) target = $region52
        $region51: #{pallas_forward.1} parent=11 // pred_region
          _
        $region52: #{pallas_forward.1} parent=11 // pred_fallthru
          _
      $region12: #{pallas_forward.1} parent=5 // pred_fallthru
        _
      %p324 = scmp.lt.s32.totalorder %s17, 3
      // Predicated region
      $region53: #{pallas_forward.1} parent=5 // pred_check
        %p325 = pneg %p324
      $region54: #{pallas_forward.1} parent=5 // pred_check_branch
        %327 = sbr.rel (%p325) target = $region56
      $region55: #{pallas_forward.1} parent=5 // pred_region
        // Predicated region
        $region57: #{pallas_forward.1} parent=55 // pred_check
          %p328 = pneg %p37
        $region58: #{pallas_forward.1} parent=55 // pred_check_branch
          %330 = sbr.rel (%p328) target = $region60
        $region59: #{pallas_forward.1} parent=55 // pred_region
          %s331 = sand.u32 %s27, 1
          %s332 = sand.u32 %s27, 1
          %s333 = smul.addr %s332, 768
          %s334 = scalar_lea.vmem [#allocation2], %s333
          %s335 = smul.addr %s17, 96
          %s336 = smul.addr %s335, 4
          %s337 = scalar_lea.vmem %s0, %s336
          // Predicated region
          $region61: #{pallas_forward.1} parent=59 // pred_check
            _
          $region62: #{pallas_forward.1} parent=59 // pred_check_branch
            %339 = sbr.rel (0) target = $region64
          $region63: #{pallas_forward.1} parent=59 // pred_region
            // Predicated region
            $region65: #{pallas_forward.1} parent=63 // pred_check
              _
            $region66: #{pallas_forward.1} parent=63 // pred_check_branch
              %341 = sbr.rel (0) target = $region68
            $region67: #{pallas_forward.1} parent=63 // pred_region
              // Predicated region
              $region80: #{pallas_forward.1} parent=67 // pred_check
                _
              $region81: #{pallas_forward.1} parent=67 // pred_check_branch
                %547 = sbr.rel (0) target = $region83
              $region82: #{pallas_forward.1} parent=67 // pred_region
                loop: start=0, step=1, limit=1
                $region84: #{pallas_forward.1} parent=82 // loop_pre_header
                  _
                $region85: #{pallas_forward.1} parent=82 // loop_header
                  %s549 = sphi 0, %s553
                  %p550 = scmp.ge.s32.totalorder %s549, 1
                  %s554 = sphi %s337, %s337
                  %s555 = sphi %s334, %s334
                $region86: #{pallas_forward.1} parent=82 // loop_header_branch
                  %552 = sbr.rel (%p550) target = $region90
                $region87: #{pallas_forward.1} parent=82 // loop_body
                  %v556 = vld [vmem:[%s554] sm:$0xff]
                  %557 = vst [vmem:[%s555] sm:$0xff] %v556
                  %v558 = vld [vmem:[%s554 + $0x8] sm:$0xff]
                  %559 = vst [vmem:[%s555 + $0x8] sm:$0xff] %v558
                  %v560 = vld [vmem:[%s554 + $0x10] sm:$0xff]
                  %561 = vst [vmem:[%s555 + $0x10] sm:$0xff] %v560
                  %v562 = vld [vmem:[%s554 + $0x18] sm:$0xff]
                  %563 = vst [vmem:[%s555 + $0x18] sm:$0xff] %v562
                  %v564 = vld [vmem:[%s554 + $0x20] sm:$0xff]
                  %565 = vst [vmem:[%s555 + $0x20] sm:$0xff] %v564
                  %v566 = vld [vmem:[%s554 + $0x28] sm:$0xff]
                  %567 = vst [vmem:[%s555 + $0x28] sm:$0xff] %v566
                  %v568 = vld [vmem:[%s554 + $0x30] sm:$0xff]
                  %569 = vst [vmem:[%s555 + $0x30] sm:$0xff] %v568
                  %v570 = vld [vmem:[%s554 + $0x38] sm:$0xff]
                  %571 = vst [vmem:[%s555 + $0x38] sm:$0xff] %v570
                  %v572 = vld [vmem:[%s554 + $0x40] sm:$0xff]
                  %573 = vst [vmem:[%s555 + $0x40] sm:$0xff] %v572
                  %v574 = vld [vmem:[%s554 + $0x48] sm:$0xff]
                  %575 = vst [vmem:[%s555 + $0x48] sm:$0xff] %v574
                  %v576 = vld [vmem:[%s554 + $0x50] sm:$0xff]
                  %577 = vst [vmem:[%s555 + $0x50] sm:$0xff] %v576
                  %v578 = vld [vmem:[%s554 + $0x58] sm:$0xff]
                  %579 = vst [vmem:[%s555 + $0x58] sm:$0xff] %v578
                  %v580 = vld [vmem:[%s554 + $0x60] sm:$0xff]
                  %581 = vst [vmem:[%s555 + $0x60] sm:$0xff] %v580
                  %v582 = vld [vmem:[%s554 + $0x68] sm:$0xff]
                  %583 = vst [vmem:[%s555 + $0x68] sm:$0xff] %v582
                  %v584 = vld [vmem:[%s554 + $0x70] sm:$0xff]
                  %585 = vst [vmem:[%s555 + $0x70] sm:$0xff] %v584
                  %v586 = vld [vmem:[%s554 + $0x78] sm:$0xff]
                  %587 = vst [vmem:[%s555 + $0x78] sm:$0xff] %v586
                  %v588 = vld [vmem:[%s554 + $0x80] sm:$0xff]
                  %589 = vst [vmem:[%s555 + $0x80] sm:$0xff] %v588
                  %v590 = vld [vmem:[%s554 + $0x88] sm:$0xff]
                  %591 = vst [vmem:[%s555 + $0x88] sm:$0xff] %v590
                  %v592 = vld [vmem:[%s554 + $0x90] sm:$0xff]
                  %593 = vst [vmem:[%s555 + $0x90] sm:$0xff] %v592
                  %v594 = vld [vmem:[%s554 + $0x98] sm:$0xff]
                  %595 = vst [vmem:[%s555 + $0x98] sm:$0xff] %v594
                  %v596 = vld [vmem:[%s554 + $0xa0] sm:$0xff]
                  %597 = vst [vmem:[%s555 + $0xa0] sm:$0xff] %v596
                  %v598 = vld [vmem:[%s554 + $0xa8] sm:$0xff]
                  %599 = vst [vmem:[%s555 + $0xa8] sm:$0xff] %v598
                  %v600 = vld [vmem:[%s554 + $0xb0] sm:$0xff]
                  %601 = vst [vmem:[%s555 + $0xb0] sm:$0xff] %v600
                  %v602 = vld [vmem:[%s554 + $0xb8] sm:$0xff]
                  %603 = vst [vmem:[%s555 + $0xb8] sm:$0xff] %v602
                  %v604 = vld [vmem:[%s554 + $0xc0] sm:$0xff]
                  %605 = vst [vmem:[%s555 + $0xc0] sm:$0xff] %v604
                  %v606 = vld [vmem:[%s554 + $0xc8] sm:$0xff]
                  %607 = vst [vmem:[%s555 + $0xc8] sm:$0xff] %v606
                  %v608 = vld [vmem:[%s554 + $0xd0] sm:$0xff]
                  %609 = vst [vmem:[%s555 + $0xd0] sm:$0xff] %v608
                  %v610 = vld [vmem:[%s554 + $0xd8] sm:$0xff]
                  %611 = vst [vmem:[%s555 + $0xd8] sm:$0xff] %v610
                  %v612 = vld [vmem:[%s554 + $0xe0] sm:$0xff]
                  %613 = vst [vmem:[%s555 + $0xe0] sm:$0xff] %v612
                  %v614 = vld [vmem:[%s554 + $0xe8] sm:$0xff]
                  %615 = vst [vmem:[%s555 + $0xe8] sm:$0xff] %v614
                  %v616 = vld [vmem:[%s554 + $0xf0] sm:$0xff]
                  %617 = vst [vmem:[%s555 + $0xf0] sm:$0xff] %v616
                  %v618 = vld [vmem:[%s554 + $0xf8] sm:$0xff]
                  %619 = vst [vmem:[%s555 + $0xf8] sm:$0xff] %v618
                  %v620 = vld [vmem:[%s554 + $0x100] sm:$0xff]
                  %621 = vst [vmem:[%s555 + $0x100] sm:$0xff] %v620
                  %v622 = vld [vmem:[%s554 + $0x108] sm:$0xff]
                  %623 = vst [vmem:[%s555 + $0x108] sm:$0xff] %v622
                  %v624 = vld [vmem:[%s554 + $0x110] sm:$0xff]
                  %625 = vst [vmem:[%s555 + $0x110] sm:$0xff] %v624
                  %v626 = vld [vmem:[%s554 + $0x118] sm:$0xff]
                  %627 = vst [vmem:[%s555 + $0x118] sm:$0xff] %v626
                  %v628 = vld [vmem:[%s554 + $0x120] sm:$0xff]
                  %629 = vst [vmem:[%s555 + $0x120] sm:$0xff] %v628
                  %v630 = vld [vmem:[%s554 + $0x128] sm:$0xff]
                  %631 = vst [vmem:[%s555 + $0x128] sm:$0xff] %v630
                  %v632 = vld [vmem:[%s554 + $0x130] sm:$0xff]
                  %633 = vst [vmem:[%s555 + $0x130] sm:$0xff] %v632
                  %v634 = vld [vmem:[%s554 + $0x138] sm:$0xff]
                  %635 = vst [vmem:[%s555 + $0x138] sm:$0xff] %v634
                  %v636 = vld [vmem:[%s554 + $0x140] sm:$0xff]
                  %637 = vst [vmem:[%s555 + $0x140] sm:$0xff] %v636
                  %v638 = vld [vmem:[%s554 + $0x148] sm:$0xff]
                  %639 = vst [vmem:[%s555 + $0x148] sm:$0xff] %v638
                  %v640 = vld [vmem:[%s554 + $0x150] sm:$0xff]
                  %641 = vst [vmem:[%s555 + $0x150] sm:$0xff] %v640
                  %v642 = vld [vmem:[%s554 + $0x158] sm:$0xff]
                  %643 = vst [vmem:[%s555 + $0x158] sm:$0xff] %v642
                  %v644 = vld [vmem:[%s554 + $0x160] sm:$0xff]
                  %645 = vst [vmem:[%s555 + $0x160] sm:$0xff] %v644
                  %v646 = vld [vmem:[%s554 + $0x168] sm:$0xff]
                  %647 = vst [vmem:[%s555 + $0x168] sm:$0xff] %v646
                  %v648 = vld [vmem:[%s554 + $0x170] sm:$0xff]
                  %649 = vst [vmem:[%s555 + $0x170] sm:$0xff] %v648
                  %v650 = vld [vmem:[%s554 + $0x178] sm:$0xff]
                  %651 = vst [vmem:[%s555 + $0x178] sm:$0xff] %v650
                  %v652 = vld [vmem:[%s554 + $0x480] sm:$0xff]
                  %653 = vst [vmem:[%s555 + $0x180] sm:$0xff] %v652
                  %v654 = vld [vmem:[%s554 + $0x488] sm:$0xff]
                  %655 = vst [vmem:[%s555 + $0x188] sm:$0xff] %v654
                  %v656 = vld [vmem:[%s554 + $0x490] sm:$0xff]
                  %657 = vst [vmem:[%s555 + $0x190] sm:$0xff] %v656
                  %v658 = vld [vmem:[%s554 + $0x498] sm:$0xff]
                  %659 = vst [vmem:[%s555 + $0x198] sm:$0xff] %v658
                  %v660 = vld [vmem:[%s554 + $0x4a0] sm:$0xff]
                  %661 = vst [vmem:[%s555 + $0x1a0] sm:$0xff] %v660
                  %v662 = vld [vmem:[%s554 + $0x4a8] sm:$0xff]
                  %663 = vst [vmem:[%s555 + $0x1a8] sm:$0xff] %v662
                  %v664 = vld [vmem:[%s554 + $0x4b0] sm:$0xff]
                  %665 = vst [vmem:[%s555 + $0x1b0] sm:$0xff] %v664
                  %v666 = vld [vmem:[%s554 + $0x4b8] sm:$0xff]
                  %667 = vst [vmem:[%s555 + $0x1b8] sm:$0xff] %v666
                  %v668 = vld [vmem:[%s554 + $0x4c0] sm:$0xff]
                  %669 = vst [vmem:[%s555 + $0x1c0] sm:$0xff] %v668
                  %v670 = vld [vmem:[%s554 + $0x4c8] sm:$0xff]
                  %671 = vst [vmem:[%s555 + $0x1c8] sm:$0xff] %v670
                  %v672 = vld [vmem:[%s554 + $0x4d0] sm:$0xff]
                  %673 = vst [vmem:[%s555 + $0x1d0] sm:$0xff] %v672
                  %v674 = vld [vmem:[%s554 + $0x4d8] sm:$0xff]
                  %675 = vst [vmem:[%s555 + $0x1d8] sm:$0xff] %v674
                  %v676 = vld [vmem:[%s554 + $0x4e0] sm:$0xff]
                  %677 = vst [vmem:[%s555 + $0x1e0] sm:$0xff] %v676
                  %v678 = vld [vmem:[%s554 + $0x4e8] sm:$0xff]
                  %679 = vst [vmem:[%s555 + $0x1e8] sm:$0xff] %v678
                  %v680 = vld [vmem:[%s554 + $0x4f0] sm:$0xff]
                  %681 = vst [vmem:[%s555 + $0x1f0] sm:$0xff] %v680
                  %v682 = vld [vmem:[%s554 + $0x4f8] sm:$0xff]
                  %683 = vst [vmem:[%s555 + $0x1f8] sm:$0xff] %v682
                  %v684 = vld [vmem:[%s554 + $0x500] sm:$0xff]
                  %685 = vst [vmem:[%s555 + $0x200] sm:$0xff] %v684
                  %v686 = vld [vmem:[%s554 + $0x508] sm:$0xff]
                  %687 = vst [vmem:[%s555 + $0x208] sm:$0xff] %v686
                  %v688 = vld [vmem:[%s554 + $0x510] sm:$0xff]
                  %689 = vst [vmem:[%s555 + $0x210] sm:$0xff] %v688
                  %v690 = vld [vmem:[%s554 + $0x518] sm:$0xff]
                  %691 = vst [vmem:[%s555 + $0x218] sm:$0xff] %v690
                  %v692 = vld [vmem:[%s554 + $0x520] sm:$0xff]
                  %693 = vst [vmem:[%s555 + $0x220] sm:$0xff] %v692
                  %v694 = vld [vmem:[%s554 + $0x528] sm:$0xff]
                  %695 = vst [vmem:[%s555 + $0x228] sm:$0xff] %v694
                  %v696 = vld [vmem:[%s554 + $0x530] sm:$0xff]
                  %697 = vst [vmem:[%s555 + $0x230] sm:$0xff] %v696
                  %v698 = vld [vmem:[%s554 + $0x538] sm:$0xff]
                  %699 = vst [vmem:[%s555 + $0x238] sm:$0xff] %v698
                  %v700 = vld [vmem:[%s554 + $0x540] sm:$0xff]
                  %701 = vst [vmem:[%s555 + $0x240] sm:$0xff] %v700
                  %v702 = vld [vmem:[%s554 + $0x548] sm:$0xff]
                  %703 = vst [vmem:[%s555 + $0x248] sm:$0xff] %v702
                  %v704 = vld [vmem:[%s554 + $0x550] sm:$0xff]
                  %705 = vst [vmem:[%s555 + $0x250] sm:$0xff] %v704
                  %v706 = vld [vmem:[%s554 + $0x558] sm:$0xff]
                  %707 = vst [vmem:[%s555 + $0x258] sm:$0xff] %v706
                  %v708 = vld [vmem:[%s554 + $0x560] sm:$0xff]
                  %709 = vst [vmem:[%s555 + $0x260] sm:$0xff] %v708
                  %v710 = vld [vmem:[%s554 + $0x568] sm:$0xff]
                  %711 = vst [vmem:[%s555 + $0x268] sm:$0xff] %v710
                  %v712 = vld [vmem:[%s554 + $0x570] sm:$0xff]
                  %713 = vst [vmem:[%s555 + $0x270] sm:$0xff] %v712
                  %v714 = vld [vmem:[%s554 + $0x578] sm:$0xff]
                  %715 = vst [vmem:[%s555 + $0x278] sm:$0xff] %v714
                  %v716 = vld [vmem:[%s554 + $0x580] sm:$0xff]
                  %717 = vst [vmem:[%s555 + $0x280] sm:$0xff] %v716
                  %v718 = vld [vmem:[%s554 + $0x588] sm:$0xff]
                  %719 = vst [vmem:[%s555 + $0x288] sm:$0xff] %v718
                  %v720 = vld [vmem:[%s554 + $0x590] sm:$0xff]
                  %721 = vst [vmem:[%s555 + $0x290] sm:$0xff] %v720
                  %v722 = vld [vmem:[%s554 + $0x598] sm:$0xff]
                  %723 = vst [vmem:[%s555 + $0x298] sm:$0xff] %v722
                  %v724 = vld [vmem:[%s554 + $0x5a0] sm:$0xff]
                  %725 = vst [vmem:[%s555 + $0x2a0] sm:$0xff] %v724
                  %v726 = vld [vmem:[%s554 + $0x5a8] sm:$0xff]
                  %727 = vst [vmem:[%s555 + $0x2a8] sm:$0xff] %v726
                  %v728 = vld [vmem:[%s554 + $0x5b0] sm:$0xff]
                  %729 = vst [vmem:[%s555 + $0x2b0] sm:$0xff] %v728
                  %v730 = vld [vmem:[%s554 + $0x5b8] sm:$0xff]
                  %731 = vst [vmem:[%s555 + $0x2b8] sm:$0xff] %v730
                  %v732 = vld [vmem:[%s554 + $0x5c0] sm:$0xff]
                  %733 = vst [vmem:[%s555 + $0x2c0] sm:$0xff] %v732
                  %v734 = vld [vmem:[%s554 + $0x5c8] sm:$0xff]
                  %735 = vst [vmem:[%s555 + $0x2c8] sm:$0xff] %v734
                  %v736 = vld [vmem:[%s554 + $0x5d0] sm:$0xff]
                  %737 = vst [vmem:[%s555 + $0x2d0] sm:$0xff] %v736
                  %v738 = vld [vmem:[%s554 + $0x5d8] sm:$0xff]
                  %739 = vst [vmem:[%s555 + $0x2d8] sm:$0xff] %v738
                  %v740 = vld [vmem:[%s554 + $0x5e0] sm:$0xff]
                  %741 = vst [vmem:[%s555 + $0x2e0] sm:$0xff] %v740
                  %v742 = vld [vmem:[%s554 + $0x5e8] sm:$0xff]
                  %743 = vst [vmem:[%s555 + $0x2e8] sm:$0xff] %v742
                  %v744 = vld [vmem:[%s554 + $0x5f0] sm:$0xff]
                  %745 = vst [vmem:[%s555 + $0x2f0] sm:$0xff] %v744
                  %v746 = vld [vmem:[%s554 + $0x5f8] sm:$0xff]
                  %747 = vst [vmem:[%s555 + $0x2f8] sm:$0xff] %v746
                $region88: #{pallas_forward.1} parent=82 // loop_footer
                  %s553 = sadd.s32 1, %s549
                $region89: #{pallas_forward.1} parent=82 // loop_footer_branch
                  %548 = sbr.rel target = $region85
                $region90: #{pallas_forward.1} parent=82 // loop_exit
                  _
              $region83: #{pallas_forward.1} parent=67 // pred_fallthru
                _
              // Predicated region
              $region91: #{pallas_forward.1} parent=67 // pred_check
                _
              $region92: #{pallas_forward.1} parent=67 // pred_check_branch
                %749 = sbr.rel target = $region94
              $region93: #{pallas_forward.1} parent=67 // pred_region
                _
              $region94: #{pallas_forward.1} parent=67 // pred_fallthru
                _
            $region68: #{pallas_forward.1} parent=63 // pred_fallthru
              _
            // Predicated region
            $region69: #{pallas_forward.1} parent=63 // pred_check
              _
            $region70: #{pallas_forward.1} parent=63 // pred_check_branch
              %343 = sbr.rel target = $region72
            $region71: #{pallas_forward.1} parent=63 // pred_region
              %s345 = ssub.s32 256, 1
              loop: start=0, step=1, limit=1
              $region73: #{pallas_forward.1} parent=71 // loop_pre_header
                _
              $region74: #{pallas_forward.1} parent=71 // loop_header
                %s347 = sphi 0, %s351
                %p348 = scmp.ge.s32.totalorder %s347, 1
                %s352 = sphi %s337, %s337
                %s353 = sphi %s334, %s334
              $region75: #{pallas_forward.1} parent=71 // loop_header_branch
                %350 = sbr.rel (%p348) target = $region79
              $region76: #{pallas_forward.1} parent=71 // loop_body
                %v354 = vld [vmem:[%s352] sm:%s345]
                %355 = vst [vmem:[%s353] sm:%s345] %v354
                %v356 = vld [vmem:[%s352 + $0x8] sm:%s345]
                %357 = vst [vmem:[%s353 + $0x8] sm:%s345] %v356
                %v358 = vld [vmem:[%s352 + $0x10] sm:%s345]
                %359 = vst [vmem:[%s353 + $0x10] sm:%s345] %v358
                %v360 = vld [vmem:[%s352 + $0x18] sm:%s345]
                %361 = vst [vmem:[%s353 + $0x18] sm:%s345] %v360
                %v362 = vld [vmem:[%s352 + $0x20] sm:%s345]
                %363 = vst [vmem:[%s353 + $0x20] sm:%s345] %v362
                %v364 = vld [vmem:[%s352 + $0x28] sm:%s345]
                %365 = vst [vmem:[%s353 + $0x28] sm:%s345] %v364
                %v366 = vld [vmem:[%s352 + $0x30] sm:%s345]
                %367 = vst [vmem:[%s353 + $0x30] sm:%s345] %v366
                %v368 = vld [vmem:[%s352 + $0x38] sm:%s345]
                %369 = vst [vmem:[%s353 + $0x38] sm:%s345] %v368
                %v370 = vld [vmem:[%s352 + $0x40] sm:%s345]
                %371 = vst [vmem:[%s353 + $0x40] sm:%s345] %v370
                %v372 = vld [vmem:[%s352 + $0x48] sm:%s345]
                %373 = vst [vmem:[%s353 + $0x48] sm:%s345] %v372
                %v374 = vld [vmem:[%s352 + $0x50] sm:%s345]
                %375 = vst [vmem:[%s353 + $0x50] sm:%s345] %v374
                %v376 = vld [vmem:[%s352 + $0x58] sm:%s345]
                %377 = vst [vmem:[%s353 + $0x58] sm:%s345] %v376
                %v378 = vld [vmem:[%s352 + $0x60] sm:%s345]
                %379 = vst [vmem:[%s353 + $0x60] sm:%s345] %v378
                %v380 = vld [vmem:[%s352 + $0x68] sm:%s345]
                %381 = vst [vmem:[%s353 + $0x68] sm:%s345] %v380
                %v382 = vld [vmem:[%s352 + $0x70] sm:%s345]
                %383 = vst [vmem:[%s353 + $0x70] sm:%s345] %v382
                %v384 = vld [vmem:[%s352 + $0x78] sm:%s345]
                %385 = vst [vmem:[%s353 + $0x78] sm:%s345] %v384
                %v386 = vld [vmem:[%s352 + $0x80] sm:%s345]
                %387 = vst [vmem:[%s353 + $0x80] sm:%s345] %v386
                %v388 = vld [vmem:[%s352 + $0x88] sm:%s345]
                %389 = vst [vmem:[%s353 + $0x88] sm:%s345] %v388
                %v390 = vld [vmem:[%s352 + $0x90] sm:%s345]
                %391 = vst [vmem:[%s353 + $0x90] sm:%s345] %v390
                %v392 = vld [vmem:[%s352 + $0x98] sm:%s345]
                %393 = vst [vmem:[%s353 + $0x98] sm:%s345] %v392
                %v394 = vld [vmem:[%s352 + $0xa0] sm:%s345]
                %395 = vst [vmem:[%s353 + $0xa0] sm:%s345] %v394
                %v396 = vld [vmem:[%s352 + $0xa8] sm:%s345]
                %397 = vst [vmem:[%s353 + $0xa8] sm:%s345] %v396
                %v398 = vld [vmem:[%s352 + $0xb0] sm:%s345]
                %399 = vst [vmem:[%s353 + $0xb0] sm:%s345] %v398
                %v400 = vld [vmem:[%s352 + $0xb8] sm:%s345]
                %401 = vst [vmem:[%s353 + $0xb8] sm:%s345] %v400
                %v402 = vld [vmem:[%s352 + $0xc0] sm:%s345]
                %403 = vst [vmem:[%s353 + $0xc0] sm:%s345] %v402
                %v404 = vld [vmem:[%s352 + $0xc8] sm:%s345]
                %405 = vst [vmem:[%s353 + $0xc8] sm:%s345] %v404
                %v406 = vld [vmem:[%s352 + $0xd0] sm:%s345]
                %407 = vst [vmem:[%s353 + $0xd0] sm:%s345] %v406
                %v408 = vld [vmem:[%s352 + $0xd8] sm:%s345]
                %409 = vst [vmem:[%s353 + $0xd8] sm:%s345] %v408
                %v410 = vld [vmem:[%s352 + $0xe0] sm:%s345]
                %411 = vst [vmem:[%s353 + $0xe0] sm:%s345] %v410
                %v412 = vld [vmem:[%s352 + $0xe8] sm:%s345]
                %413 = vst [vmem:[%s353 + $0xe8] sm:%s345] %v412
                %v414 = vld [vmem:[%s352 + $0xf0] sm:%s345]
                %415 = vst [vmem:[%s353 + $0xf0] sm:%s345] %v414
                %v416 = vld [vmem:[%s352 + $0xf8] sm:%s345]
                %417 = vst [vmem:[%s353 + $0xf8] sm:%s345] %v416
                %v418 = vld [vmem:[%s352 + $0x100] sm:%s345]
                %419 = vst [vmem:[%s353 + $0x100] sm:%s345] %v418
                %v420 = vld [vmem:[%s352 + $0x108] sm:%s345]
                %421 = vst [vmem:[%s353 + $0x108] sm:%s345] %v420
                %v422 = vld [vmem:[%s352 + $0x110] sm:%s345]
                %423 = vst [vmem:[%s353 + $0x110] sm:%s345] %v422
                %v424 = vld [vmem:[%s352 + $0x118] sm:%s345]
                %425 = vst [vmem:[%s353 + $0x118] sm:%s345] %v424
                %v426 = vld [vmem:[%s352 + $0x120] sm:%s345]
                %427 = vst [vmem:[%s353 + $0x120] sm:%s345] %v426
                %v428 = vld [vmem:[%s352 + $0x128] sm:%s345]
                %429 = vst [vmem:[%s353 + $0x128] sm:%s345] %v428
                %v430 = vld [vmem:[%s352 + $0x130] sm:%s345]
                %431 = vst [vmem:[%s353 + $0x130] sm:%s345] %v430
                %v432 = vld [vmem:[%s352 + $0x138] sm:%s345]
                %433 = vst [vmem:[%s353 + $0x138] sm:%s345] %v432
                %v434 = vld [vmem:[%s352 + $0x140] sm:%s345]
                %435 = vst [vmem:[%s353 + $0x140] sm:%s345] %v434
                %v436 = vld [vmem:[%s352 + $0x148] sm:%s345]
                %437 = vst [vmem:[%s353 + $0x148] sm:%s345] %v436
                %v438 = vld [vmem:[%s352 + $0x150] sm:%s345]
                %439 = vst [vmem:[%s353 + $0x150] sm:%s345] %v438
                %v440 = vld [vmem:[%s352 + $0x158] sm:%s345]
                %441 = vst [vmem:[%s353 + $0x158] sm:%s345] %v440
                %v442 = vld [vmem:[%s352 + $0x160] sm:%s345]
                %443 = vst [vmem:[%s353 + $0x160] sm:%s345] %v442
                %v444 = vld [vmem:[%s352 + $0x168] sm:%s345]
                %445 = vst [vmem:[%s353 + $0x168] sm:%s345] %v444
                %v446 = vld [vmem:[%s352 + $0x170] sm:%s345]
                %447 = vst [vmem:[%s353 + $0x170] sm:%s345] %v446
                %v448 = vld [vmem:[%s352 + $0x178] sm:%s345]
                %449 = vst [vmem:[%s353 + $0x178] sm:%s345] %v448
                %v450 = vld [vmem:[%s352 + $0x480] sm:%s345]
                %451 = vst [vmem:[%s353 + $0x180] sm:%s345] %v450
                %v452 = vld [vmem:[%s352 + $0x488] sm:%s345]
                %453 = vst [vmem:[%s353 + $0x188] sm:%s345] %v452
                %v454 = vld [vmem:[%s352 + $0x490] sm:%s345]
                %455 = vst [vmem:[%s353 + $0x190] sm:%s345] %v454
                %v456 = vld [vmem:[%s352 + $0x498] sm:%s345]
                %457 = vst [vmem:[%s353 + $0x198] sm:%s345] %v456
                %v458 = vld [vmem:[%s352 + $0x4a0] sm:%s345]
                %459 = vst [vmem:[%s353 + $0x1a0] sm:%s345] %v458
                %v460 = vld [vmem:[%s352 + $0x4a8] sm:%s345]
                %461 = vst [vmem:[%s353 + $0x1a8] sm:%s345] %v460
                %v462 = vld [vmem:[%s352 + $0x4b0] sm:%s345]
                %463 = vst [vmem:[%s353 + $0x1b0] sm:%s345] %v462
                %v464 = vld [vmem:[%s352 + $0x4b8] sm:%s345]
                %465 = vst [vmem:[%s353 + $0x1b8] sm:%s345] %v464
                %v466 = vld [vmem:[%s352 + $0x4c0] sm:%s345]
                %467 = vst [vmem:[%s353 + $0x1c0] sm:%s345] %v466
                %v468 = vld [vmem:[%s352 + $0x4c8] sm:%s345]
                %469 = vst [vmem:[%s353 + $0x1c8] sm:%s345] %v468
                %v470 = vld [vmem:[%s352 + $0x4d0] sm:%s345]
                %471 = vst [vmem:[%s353 + $0x1d0] sm:%s345] %v470
                %v472 = vld [vmem:[%s352 + $0x4d8] sm:%s345]
                %473 = vst [vmem:[%s353 + $0x1d8] sm:%s345] %v472
                %v474 = vld [vmem:[%s352 + $0x4e0] sm:%s345]
                %475 = vst [vmem:[%s353 + $0x1e0] sm:%s345] %v474
                %v476 = vld [vmem:[%s352 + $0x4e8] sm:%s345]
                %477 = vst [vmem:[%s353 + $0x1e8] sm:%s345] %v476
                %v478 = vld [vmem:[%s352 + $0x4f0] sm:%s345]
                %479 = vst [vmem:[%s353 + $0x1f0] sm:%s345] %v478
                %v480 = vld [vmem:[%s352 + $0x4f8] sm:%s345]
                %481 = vst [vmem:[%s353 + $0x1f8] sm:%s345] %v480
                %v482 = vld [vmem:[%s352 + $0x500] sm:%s345]
                %483 = vst [vmem:[%s353 + $0x200] sm:%s345] %v482
                %v484 = vld [vmem:[%s352 + $0x508] sm:%s345]
                %485 = vst [vmem:[%s353 + $0x208] sm:%s345] %v484
                %v486 = vld [vmem:[%s352 + $0x510] sm:%s345]
                %487 = vst [vmem:[%s353 + $0x210] sm:%s345] %v486
                %v488 = vld [vmem:[%s352 + $0x518] sm:%s345]
                %489 = vst [vmem:[%s353 + $0x218] sm:%s345] %v488
                %v490 = vld [vmem:[%s352 + $0x520] sm:%s345]
                %491 = vst [vmem:[%s353 + $0x220] sm:%s345] %v490
                %v492 = vld [vmem:[%s352 + $0x528] sm:%s345]
                %493 = vst [vmem:[%s353 + $0x228] sm:%s345] %v492
                %v494 = vld [vmem:[%s352 + $0x530] sm:%s345]
                %495 = vst [vmem:[%s353 + $0x230] sm:%s345] %v494
                %v496 = vld [vmem:[%s352 + $0x538] sm:%s345]
                %497 = vst [vmem:[%s353 + $0x238] sm:%s345] %v496
                %v498 = vld [vmem:[%s352 + $0x540] sm:%s345]
                %499 = vst [vmem:[%s353 + $0x240] sm:%s345] %v498
                %v500 = vld [vmem:[%s352 + $0x548] sm:%s345]
                %501 = vst [vmem:[%s353 + $0x248] sm:%s345] %v500
                %v502 = vld [vmem:[%s352 + $0x550] sm:%s345]
                %503 = vst [vmem:[%s353 + $0x250] sm:%s345] %v502
                %v504 = vld [vmem:[%s352 + $0x558] sm:%s345]
                %505 = vst [vmem:[%s353 + $0x258] sm:%s345] %v504
                %v506 = vld [vmem:[%s352 + $0x560] sm:%s345]
                %507 = vst [vmem:[%s353 + $0x260] sm:%s345] %v506
                %v508 = vld [vmem:[%s352 + $0x568] sm:%s345]
                %509 = vst [vmem:[%s353 + $0x268] sm:%s345] %v508
                %v510 = vld [vmem:[%s352 + $0x570] sm:%s345]
                %511 = vst [vmem:[%s353 + $0x270] sm:%s345] %v510
                %v512 = vld [vmem:[%s352 + $0x578] sm:%s345]
                %513 = vst [vmem:[%s353 + $0x278] sm:%s345] %v512
                %v514 = vld [vmem:[%s352 + $0x580] sm:%s345]
                %515 = vst [vmem:[%s353 + $0x280] sm:%s345] %v514
                %v516 = vld [vmem:[%s352 + $0x588] sm:%s345]
                %517 = vst [vmem:[%s353 + $0x288] sm:%s345] %v516
                %v518 = vld [vmem:[%s352 + $0x590] sm:%s345]
                %519 = vst [vmem:[%s353 + $0x290] sm:%s345] %v518
                %v520 = vld [vmem:[%s352 + $0x598] sm:%s345]
                %521 = vst [vmem:[%s353 + $0x298] sm:%s345] %v520
                %v522 = vld [vmem:[%s352 + $0x5a0] sm:%s345]
                %523 = vst [vmem:[%s353 + $0x2a0] sm:%s345] %v522
                %v524 = vld [vmem:[%s352 + $0x5a8] sm:%s345]
                %525 = vst [vmem:[%s353 + $0x2a8] sm:%s345] %v524
                %v526 = vld [vmem:[%s352 + $0x5b0] sm:%s345]
                %527 = vst [vmem:[%s353 + $0x2b0] sm:%s345] %v526
                %v528 = vld [vmem:[%s352 + $0x5b8] sm:%s345]
                %529 = vst [vmem:[%s353 + $0x2b8] sm:%s345] %v528
                %v530 = vld [vmem:[%s352 + $0x5c0] sm:%s345]
                %531 = vst [vmem:[%s353 + $0x2c0] sm:%s345] %v530
                %v532 = vld [vmem:[%s352 + $0x5c8] sm:%s345]
                %533 = vst [vmem:[%s353 + $0x2c8] sm:%s345] %v532
                %v534 = vld [vmem:[%s352 + $0x5d0] sm:%s345]
                %535 = vst [vmem:[%s353 + $0x2d0] sm:%s345] %v534
                %v536 = vld [vmem:[%s352 + $0x5d8] sm:%s345]
                %537 = vst [vmem:[%s353 + $0x2d8] sm:%s345] %v536
                %v538 = vld [vmem:[%s352 + $0x5e0] sm:%s345]
                %539 = vst [vmem:[%s353 + $0x2e0] sm:%s345] %v538
                %v540 = vld [vmem:[%s352 + $0x5e8] sm:%s345]
                %541 = vst [vmem:[%s353 + $0x2e8] sm:%s345] %v540
                %v542 = vld [vmem:[%s352 + $0x5f0] sm:%s345]
                %543 = vst [vmem:[%s353 + $0x2f0] sm:%s345] %v542
                %v544 = vld [vmem:[%s352 + $0x5f8] sm:%s345]
                %545 = vst [vmem:[%s353 + $0x2f8] sm:%s345] %v544
              $region77: #{pallas_forward.1} parent=71 // loop_footer
                %s351 = sadd.s32 1, %s347
              $region78: #{pallas_forward.1} parent=71 // loop_footer_branch
                %346 = sbr.rel target = $region74
              $region79: #{pallas_forward.1} parent=71 // loop_exit
                _
            $region72: #{pallas_forward.1} parent=63 // pred_fallthru
              _
          $region64: #{pallas_forward.1} parent=59 // pred_fallthru
            _
          %750 = vnop
        $region60: #{pallas_forward.1} parent=55 // pred_fallthru
          _
      $region56: #{pallas_forward.1} parent=5 // pred_fallthru
        _
      %p751 = scmp.le.s32.totalorder 1, %s17
      %p752 = scmp.lt.s32.totalorder %s17, 4
      %p753 = pnand %p751, %p752
      %p754 = pneg %p753
      // Predicated region
      $region95: #{pallas_forward.1} parent=5 // pred_check
        _
      $region96: #{pallas_forward.1} parent=5 // pred_check_branch
        %756 = sbr.rel (%p753) target = $region98
      $region97: #{pallas_forward.1} parent=5 // pred_region
        %s757 = ssub.s32 %s17, 1
        %s758 = sand.u32 %s30, 1
        %s759 = sand.u32 %s30, 1
        %s760 = smul.addr %s759, 768
        %s761 = scalar_lea.vmem [#allocation2], %s760
        // Predicated region
        $region99: #{pallas_forward.1} parent=97 // pred_check
          %p762 = pneg %p43
        $region100: #{pallas_forward.1} parent=97 // pred_check_branch
          %764 = sbr.rel (%p762) target = $region102
        $region101: #{pallas_forward.1} parent=97 // pred_region
          _
        $region102: #{pallas_forward.1} parent=97 // pred_fallthru
          _
        %s765 = sand.u32 %s30, 1
        %s766 = sand.u32 %s30, 1
        %s767 = smul.addr %s766, 768
        %s768 = scalar_lea.vmem [#allocation2], %s767
        %p769 = pneg %p43
        %p770 = pneg %p40
        %p771 = pneg %p64
        %p772 = pneg %p61
        %p773 = pneg %p85
        %p774 = pneg %p82
        %p775 = pneg %p106
        %p776 = pneg %p103
        %p777 = pneg %p127
        %p778 = pneg %p124
        %p779 = pneg %p148
        %p780 = pneg %p145
        %p781 = pneg %p169
        %p782 = pneg %p166
        %p783 = pneg %p190
        %p784 = pneg %p187
        %p785 = pneg %p211
        %p786 = pneg %p208
        %p787 = pneg %p232
        %p788 = pneg %p229
        %p789 = pneg %p253
        %p790 = pneg %p250
        %p791 = pneg %p279
        %p792 = pneg %p276
        %s793 = smul.u32 4, %s22
        %p794 = scmp.lt.s32.totalorder %s793, 11
        %s795 = scalar_select %p794, %s793, 11
        %s796 = smul.addr %s795, 8
        %s797 = scalar_lea.vmem %s11, %s796
        %s798 = smul.u32 4, %s22
        %p799 = scmp.lt.s32.totalorder %s798, 11
        %s800 = scalar_select %p799, %s798, 11
        %s801 = smul.addr %s800, 8
        %s802 = scalar_lea.vmem %s11, %s801
        %s803 = smul.u32 4, %s22
        %v805 = vld [vmem:[%s761] sm:$0xff]
        %v806 = vld [vmem:[%s761 + $0x8] sm:$0xff]
        %v807 = vld [vmem:[%s761 + $0x10] sm:$0xff]
        %v808 = vld [vmem:[%s761 + $0x18] sm:$0xff]
        %v809 = vld [vmem:[%s761 + $0x20] sm:$0xff]
        %v810 = vld [vmem:[%s761 + $0x28] sm:$0xff]
        %v811 = vld [vmem:[%s761 + $0x30] sm:$0xff]
        %v812 = vld [vmem:[%s761 + $0x38] sm:$0xff]
        %v813 = vld [vmem:[%s761 + $0x40] sm:$0xff]
        %v814 = vld [vmem:[%s761 + $0x48] sm:$0xff]
        %v815 = vld [vmem:[%s761 + $0x50] sm:$0xff]
        %v816 = vld [vmem:[%s761 + $0x58] sm:$0xff]
        %v817 = vld [vmem:[%s761 + $0x60] sm:$0xff]
        %v818 = vld [vmem:[%s761 + $0x68] sm:$0xff]
        %v819 = vld [vmem:[%s761 + $0x70] sm:$0xff]
        %v820 = vld [vmem:[%s761 + $0x78] sm:$0xff]
        %v821 = vld [vmem:[%s761 + $0x80] sm:$0xff]
        %v822 = vld [vmem:[%s761 + $0x88] sm:$0xff]
        %v823 = vld [vmem:[%s761 + $0x90] sm:$0xff]
        %v824 = vld [vmem:[%s761 + $0x98] sm:$0xff]
        %v825 = vld [vmem:[%s761 + $0xa0] sm:$0xff]
        %v826 = vld [vmem:[%s761 + $0xa8] sm:$0xff]
        %v827 = vld [vmem:[%s761 + $0xb0] sm:$0xff]
        %v828 = vld [vmem:[%s761 + $0xb8] sm:$0xff]
        %v829 = vld [vmem:[%s761 + $0xc0] sm:$0xff]
        %v830 = vld [vmem:[%s761 + $0xc8] sm:$0xff]
        %v831 = vld [vmem:[%s761 + $0xd0] sm:$0xff]
        %v832 = vld [vmem:[%s761 + $0xd8] sm:$0xff]
        %v833 = vld [vmem:[%s761 + $0xe0] sm:$0xff]
        %v834 = vld [vmem:[%s761 + $0xe8] sm:$0xff]
        %v835 = vld [vmem:[%s761 + $0xf0] sm:$0xff]
        %v836 = vld [vmem:[%s761 + $0xf8] sm:$0xff]
        %v837 = vld [vmem:[%s761 + $0x100] sm:$0xff]
        %v838 = vld [vmem:[%s761 + $0x108] sm:$0xff]
        %v839 = vld [vmem:[%s761 + $0x110] sm:$0xff]
        %v840 = vld [vmem:[%s761 + $0x118] sm:$0xff]
        %v841 = vld [vmem:[%s761 + $0x120] sm:$0xff]
        %v842 = vld [vmem:[%s761 + $0x128] sm:$0xff]
        %v843 = vld [vmem:[%s761 + $0x130] sm:$0xff]
        %v844 = vld [vmem:[%s761 + $0x138] sm:$0xff]
        %v845 = vld [vmem:[%s761 + $0x140] sm:$0xff]
        %v846 = vld [vmem:[%s761 + $0x148] sm:$0xff]
        %v847 = vld [vmem:[%s761 + $0x150] sm:$0xff]
        %v848 = vld [vmem:[%s761 + $0x158] sm:$0xff]
        %v849 = vld [vmem:[%s761 + $0x160] sm:$0xff]
        %v850 = vld [vmem:[%s761 + $0x168] sm:$0xff]
        %v851 = vld [vmem:[%s761 + $0x170] sm:$0xff]
        %v852 = vld [vmem:[%s761 + $0x178] sm:$0xff]
        %v853 = vld [vmem:[%s1] sm:$0xff]
        %v854 = vld [vmem:[%s1 + $0x8] sm:$0xf]
        %v855 = vld [vmem:[%s1 + $0xc] sm:$0xff]
        %v856 = vld [vmem:[%s1 + $0x14] sm:$0xf]
        %v857 = vld [vmem:[%s1 + $0x18] sm:$0xff]
        %v858 = vld [vmem:[%s1 + $0x20] sm:$0xf]
        %v859 = vld [vmem:[%s1 + $0x24] sm:$0xff]
        %v860 = vld [vmem:[%s1 + $0x2c] sm:$0xf]
        %v861 = vld [vmem:[%s1 + $0x30] sm:$0xff]
        %v862 = vld [vmem:[%s1 + $0x38] sm:$0xf]
        %v863 = vld [vmem:[%s1 + $0x3c] sm:$0xff]
        %v864 = vld [vmem:[%s1 + $0x44] sm:$0xf]
        %v865 = vld [vmem:[%s1 + $0x48] sm:$0xff]
        %v866 = vld [vmem:[%s1 + $0x50] sm:$0xf]
        %v867 = vld [vmem:[%s1 + $0x54] sm:$0xff]
        %v868 = vld [vmem:[%s1 + $0x5c] sm:$0xf]
        %v869 = vld [vmem:[%s1 + $0x60] sm:$0xff]
        %v870 = vld [vmem:[%s1 + $0x68] sm:$0xf]
        %v871 = vld [vmem:[%s1 + $0x6c] sm:$0xff]
        %v872 = vld [vmem:[%s1 + $0x74] sm:$0xf]
        %v873 = vld [vmem:[%s1 + $0x78] sm:$0xff]
        %v874 = vld [vmem:[%s1 + $0x80] sm:$0xf]
        %v875 = vld [vmem:[%s1 + $0x84] sm:$0xff]
        %v876 = vld [vmem:[%s1 + $0x8c] sm:$0xf]
        %v877 = vld [vmem:[%s1 + $0x90] sm:$0xff]
        %v878 = vld [vmem:[%s1 + $0x98] sm:$0xf]
        %v879 = vld [vmem:[%s1 + $0x9c] sm:$0xff]
        %v880 = vld [vmem:[%s1 + $0xa4] sm:$0xf]
        %v881 = vld [vmem:[%s1 + $0xa8] sm:$0xff]
        %v882 = vld [vmem:[%s1 + $0xb0] sm:$0xf]
        %v883 = vld [vmem:[%s1 + $0xb4] sm:$0xff]
        %v884 = vld [vmem:[%s1 + $0xbc] sm:$0xf]
        %v885 = vld [vmem:[%s1 + $0xc0] sm:$0xff]
        %v886 = vld [vmem:[%s1 + $0xc8] sm:$0xf]
        %v887 = vld [vmem:[%s1 + $0xcc] sm:$0x33]
        %v888 = vld [vmem:[%s1 + $0xd4] sm:$0x3]
        %v937 = vunpack.c.l.b16 %v805
        %v938 = vunpack.c.h.b16 %v805
        %v939 = vunpack.c.l.b16 %v806
        %v940 = vunpack.c.h.b16 %v806
        %v941 = vunpack.c.l.b16 %v807
        %v942 = vunpack.c.h.b16 %v807
        %v943 = vunpack.c.l.b16 %v808
        %v944 = vunpack.c.h.b16 %v808
        %v945 = vunpack.c.l.b16 %v809
        %v946 = vunpack.c.h.b16 %v809
        %v947 = vunpack.c.l.b16 %v810
        %v948 = vunpack.c.h.b16 %v810
        %v949 = vunpack.c.l.b16 %v811
        %v950 = vunpack.c.h.b16 %v811
        %v951 = vunpack.c.l.b16 %v812
        %v952 = vunpack.c.h.b16 %v812
        %v953 = vunpack.c.l.b16 %v813
        %v954 = vunpack.c.h.b16 %v813
        %v955 = vunpack.c.l.b16 %v814
        %v956 = vunpack.c.h.b16 %v814
        %v957 = vunpack.c.l.b16 %v815
        %v958 = vunpack.c.h.b16 %v815
        %v959 = vunpack.c.l.b16 %v816
        %v960 = vunpack.c.h.b16 %v816
        %v961 = vunpack.c.l.b16 %v817
        %v962 = vunpack.c.h.b16 %v817
        %v963 = vunpack.c.l.b16 %v818
        %v964 = vunpack.c.h.b16 %v818
        %v965 = vunpack.c.l.b16 %v819
        %v966 = vunpack.c.h.b16 %v819
        %v967 = vunpack.c.l.b16 %v820
        %v968 = vunpack.c.h.b16 %v820
        %v969 = vunpack.c.l.b16 %v821
        %v970 = vunpack.c.h.b16 %v821
        %v971 = vunpack.c.l.b16 %v822
        %v972 = vunpack.c.h.b16 %v822
        %v973 = vunpack.c.l.b16 %v823
        %v974 = vunpack.c.h.b16 %v823
        %v975 = vunpack.c.l.b16 %v824
        %v976 = vunpack.c.h.b16 %v824
        %v977 = vunpack.c.l.b16 %v825
        %v978 = vunpack.c.h.b16 %v825
        %v979 = vunpack.c.l.b16 %v826
        %v980 = vunpack.c.h.b16 %v826
        %v981 = vunpack.c.l.b16 %v827
        %v982 = vunpack.c.h.b16 %v827
        %v983 = vunpack.c.l.b16 %v828
        %v984 = vunpack.c.h.b16 %v828
        %v985 = vunpack.c.l.b16 %v829
        %v986 = vunpack.c.h.b16 %v829
        %v987 = vunpack.c.l.b16 %v830
        %v988 = vunpack.c.h.b16 %v830
        %v989 = vunpack.c.l.b16 %v831
        %v990 = vunpack.c.h.b16 %v831
        %v991 = vunpack.c.l.b16 %v832
        %v992 = vunpack.c.h.b16 %v832
        %v993 = vunpack.c.l.b16 %v833
        %v994 = vunpack.c.h.b16 %v833
        %v995 = vunpack.c.l.b16 %v834
        %v996 = vunpack.c.h.b16 %v834
        %v997 = vunpack.c.l.b16 %v835
        %v998 = vunpack.c.h.b16 %v835
        %v999 = vunpack.c.l.b16 %v836
        %v1000 = vunpack.c.h.b16 %v836
        %v1001 = vunpack.c.l.b16 %v837
        %v1002 = vunpack.c.h.b16 %v837
        %v1003 = vunpack.c.l.b16 %v838
        %v1004 = vunpack.c.h.b16 %v838
        %v1005 = vunpack.c.l.b16 %v839
        %v1006 = vunpack.c.h.b16 %v839
        %v1007 = vunpack.c.l.b16 %v840
        %v1008 = vunpack.c.h.b16 %v840
        %v1009 = vunpack.c.l.b16 %v841
        %v1010 = vunpack.c.h.b16 %v841
        %v1011 = vunpack.c.l.b16 %v842
        %v1012 = vunpack.c.h.b16 %v842
        %v1013 = vunpack.c.l.b16 %v843
        %v1014 = vunpack.c.h.b16 %v843
        %v1015 = vunpack.c.l.b16 %v844
        %v1016 = vunpack.c.h.b16 %v844
        %v1017 = vunpack.c.l.b16 %v845
        %v1018 = vunpack.c.h.b16 %v845
        %v1019 = vunpack.c.l.b16 %v846
        %v1020 = vunpack.c.h.b16 %v846
        %v1021 = vunpack.c.l.b16 %v847
        %v1022 = vunpack.c.h.b16 %v847
        %v1023 = vunpack.c.l.b16 %v848
        %v1024 = vunpack.c.h.b16 %v848
        %v1025 = vunpack.c.l.b16 %v849
        %v1026 = vunpack.c.h.b16 %v849
        %v1027 = vunpack.c.l.b16 %v850
        %v1028 = vunpack.c.h.b16 %v850
        %v1029 = vunpack.c.l.b16 %v851
        %v1030 = vunpack.c.h.b16 %v851
        %v1031 = vunpack.c.l.b16 %v852
        %v1032 = vunpack.c.h.b16 %v852
        %v1033 = vpack.c.b16 %v939, %v937
        %v1034 = vpack.c.b16 %v940, %v938
        %v1035 = vpack.c.b16 %v943, %v941
        %v1036 = vpack.c.b16 %v944, %v942
        %v1037 = vpack.c.b16 %v947, %v945
        %v1038 = vpack.c.b16 %v948, %v946
        %v1039 = vpack.c.b16 %v951, %v949
        %v1040 = vpack.c.b16 %v952, %v950
        %v1041 = vpack.c.b16 %v955, %v953
        %v1042 = vpack.c.b16 %v956, %v954
        %v1043 = vpack.c.b16 %v959, %v957
        %v1044 = vpack.c.b16 %v960, %v958
        %v1045 = vpack.c.b16 %v963, %v961
        %v1046 = vpack.c.b16 %v964, %v962
        %v1047 = vpack.c.b16 %v967, %v965
        %v1048 = vpack.c.b16 %v968, %v966
        %v1049 = vpack.c.b16 %v971, %v969
        %v1050 = vpack.c.b16 %v972, %v970
        %v1051 = vpack.c.b16 %v975, %v973
        %v1052 = vpack.c.b16 %v976, %v974
        %v1053 = vpack.c.b16 %v979, %v977
        %v1054 = vpack.c.b16 %v980, %v978
        %v1055 = vpack.c.b16 %v983, %v981
        %v1056 = vpack.c.b16 %v984, %v982
        %v1057 = vpack.c.b16 %v987, %v985
        %v1058 = vpack.c.b16 %v988, %v986
        %v1059 = vpack.c.b16 %v991, %v989
        %v1060 = vpack.c.b16 %v992, %v990
        %v1061 = vpack.c.b16 %v995, %v993
        %v1062 = vpack.c.b16 %v996, %v994
        %v1063 = vpack.c.b16 %v999, %v997
        %v1064 = vpack.c.b16 %v1000, %v998
        %v1065 = vpack.c.b16 %v1003, %v1001
        %v1066 = vpack.c.b16 %v1004, %v1002
        %v1067 = vpack.c.b16 %v1007, %v1005
        %v1068 = vpack.c.b16 %v1008, %v1006
        %v1069 = vpack.c.b16 %v1011, %v1009
        %v1070 = vpack.c.b16 %v1012, %v1010
        %v1071 = vpack.c.b16 %v1015, %v1013
        %v1072 = vpack.c.b16 %v1016, %v1014
        %v1073 = vpack.c.b16 %v1019, %v1017
        %v1074 = vpack.c.b16 %v1020, %v1018
        %v1075 = vpack.c.b16 %v1023, %v1021
        %v1076 = vpack.c.b16 %v1024, %v1022
        %v1077 = vpack.c.b16 %v1027, %v1025
        %v1078 = vpack.c.b16 %v1028, %v1026
        %v1079 = vpack.c.b16 %v1031, %v1029
        %v1080 = vpack.c.b16 %v1032, %v1030
        %v1141 = vunpack.c.l.b16 %v853
        %v1142 = vunpack.c.h.b16 %v853
        %v1143 = vunpack.c.l.b16 %v854
        %v1144 = vunpack.c.l.b16 %v855
        %v1145 = vunpack.c.h.b16 %v855
        %v1146 = vunpack.c.l.b16 %v856
        %v1147 = vunpack.c.l.b16 %v857
        %v1148 = vunpack.c.h.b16 %v857
        %v1149 = vunpack.c.l.b16 %v858
        %v1150 = vunpack.c.l.b16 %v859
        %v1151 = vunpack.c.h.b16 %v859
        %v1152 = vunpack.c.l.b16 %v860
        %v1153 = vunpack.c.l.b16 %v861
        %v1154 = vunpack.c.h.b16 %v861
        %v1155 = vunpack.c.l.b16 %v862
        %v1156 = vunpack.c.l.b16 %v863
        %v1157 = vunpack.c.h.b16 %v863
        %v1158 = vunpack.c.l.b16 %v864
        %v1159 = vunpack.c.l.b16 %v865
        %v1160 = vunpack.c.h.b16 %v865
        %v1161 = vunpack.c.l.b16 %v866
        %v1162 = vunpack.c.l.b16 %v867
        %v1163 = vunpack.c.h.b16 %v867
        %v1164 = vunpack.c.l.b16 %v868
        %v1165 = vunpack.c.l.b16 %v869
        %v1166 = vunpack.c.h.b16 %v869
        %v1167 = vunpack.c.l.b16 %v870
        %v1168 = vunpack.c.l.b16 %v871
        %v1169 = vunpack.c.h.b16 %v871
        %v1170 = vunpack.c.l.b16 %v872
        %v1171 = vunpack.c.l.b16 %v873
        %v1172 = vunpack.c.h.b16 %v873
        %v1173 = vunpack.c.l.b16 %v874
        %v1174 = vunpack.c.l.b16 %v875
        %v1175 = vunpack.c.h.b16 %v875
        %v1176 = vunpack.c.l.b16 %v876
        %v1177 = vunpack.c.l.b16 %v877
        %v1178 = vunpack.c.h.b16 %v877
        %v1179 = vunpack.c.l.b16 %v878
        %v1180 = vunpack.c.l.b16 %v879
        %v1181 = vunpack.c.h.b16 %v879
        %v1182 = vunpack.c.l.b16 %v880
        %v1183 = vunpack.c.l.b16 %v881
        %v1184 = vunpack.c.h.b16 %v881
        %v1185 = vunpack.c.l.b16 %v882
        %v1186 = vunpack.c.l.b16 %v883
        %v1187 = vunpack.c.h.b16 %v883
        %v1188 = vunpack.c.l.b16 %v884
        %v1189 = vunpack.c.l.b16 %v885
        %v1190 = vunpack.c.h.b16 %v885
        %v1191 = vunpack.c.l.b16 %v886
        %v1192 = vunpack.c.l.b16 %v887
        %v1193 = vunpack.c.h.b16 %v887
        %v1194 = vunpack.c.l.b16 %v888
        %v1195 = vpack.c.b16 %v1144, %v1141
        %v1196 = vpack.c.b16 %v1145, %v1142
        %v1197 = vpack.c.b16 %v1146, %v1143
        %v1198 = vpack.c.b16 %v1150, %v1147
        %v1199 = vpack.c.b16 %v1151, %v1148
        %v1200 = vpack.c.b16 %v1152, %v1149
        %v1201 = vpack.c.b16 %v1156, %v1153
        %v1202 = vpack.c.b16 %v1157, %v1154
        %v1203 = vpack.c.b16 %v1158, %v1155
        %v1204 = vpack.c.b16 %v1162, %v1159
        %v1205 = vpack.c.b16 %v1163, %v1160
        %v1206 = vpack.c.b16 %v1164, %v1161
        %v1207 = vpack.c.b16 %v1168, %v1165
        %v1208 = vpack.c.b16 %v1169, %v1166
        %v1209 = vpack.c.b16 %v1170, %v1167
        %v1210 = vpack.c.b16 %v1174, %v1171
        %v1211 = vpack.c.b16 %v1175, %v1172
        %v1212 = vpack.c.b16 %v1176, %v1173
        %v1213 = vpack.c.b16 %v1180, %v1177
        %v1214 = vpack.c.b16 %v1181, %v1178
        %v1215 = vpack.c.b16 %v1182, %v1179
        %v1216 = vpack.c.b16 %v1186, %v1183
        %v1217 = vpack.c.b16 %v1187, %v1184
        %v1218 = vpack.c.b16 %v1188, %v1185
        %v1219 = vpack.c.b16 %v1192, %v1189
        %v1220 = vpack.c.b16 %v1193, %v1190
        %v1221 = vpack.c.b16 %v1194, %v1191
        %vm1246 = vcmask 97280
        %v1248 = vsel %vm1246, %v1034, 0
        %v1251 = vsel %vm1246, %v1036, 0
        %v1254 = vsel %vm1246, %v1038, 0
        %v1257 = vsel %vm1246, %v1040, 0
        %v1260 = vsel %vm1246, %v1042, 0
        %v1263 = vsel %vm1246, %v1044, 0
        %v1266 = vsel %vm1246, %v1046, 0
        %v1269 = vsel %vm1246, %v1048, 0
        %v1272 = vsel %vm1246, %v1050, 0
        %v1275 = vsel %vm1246, %v1052, 0
        %v1278 = vsel %vm1246, %v1054, 0
        %v1281 = vsel %vm1246, %v1056, 0
        %v1284 = vsel %vm1246, %v1058, 0
        %v1287 = vsel %vm1246, %v1060, 0
        %v1290 = vsel %vm1246, %v1062, 0
        %v1293 = vsel %vm1246, %v1064, 0
        %v1296 = vsel %vm1246, %v1066, 0
        %v1299 = vsel %vm1246, %v1068, 0
        %v1302 = vsel %vm1246, %v1070, 0
        %v1305 = vsel %vm1246, %v1072, 0
        %v1308 = vsel %vm1246, %v1074, 0
        %v1311 = vsel %vm1246, %v1076, 0
        %v1314 = vsel %vm1246, %v1078, 0
        %v1317 = vsel %vm1246, %v1080, 0
        %vm1319 = vcmask 1045504
        %v1321 = vsel %vm1319, %v1219, 0
        %v1324 = vsel %vm1319, %v1220, 0
        %v1327 = vsel %vm1319, %v1221, 0
        %1329 = vmatpush.bf16.msra.mxu0 %v1216
        %1330 = vmatpush.bf16.msra.mxu0 %v1213
        %1331 = vmatpush.bf16.msra.mxu0 %v1210
        %1332 = vmatpush.bf16.msra.mxu0 %v1207
        %1333 = vmatpush.bf16.msra.mxu0 %v1204
        %1334 = vmatpush.bf16.msra.mxu0 %v1201
        %1335 = vmatpush.bf16.msra.mxu0 %v1198
        %1336 = vmatpush.bf16.msra.mxu0 %v1195
        %1337 = vmatmul.bf16.gmra.mxu0 %v1033
        %v1338 = vpop.f32.mrf.mxu0
        %v1339 = vadd.f32 0.0, %v1338
        %v1340 = vpop.f32.mrf.mxu0
        %v1341 = vadd.f32 0.0, %v1340
        %1342 = vmatmul.bf16.gmra.mxu0 %v1035
        %v1343 = vpop.f32.mrf.mxu0
        %v1344 = vadd.f32 0.0, %v1343
        %v1345 = vpop.f32.mrf.mxu0
        %v1346 = vadd.f32 0.0, %v1345
        %1347 = vmatmul.bf16.gmra.mxu0 %v1037
        %v1348 = vpop.f32.mrf.mxu0
        %v1349 = vadd.f32 0.0, %v1348
        %v1350 = vpop.f32.mrf.mxu0
        %v1351 = vadd.f32 0.0, %v1350
        %1352 = vmatmul.bf16.gmra.mxu0 %v1039
        %v1353 = vpop.f32.mrf.mxu0
        %v1354 = vadd.f32 0.0, %v1353
        %v1355 = vpop.f32.mrf.mxu0
        %v1356 = vadd.f32 0.0, %v1355
        %1357 = vmatmul.bf16.gmra.mxu0 %v1041
        %v1358 = vpop.f32.mrf.mxu0
        %v1359 = vadd.f32 0.0, %v1358
        %v1360 = vpop.f32.mrf.mxu0
        %v1361 = vadd.f32 0.0, %v1360
        %1362 = vmatmul.bf16.gmra.mxu0 %v1043
        %v1363 = vpop.f32.mrf.mxu0
        %v1364 = vadd.f32 0.0, %v1363
        %v1365 = vpop.f32.mrf.mxu0
        %v1366 = vadd.f32 0.0, %v1365
        %1367 = vmatmul.bf16.gmra.mxu0 %v1045
        %v1368 = vpop.f32.mrf.mxu0
        %v1369 = vadd.f32 0.0, %v1368
        %v1370 = vpop.f32.mrf.mxu0
        %v1371 = vadd.f32 0.0, %v1370
        %1372 = vmatmul.bf16.gmra.mxu0 %v1047
        %v1373 = vpop.f32.mrf.mxu0
        %v1374 = vadd.f32 0.0, %v1373
        %v1375 = vpop.f32.mrf.mxu0
        %v1376 = vadd.f32 0.0, %v1375
        %1377 = vmatmul.bf16.gmra.mxu0 %v1049
        %v1378 = vpop.f32.mrf.mxu0
        %v1379 = vadd.f32 0.0, %v1378
        %v1380 = vpop.f32.mrf.mxu0
        %v1381 = vadd.f32 0.0, %v1380
        %1382 = vmatmul.bf16.gmra.mxu0 %v1051
        %v1383 = vpop.f32.mrf.mxu0
        %v1384 = vadd.f32 0.0, %v1383
        %v1385 = vpop.f32.mrf.mxu0
        %v1386 = vadd.f32 0.0, %v1385
        %1387 = vmatmul.bf16.gmra.mxu0 %v1053
        %v1388 = vpop.f32.mrf.mxu0
        %v1389 = vadd.f32 0.0, %v1388
        %v1390 = vpop.f32.mrf.mxu0
        %v1391 = vadd.f32 0.0, %v1390
        %1392 = vmatmul.bf16.gmra.mxu0 %v1055
        %v1393 = vpop.f32.mrf.mxu0
        %v1394 = vadd.f32 0.0, %v1393
        %v1395 = vpop.f32.mrf.mxu0
        %v1396 = vadd.f32 0.0, %v1395
        %1397 = vmatmul.bf16.gmra.mxu0 %v1057
        %v1398 = vpop.f32.mrf.mxu0
        %v1399 = vadd.f32 0.0, %v1398
        %v1400 = vpop.f32.mrf.mxu0
        %v1401 = vadd.f32 0.0, %v1400
        %1402 = vmatmul.bf16.gmra.mxu0 %v1059
        %v1403 = vpop.f32.mrf.mxu0
        %v1404 = vadd.f32 0.0, %v1403
        %v1405 = vpop.f32.mrf.mxu0
        %v1406 = vadd.f32 0.0, %v1405
        %1407 = vmatmul.bf16.gmra.mxu0 %v1061
        %v1408 = vpop.f32.mrf.mxu0
        %v1409 = vadd.f32 0.0, %v1408
        %v1410 = vpop.f32.mrf.mxu0
        %v1411 = vadd.f32 0.0, %v1410
        %1412 = vmatmul.bf16.gmra.mxu0 %v1063
        %v1413 = vpop.f32.mrf.mxu0
        %v1414 = vadd.f32 0.0, %v1413
        %v1415 = vpop.f32.mrf.mxu0
        %v1416 = vadd.f32 0.0, %v1415
        %1417 = vmatmul.bf16.gmra.mxu0 %v1065
        %v1418 = vpop.f32.mrf.mxu0
        %v1419 = vadd.f32 0.0, %v1418
        %v1420 = vpop.f32.mrf.mxu0
        %v1421 = vadd.f32 0.0, %v1420
        %1422 = vmatmul.bf16.gmra.mxu0 %v1067
        %v1423 = vpop.f32.mrf.mxu0
        %v1424 = vadd.f32 0.0, %v1423
        %v1425 = vpop.f32.mrf.mxu0
        %v1426 = vadd.f32 0.0, %v1425
        %1427 = vmatmul.bf16.gmra.mxu0 %v1069
        %v1428 = vpop.f32.mrf.mxu0
        %v1429 = vadd.f32 0.0, %v1428
        %v1430 = vpop.f32.mrf.mxu0
        %v1431 = vadd.f32 0.0, %v1430
        %1432 = vmatmul.bf16.gmra.mxu0 %v1071
        %v1433 = vpop.f32.mrf.mxu0
        %v1434 = vadd.f32 0.0, %v1433
        %v1435 = vpop.f32.mrf.mxu0
        %v1436 = vadd.f32 0.0, %v1435
        %1437 = vmatmul.bf16.gmra.mxu0 %v1073
        %v1438 = vpop.f32.mrf.mxu0
        %v1439 = vadd.f32 0.0, %v1438
        %v1440 = vpop.f32.mrf.mxu0
        %v1441 = vadd.f32 0.0, %v1440
        %1442 = vmatmul.bf16.gmra.mxu0 %v1075
        %v1443 = vpop.f32.mrf.mxu0
        %v1444 = vadd.f32 0.0, %v1443
        %v1445 = vpop.f32.mrf.mxu0
        %v1446 = vadd.f32 0.0, %v1445
        %1447 = vmatmul.bf16.gmra.mxu0 %v1077
        %v1448 = vpop.f32.mrf.mxu0
        %v1449 = vadd.f32 0.0, %v1448
        %v1450 = vpop.f32.mrf.mxu0
        %v1451 = vadd.f32 0.0, %v1450
        %1452 = vmatmul.bf16.gmra.mxu0 %v1079
        %v1453 = vpop.f32.mrf.mxu0
        %v1454 = vadd.f32 0.0, %v1453
        %v1455 = vpop.f32.mrf.mxu0
        %v1456 = vadd.f32 0.0, %v1455
        %1457 = vdwg.mxu0
        %1458 = vmatpush.bf16.msra.mxu0 0
        %1459 = vmatpush.bf16.msra.mxu0 0
        %1460 = vmatpush.bf16.msra.mxu0 0
        %1461 = vmatpush.bf16.msra.mxu0 0
        %1462 = vmatpush.bf16.msra.mxu0 0
        %1463 = vmatpush.bf16.msra.mxu0 0
        %1464 = vmatpush.bf16.msra.mxu0 0
        %1465 = vmatpush.bf16.msra.mxu0 %v1321
        %1466 = vmatmul.bf16.gmra.mxu0 %v1248
        %v1467 = vpop.f32.mrf.mxu0
        %v1468 = vadd.f32 %v1339, %v1467
        %v1469 = vpop.f32.mrf.mxu0
        %v1470 = vadd.f32 %v1341, %v1469
        %1471 = vmatmul.bf16.gmra.mxu0 %v1251
        %v1472 = vpop.f32.mrf.mxu0
        %v1473 = vadd.f32 %v1344, %v1472
        %v1474 = vpop.f32.mrf.mxu0
        %v1475 = vadd.f32 %v1346, %v1474
        %1476 = vmatmul.bf16.gmra.mxu0 %v1254
        %v1477 = vpop.f32.mrf.mxu0
        %v1478 = vadd.f32 %v1349, %v1477
        %v1479 = vpop.f32.mrf.mxu0
        %v1480 = vadd.f32 %v1351, %v1479
        %1481 = vmatmul.bf16.gmra.mxu0 %v1257
        %v1482 = vpop.f32.mrf.mxu0
        %v1483 = vadd.f32 %v1354, %v1482
        %v1484 = vpop.f32.mrf.mxu0
        %v1485 = vadd.f32 %v1356, %v1484
        %1486 = vmatmul.bf16.gmra.mxu0 %v1260
        %v1487 = vpop.f32.mrf.mxu0
        %v1488 = vadd.f32 %v1359, %v1487
        %v1489 = vpop.f32.mrf.mxu0
        %v1490 = vadd.f32 %v1361, %v1489
        %1491 = vmatmul.bf16.gmra.mxu0 %v1263
        %v1492 = vpop.f32.mrf.mxu0
        %v1493 = vadd.f32 %v1364, %v1492
        %v1494 = vpop.f32.mrf.mxu0
        %v1495 = vadd.f32 %v1366, %v1494
        %1496 = vmatmul.bf16.gmra.mxu0 %v1266
        %v1497 = vpop.f32.mrf.mxu0
        %v1498 = vadd.f32 %v1369, %v1497
        %v1499 = vpop.f32.mrf.mxu0
        %v1500 = vadd.f32 %v1371, %v1499
        %1501 = vmatmul.bf16.gmra.mxu0 %v1269
        %v1502 = vpop.f32.mrf.mxu0
        %v1503 = vadd.f32 %v1374, %v1502
        %v1504 = vpop.f32.mrf.mxu0
        %v1505 = vadd.f32 %v1376, %v1504
        %1506 = vmatmul.bf16.gmra.mxu0 %v1272
        %v1507 = vpop.f32.mrf.mxu0
        %v1508 = vadd.f32 %v1379, %v1507
        %v1509 = vpop.f32.mrf.mxu0
        %v1510 = vadd.f32 %v1381, %v1509
        %1511 = vmatmul.bf16.gmra.mxu0 %v1275
        %v1512 = vpop.f32.mrf.mxu0
        %v1513 = vadd.f32 %v1384, %v1512
        %v1514 = vpop.f32.mrf.mxu0
        %v1515 = vadd.f32 %v1386, %v1514
        %1516 = vmatmul.bf16.gmra.mxu0 %v1278
        %v1517 = vpop.f32.mrf.mxu0
        %v1518 = vadd.f32 %v1389, %v1517
        %v1519 = vpop.f32.mrf.mxu0
        %v1520 = vadd.f32 %v1391, %v1519
        %1521 = vmatmul.bf16.gmra.mxu0 %v1281
        %v1522 = vpop.f32.mrf.mxu0
        %v1523 = vadd.f32 %v1394, %v1522
        %v1524 = vpop.f32.mrf.mxu0
        %v1525 = vadd.f32 %v1396, %v1524
        %1526 = vmatmul.bf16.gmra.mxu0 %v1284
        %v1527 = vpop.f32.mrf.mxu0
        %v1528 = vadd.f32 %v1399, %v1527
        %v1529 = vpop.f32.mrf.mxu0
        %v1530 = vadd.f32 %v1401, %v1529
        %1531 = vmatmul.bf16.gmra.mxu0 %v1287
        %v1532 = vpop.f32.mrf.mxu0
        %v1533 = vadd.f32 %v1404, %v1532
        %v1534 = vpop.f32.mrf.mxu0
        %v1535 = vadd.f32 %v1406, %v1534
        %1536 = vmatmul.bf16.gmra.mxu0 %v1290
        %v1537 = vpop.f32.mrf.mxu0
        %v1538 = vadd.f32 %v1409, %v1537
        %v1539 = vpop.f32.mrf.mxu0
        %v1540 = vadd.f32 %v1411, %v1539
        %1541 = vmatmul.bf16.gmra.mxu0 %v1293
        %v1542 = vpop.f32.mrf.mxu0
        %v1543 = vadd.f32 %v1414, %v1542
        %v1544 = vpop.f32.mrf.mxu0
        %v1545 = vadd.f32 %v1416, %v1544
        %1546 = vmatmul.bf16.gmra.mxu0 %v1296
        %v1547 = vpop.f32.mrf.mxu0
        %v1548 = vadd.f32 %v1419, %v1547
        %v1549 = vpop.f32.mrf.mxu0
        %v1550 = vadd.f32 %v1421, %v1549
        %1551 = vmatmul.bf16.gmra.mxu0 %v1299
        %v1552 = vpop.f32.mrf.mxu0
        %v1553 = vadd.f32 %v1424, %v1552
        %v1554 = vpop.f32.mrf.mxu0
        %v1555 = vadd.f32 %v1426, %v1554
        %1556 = vmatmul.bf16.gmra.mxu0 %v1302
        %v1557 = vpop.f32.mrf.mxu0
        %v1558 = vadd.f32 %v1429, %v1557
        %v1559 = vpop.f32.mrf.mxu0
        %v1560 = vadd.f32 %v1431, %v1559
        %1561 = vmatmul.bf16.gmra.mxu0 %v1305
        %v1562 = vpop.f32.mrf.mxu0
        %v1563 = vadd.f32 %v1434, %v1562
        %v1564 = vpop.f32.mrf.mxu0
        %v1565 = vadd.f32 %v1436, %v1564
        %1566 = vmatmul.bf16.gmra.mxu0 %v1308
        %v1567 = vpop.f32.mrf.mxu0
        %v1568 = vadd.f32 %v1439, %v1567
        %v1569 = vpop.f32.mrf.mxu0
        %v1570 = vadd.f32 %v1441, %v1569
        %1571 = vmatmul.bf16.gmra.mxu0 %v1311
        %v1572 = vpop.f32.mrf.mxu0
        %v1573 = vadd.f32 %v1444, %v1572
        %v1574 = vpop.f32.mrf.mxu0
        %v1575 = vadd.f32 %v1446, %v1574
        %1576 = vmatmul.bf16.gmra.mxu0 %v1314
        %v1577 = vpop.f32.mrf.mxu0
        %v1578 = vadd.f32 %v1449, %v1577
        %v1579 = vpop.f32.mrf.mxu0
        %v1580 = vadd.f32 %v1451, %v1579
        %1581 = vmatmul.bf16.gmra.mxu0 %v1317
        %v1582 = vpop.f32.mrf.mxu0
        %v1583 = vadd.f32 %v1454, %v1582
        %v1584 = vpop.f32.mrf.mxu0
        %v1585 = vadd.f32 %v1456, %v1584
        %1586 = vdwg.mxu0
        %1587 = vmatpush.bf16.msra.mxu0 %v1217
        %1588 = vmatpush.bf16.msra.mxu0 %v1214
        %1589 = vmatpush.bf16.msra.mxu0 %v1211
        %1590 = vmatpush.bf16.msra.mxu0 %v1208
        %1591 = vmatpush.bf16.msra.mxu0 %v1205
        %1592 = vmatpush.bf16.msra.mxu0 %v1202
        %1593 = vmatpush.bf16.msra.mxu0 %v1199
        %1594 = vmatpush.bf16.msra.mxu0 %v1196
        %1595 = vmatmul.bf16.gmra.mxu0 %v1033
        %v1596 = vpop.f32.mrf.mxu0
        %v1597 = vadd.f32 0.0, %v1596
        %v1598 = vpop.f32.mrf.mxu0
        %v1599 = vadd.f32 0.0, %v1598
        %1600 = vmatmul.bf16.gmra.mxu0 %v1035
        %v1601 = vpop.f32.mrf.mxu0
        %v1602 = vadd.f32 0.0, %v1601
        %v1603 = vpop.f32.mrf.mxu0
        %v1604 = vadd.f32 0.0, %v1603
        %1605 = vmatmul.bf16.gmra.mxu0 %v1037
        %v1606 = vpop.f32.mrf.mxu0
        %v1607 = vadd.f32 0.0, %v1606
        %v1608 = vpop.f32.mrf.mxu0
        %v1609 = vadd.f32 0.0, %v1608
        %1610 = vmatmul.bf16.gmra.mxu0 %v1039
        %v1611 = vpop.f32.mrf.mxu0
        %v1612 = vadd.f32 0.0, %v1611
        %v1613 = vpop.f32.mrf.mxu0
        %v1614 = vadd.f32 0.0, %v1613
        %1615 = vmatmul.bf16.gmra.mxu0 %v1041
        %v1616 = vpop.f32.mrf.mxu0
        %v1617 = vadd.f32 0.0, %v1616
        %v1618 = vpop.f32.mrf.mxu0
        %v1619 = vadd.f32 0.0, %v1618
        %1620 = vmatmul.bf16.gmra.mxu0 %v1043
        %v1621 = vpop.f32.mrf.mxu0
        %v1622 = vadd.f32 0.0, %v1621
        %v1623 = vpop.f32.mrf.mxu0
        %v1624 = vadd.f32 0.0, %v1623
        %1625 = vmatmul.bf16.gmra.mxu0 %v1045
        %v1626 = vpop.f32.mrf.mxu0
        %v1627 = vadd.f32 0.0, %v1626
        %v1628 = vpop.f32.mrf.mxu0
        %v1629 = vadd.f32 0.0, %v1628
        %1630 = vmatmul.bf16.gmra.mxu0 %v1047
        %v1631 = vpop.f32.mrf.mxu0
        %v1632 = vadd.f32 0.0, %v1631
        %v1633 = vpop.f32.mrf.mxu0
        %v1634 = vadd.f32 0.0, %v1633
        %1635 = vmatmul.bf16.gmra.mxu0 %v1049
        %v1636 = vpop.f32.mrf.mxu0
        %v1637 = vadd.f32 0.0, %v1636
        %v1638 = vpop.f32.mrf.mxu0
        %v1639 = vadd.f32 0.0, %v1638
        %1640 = vmatmul.bf16.gmra.mxu0 %v1051
        %v1641 = vpop.f32.mrf.mxu0
        %v1642 = vadd.f32 0.0, %v1641
        %v1643 = vpop.f32.mrf.mxu0
        %v1644 = vadd.f32 0.0, %v1643
        %1645 = vmatmul.bf16.gmra.mxu0 %v1053
        %v1646 = vpop.f32.mrf.mxu0
        %v1647 = vadd.f32 0.0, %v1646
        %v1648 = vpop.f32.mrf.mxu0
        %v1649 = vadd.f32 0.0, %v1648
        %1650 = vmatmul.bf16.gmra.mxu0 %v1055
        %v1651 = vpop.f32.mrf.mxu0
        %v1652 = vadd.f32 0.0, %v1651
        %v1653 = vpop.f32.mrf.mxu0
        %v1654 = vadd.f32 0.0, %v1653
        %1655 = vmatmul.bf16.gmra.mxu0 %v1057
        %v1656 = vpop.f32.mrf.mxu0
        %v1657 = vadd.f32 0.0, %v1656
        %v1658 = vpop.f32.mrf.mxu0
        %v1659 = vadd.f32 0.0, %v1658
        %1660 = vmatmul.bf16.gmra.mxu0 %v1059
        %v1661 = vpop.f32.mrf.mxu0
        %v1662 = vadd.f32 0.0, %v1661
        %v1663 = vpop.f32.mrf.mxu0
        %v1664 = vadd.f32 0.0, %v1663
        %1665 = vmatmul.bf16.gmra.mxu0 %v1061
        %v1666 = vpop.f32.mrf.mxu0
        %v1667 = vadd.f32 0.0, %v1666
        %v1668 = vpop.f32.mrf.mxu0
        %v1669 = vadd.f32 0.0, %v1668
        %1670 = vmatmul.bf16.gmra.mxu0 %v1063
        %v1671 = vpop.f32.mrf.mxu0
        %v1672 = vadd.f32 0.0, %v1671
        %v1673 = vpop.f32.mrf.mxu0
        %v1674 = vadd.f32 0.0, %v1673
        %1675 = vmatmul.bf16.gmra.mxu0 %v1065
        %v1676 = vpop.f32.mrf.mxu0
        %v1677 = vadd.f32 0.0, %v1676
        %v1678 = vpop.f32.mrf.mxu0
        %v1679 = vadd.f32 0.0, %v1678
        %1680 = vmatmul.bf16.gmra.mxu0 %v1067
        %v1681 = vpop.f32.mrf.mxu0
        %v1682 = vadd.f32 0.0, %v1681
        %v1683 = vpop.f32.mrf.mxu0
        %v1684 = vadd.f32 0.0, %v1683
        %1685 = vmatmul.bf16.gmra.mxu0 %v1069
        %v1686 = vpop.f32.mrf.mxu0
        %v1687 = vadd.f32 0.0, %v1686
        %v1688 = vpop.f32.mrf.mxu0
        %v1689 = vadd.f32 0.0, %v1688
        %1690 = vmatmul.bf16.gmra.mxu0 %v1071
        %v1691 = vpop.f32.mrf.mxu0
        %v1692 = vadd.f32 0.0, %v1691
        %v1693 = vpop.f32.mrf.mxu0
        %v1694 = vadd.f32 0.0, %v1693
        %1695 = vmatmul.bf16.gmra.mxu0 %v1073
        %v1696 = vpop.f32.mrf.mxu0
        %v1697 = vadd.f32 0.0, %v1696
        %v1698 = vpop.f32.mrf.mxu0
        %v1699 = vadd.f32 0.0, %v1698
        %1700 = vmatmul.bf16.gmra.mxu0 %v1075
        %v1701 = vpop.f32.mrf.mxu0
        %v1702 = vadd.f32 0.0, %v1701
        %v1703 = vpop.f32.mrf.mxu0
        %v1704 = vadd.f32 0.0, %v1703
        %1705 = vmatmul.bf16.gmra.mxu0 %v1077
        %v1706 = vpop.f32.mrf.mxu0
        %v1707 = vadd.f32 0.0, %v1706
        %v1708 = vpop.f32.mrf.mxu0
        %v1709 = vadd.f32 0.0, %v1708
        %1710 = vmatmul.bf16.gmra.mxu0 %v1079
        %v1711 = vpop.f32.mrf.mxu0
        %v1712 = vadd.f32 0.0, %v1711
        %v1713 = vpop.f32.mrf.mxu0
        %v1714 = vadd.f32 0.0, %v1713
        %1715 = vdwg.mxu0
        %1716 = vmatpush.bf16.msra.mxu0 0
        %1717 = vmatpush.bf16.msra.mxu0 0
        %1718 = vmatpush.bf16.msra.mxu0 0
        %1719 = vmatpush.bf16.msra.mxu0 0
        %1720 = vmatpush.bf16.msra.mxu0 0
        %1721 = vmatpush.bf16.msra.mxu0 0
        %1722 = vmatpush.bf16.msra.mxu0 0
        %1723 = vmatpush.bf16.msra.mxu0 %v1324
        %1724 = vmatmul.bf16.gmra.mxu0 %v1248
        %v1725 = vpop.f32.mrf.mxu0
        %v1726 = vadd.f32 %v1597, %v1725
        %v1727 = vpop.f32.mrf.mxu0
        %v1728 = vadd.f32 %v1599, %v1727
        %1729 = vmatmul.bf16.gmra.mxu0 %v1251
        %v1730 = vpop.f32.mrf.mxu0
        %v1731 = vadd.f32 %v1602, %v1730
        %v1732 = vpop.f32.mrf.mxu0
        %v1733 = vadd.f32 %v1604, %v1732
        %1734 = vmatmul.bf16.gmra.mxu0 %v1254
        %v1735 = vpop.f32.mrf.mxu0
        %v1736 = vadd.f32 %v1607, %v1735
        %v1737 = vpop.f32.mrf.mxu0
        %v1738 = vadd.f32 %v1609, %v1737
        %1739 = vmatmul.bf16.gmra.mxu0 %v1257
        %v1740 = vpop.f32.mrf.mxu0
        %v1741 = vadd.f32 %v1612, %v1740
        %v1742 = vpop.f32.mrf.mxu0
        %v1743 = vadd.f32 %v1614, %v1742
        %1744 = vmatmul.bf16.gmra.mxu0 %v1260
        %v1745 = vpop.f32.mrf.mxu0
        %v1746 = vadd.f32 %v1617, %v1745
        %v1747 = vpop.f32.mrf.mxu0
        %v1748 = vadd.f32 %v1619, %v1747
        %1749 = vmatmul.bf16.gmra.mxu0 %v1263
        %v1750 = vpop.f32.mrf.mxu0
        %v1751 = vadd.f32 %v1622, %v1750
        %v1752 = vpop.f32.mrf.mxu0
        %v1753 = vadd.f32 %v1624, %v1752
        %1754 = vmatmul.bf16.gmra.mxu0 %v1266
        %v1755 = vpop.f32.mrf.mxu0
        %v1756 = vadd.f32 %v1627, %v1755
        %v1757 = vpop.f32.mrf.mxu0
        %v1758 = vadd.f32 %v1629, %v1757
        %1759 = vmatmul.bf16.gmra.mxu0 %v1269
        %v1760 = vpop.f32.mrf.mxu0
        %v1761 = vadd.f32 %v1632, %v1760
        %v1762 = vpop.f32.mrf.mxu0
        %v1763 = vadd.f32 %v1634, %v1762
        %1764 = vmatmul.bf16.gmra.mxu0 %v1272
        %v1765 = vpop.f32.mrf.mxu0
        %v1766 = vadd.f32 %v1637, %v1765
        %v1767 = vpop.f32.mrf.mxu0
        %v1768 = vadd.f32 %v1639, %v1767
        %1769 = vmatmul.bf16.gmra.mxu0 %v1275
        %v1770 = vpop.f32.mrf.mxu0
        %v1771 = vadd.f32 %v1642, %v1770
        %v1772 = vpop.f32.mrf.mxu0
        %v1773 = vadd.f32 %v1644, %v1772
        %1774 = vmatmul.bf16.gmra.mxu0 %v1278
        %v1775 = vpop.f32.mrf.mxu0
        %v1776 = vadd.f32 %v1647, %v1775
        %v1777 = vpop.f32.mrf.mxu0
        %v1778 = vadd.f32 %v1649, %v1777
        %1779 = vmatmul.bf16.gmra.mxu0 %v1281
        %v1780 = vpop.f32.mrf.mxu0
        %v1781 = vadd.f32 %v1652, %v1780
        %v1782 = vpop.f32.mrf.mxu0
        %v1783 = vadd.f32 %v1654, %v1782
        %1784 = vmatmul.bf16.gmra.mxu0 %v1284
        %v1785 = vpop.f32.mrf.mxu0
        %v1786 = vadd.f32 %v1657, %v1785
        %v1787 = vpop.f32.mrf.mxu0
        %v1788 = vadd.f32 %v1659, %v1787
        %1789 = vmatmul.bf16.gmra.mxu0 %v1287
        %v1790 = vpop.f32.mrf.mxu0
        %v1791 = vadd.f32 %v1662, %v1790
        %v1792 = vpop.f32.mrf.mxu0
        %v1793 = vadd.f32 %v1664, %v1792
        %1794 = vmatmul.bf16.gmra.mxu0 %v1290
        %v1795 = vpop.f32.mrf.mxu0
        %v1796 = vadd.f32 %v1667, %v1795
        %v1797 = vpop.f32.mrf.mxu0
        %v1798 = vadd.f32 %v1669, %v1797
        %1799 = vmatmul.bf16.gmra.mxu0 %v1293
        %v1800 = vpop.f32.mrf.mxu0
        %v1801 = vadd.f32 %v1672, %v1800
        %v1802 = vpop.f32.mrf.mxu0
        %v1803 = vadd.f32 %v1674, %v1802
        %1804 = vmatmul.bf16.gmra.mxu0 %v1296
        %v1805 = vpop.f32.mrf.mxu0
        %v1806 = vadd.f32 %v1677, %v1805
        %v1807 = vpop.f32.mrf.mxu0
        %v1808 = vadd.f32 %v1679, %v1807
        %1809 = vmatmul.bf16.gmra.mxu0 %v1299
        %v1810 = vpop.f32.mrf.mxu0
        %v1811 = vadd.f32 %v1682, %v1810
        %v1812 = vpop.f32.mrf.mxu0
        %v1813 = vadd.f32 %v1684, %v1812
        %1814 = vmatmul.bf16.gmra.mxu0 %v1302
        %v1815 = vpop.f32.mrf.mxu0
        %v1816 = vadd.f32 %v1687, %v1815
        %v1817 = vpop.f32.mrf.mxu0
        %v1818 = vadd.f32 %v1689, %v1817
        %1819 = vmatmul.bf16.gmra.mxu0 %v1305
        %v1820 = vpop.f32.mrf.mxu0
        %v1821 = vadd.f32 %v1692, %v1820
        %v1822 = vpop.f32.mrf.mxu0
        %v1823 = vadd.f32 %v1694, %v1822
        %1824 = vmatmul.bf16.gmra.mxu0 %v1308
        %v1825 = vpop.f32.mrf.mxu0
        %v1826 = vadd.f32 %v1697, %v1825
        %v1827 = vpop.f32.mrf.mxu0
        %v1828 = vadd.f32 %v1699, %v1827
        %1829 = vmatmul.bf16.gmra.mxu0 %v1311
        %v1830 = vpop.f32.mrf.mxu0
        %v1831 = vadd.f32 %v1702, %v1830
        %v1832 = vpop.f32.mrf.mxu0
        %v1833 = vadd.f32 %v1704, %v1832
        %1834 = vmatmul.bf16.gmra.mxu0 %v1314
        %v1835 = vpop.f32.mrf.mxu0
        %v1836 = vadd.f32 %v1707, %v1835
        %v1837 = vpop.f32.mrf.mxu0
        %v1838 = vadd.f32 %v1709, %v1837
        %1839 = vmatmul.bf16.gmra.mxu0 %v1317
        %v1840 = vpop.f32.mrf.mxu0
        %v1841 = vadd.f32 %v1712, %v1840
        %v1842 = vpop.f32.mrf.mxu0
        %v1843 = vadd.f32 %v1714, %v1842
        %1844 = vdwg.mxu0
        %1845 = vmatpush.bf16.msra.mxu0 %v1218
        %1846 = vmatpush.bf16.msra.mxu0 %v1215
        %1847 = vmatpush.bf16.msra.mxu0 %v1212
        %1848 = vmatpush.bf16.msra.mxu0 %v1209
        %1849 = vmatpush.bf16.msra.mxu0 %v1206
        %1850 = vmatpush.bf16.msra.mxu0 %v1203
        %1851 = vmatpush.bf16.msra.mxu0 %v1200
        %1852 = vmatpush.bf16.msra.mxu0 %v1197
        %1853 = vmatmul.bf16.gmra.mxu0 %v1033
        %v1854 = vpop.f32.mrf.mxu0
        %v1855 = vadd.f32 0.0, %v1854
        %v1856 = vpop.f32.mrf.mxu0
        %v1857 = vadd.f32 0.0, %v1856
        %1858 = vmatmul.bf16.gmra.mxu0 %v1035
        %v1859 = vpop.f32.mrf.mxu0
        %v1860 = vadd.f32 0.0, %v1859
        %v1861 = vpop.f32.mrf.mxu0
        %v1862 = vadd.f32 0.0, %v1861
        %1863 = vmatmul.bf16.gmra.mxu0 %v1037
        %v1864 = vpop.f32.mrf.mxu0
        %v1865 = vadd.f32 0.0, %v1864
        %v1866 = vpop.f32.mrf.mxu0
        %v1867 = vadd.f32 0.0, %v1866
        %1868 = vmatmul.bf16.gmra.mxu0 %v1039
        %v1869 = vpop.f32.mrf.mxu0
        %v1870 = vadd.f32 0.0, %v1869
        %v1871 = vpop.f32.mrf.mxu0
        %v1872 = vadd.f32 0.0, %v1871
        %1873 = vmatmul.bf16.gmra.mxu0 %v1041
        %v1874 = vpop.f32.mrf.mxu0
        %v1875 = vadd.f32 0.0, %v1874
        %v1876 = vpop.f32.mrf.mxu0
        %v1877 = vadd.f32 0.0, %v1876
        %1878 = vmatmul.bf16.gmra.mxu0 %v1043
        %v1879 = vpop.f32.mrf.mxu0
        %v1880 = vadd.f32 0.0, %v1879
        %v1881 = vpop.f32.mrf.mxu0
        %v1882 = vadd.f32 0.0, %v1881
        %1883 = vmatmul.bf16.gmra.mxu0 %v1045
        %v1884 = vpop.f32.mrf.mxu0
        %v1885 = vadd.f32 0.0, %v1884
        %v1886 = vpop.f32.mrf.mxu0
        %v1887 = vadd.f32 0.0, %v1886
        %1888 = vmatmul.bf16.gmra.mxu0 %v1047
        %v1889 = vpop.f32.mrf.mxu0
        %v1890 = vadd.f32 0.0, %v1889
        %v1891 = vpop.f32.mrf.mxu0
        %v1892 = vadd.f32 0.0, %v1891
        %1893 = vmatmul.bf16.gmra.mxu0 %v1049
        %v1894 = vpop.f32.mrf.mxu0
        %v1895 = vadd.f32 0.0, %v1894
        %v1896 = vpop.f32.mrf.mxu0
        %v1897 = vadd.f32 0.0, %v1896
        %1898 = vmatmul.bf16.gmra.mxu0 %v1051
        %v1899 = vpop.f32.mrf.mxu0
        %v1900 = vadd.f32 0.0, %v1899
        %v1901 = vpop.f32.mrf.mxu0
        %v1902 = vadd.f32 0.0, %v1901
        %1903 = vmatmul.bf16.gmra.mxu0 %v1053
        %v1904 = vpop.f32.mrf.mxu0
        %v1905 = vadd.f32 0.0, %v1904
        %v1906 = vpop.f32.mrf.mxu0
        %v1907 = vadd.f32 0.0, %v1906
        %1908 = vmatmul.bf16.gmra.mxu0 %v1055
        %v1909 = vpop.f32.mrf.mxu0
        %v1910 = vadd.f32 0.0, %v1909
        %v1911 = vpop.f32.mrf.mxu0
        %v1912 = vadd.f32 0.0, %v1911
        %1913 = vmatmul.bf16.gmra.mxu0 %v1057
        %v1914 = vpop.f32.mrf.mxu0
        %v1915 = vadd.f32 0.0, %v1914
        %v1916 = vpop.f32.mrf.mxu0
        %v1917 = vadd.f32 0.0, %v1916
        %1918 = vmatmul.bf16.gmra.mxu0 %v1059
        %v1919 = vpop.f32.mrf.mxu0
        %v1920 = vadd.f32 0.0, %v1919
        %v1921 = vpop.f32.mrf.mxu0
        %v1922 = vadd.f32 0.0, %v1921
        %1923 = vmatmul.bf16.gmra.mxu0 %v1061
        %v1924 = vpop.f32.mrf.mxu0
        %v1925 = vadd.f32 0.0, %v1924
        %v1926 = vpop.f32.mrf.mxu0
        %v1927 = vadd.f32 0.0, %v1926
        %1928 = vmatmul.bf16.gmra.mxu0 %v1063
        %v1929 = vpop.f32.mrf.mxu0
        %v1930 = vadd.f32 0.0, %v1929
        %v1931 = vpop.f32.mrf.mxu0
        %v1932 = vadd.f32 0.0, %v1931
        %1933 = vmatmul.bf16.gmra.mxu0 %v1065
        %v1934 = vpop.f32.mrf.mxu0
        %v1935 = vadd.f32 0.0, %v1934
        %v1936 = vpop.f32.mrf.mxu0
        %v1937 = vadd.f32 0.0, %v1936
        %1938 = vmatmul.bf16.gmra.mxu0 %v1067
        %v1939 = vpop.f32.mrf.mxu0
        %v1940 = vadd.f32 0.0, %v1939
        %v1941 = vpop.f32.mrf.mxu0
        %v1942 = vadd.f32 0.0, %v1941
        %1943 = vmatmul.bf16.gmra.mxu0 %v1069
        %v1944 = vpop.f32.mrf.mxu0
        %v1945 = vadd.f32 0.0, %v1944
        %v1946 = vpop.f32.mrf.mxu0
        %v1947 = vadd.f32 0.0, %v1946
        %1948 = vmatmul.bf16.gmra.mxu0 %v1071
        %v1949 = vpop.f32.mrf.mxu0
        %v1950 = vadd.f32 0.0, %v1949
        %v1951 = vpop.f32.mrf.mxu0
        %v1952 = vadd.f32 0.0, %v1951
        %1953 = vmatmul.bf16.gmra.mxu0 %v1073
        %v1954 = vpop.f32.mrf.mxu0
        %v1955 = vadd.f32 0.0, %v1954
        %v1956 = vpop.f32.mrf.mxu0
        %v1957 = vadd.f32 0.0, %v1956
        %1958 = vmatmul.bf16.gmra.mxu0 %v1075
        %v1959 = vpop.f32.mrf.mxu0
        %v1960 = vadd.f32 0.0, %v1959
        %v1961 = vpop.f32.mrf.mxu0
        %v1962 = vadd.f32 0.0, %v1961
        %1963 = vmatmul.bf16.gmra.mxu0 %v1077
        %v1964 = vpop.f32.mrf.mxu0
        %v1965 = vadd.f32 0.0, %v1964
        %v1966 = vpop.f32.mrf.mxu0
        %v1967 = vadd.f32 0.0, %v1966
        %1968 = vmatmul.bf16.gmra.mxu0 %v1079
        %v1969 = vpop.f32.mrf.mxu0
        %v1970 = vadd.f32 0.0, %v1969
        %v1971 = vpop.f32.mrf.mxu0
        %v1972 = vadd.f32 0.0, %v1971
        %1973 = vdwg.mxu0
        %1974 = vmatpush.bf16.msra.mxu0 0
        %1975 = vmatpush.bf16.msra.mxu0 0
        %1976 = vmatpush.bf16.msra.mxu0 0
        %1977 = vmatpush.bf16.msra.mxu0 0
        %1978 = vmatpush.bf16.msra.mxu0 0
        %1979 = vmatpush.bf16.msra.mxu0 0
        %1980 = vmatpush.bf16.msra.mxu0 0
        %1981 = vmatpush.bf16.msra.mxu0 %v1327
        %1982 = vmatmul.bf16.gmra.mxu0 %v1248
        %v1983 = vpop.f32.mrf.mxu0
        %v1984 = vadd.f32 %v1855, %v1983
        %v1985 = vpop.f32.mrf.mxu0
        %v1986 = vadd.f32 %v1857, %v1985
        %1987 = vmatmul.bf16.gmra.mxu0 %v1251
        %v1988 = vpop.f32.mrf.mxu0
        %v1989 = vadd.f32 %v1860, %v1988
        %v1990 = vpop.f32.mrf.mxu0
        %v1991 = vadd.f32 %v1862, %v1990
        %1992 = vmatmul.bf16.gmra.mxu0 %v1254
        %v1993 = vpop.f32.mrf.mxu0
        %v1994 = vadd.f32 %v1865, %v1993
        %v1995 = vpop.f32.mrf.mxu0
        %v1996 = vadd.f32 %v1867, %v1995
        %1997 = vmatmul.bf16.gmra.mxu0 %v1257
        %v1998 = vpop.f32.mrf.mxu0
        %v1999 = vadd.f32 %v1870, %v1998
        %v2000 = vpop.f32.mrf.mxu0
        %v2001 = vadd.f32 %v1872, %v2000
        %2002 = vmatmul.bf16.gmra.mxu0 %v1260
        %v2003 = vpop.f32.mrf.mxu0
        %v2004 = vadd.f32 %v1875, %v2003
        %v2005 = vpop.f32.mrf.mxu0
        %v2006 = vadd.f32 %v1877, %v2005
        %2007 = vmatmul.bf16.gmra.mxu0 %v1263
        %v2008 = vpop.f32.mrf.mxu0
        %v2009 = vadd.f32 %v1880, %v2008
        %v2010 = vpop.f32.mrf.mxu0
        %v2011 = vadd.f32 %v1882, %v2010
        %2012 = vmatmul.bf16.gmra.mxu0 %v1266
        %v2013 = vpop.f32.mrf.mxu0
        %v2014 = vadd.f32 %v1885, %v2013
        %v2015 = vpop.f32.mrf.mxu0
        %v2016 = vadd.f32 %v1887, %v2015
        %2017 = vmatmul.bf16.gmra.mxu0 %v1269
        %v2018 = vpop.f32.mrf.mxu0
        %v2019 = vadd.f32 %v1890, %v2018
        %v2020 = vpop.f32.mrf.mxu0
        %v2021 = vadd.f32 %v1892, %v2020
        %2022 = vmatmul.bf16.gmra.mxu0 %v1272
        %v2023 = vpop.f32.mrf.mxu0
        %v2024 = vadd.f32 %v1895, %v2023
        %v2025 = vpop.f32.mrf.mxu0
        %v2026 = vadd.f32 %v1897, %v2025
        %2027 = vmatmul.bf16.gmra.mxu0 %v1275
        %v2028 = vpop.f32.mrf.mxu0
        %v2029 = vadd.f32 %v1900, %v2028
        %v2030 = vpop.f32.mrf.mxu0
        %v2031 = vadd.f32 %v1902, %v2030
        %2032 = vmatmul.bf16.gmra.mxu0 %v1278
        %v2033 = vpop.f32.mrf.mxu0
        %v2034 = vadd.f32 %v1905, %v2033
        %v2035 = vpop.f32.mrf.mxu0
        %v2036 = vadd.f32 %v1907, %v2035
        %2037 = vmatmul.bf16.gmra.mxu0 %v1281
        %v2038 = vpop.f32.mrf.mxu0
        %v2039 = vadd.f32 %v1910, %v2038
        %v2040 = vpop.f32.mrf.mxu0
        %v2041 = vadd.f32 %v1912, %v2040
        %2042 = vmatmul.bf16.gmra.mxu0 %v1284
        %v2043 = vpop.f32.mrf.mxu0
        %v2044 = vadd.f32 %v1915, %v2043
        %v2045 = vpop.f32.mrf.mxu0
        %v2046 = vadd.f32 %v1917, %v2045
        %2047 = vmatmul.bf16.gmra.mxu0 %v1287
        %v2048 = vpop.f32.mrf.mxu0
        %v2049 = vadd.f32 %v1920, %v2048
        %v2050 = vpop.f32.mrf.mxu0
        %v2051 = vadd.f32 %v1922, %v2050
        %2052 = vmatmul.bf16.gmra.mxu0 %v1290
        %v2053 = vpop.f32.mrf.mxu0
        %v2054 = vadd.f32 %v1925, %v2053
        %v2055 = vpop.f32.mrf.mxu0
        %v2056 = vadd.f32 %v1927, %v2055
        %2057 = vmatmul.bf16.gmra.mxu0 %v1293
        %v2058 = vpop.f32.mrf.mxu0
        %v2059 = vadd.f32 %v1930, %v2058
        %v2060 = vpop.f32.mrf.mxu0
        %v2061 = vadd.f32 %v1932, %v2060
        %2062 = vmatmul.bf16.gmra.mxu0 %v1296
        %v2063 = vpop.f32.mrf.mxu0
        %v2064 = vadd.f32 %v1935, %v2063
        %v2065 = vpop.f32.mrf.mxu0
        %v2066 = vadd.f32 %v1937, %v2065
        %2067 = vmatmul.bf16.gmra.mxu0 %v1299
        %v2068 = vpop.f32.mrf.mxu0
        %v2069 = vadd.f32 %v1940, %v2068
        %v2070 = vpop.f32.mrf.mxu0
        %v2071 = vadd.f32 %v1942, %v2070
        %2072 = vmatmul.bf16.gmra.mxu0 %v1302
        %v2073 = vpop.f32.mrf.mxu0
        %v2074 = vadd.f32 %v1945, %v2073
        %v2075 = vpop.f32.mrf.mxu0
        %v2076 = vadd.f32 %v1947, %v2075
        %2077 = vmatmul.bf16.gmra.mxu0 %v1305
        %v2078 = vpop.f32.mrf.mxu0
        %v2079 = vadd.f32 %v1950, %v2078
        %v2080 = vpop.f32.mrf.mxu0
        %v2081 = vadd.f32 %v1952, %v2080
        %2082 = vmatmul.bf16.gmra.mxu0 %v1308
        %v2083 = vpop.f32.mrf.mxu0
        %v2084 = vadd.f32 %v1955, %v2083
        %v2085 = vpop.f32.mrf.mxu0
        %v2086 = vadd.f32 %v1957, %v2085
        %2087 = vmatmul.bf16.gmra.mxu0 %v1311
        %v2088 = vpop.f32.mrf.mxu0
        %v2089 = vadd.f32 %v1960, %v2088
        %v2090 = vpop.f32.mrf.mxu0
        %v2091 = vadd.f32 %v1962, %v2090
        %2092 = vmatmul.bf16.gmra.mxu0 %v1314
        %v2093 = vpop.f32.mrf.mxu0
        %v2094 = vadd.f32 %v1965, %v2093
        %v2095 = vpop.f32.mrf.mxu0
        %v2096 = vadd.f32 %v1967, %v2095
        %2097 = vmatmul.bf16.gmra.mxu0 %v1317
        %v2098 = vpop.f32.mrf.mxu0
        %v2099 = vadd.f32 %v1970, %v2098
        %v2100 = vpop.f32.mrf.mxu0
        %v2101 = vadd.f32 %v1972, %v2100
        %2102 = vdwg.mxu0
        %v2103 = vld [vmem:[%s2] sm:$0xff]
        %v2104 = vld [vmem:[%s2 + $0x8] sm:$0xf]
        %v2105 = vld [vmem:[%s2 + $0xc] sm:$0xff]
        %v2106 = vld [vmem:[%s2 + $0x14] sm:$0xf]
        %v2107 = vld [vmem:[%s2 + $0x18] sm:$0xff]
        %v2108 = vld [vmem:[%s2 + $0x20] sm:$0xf]
        %v2109 = vld [vmem:[%s2 + $0x24] sm:$0xff]
        %v2110 = vld [vmem:[%s2 + $0x2c] sm:$0xf]
        %v2111 = vld [vmem:[%s2 + $0x30] sm:$0xff]
        %v2112 = vld [vmem:[%s2 + $0x38] sm:$0xf]
        %v2113 = vld [vmem:[%s2 + $0x3c] sm:$0xff]
        %v2114 = vld [vmem:[%s2 + $0x44] sm:$0xf]
        %v2115 = vld [vmem:[%s2 + $0x48] sm:$0xff]
        %v2116 = vld [vmem:[%s2 + $0x50] sm:$0xf]
        %v2117 = vld [vmem:[%s2 + $0x54] sm:$0xff]
        %v2118 = vld [vmem:[%s2 + $0x5c] sm:$0xf]
        %v2119 = vld [vmem:[%s2 + $0x60] sm:$0xff]
        %v2120 = vld [vmem:[%s2 + $0x68] sm:$0xf]
        %v2121 = vld [vmem:[%s2 + $0x6c] sm:$0xff]
        %v2122 = vld [vmem:[%s2 + $0x74] sm:$0xf]
        %v2123 = vld [vmem:[%s2 + $0x78] sm:$0xff]
        %v2124 = vld [vmem:[%s2 + $0x80] sm:$0xf]
        %v2125 = vld [vmem:[%s2 + $0x84] sm:$0xff]
        %v2126 = vld [vmem:[%s2 + $0x8c] sm:$0xf]
        %v2127 = vld [vmem:[%s2 + $0x90] sm:$0xff]
        %v2128 = vld [vmem:[%s2 + $0x98] sm:$0xf]
        %v2129 = vld [vmem:[%s2 + $0x9c] sm:$0xff]
        %v2130 = vld [vmem:[%s2 + $0xa4] sm:$0xf]
        %v2131 = vld [vmem:[%s2 + $0xa8] sm:$0xff]
        %v2132 = vld [vmem:[%s2 + $0xb0] sm:$0xf]
        %v2133 = vld [vmem:[%s2 + $0xb4] sm:$0xff]
        %v2134 = vld [vmem:[%s2 + $0xbc] sm:$0xf]
        %v2135 = vld [vmem:[%s2 + $0xc0] sm:$0xff]
        %v2136 = vld [vmem:[%s2 + $0xc8] sm:$0xf]
        %v2137 = vld [vmem:[%s2 + $0xcc] sm:$0x33]
        %v2138 = vld [vmem:[%s2 + $0xd4] sm:$0x3]
        %v2175 = vunpack.c.l.b16 %v2103
        %v2176 = vunpack.c.h.b16 %v2103
        %v2177 = vunpack.c.l.b16 %v2104
        %v2178 = vunpack.c.l.b16 %v2105
        %v2179 = vunpack.c.h.b16 %v2105
        %v2180 = vunpack.c.l.b16 %v2106
        %v2181 = vunpack.c.l.b16 %v2107
        %v2182 = vunpack.c.h.b16 %v2107
        %v2183 = vunpack.c.l.b16 %v2108
        %v2184 = vunpack.c.l.b16 %v2109
        %v2185 = vunpack.c.h.b16 %v2109
        %v2186 = vunpack.c.l.b16 %v2110
        %v2187 = vunpack.c.l.b16 %v2111
        %v2188 = vunpack.c.h.b16 %v2111
        %v2189 = vunpack.c.l.b16 %v2112
        %v2190 = vunpack.c.l.b16 %v2113
        %v2191 = vunpack.c.h.b16 %v2113
        %v2192 = vunpack.c.l.b16 %v2114
        %v2193 = vunpack.c.l.b16 %v2115
        %v2194 = vunpack.c.h.b16 %v2115
        %v2195 = vunpack.c.l.b16 %v2116
        %v2196 = vunpack.c.l.b16 %v2117
        %v2197 = vunpack.c.h.b16 %v2117
        %v2198 = vunpack.c.l.b16 %v2118
        %v2199 = vunpack.c.l.b16 %v2119
        %v2200 = vunpack.c.h.b16 %v2119
        %v2201 = vunpack.c.l.b16 %v2120
        %v2202 = vunpack.c.l.b16 %v2121
        %v2203 = vunpack.c.h.b16 %v2121
        %v2204 = vunpack.c.l.b16 %v2122
        %v2205 = vunpack.c.l.b16 %v2123
        %v2206 = vunpack.c.h.b16 %v2123
        %v2207 = vunpack.c.l.b16 %v2124
        %v2208 = vunpack.c.l.b16 %v2125
        %v2209 = vunpack.c.h.b16 %v2125
        %v2210 = vunpack.c.l.b16 %v2126
        %v2211 = vunpack.c.l.b16 %v2127
        %v2212 = vunpack.c.h.b16 %v2127
        %v2213 = vunpack.c.l.b16 %v2128
        %v2214 = vunpack.c.l.b16 %v2129
        %v2215 = vunpack.c.h.b16 %v2129
        %v2216 = vunpack.c.l.b16 %v2130
        %v2217 = vunpack.c.l.b16 %v2131
        %v2218 = vunpack.c.h.b16 %v2131
        %v2219 = vunpack.c.l.b16 %v2132
        %v2220 = vunpack.c.l.b16 %v2133
        %v2221 = vunpack.c.h.b16 %v2133
        %v2222 = vunpack.c.l.b16 %v2134
        %v2223 = vunpack.c.l.b16 %v2135
        %v2224 = vunpack.c.h.b16 %v2135
        %v2225 = vunpack.c.l.b16 %v2136
        %v2226 = vunpack.c.l.b16 %v2137
        %v2227 = vunpack.c.h.b16 %v2137
        %v2228 = vunpack.c.l.b16 %v2138
        %v2229 = vpack.c.b16 %v2178, %v2175
        %v2230 = vpack.c.b16 %v2179, %v2176
        %v2231 = vpack.c.b16 %v2180, %v2177
        %v2232 = vpack.c.b16 %v2184, %v2181
        %v2233 = vpack.c.b16 %v2185, %v2182
        %v2234 = vpack.c.b16 %v2186, %v2183
        %v2235 = vpack.c.b16 %v2190, %v2187
        %v2236 = vpack.c.b16 %v2191, %v2188
        %v2237 = vpack.c.b16 %v2192, %v2189
        %v2238 = vpack.c.b16 %v2196, %v2193
        %v2239 = vpack.c.b16 %v2197, %v2194
        %v2240 = vpack.c.b16 %v2198, %v2195
        %v2241 = vpack.c.b16 %v2202, %v2199
        %v2242 = vpack.c.b16 %v2203, %v2200
        %v2243 = vpack.c.b16 %v2204, %v2201
        %v2244 = vpack.c.b16 %v2208, %v2205
        %v2245 = vpack.c.b16 %v2209, %v2206
        %v2246 = vpack.c.b16 %v2210, %v2207
        %v2247 = vpack.c.b16 %v2214, %v2211
        %v2248 = vpack.c.b16 %v2215, %v2212
        %v2249 = vpack.c.b16 %v2216, %v2213
        %v2250 = vpack.c.b16 %v2220, %v2217
        %v2251 = vpack.c.b16 %v2221, %v2218
        %v2252 = vpack.c.b16 %v2222, %v2219
        %v2253 = vpack.c.b16 %v2226, %v2223
        %v2254 = vpack.c.b16 %v2227, %v2224
        %v2255 = vpack.c.b16 %v2228, %v2225
        %v2281 = vsel %vm1319, %v2253, 0
        %v2284 = vsel %vm1319, %v2254, 0
        %v2287 = vsel %vm1319, %v2255, 0
        %2289 = vmatpush.bf16.msra.mxu0 %v2250
        %2290 = vmatpush.bf16.msra.mxu0 %v2247
        %2291 = vmatpush.bf16.msra.mxu0 %v2244
        %2292 = vmatpush.bf16.msra.mxu0 %v2241
        %2293 = vmatpush.bf16.msra.mxu0 %v2238
        %2294 = vmatpush.bf16.msra.mxu0 %v2235
        %2295 = vmatpush.bf16.msra.mxu0 %v2232
        %2296 = vmatpush.bf16.msra.mxu0 %v2229
        %2297 = vmatmul.bf16.gmra.mxu0 %v1033
        %v2298 = vpop.f32.mrf.mxu0
        %v2299 = vadd.f32 0.0, %v2298
        %v2300 = vpop.f32.mrf.mxu0
        %v2301 = vadd.f32 0.0, %v2300
        %2302 = vmatmul.bf16.gmra.mxu0 %v1035
        %v2303 = vpop.f32.mrf.mxu0
        %v2304 = vadd.f32 0.0, %v2303
        %v2305 = vpop.f32.mrf.mxu0
        %v2306 = vadd.f32 0.0, %v2305
        %2307 = vmatmul.bf16.gmra.mxu0 %v1037
        %v2308 = vpop.f32.mrf.mxu0
        %v2309 = vadd.f32 0.0, %v2308
        %v2310 = vpop.f32.mrf.mxu0
        %v2311 = vadd.f32 0.0, %v2310
        %2312 = vmatmul.bf16.gmra.mxu0 %v1039
        %v2313 = vpop.f32.mrf.mxu0
        %v2314 = vadd.f32 0.0, %v2313
        %v2315 = vpop.f32.mrf.mxu0
        %v2316 = vadd.f32 0.0, %v2315
        %2317 = vmatmul.bf16.gmra.mxu0 %v1041
        %v2318 = vpop.f32.mrf.mxu0
        %v2319 = vadd.f32 0.0, %v2318
        %v2320 = vpop.f32.mrf.mxu0
        %v2321 = vadd.f32 0.0, %v2320
        %2322 = vmatmul.bf16.gmra.mxu0 %v1043
        %v2323 = vpop.f32.mrf.mxu0
        %v2324 = vadd.f32 0.0, %v2323
        %v2325 = vpop.f32.mrf.mxu0
        %v2326 = vadd.f32 0.0, %v2325
        %2327 = vmatmul.bf16.gmra.mxu0 %v1045
        %v2328 = vpop.f32.mrf.mxu0
        %v2329 = vadd.f32 0.0, %v2328
        %v2330 = vpop.f32.mrf.mxu0
        %v2331 = vadd.f32 0.0, %v2330
        %2332 = vmatmul.bf16.gmra.mxu0 %v1047
        %v2333 = vpop.f32.mrf.mxu0
        %v2334 = vadd.f32 0.0, %v2333
        %v2335 = vpop.f32.mrf.mxu0
        %v2336 = vadd.f32 0.0, %v2335
        %2337 = vmatmul.bf16.gmra.mxu0 %v1049
        %v2338 = vpop.f32.mrf.mxu0
        %v2339 = vadd.f32 0.0, %v2338
        %v2340 = vpop.f32.mrf.mxu0
        %v2341 = vadd.f32 0.0, %v2340
        %2342 = vmatmul.bf16.gmra.mxu0 %v1051
        %v2343 = vpop.f32.mrf.mxu0
        %v2344 = vadd.f32 0.0, %v2343
        %v2345 = vpop.f32.mrf.mxu0
        %v2346 = vadd.f32 0.0, %v2345
        %2347 = vmatmul.bf16.gmra.mxu0 %v1053
        %v2348 = vpop.f32.mrf.mxu0
        %v2349 = vadd.f32 0.0, %v2348
        %v2350 = vpop.f32.mrf.mxu0
        %v2351 = vadd.f32 0.0, %v2350
        %2352 = vmatmul.bf16.gmra.mxu0 %v1055
        %v2353 = vpop.f32.mrf.mxu0
        %v2354 = vadd.f32 0.0, %v2353
        %v2355 = vpop.f32.mrf.mxu0
        %v2356 = vadd.f32 0.0, %v2355
        %2357 = vmatmul.bf16.gmra.mxu0 %v1057
        %v2358 = vpop.f32.mrf.mxu0
        %v2359 = vadd.f32 0.0, %v2358
        %v2360 = vpop.f32.mrf.mxu0
        %v2361 = vadd.f32 0.0, %v2360
        %2362 = vmatmul.bf16.gmra.mxu0 %v1059
        %v2363 = vpop.f32.mrf.mxu0
        %v2364 = vadd.f32 0.0, %v2363
        %v2365 = vpop.f32.mrf.mxu0
        %v2366 = vadd.f32 0.0, %v2365
        %2367 = vmatmul.bf16.gmra.mxu0 %v1061
        %v2368 = vpop.f32.mrf.mxu0
        %v2369 = vadd.f32 0.0, %v2368
        %v2370 = vpop.f32.mrf.mxu0
        %v2371 = vadd.f32 0.0, %v2370
        %2372 = vmatmul.bf16.gmra.mxu0 %v1063
        %v2373 = vpop.f32.mrf.mxu0
        %v2374 = vadd.f32 0.0, %v2373
        %v2375 = vpop.f32.mrf.mxu0
        %v2376 = vadd.f32 0.0, %v2375
        %2377 = vmatmul.bf16.gmra.mxu0 %v1065
        %v2378 = vpop.f32.mrf.mxu0
        %v2379 = vadd.f32 0.0, %v2378
        %v2380 = vpop.f32.mrf.mxu0
        %v2381 = vadd.f32 0.0, %v2380
        %2382 = vmatmul.bf16.gmra.mxu0 %v1067
        %v2383 = vpop.f32.mrf.mxu0
        %v2384 = vadd.f32 0.0, %v2383
        %v2385 = vpop.f32.mrf.mxu0
        %v2386 = vadd.f32 0.0, %v2385
        %2387 = vmatmul.bf16.gmra.mxu0 %v1069
        %v2388 = vpop.f32.mrf.mxu0
        %v2389 = vadd.f32 0.0, %v2388
        %v2390 = vpop.f32.mrf.mxu0
        %v2391 = vadd.f32 0.0, %v2390
        %2392 = vmatmul.bf16.gmra.mxu0 %v1071
        %v2393 = vpop.f32.mrf.mxu0
        %v2394 = vadd.f32 0.0, %v2393
        %v2395 = vpop.f32.mrf.mxu0
        %v2396 = vadd.f32 0.0, %v2395
        %2397 = vmatmul.bf16.gmra.mxu0 %v1073
        %v2398 = vpop.f32.mrf.mxu0
        %v2399 = vadd.f32 0.0, %v2398
        %v2400 = vpop.f32.mrf.mxu0
        %v2401 = vadd.f32 0.0, %v2400
        %2402 = vmatmul.bf16.gmra.mxu0 %v1075
        %v2403 = vpop.f32.mrf.mxu0
        %v2404 = vadd.f32 0.0, %v2403
        %v2405 = vpop.f32.mrf.mxu0
        %v2406 = vadd.f32 0.0, %v2405
        %2407 = vmatmul.bf16.gmra.mxu0 %v1077
        %v2408 = vpop.f32.mrf.mxu0
        %v2409 = vadd.f32 0.0, %v2408
        %v2410 = vpop.f32.mrf.mxu0
        %v2411 = vadd.f32 0.0, %v2410
        %2412 = vmatmul.bf16.gmra.mxu0 %v1079
        %v2413 = vpop.f32.mrf.mxu0
        %v2414 = vadd.f32 0.0, %v2413
        %v2415 = vpop.f32.mrf.mxu0
        %v2416 = vadd.f32 0.0, %v2415
        %2417 = vdwg.mxu0
        %2418 = vmatpush.bf16.msra.mxu0 0
        %2419 = vmatpush.bf16.msra.mxu0 0
        %2420 = vmatpush.bf16.msra.mxu0 0
        %2421 = vmatpush.bf16.msra.mxu0 0
        %2422 = vmatpush.bf16.msra.mxu0 0
        %2423 = vmatpush.bf16.msra.mxu0 0
        %2424 = vmatpush.bf16.msra.mxu0 0
        %2425 = vmatpush.bf16.msra.mxu0 %v2281
        %2426 = vmatmul.bf16.gmra.mxu0 %v1248
        %v2427 = vpop.f32.mrf.mxu0
        %v2428 = vadd.f32 %v2299, %v2427
        %v2429 = vpop.f32.mrf.mxu0
        %v2430 = vadd.f32 %v2301, %v2429
        %2431 = vmatmul.bf16.gmra.mxu0 %v1251
        %v2432 = vpop.f32.mrf.mxu0
        %v2433 = vadd.f32 %v2304, %v2432
        %v2434 = vpop.f32.mrf.mxu0
        %v2435 = vadd.f32 %v2306, %v2434
        %2436 = vmatmul.bf16.gmra.mxu0 %v1254
        %v2437 = vpop.f32.mrf.mxu0
        %v2438 = vadd.f32 %v2309, %v2437
        %v2439 = vpop.f32.mrf.mxu0
        %v2440 = vadd.f32 %v2311, %v2439
        %2441 = vmatmul.bf16.gmra.mxu0 %v1257
        %v2442 = vpop.f32.mrf.mxu0
        %v2443 = vadd.f32 %v2314, %v2442
        %v2444 = vpop.f32.mrf.mxu0
        %v2445 = vadd.f32 %v2316, %v2444
        %2446 = vmatmul.bf16.gmra.mxu0 %v1260
        %v2447 = vpop.f32.mrf.mxu0
        %v2448 = vadd.f32 %v2319, %v2447
        %v2449 = vpop.f32.mrf.mxu0
        %v2450 = vadd.f32 %v2321, %v2449
        %2451 = vmatmul.bf16.gmra.mxu0 %v1263
        %v2452 = vpop.f32.mrf.mxu0
        %v2453 = vadd.f32 %v2324, %v2452
        %v2454 = vpop.f32.mrf.mxu0
        %v2455 = vadd.f32 %v2326, %v2454
        %2456 = vmatmul.bf16.gmra.mxu0 %v1266
        %v2457 = vpop.f32.mrf.mxu0
        %v2458 = vadd.f32 %v2329, %v2457
        %v2459 = vpop.f32.mrf.mxu0
        %v2460 = vadd.f32 %v2331, %v2459
        %2461 = vmatmul.bf16.gmra.mxu0 %v1269
        %v2462 = vpop.f32.mrf.mxu0
        %v2463 = vadd.f32 %v2334, %v2462
        %v2464 = vpop.f32.mrf.mxu0
        %v2465 = vadd.f32 %v2336, %v2464
        %2466 = vmatmul.bf16.gmra.mxu0 %v1272
        %v2467 = vpop.f32.mrf.mxu0
        %v2468 = vadd.f32 %v2339, %v2467
        %v2469 = vpop.f32.mrf.mxu0
        %v2470 = vadd.f32 %v2341, %v2469
        %2471 = vmatmul.bf16.gmra.mxu0 %v1275
        %v2472 = vpop.f32.mrf.mxu0
        %v2473 = vadd.f32 %v2344, %v2472
        %v2474 = vpop.f32.mrf.mxu0
        %v2475 = vadd.f32 %v2346, %v2474
        %2476 = vmatmul.bf16.gmra.mxu0 %v1278
        %v2477 = vpop.f32.mrf.mxu0
        %v2478 = vadd.f32 %v2349, %v2477
        %v2479 = vpop.f32.mrf.mxu0
        %v2480 = vadd.f32 %v2351, %v2479
        %2481 = vmatmul.bf16.gmra.mxu0 %v1281
        %v2482 = vpop.f32.mrf.mxu0
        %v2483 = vadd.f32 %v2354, %v2482
        %v2484 = vpop.f32.mrf.mxu0
        %v2485 = vadd.f32 %v2356, %v2484
        %2486 = vmatmul.bf16.gmra.mxu0 %v1284
        %v2487 = vpop.f32.mrf.mxu0
        %v2488 = vadd.f32 %v2359, %v2487
        %v2489 = vpop.f32.mrf.mxu0
        %v2490 = vadd.f32 %v2361, %v2489
        %2491 = vmatmul.bf16.gmra.mxu0 %v1287
        %v2492 = vpop.f32.mrf.mxu0
        %v2493 = vadd.f32 %v2364, %v2492
        %v2494 = vpop.f32.mrf.mxu0
        %v2495 = vadd.f32 %v2366, %v2494
        %2496 = vmatmul.bf16.gmra.mxu0 %v1290
        %v2497 = vpop.f32.mrf.mxu0
        %v2498 = vadd.f32 %v2369, %v2497
        %v2499 = vpop.f32.mrf.mxu0
        %v2500 = vadd.f32 %v2371, %v2499
        %2501 = vmatmul.bf16.gmra.mxu0 %v1293
        %v2502 = vpop.f32.mrf.mxu0
        %v2503 = vadd.f32 %v2374, %v2502
        %v2504 = vpop.f32.mrf.mxu0
        %v2505 = vadd.f32 %v2376, %v2504
        %2506 = vmatmul.bf16.gmra.mxu0 %v1296
        %v2507 = vpop.f32.mrf.mxu0
        %v2508 = vadd.f32 %v2379, %v2507
        %v2509 = vpop.f32.mrf.mxu0
        %v2510 = vadd.f32 %v2381, %v2509
        %2511 = vmatmul.bf16.gmra.mxu0 %v1299
        %v2512 = vpop.f32.mrf.mxu0
        %v2513 = vadd.f32 %v2384, %v2512
        %v2514 = vpop.f32.mrf.mxu0
        %v2515 = vadd.f32 %v2386, %v2514
        %2516 = vmatmul.bf16.gmra.mxu0 %v1302
        %v2517 = vpop.f32.mrf.mxu0
        %v2518 = vadd.f32 %v2389, %v2517
        %v2519 = vpop.f32.mrf.mxu0
        %v2520 = vadd.f32 %v2391, %v2519
        %2521 = vmatmul.bf16.gmra.mxu0 %v1305
        %v2522 = vpop.f32.mrf.mxu0
        %v2523 = vadd.f32 %v2394, %v2522
        %v2524 = vpop.f32.mrf.mxu0
        %v2525 = vadd.f32 %v2396, %v2524
        %2526 = vmatmul.bf16.gmra.mxu0 %v1308
        %v2527 = vpop.f32.mrf.mxu0
        %v2528 = vadd.f32 %v2399, %v2527
        %v2529 = vpop.f32.mrf.mxu0
        %v2530 = vadd.f32 %v2401, %v2529
        %2531 = vmatmul.bf16.gmra.mxu0 %v1311
        %v2532 = vpop.f32.mrf.mxu0
        %v2533 = vadd.f32 %v2404, %v2532
        %v2534 = vpop.f32.mrf.mxu0
        %v2535 = vadd.f32 %v2406, %v2534
        %2536 = vmatmul.bf16.gmra.mxu0 %v1314
        %v2537 = vpop.f32.mrf.mxu0
        %v2538 = vadd.f32 %v2409, %v2537
        %v2539 = vpop.f32.mrf.mxu0
        %v2540 = vadd.f32 %v2411, %v2539
        %2541 = vmatmul.bf16.gmra.mxu0 %v1317
        %v2542 = vpop.f32.mrf.mxu0
        %v2543 = vadd.f32 %v2414, %v2542
        %v2544 = vpop.f32.mrf.mxu0
        %v2545 = vadd.f32 %v2416, %v2544
        %2546 = vdwg.mxu0
        %2547 = vmatpush.bf16.msra.mxu0 %v2251
        %2548 = vmatpush.bf16.msra.mxu0 %v2248
        %2549 = vmatpush.bf16.msra.mxu0 %v2245
        %2550 = vmatpush.bf16.msra.mxu0 %v2242
        %2551 = vmatpush.bf16.msra.mxu0 %v2239
        %2552 = vmatpush.bf16.msra.mxu0 %v2236
        %2553 = vmatpush.bf16.msra.mxu0 %v2233
        %2554 = vmatpush.bf16.msra.mxu0 %v2230
        %2555 = vmatmul.bf16.gmra.mxu0 %v1033
        %v2556 = vpop.f32.mrf.mxu0
        %v2557 = vadd.f32 0.0, %v2556
        %v2558 = vpop.f32.mrf.mxu0
        %v2559 = vadd.f32 0.0, %v2558
        %2560 = vmatmul.bf16.gmra.mxu0 %v1035
        %v2561 = vpop.f32.mrf.mxu0
        %v2562 = vadd.f32 0.0, %v2561
        %v2563 = vpop.f32.mrf.mxu0
        %v2564 = vadd.f32 0.0, %v2563
        %2565 = vmatmul.bf16.gmra.mxu0 %v1037
        %v2566 = vpop.f32.mrf.mxu0
        %v2567 = vadd.f32 0.0, %v2566
        %v2568 = vpop.f32.mrf.mxu0
        %v2569 = vadd.f32 0.0, %v2568
        %2570 = vmatmul.bf16.gmra.mxu0 %v1039
        %v2571 = vpop.f32.mrf.mxu0
        %v2572 = vadd.f32 0.0, %v2571
        %v2573 = vpop.f32.mrf.mxu0
        %v2574 = vadd.f32 0.0, %v2573
        %2575 = vmatmul.bf16.gmra.mxu0 %v1041
        %v2576 = vpop.f32.mrf.mxu0
        %v2577 = vadd.f32 0.0, %v2576
        %v2578 = vpop.f32.mrf.mxu0
        %v2579 = vadd.f32 0.0, %v2578
        %2580 = vmatmul.bf16.gmra.mxu0 %v1043
        %v2581 = vpop.f32.mrf.mxu0
        %v2582 = vadd.f32 0.0, %v2581
        %v2583 = vpop.f32.mrf.mxu0
        %v2584 = vadd.f32 0.0, %v2583
        %2585 = vmatmul.bf16.gmra.mxu0 %v1045
        %v2586 = vpop.f32.mrf.mxu0
        %v2587 = vadd.f32 0.0, %v2586
        %v2588 = vpop.f32.mrf.mxu0
        %v2589 = vadd.f32 0.0, %v2588
        %2590 = vmatmul.bf16.gmra.mxu0 %v1047
        %v2591 = vpop.f32.mrf.mxu0
        %v2592 = vadd.f32 0.0, %v2591
        %v2593 = vpop.f32.mrf.mxu0
        %v2594 = vadd.f32 0.0, %v2593
        %2595 = vmatmul.bf16.gmra.mxu0 %v1049
        %v2596 = vpop.f32.mrf.mxu0
        %v2597 = vadd.f32 0.0, %v2596
        %v2598 = vpop.f32.mrf.mxu0
        %v2599 = vadd.f32 0.0, %v2598
        %2600 = vmatmul.bf16.gmra.mxu0 %v1051
        %v2601 = vpop.f32.mrf.mxu0
        %v2602 = vadd.f32 0.0, %v2601
        %v2603 = vpop.f32.mrf.mxu0
        %v2604 = vadd.f32 0.0, %v2603
        %2605 = vmatmul.bf16.gmra.mxu0 %v1053
        %v2606 = vpop.f32.mrf.mxu0
        %v2607 = vadd.f32 0.0, %v2606
        %v2608 = vpop.f32.mrf.mxu0
        %v2609 = vadd.f32 0.0, %v2608
        %2610 = vmatmul.bf16.gmra.mxu0 %v1055
        %v2611 = vpop.f32.mrf.mxu0
        %v2612 = vadd.f32 0.0, %v2611
        %v2613 = vpop.f32.mrf.mxu0
        %v2614 = vadd.f32 0.0, %v2613
        %2615 = vmatmul.bf16.gmra.mxu0 %v1057
        %v2616 = vpop.f32.mrf.mxu0
        %v2617 = vadd.f32 0.0, %v2616
        %v2618 = vpop.f32.mrf.mxu0
        %v2619 = vadd.f32 0.0, %v2618
        %2620 = vmatmul.bf16.gmra.mxu0 %v1059
        %v2621 = vpop.f32.mrf.mxu0
        %v2622 = vadd.f32 0.0, %v2621
        %v2623 = vpop.f32.mrf.mxu0
        %v2624 = vadd.f32 0.0, %v2623
        %2625 = vmatmul.bf16.gmra.mxu0 %v1061
        %v2626 = vpop.f32.mrf.mxu0
        %v2627 = vadd.f32 0.0, %v2626
        %v2628 = vpop.f32.mrf.mxu0
        %v2629 = vadd.f32 0.0, %v2628
        %2630 = vmatmul.bf16.gmra.mxu0 %v1063
        %v2631 = vpop.f32.mrf.mxu0
        %v2632 = vadd.f32 0.0, %v2631
        %v2633 = vpop.f32.mrf.mxu0
        %v2634 = vadd.f32 0.0, %v2633
        %2635 = vmatmul.bf16.gmra.mxu0 %v1065
        %v2636 = vpop.f32.mrf.mxu0
        %v2637 = vadd.f32 0.0, %v2636
        %v2638 = vpop.f32.mrf.mxu0
        %v2639 = vadd.f32 0.0, %v2638
        %2640 = vmatmul.bf16.gmra.mxu0 %v1067
        %v2641 = vpop.f32.mrf.mxu0
        %v2642 = vadd.f32 0.0, %v2641
        %v2643 = vpop.f32.mrf.mxu0
        %v2644 = vadd.f32 0.0, %v2643
        %2645 = vmatmul.bf16.gmra.mxu0 %v1069
        %v2646 = vpop.f32.mrf.mxu0
        %v2647 = vadd.f32 0.0, %v2646
        %v2648 = vpop.f32.mrf.mxu0
        %v2649 = vadd.f32 0.0, %v2648
        %2650 = vmatmul.bf16.gmra.mxu0 %v1071
        %v2651 = vpop.f32.mrf.mxu0
        %v2652 = vadd.f32 0.0, %v2651
        %v2653 = vpop.f32.mrf.mxu0
        %v2654 = vadd.f32 0.0, %v2653
        %2655 = vmatmul.bf16.gmra.mxu0 %v1073
        %v2656 = vpop.f32.mrf.mxu0
        %v2657 = vadd.f32 0.0, %v2656
        %v2658 = vpop.f32.mrf.mxu0
        %v2659 = vadd.f32 0.0, %v2658
        %2660 = vmatmul.bf16.gmra.mxu0 %v1075
        %v2661 = vpop.f32.mrf.mxu0
        %v2662 = vadd.f32 0.0, %v2661
        %v2663 = vpop.f32.mrf.mxu0
        %v2664 = vadd.f32 0.0, %v2663
        %2665 = vmatmul.bf16.gmra.mxu0 %v1077
        %v2666 = vpop.f32.mrf.mxu0
        %v2667 = vadd.f32 0.0, %v2666
        %v2668 = vpop.f32.mrf.mxu0
        %v2669 = vadd.f32 0.0, %v2668
        %2670 = vmatmul.bf16.gmra.mxu0 %v1079
        %v2671 = vpop.f32.mrf.mxu0
        %v2672 = vadd.f32 0.0, %v2671
        %v2673 = vpop.f32.mrf.mxu0
        %v2674 = vadd.f32 0.0, %v2673
        %2675 = vdwg.mxu0
        %2676 = vmatpush.bf16.msra.mxu0 0
        %2677 = vmatpush.bf16.msra.mxu0 0
        %2678 = vmatpush.bf16.msra.mxu0 0
        %2679 = vmatpush.bf16.msra.mxu0 0
        %2680 = vmatpush.bf16.msra.mxu0 0
        %2681 = vmatpush.bf16.msra.mxu0 0
        %2682 = vmatpush.bf16.msra.mxu0 0
        %2683 = vmatpush.bf16.msra.mxu0 %v2284
        %2684 = vmatmul.bf16.gmra.mxu0 %v1248
        %v2685 = vpop.f32.mrf.mxu0
        %v2686 = vadd.f32 %v2557, %v2685
        %v2687 = vpop.f32.mrf.mxu0
        %v2688 = vadd.f32 %v2559, %v2687
        %2689 = vmatmul.bf16.gmra.mxu0 %v1251
        %v2690 = vpop.f32.mrf.mxu0
        %v2691 = vadd.f32 %v2562, %v2690
        %v2692 = vpop.f32.mrf.mxu0
        %v2693 = vadd.f32 %v2564, %v2692
        %2694 = vmatmul.bf16.gmra.mxu0 %v1254
        %v2695 = vpop.f32.mrf.mxu0
        %v2696 = vadd.f32 %v2567, %v2695
        %v2697 = vpop.f32.mrf.mxu0
        %v2698 = vadd.f32 %v2569, %v2697
        %2699 = vmatmul.bf16.gmra.mxu0 %v1257
        %v2700 = vpop.f32.mrf.mxu0
        %v2701 = vadd.f32 %v2572, %v2700
        %v2702 = vpop.f32.mrf.mxu0
        %v2703 = vadd.f32 %v2574, %v2702
        %2704 = vmatmul.bf16.gmra.mxu0 %v1260
        %v2705 = vpop.f32.mrf.mxu0
        %v2706 = vadd.f32 %v2577, %v2705
        %v2707 = vpop.f32.mrf.mxu0
        %v2708 = vadd.f32 %v2579, %v2707
        %2709 = vmatmul.bf16.gmra.mxu0 %v1263
        %v2710 = vpop.f32.mrf.mxu0
        %v2711 = vadd.f32 %v2582, %v2710
        %v2712 = vpop.f32.mrf.mxu0
        %v2713 = vadd.f32 %v2584, %v2712
        %2714 = vmatmul.bf16.gmra.mxu0 %v1266
        %v2715 = vpop.f32.mrf.mxu0
        %v2716 = vadd.f32 %v2587, %v2715
        %v2717 = vpop.f32.mrf.mxu0
        %v2718 = vadd.f32 %v2589, %v2717
        %2719 = vmatmul.bf16.gmra.mxu0 %v1269
        %v2720 = vpop.f32.mrf.mxu0
        %v2721 = vadd.f32 %v2592, %v2720
        %v2722 = vpop.f32.mrf.mxu0
        %v2723 = vadd.f32 %v2594, %v2722
        %2724 = vmatmul.bf16.gmra.mxu0 %v1272
        %v2725 = vpop.f32.mrf.mxu0
        %v2726 = vadd.f32 %v2597, %v2725
        %v2727 = vpop.f32.mrf.mxu0
        %v2728 = vadd.f32 %v2599, %v2727
        %2729 = vmatmul.bf16.gmra.mxu0 %v1275
        %v2730 = vpop.f32.mrf.mxu0
        %v2731 = vadd.f32 %v2602, %v2730
        %v2732 = vpop.f32.mrf.mxu0
        %v2733 = vadd.f32 %v2604, %v2732
        %2734 = vmatmul.bf16.gmra.mxu0 %v1278
        %v2735 = vpop.f32.mrf.mxu0
        %v2736 = vadd.f32 %v2607, %v2735
        %v2737 = vpop.f32.mrf.mxu0
        %v2738 = vadd.f32 %v2609, %v2737
        %2739 = vmatmul.bf16.gmra.mxu0 %v1281
        %v2740 = vpop.f32.mrf.mxu0
        %v2741 = vadd.f32 %v2612, %v2740
        %v2742 = vpop.f32.mrf.mxu0
        %v2743 = vadd.f32 %v2614, %v2742
        %2744 = vmatmul.bf16.gmra.mxu0 %v1284
        %v2745 = vpop.f32.mrf.mxu0
        %v2746 = vadd.f32 %v2617, %v2745
        %v2747 = vpop.f32.mrf.mxu0
        %v2748 = vadd.f32 %v2619, %v2747
        %2749 = vmatmul.bf16.gmra.mxu0 %v1287
        %v2750 = vpop.f32.mrf.mxu0
        %v2751 = vadd.f32 %v2622, %v2750
        %v2752 = vpop.f32.mrf.mxu0
        %v2753 = vadd.f32 %v2624, %v2752
        %2754 = vmatmul.bf16.gmra.mxu0 %v1290
        %v2755 = vpop.f32.mrf.mxu0
        %v2756 = vadd.f32 %v2627, %v2755
        %v2757 = vpop.f32.mrf.mxu0
        %v2758 = vadd.f32 %v2629, %v2757
        %2759 = vmatmul.bf16.gmra.mxu0 %v1293
        %v2760 = vpop.f32.mrf.mxu0
        %v2761 = vadd.f32 %v2632, %v2760
        %v2762 = vpop.f32.mrf.mxu0
        %v2763 = vadd.f32 %v2634, %v2762
        %2764 = vmatmul.bf16.gmra.mxu0 %v1296
        %v2765 = vpop.f32.mrf.mxu0
        %v2766 = vadd.f32 %v2637, %v2765
        %v2767 = vpop.f32.mrf.mxu0
        %v2768 = vadd.f32 %v2639, %v2767
        %2769 = vmatmul.bf16.gmra.mxu0 %v1299
        %v2770 = vpop.f32.mrf.mxu0
        %v2771 = vadd.f32 %v2642, %v2770
        %v2772 = vpop.f32.mrf.mxu0
        %v2773 = vadd.f32 %v2644, %v2772
        %2774 = vmatmul.bf16.gmra.mxu0 %v1302
        %v2775 = vpop.f32.mrf.mxu0
        %v2776 = vadd.f32 %v2647, %v2775
        %v2777 = vpop.f32.mrf.mxu0
        %v2778 = vadd.f32 %v2649, %v2777
        %2779 = vmatmul.bf16.gmra.mxu0 %v1305
        %v2780 = vpop.f32.mrf.mxu0
        %v2781 = vadd.f32 %v2652, %v2780
        %v2782 = vpop.f32.mrf.mxu0
        %v2783 = vadd.f32 %v2654, %v2782
        %2784 = vmatmul.bf16.gmra.mxu0 %v1308
        %v2785 = vpop.f32.mrf.mxu0
        %v2786 = vadd.f32 %v2657, %v2785
        %v2787 = vpop.f32.mrf.mxu0
        %v2788 = vadd.f32 %v2659, %v2787
        %2789 = vmatmul.bf16.gmra.mxu0 %v1311
        %v2790 = vpop.f32.mrf.mxu0
        %v2791 = vadd.f32 %v2662, %v2790
        %v2792 = vpop.f32.mrf.mxu0
        %v2793 = vadd.f32 %v2664, %v2792
        %2794 = vmatmul.bf16.gmra.mxu0 %v1314
        %v2795 = vpop.f32.mrf.mxu0
        %v2796 = vadd.f32 %v2667, %v2795
        %v2797 = vpop.f32.mrf.mxu0
        %v2798 = vadd.f32 %v2669, %v2797
        %2799 = vmatmul.bf16.gmra.mxu0 %v1317
        %v2800 = vpop.f32.mrf.mxu0
        %v2801 = vadd.f32 %v2672, %v2800
        %v2802 = vpop.f32.mrf.mxu0
        %v2803 = vadd.f32 %v2674, %v2802
        %2804 = vdwg.mxu0
        %2805 = vmatpush.bf16.msra.mxu0 %v2252
        %2806 = vmatpush.bf16.msra.mxu0 %v2249
        %2807 = vmatpush.bf16.msra.mxu0 %v2246
        %2808 = vmatpush.bf16.msra.mxu0 %v2243
        %2809 = vmatpush.bf16.msra.mxu0 %v2240
        %2810 = vmatpush.bf16.msra.mxu0 %v2237
        %2811 = vmatpush.bf16.msra.mxu0 %v2234
        %2812 = vmatpush.bf16.msra.mxu0 %v2231
        %2813 = vmatmul.bf16.gmra.mxu0 %v1033
        %v2814 = vpop.f32.mrf.mxu0
        %v2815 = vadd.f32 0.0, %v2814
        %v2816 = vpop.f32.mrf.mxu0
        %v2817 = vadd.f32 0.0, %v2816
        %2818 = vmatmul.bf16.gmra.mxu0 %v1035
        %v2819 = vpop.f32.mrf.mxu0
        %v2820 = vadd.f32 0.0, %v2819
        %v2821 = vpop.f32.mrf.mxu0
        %v2822 = vadd.f32 0.0, %v2821
        %2823 = vmatmul.bf16.gmra.mxu0 %v1037
        %v2824 = vpop.f32.mrf.mxu0
        %v2825 = vadd.f32 0.0, %v2824
        %v2826 = vpop.f32.mrf.mxu0
        %v2827 = vadd.f32 0.0, %v2826
        %2828 = vmatmul.bf16.gmra.mxu0 %v1039
        %v2829 = vpop.f32.mrf.mxu0
        %v2830 = vadd.f32 0.0, %v2829
        %v2831 = vpop.f32.mrf.mxu0
        %v2832 = vadd.f32 0.0, %v2831
        %2833 = vmatmul.bf16.gmra.mxu0 %v1041
        %v2834 = vpop.f32.mrf.mxu0
        %v2835 = vadd.f32 0.0, %v2834
        %v2836 = vpop.f32.mrf.mxu0
        %v2837 = vadd.f32 0.0, %v2836
        %2838 = vmatmul.bf16.gmra.mxu0 %v1043
        %v2839 = vpop.f32.mrf.mxu0
        %v2840 = vadd.f32 0.0, %v2839
        %v2841 = vpop.f32.mrf.mxu0
        %v2842 = vadd.f32 0.0, %v2841
        %2843 = vmatmul.bf16.gmra.mxu0 %v1045
        %v2844 = vpop.f32.mrf.mxu0
        %v2845 = vadd.f32 0.0, %v2844
        %v2846 = vpop.f32.mrf.mxu0
        %v2847 = vadd.f32 0.0, %v2846
        %2848 = vmatmul.bf16.gmra.mxu0 %v1047
        %v2849 = vpop.f32.mrf.mxu0
        %v2850 = vadd.f32 0.0, %v2849
        %v2851 = vpop.f32.mrf.mxu0
        %v2852 = vadd.f32 0.0, %v2851
        %2853 = vmatmul.bf16.gmra.mxu0 %v1049
        %v2854 = vpop.f32.mrf.mxu0
        %v2855 = vadd.f32 0.0, %v2854
        %v2856 = vpop.f32.mrf.mxu0
        %v2857 = vadd.f32 0.0, %v2856
        %2858 = vmatmul.bf16.gmra.mxu0 %v1051
        %v2859 = vpop.f32.mrf.mxu0
        %v2860 = vadd.f32 0.0, %v2859
        %v2861 = vpop.f32.mrf.mxu0
        %v2862 = vadd.f32 0.0, %v2861
        %2863 = vmatmul.bf16.gmra.mxu0 %v1053
        %v2864 = vpop.f32.mrf.mxu0
        %v2865 = vadd.f32 0.0, %v2864
        %v2866 = vpop.f32.mrf.mxu0
        %v2867 = vadd.f32 0.0, %v2866
        %2868 = vmatmul.bf16.gmra.mxu0 %v1055
        %v2869 = vpop.f32.mrf.mxu0
        %v2870 = vadd.f32 0.0, %v2869
        %v2871 = vpop.f32.mrf.mxu0
        %v2872 = vadd.f32 0.0, %v2871
        %2873 = vmatmul.bf16.gmra.mxu0 %v1057
        %v2874 = vpop.f32.mrf.mxu0
        %v2875 = vadd.f32 0.0, %v2874
        %v2876 = vpop.f32.mrf.mxu0
        %v2877 = vadd.f32 0.0, %v2876
        %2878 = vmatmul.bf16.gmra.mxu0 %v1059
        %v2879 = vpop.f32.mrf.mxu0
        %v2880 = vadd.f32 0.0, %v2879
        %v2881 = vpop.f32.mrf.mxu0
        %v2882 = vadd.f32 0.0, %v2881
        %2883 = vmatmul.bf16.gmra.mxu0 %v1061
        %v2884 = vpop.f32.mrf.mxu0
        %v2885 = vadd.f32 0.0, %v2884
        %v2886 = vpop.f32.mrf.mxu0
        %v2887 = vadd.f32 0.0, %v2886
        %2888 = vmatmul.bf16.gmra.mxu0 %v1063
        %v2889 = vpop.f32.mrf.mxu0
        %v2890 = vadd.f32 0.0, %v2889
        %v2891 = vpop.f32.mrf.mxu0
        %v2892 = vadd.f32 0.0, %v2891
        %2893 = vmatmul.bf16.gmra.mxu0 %v1065
        %v2894 = vpop.f32.mrf.mxu0
        %v2895 = vadd.f32 0.0, %v2894
        %v2896 = vpop.f32.mrf.mxu0
        %v2897 = vadd.f32 0.0, %v2896
        %2898 = vmatmul.bf16.gmra.mxu0 %v1067
        %v2899 = vpop.f32.mrf.mxu0
        %v2900 = vadd.f32 0.0, %v2899
        %v2901 = vpop.f32.mrf.mxu0
        %v2902 = vadd.f32 0.0, %v2901
        %2903 = vmatmul.bf16.gmra.mxu0 %v1069
        %v2904 = vpop.f32.mrf.mxu0
        %v2905 = vadd.f32 0.0, %v2904
        %v2906 = vpop.f32.mrf.mxu0
        %v2907 = vadd.f32 0.0, %v2906
        %2908 = vmatmul.bf16.gmra.mxu0 %v1071
        %v2909 = vpop.f32.mrf.mxu0
        %v2910 = vadd.f32 0.0, %v2909
        %v2911 = vpop.f32.mrf.mxu0
        %v2912 = vadd.f32 0.0, %v2911
        %2913 = vmatmul.bf16.gmra.mxu0 %v1073
        %v2914 = vpop.f32.mrf.mxu0
        %v2915 = vadd.f32 0.0, %v2914
        %v2916 = vpop.f32.mrf.mxu0
        %v2917 = vadd.f32 0.0, %v2916
        %2918 = vmatmul.bf16.gmra.mxu0 %v1075
        %v2919 = vpop.f32.mrf.mxu0
        %v2920 = vadd.f32 0.0, %v2919
        %v2921 = vpop.f32.mrf.mxu0
        %v2922 = vadd.f32 0.0, %v2921
        %2923 = vmatmul.bf16.gmra.mxu0 %v1077
        %v2924 = vpop.f32.mrf.mxu0
        %v2925 = vadd.f32 0.0, %v2924
        %v2926 = vpop.f32.mrf.mxu0
        %v2927 = vadd.f32 0.0, %v2926
        %2928 = vmatmul.bf16.gmra.mxu0 %v1079
        %v2929 = vpop.f32.mrf.mxu0
        %v2930 = vadd.f32 0.0, %v2929
        %v2931 = vpop.f32.mrf.mxu0
        %v2932 = vadd.f32 0.0, %v2931
        %2933 = vdwg.mxu0
        %2934 = vmatpush.bf16.msra.mxu0 0
        %2935 = vmatpush.bf16.msra.mxu0 0
        %2936 = vmatpush.bf16.msra.mxu0 0
        %2937 = vmatpush.bf16.msra.mxu0 0
        %2938 = vmatpush.bf16.msra.mxu0 0
        %2939 = vmatpush.bf16.msra.mxu0 0
        %2940 = vmatpush.bf16.msra.mxu0 0
        %2941 = vmatpush.bf16.msra.mxu0 %v2287
        %2942 = vmatmul.bf16.gmra.mxu0 %v1248
        %v2943 = vpop.f32.mrf.mxu0
        %v2944 = vadd.f32 %v2815, %v2943
        %v2945 = vpop.f32.mrf.mxu0
        %v2946 = vadd.f32 %v2817, %v2945
        %2947 = vmatmul.bf16.gmra.mxu0 %v1251
        %v2948 = vpop.f32.mrf.mxu0
        %v2949 = vadd.f32 %v2820, %v2948
        %v2950 = vpop.f32.mrf.mxu0
        %v2951 = vadd.f32 %v2822, %v2950
        %2952 = vmatmul.bf16.gmra.mxu0 %v1254
        %v2953 = vpop.f32.mrf.mxu0
        %v2954 = vadd.f32 %v2825, %v2953
        %v2955 = vpop.f32.mrf.mxu0
        %v2956 = vadd.f32 %v2827, %v2955
        %2957 = vmatmul.bf16.gmra.mxu0 %v1257
        %v2958 = vpop.f32.mrf.mxu0
        %v2959 = vadd.f32 %v2830, %v2958
        %v2960 = vpop.f32.mrf.mxu0
        %v2961 = vadd.f32 %v2832, %v2960
        %2962 = vmatmul.bf16.gmra.mxu0 %v1260
        %v2963 = vpop.f32.mrf.mxu0
        %v2964 = vadd.f32 %v2835, %v2963
        %v2965 = vpop.f32.mrf.mxu0
        %v2966 = vadd.f32 %v2837, %v2965
        %2967 = vmatmul.bf16.gmra.mxu0 %v1263
        %v2968 = vpop.f32.mrf.mxu0
        %v2969 = vadd.f32 %v2840, %v2968
        %v2970 = vpop.f32.mrf.mxu0
        %v2971 = vadd.f32 %v2842, %v2970
        %2972 = vmatmul.bf16.gmra.mxu0 %v1266
        %v2973 = vpop.f32.mrf.mxu0
        %v2974 = vadd.f32 %v2845, %v2973
        %v2975 = vpop.f32.mrf.mxu0
        %v2976 = vadd.f32 %v2847, %v2975
        %2977 = vmatmul.bf16.gmra.mxu0 %v1269
        %v2978 = vpop.f32.mrf.mxu0
        %v2979 = vadd.f32 %v2850, %v2978
        %v2980 = vpop.f32.mrf.mxu0
        %v2981 = vadd.f32 %v2852, %v2980
        %2982 = vmatmul.bf16.gmra.mxu0 %v1272
        %v2983 = vpop.f32.mrf.mxu0
        %v2984 = vadd.f32 %v2855, %v2983
        %v2985 = vpop.f32.mrf.mxu0
        %v2986 = vadd.f32 %v2857, %v2985
        %2987 = vmatmul.bf16.gmra.mxu0 %v1275
        %v2988 = vpop.f32.mrf.mxu0
        %v2989 = vadd.f32 %v2860, %v2988
        %v2990 = vpop.f32.mrf.mxu0
        %v2991 = vadd.f32 %v2862, %v2990
        %2992 = vmatmul.bf16.gmra.mxu0 %v1278
        %v2993 = vpop.f32.mrf.mxu0
        %v2994 = vadd.f32 %v2865, %v2993
        %v2995 = vpop.f32.mrf.mxu0
        %v2996 = vadd.f32 %v2867, %v2995
        %2997 = vmatmul.bf16.gmra.mxu0 %v1281
        %v2998 = vpop.f32.mrf.mxu0
        %v2999 = vadd.f32 %v2870, %v2998
        %v3000 = vpop.f32.mrf.mxu0
        %v3001 = vadd.f32 %v2872, %v3000
        %3002 = vmatmul.bf16.gmra.mxu0 %v1284
        %v3003 = vpop.f32.mrf.mxu0
        %v3004 = vadd.f32 %v2875, %v3003
        %v3005 = vpop.f32.mrf.mxu0
        %v3006 = vadd.f32 %v2877, %v3005
        %3007 = vmatmul.bf16.gmra.mxu0 %v1287
        %v3008 = vpop.f32.mrf.mxu0
        %v3009 = vadd.f32 %v2880, %v3008
        %v3010 = vpop.f32.mrf.mxu0
        %v3011 = vadd.f32 %v2882, %v3010
        %3012 = vmatmul.bf16.gmra.mxu0 %v1290
        %v3013 = vpop.f32.mrf.mxu0
        %v3014 = vadd.f32 %v2885, %v3013
        %v3015 = vpop.f32.mrf.mxu0
        %v3016 = vadd.f32 %v2887, %v3015
        %3017 = vmatmul.bf16.gmra.mxu0 %v1293
        %v3018 = vpop.f32.mrf.mxu0
        %v3019 = vadd.f32 %v2890, %v3018
        %v3020 = vpop.f32.mrf.mxu0
        %v3021 = vadd.f32 %v2892, %v3020
        %3022 = vmatmul.bf16.gmra.mxu0 %v1296
        %v3023 = vpop.f32.mrf.mxu0
        %v3024 = vadd.f32 %v2895, %v3023
        %v3025 = vpop.f32.mrf.mxu0
        %v3026 = vadd.f32 %v2897, %v3025
        %3027 = vmatmul.bf16.gmra.mxu0 %v1299
        %v3028 = vpop.f32.mrf.mxu0
        %v3029 = vadd.f32 %v2900, %v3028
        %v3030 = vpop.f32.mrf.mxu0
        %v3031 = vadd.f32 %v2902, %v3030
        %3032 = vmatmul.bf16.gmra.mxu0 %v1302
        %v3033 = vpop.f32.mrf.mxu0
        %v3034 = vadd.f32 %v2905, %v3033
        %v3035 = vpop.f32.mrf.mxu0
        %v3036 = vadd.f32 %v2907, %v3035
        %3037 = vmatmul.bf16.gmra.mxu0 %v1305
        %v3038 = vpop.f32.mrf.mxu0
        %v3039 = vadd.f32 %v2910, %v3038
        %v3040 = vpop.f32.mrf.mxu0
        %v3041 = vadd.f32 %v2912, %v3040
        %3042 = vmatmul.bf16.gmra.mxu0 %v1308
        %v3043 = vpop.f32.mrf.mxu0
        %v3044 = vadd.f32 %v2915, %v3043
        %v3045 = vpop.f32.mrf.mxu0
        %v3046 = vadd.f32 %v2917, %v3045
        %3047 = vmatmul.bf16.gmra.mxu0 %v1311
        %v3048 = vpop.f32.mrf.mxu0
        %v3049 = vadd.f32 %v2920, %v3048
        %v3050 = vpop.f32.mrf.mxu0
        %v3051 = vadd.f32 %v2922, %v3050
        %3052 = vmatmul.bf16.gmra.mxu0 %v1314
        %v3053 = vpop.f32.mrf.mxu0
        %v3054 = vadd.f32 %v2925, %v3053
        %v3055 = vpop.f32.mrf.mxu0
        %v3056 = vadd.f32 %v2927, %v3055
        %3057 = vmatmul.bf16.gmra.mxu0 %v1317
        %v3058 = vpop.f32.mrf.mxu0
        %v3059 = vadd.f32 %v2930, %v3058
        %v3060 = vpop.f32.mrf.mxu0
        %v3061 = vadd.f32 %v2932, %v3060
        %3062 = vdwg.mxu0
        %v3063 = vmax.f32 %v1468, %v2428
        %v3064 = vmax.f32 %v1726, %v2686
        %v3065 = vmax.f32 %v1984, %v2944
        %v3066 = vmax.f32 %v1470, %v2430
        %v3067 = vmax.f32 %v1728, %v2688
        %v3068 = vmax.f32 %v1986, %v2946
        %v3069 = vmax.f32 %v1473, %v2433
        %v3070 = vmax.f32 %v1731, %v2691
        %v3071 = vmax.f32 %v1989, %v2949
        %v3072 = vmax.f32 %v1475, %v2435
        %v3073 = vmax.f32 %v1733, %v2693
        %v3074 = vmax.f32 %v1991, %v2951
        %v3075 = vmax.f32 %v1478, %v2438
        %v3076 = vmax.f32 %v1736, %v2696
        %v3077 = vmax.f32 %v1994, %v2954
        %v3078 = vmax.f32 %v1480, %v2440
        %v3079 = vmax.f32 %v1738, %v2698
        %v3080 = vmax.f32 %v1996, %v2956
        %v3081 = vmax.f32 %v1483, %v2443
        %v3082 = vmax.f32 %v1741, %v2701
        %v3083 = vmax.f32 %v1999, %v2959
        %v3084 = vmax.f32 %v1485, %v2445
        %v3085 = vmax.f32 %v1743, %v2703
        %v3086 = vmax.f32 %v2001, %v2961
        %v3087 = vmax.f32 %v1488, %v2448
        %v3088 = vmax.f32 %v1746, %v2706
        %v3089 = vmax.f32 %v2004, %v2964
        %v3090 = vmax.f32 %v1490, %v2450
        %v3091 = vmax.f32 %v1748, %v2708
        %v3092 = vmax.f32 %v2006, %v2966
        %v3093 = vmax.f32 %v1493, %v2453
        %v3094 = vmax.f32 %v1751, %v2711
        %v3095 = vmax.f32 %v2009, %v2969
        %v3096 = vmax.f32 %v1495, %v2455
        %v3097 = vmax.f32 %v1753, %v2713
        %v3098 = vmax.f32 %v2011, %v2971
        %v3099 = vmax.f32 %v1498, %v2458
        %v3100 = vmax.f32 %v1756, %v2716
        %v3101 = vmax.f32 %v2014, %v2974
        %v3102 = vmax.f32 %v1500, %v2460
        %v3103 = vmax.f32 %v1758, %v2718
        %v3104 = vmax.f32 %v2016, %v2976
        %v3105 = vmax.f32 %v1503, %v2463
        %v3106 = vmax.f32 %v1761, %v2721
        %v3107 = vmax.f32 %v2019, %v2979
        %v3108 = vmax.f32 %v1505, %v2465
        %v3109 = vmax.f32 %v1763, %v2723
        %v3110 = vmax.f32 %v2021, %v2981
        %v3111 = vmax.f32 %v1508, %v2468
        %v3112 = vmax.f32 %v1766, %v2726
        %v3113 = vmax.f32 %v2024, %v2984
        %v3114 = vmax.f32 %v1510, %v2470
        %v3115 = vmax.f32 %v1768, %v2728
        %v3116 = vmax.f32 %v2026, %v2986
        %v3117 = vmax.f32 %v1513, %v2473
        %v3118 = vmax.f32 %v1771, %v2731
        %v3119 = vmax.f32 %v2029, %v2989
        %v3120 = vmax.f32 %v1515, %v2475
        %v3121 = vmax.f32 %v1773, %v2733
        %v3122 = vmax.f32 %v2031, %v2991
        %v3123 = vmax.f32 %v1518, %v2478
        %v3124 = vmax.f32 %v1776, %v2736
        %v3125 = vmax.f32 %v2034, %v2994
        %v3126 = vmax.f32 %v1520, %v2480
        %v3127 = vmax.f32 %v1778, %v2738
        %v3128 = vmax.f32 %v2036, %v2996
        %v3129 = vmax.f32 %v1523, %v2483
        %v3130 = vmax.f32 %v1781, %v2741
        %v3131 = vmax.f32 %v2039, %v2999
        %v3132 = vmax.f32 %v1525, %v2485
        %v3133 = vmax.f32 %v1783, %v2743
        %v3134 = vmax.f32 %v2041, %v3001
        %v3135 = vmax.f32 %v1528, %v2488
        %v3136 = vmax.f32 %v1786, %v2746
        %v3137 = vmax.f32 %v2044, %v3004
        %v3138 = vmax.f32 %v1530, %v2490
        %v3139 = vmax.f32 %v1788, %v2748
        %v3140 = vmax.f32 %v2046, %v3006
        %v3141 = vmax.f32 %v1533, %v2493
        %v3142 = vmax.f32 %v1791, %v2751
        %v3143 = vmax.f32 %v2049, %v3009
        %v3144 = vmax.f32 %v1535, %v2495
        %v3145 = vmax.f32 %v1793, %v2753
        %v3146 = vmax.f32 %v2051, %v3011
        %v3147 = vmax.f32 %v1538, %v2498
        %v3148 = vmax.f32 %v1796, %v2756
        %v3149 = vmax.f32 %v2054, %v3014
        %v3150 = vmax.f32 %v1540, %v2500
        %v3151 = vmax.f32 %v1798, %v2758
        %v3152 = vmax.f32 %v2056, %v3016
        %v3153 = vmax.f32 %v1543, %v2503
        %v3154 = vmax.f32 %v1801, %v2761
        %v3155 = vmax.f32 %v2059, %v3019
        %v3156 = vmax.f32 %v1545, %v2505
        %v3157 = vmax.f32 %v1803, %v2763
        %v3158 = vmax.f32 %v2061, %v3021
        %v3159 = vmax.f32 %v1548, %v2508
        %v3160 = vmax.f32 %v1806, %v2766
        %v3161 = vmax.f32 %v2064, %v3024
        %v3162 = vmax.f32 %v1550, %v2510
        %v3163 = vmax.f32 %v1808, %v2768
        %v3164 = vmax.f32 %v2066, %v3026
        %v3165 = vmax.f32 %v1553, %v2513
        %v3166 = vmax.f32 %v1811, %v2771
        %v3167 = vmax.f32 %v2069, %v3029
        %v3168 = vmax.f32 %v1555, %v2515
        %v3169 = vmax.f32 %v1813, %v2773
        %v3170 = vmax.f32 %v2071, %v3031
        %v3171 = vmax.f32 %v1558, %v2518
        %v3172 = vmax.f32 %v1816, %v2776
        %v3173 = vmax.f32 %v2074, %v3034
        %v3174 = vmax.f32 %v1560, %v2520
        %v3175 = vmax.f32 %v1818, %v2778
        %v3176 = vmax.f32 %v2076, %v3036
        %v3177 = vmax.f32 %v1563, %v2523
        %v3178 = vmax.f32 %v1821, %v2781
        %v3179 = vmax.f32 %v2079, %v3039
        %v3180 = vmax.f32 %v1565, %v2525
        %v3181 = vmax.f32 %v1823, %v2783
        %v3182 = vmax.f32 %v2081, %v3041
        %v3183 = vmax.f32 %v1568, %v2528
        %v3184 = vmax.f32 %v1826, %v2786
        %v3185 = vmax.f32 %v2084, %v3044
        %v3186 = vmax.f32 %v1570, %v2530
        %v3187 = vmax.f32 %v1828, %v2788
        %v3188 = vmax.f32 %v2086, %v3046
        %v3189 = vmax.f32 %v1573, %v2533
        %v3190 = vmax.f32 %v1831, %v2791
        %v3191 = vmax.f32 %v2089, %v3049
        %v3192 = vmax.f32 %v1575, %v2535
        %v3193 = vmax.f32 %v1833, %v2793
        %v3194 = vmax.f32 %v2091, %v3051
        %v3195 = vmax.f32 %v1578, %v2538
        %v3196 = vmax.f32 %v1836, %v2796
        %v3197 = vmax.f32 %v2094, %v3054
        %v3198 = vmax.f32 %v1580, %v2540
        %v3199 = vmax.f32 %v1838, %v2798
        %v3200 = vmax.f32 %v2096, %v3056
        %v3201 = vmax.f32 %v1583, %v2543
        %v3202 = vmax.f32 %v1841, %v2801
        %v3203 = vmax.f32 %v2099, %v3059
        %v3204 = vmax.f32 %v1585, %v2545
        %v3205 = vmax.f32 %v1843, %v2803
        %v3206 = vmax.f32 %v2101, %v3061
        %s3207 = scalar_lea.vmem %s761, 384 [#allocation2]
        %v3208 = vld [vmem:[%s3207] sm:$0xff]
        %v3209 = vld [vmem:[%s3207 + $0x8] sm:$0xff]
        %v3210 = vld [vmem:[%s3207 + $0x10] sm:$0xff]
        %v3211 = vld [vmem:[%s3207 + $0x18] sm:$0xff]
        %v3212 = vld [vmem:[%s3207 + $0x20] sm:$0xff]
        %v3213 = vld [vmem:[%s3207 + $0x28] sm:$0xff]
        %v3214 = vld [vmem:[%s3207 + $0x30] sm:$0xff]
        %v3215 = vld [vmem:[%s3207 + $0x38] sm:$0xff]
        %v3216 = vld [vmem:[%s3207 + $0x40] sm:$0xff]
        %v3217 = vld [vmem:[%s3207 + $0x48] sm:$0xff]
        %v3218 = vld [vmem:[%s3207 + $0x50] sm:$0xff]
        %v3219 = vld [vmem:[%s3207 + $0x58] sm:$0xff]
        %v3220 = vld [vmem:[%s3207 + $0x60] sm:$0xff]
        %v3221 = vld [vmem:[%s3207 + $0x68] sm:$0xff]
        %v3222 = vld [vmem:[%s3207 + $0x70] sm:$0xff]
        %v3223 = vld [vmem:[%s3207 + $0x78] sm:$0xff]
        %v3224 = vld [vmem:[%s3207 + $0x80] sm:$0xff]
        %v3225 = vld [vmem:[%s3207 + $0x88] sm:$0xff]
        %v3226 = vld [vmem:[%s3207 + $0x90] sm:$0xff]
        %v3227 = vld [vmem:[%s3207 + $0x98] sm:$0xff]
        %v3228 = vld [vmem:[%s3207 + $0xa0] sm:$0xff]
        %v3229 = vld [vmem:[%s3207 + $0xa8] sm:$0xff]
        %v3230 = vld [vmem:[%s3207 + $0xb0] sm:$0xff]
        %v3231 = vld [vmem:[%s3207 + $0xb8] sm:$0xff]
        %v3232 = vld [vmem:[%s3207 + $0xc0] sm:$0xff]
        %v3233 = vld [vmem:[%s3207 + $0xc8] sm:$0xff]
        %v3234 = vld [vmem:[%s3207 + $0xd0] sm:$0xff]
        %v3235 = vld [vmem:[%s3207 + $0xd8] sm:$0xff]
        %v3236 = vld [vmem:[%s3207 + $0xe0] sm:$0xff]
        %v3237 = vld [vmem:[%s3207 + $0xe8] sm:$0xff]
        %v3238 = vld [vmem:[%s3207 + $0xf0] sm:$0xff]
        %v3239 = vld [vmem:[%s3207 + $0xf8] sm:$0xff]
        %v3240 = vld [vmem:[%s3207 + $0x100] sm:$0xff]
        %v3241 = vld [vmem:[%s3207 + $0x108] sm:$0xff]
        %v3242 = vld [vmem:[%s3207 + $0x110] sm:$0xff]
        %v3243 = vld [vmem:[%s3207 + $0x118] sm:$0xff]
        %v3244 = vld [vmem:[%s3207 + $0x120] sm:$0xff]
        %v3245 = vld [vmem:[%s3207 + $0x128] sm:$0xff]
        %v3246 = vld [vmem:[%s3207 + $0x130] sm:$0xff]
        %v3247 = vld [vmem:[%s3207 + $0x138] sm:$0xff]
        %v3248 = vld [vmem:[%s3207 + $0x140] sm:$0xff]
        %v3249 = vld [vmem:[%s3207 + $0x148] sm:$0xff]
        %v3250 = vld [vmem:[%s3207 + $0x150] sm:$0xff]
        %v3251 = vld [vmem:[%s3207 + $0x158] sm:$0xff]
        %v3252 = vld [vmem:[%s3207 + $0x160] sm:$0xff]
        %v3253 = vld [vmem:[%s3207 + $0x168] sm:$0xff]
        %v3254 = vld [vmem:[%s3207 + $0x170] sm:$0xff]
        %v3255 = vld [vmem:[%s3207 + $0x178] sm:$0xff]
        %v3304 = vunpack.c.l.b16 %v3208
        %v3305 = vunpack.c.h.b16 %v3208
        %v3306 = vunpack.c.l.b16 %v3209
        %v3307 = vunpack.c.h.b16 %v3209
        %v3308 = vunpack.c.l.b16 %v3210
        %v3309 = vunpack.c.h.b16 %v3210
        %v3310 = vunpack.c.l.b16 %v3211
        %v3311 = vunpack.c.h.b16 %v3211
        %v3312 = vunpack.c.l.b16 %v3212
        %v3313 = vunpack.c.h.b16 %v3212
        %v3314 = vunpack.c.l.b16 %v3213
        %v3315 = vunpack.c.h.b16 %v3213
        %v3316 = vunpack.c.l.b16 %v3214
        %v3317 = vunpack.c.h.b16 %v3214
        %v3318 = vunpack.c.l.b16 %v3215
        %v3319 = vunpack.c.h.b16 %v3215
        %v3320 = vunpack.c.l.b16 %v3216
        %v3321 = vunpack.c.h.b16 %v3216
        %v3322 = vunpack.c.l.b16 %v3217
        %v3323 = vunpack.c.h.b16 %v3217
        %v3324 = vunpack.c.l.b16 %v3218
        %v3325 = vunpack.c.h.b16 %v3218
        %v3326 = vunpack.c.l.b16 %v3219
        %v3327 = vunpack.c.h.b16 %v3219
        %v3328 = vunpack.c.l.b16 %v3220
        %v3329 = vunpack.c.h.b16 %v3220
        %v3330 = vunpack.c.l.b16 %v3221
        %v3331 = vunpack.c.h.b16 %v3221
        %v3332 = vunpack.c.l.b16 %v3222
        %v3333 = vunpack.c.h.b16 %v3222
        %v3334 = vunpack.c.l.b16 %v3223
        %v3335 = vunpack.c.h.b16 %v3223
        %v3336 = vunpack.c.l.b16 %v3224
        %v3337 = vunpack.c.h.b16 %v3224
        %v3338 = vunpack.c.l.b16 %v3225
        %v3339 = vunpack.c.h.b16 %v3225
        %v3340 = vunpack.c.l.b16 %v3226
        %v3341 = vunpack.c.h.b16 %v3226
        %v3342 = vunpack.c.l.b16 %v3227
        %v3343 = vunpack.c.h.b16 %v3227
        %v3344 = vunpack.c.l.b16 %v3228
        %v3345 = vunpack.c.h.b16 %v3228
        %v3346 = vunpack.c.l.b16 %v3229
        %v3347 = vunpack.c.h.b16 %v3229
        %v3348 = vunpack.c.l.b16 %v3230
        %v3349 = vunpack.c.h.b16 %v3230
        %v3350 = vunpack.c.l.b16 %v3231
        %v3351 = vunpack.c.h.b16 %v3231
        %v3352 = vunpack.c.l.b16 %v3232
        %v3353 = vunpack.c.h.b16 %v3232
        %v3354 = vunpack.c.l.b16 %v3233
        %v3355 = vunpack.c.h.b16 %v3233
        %v3356 = vunpack.c.l.b16 %v3234
        %v3357 = vunpack.c.h.b16 %v3234
        %v3358 = vunpack.c.l.b16 %v3235
        %v3359 = vunpack.c.h.b16 %v3235
        %v3360 = vunpack.c.l.b16 %v3236
        %v3361 = vunpack.c.h.b16 %v3236
        %v3362 = vunpack.c.l.b16 %v3237
        %v3363 = vunpack.c.h.b16 %v3237
        %v3364 = vunpack.c.l.b16 %v3238
        %v3365 = vunpack.c.h.b16 %v3238
        %v3366 = vunpack.c.l.b16 %v3239
        %v3367 = vunpack.c.h.b16 %v3239
        %v3368 = vunpack.c.l.b16 %v3240
        %v3369 = vunpack.c.h.b16 %v3240
        %v3370 = vunpack.c.l.b16 %v3241
        %v3371 = vunpack.c.h.b16 %v3241
        %v3372 = vunpack.c.l.b16 %v3242
        %v3373 = vunpack.c.h.b16 %v3242
        %v3374 = vunpack.c.l.b16 %v3243
        %v3375 = vunpack.c.h.b16 %v3243
        %v3376 = vunpack.c.l.b16 %v3244
        %v3377 = vunpack.c.h.b16 %v3244
        %v3378 = vunpack.c.l.b16 %v3245
        %v3379 = vunpack.c.h.b16 %v3245
        %v3380 = vunpack.c.l.b16 %v3246
        %v3381 = vunpack.c.h.b16 %v3246
        %v3382 = vunpack.c.l.b16 %v3247
        %v3383 = vunpack.c.h.b16 %v3247
        %v3384 = vunpack.c.l.b16 %v3248
        %v3385 = vunpack.c.h.b16 %v3248
        %v3386 = vunpack.c.l.b16 %v3249
        %v3387 = vunpack.c.h.b16 %v3249
        %v3388 = vunpack.c.l.b16 %v3250
        %v3389 = vunpack.c.h.b16 %v3250
        %v3390 = vunpack.c.l.b16 %v3251
        %v3391 = vunpack.c.h.b16 %v3251
        %v3392 = vunpack.c.l.b16 %v3252
        %v3393 = vunpack.c.h.b16 %v3252
        %v3394 = vunpack.c.l.b16 %v3253
        %v3395 = vunpack.c.h.b16 %v3253
        %v3396 = vunpack.c.l.b16 %v3254
        %v3397 = vunpack.c.h.b16 %v3254
        %v3398 = vunpack.c.l.b16 %v3255
        %v3399 = vunpack.c.h.b16 %v3255
        %v3400 = vpack.c.b16 %v3306, %v3304
        %v3401 = vpack.c.b16 %v3307, %v3305
        %v3402 = vpack.c.b16 %v3310, %v3308
        %v3403 = vpack.c.b16 %v3311, %v3309
        %v3404 = vpack.c.b16 %v3314, %v3312
        %v3405 = vpack.c.b16 %v3315, %v3313
        %v3406 = vpack.c.b16 %v3318, %v3316
        %v3407 = vpack.c.b16 %v3319, %v3317
        %v3408 = vpack.c.b16 %v3322, %v3320
        %v3409 = vpack.c.b16 %v3323, %v3321
        %v3410 = vpack.c.b16 %v3326, %v3324
        %v3411 = vpack.c.b16 %v3327, %v3325
        %v3412 = vpack.c.b16 %v3330, %v3328
        %v3413 = vpack.c.b16 %v3331, %v3329
        %v3414 = vpack.c.b16 %v3334, %v3332
        %v3415 = vpack.c.b16 %v3335, %v3333
        %v3416 = vpack.c.b16 %v3338, %v3336
        %v3417 = vpack.c.b16 %v3339, %v3337
        %v3418 = vpack.c.b16 %v3342, %v3340
        %v3419 = vpack.c.b16 %v3343, %v3341
        %v3420 = vpack.c.b16 %v3346, %v3344
        %v3421 = vpack.c.b16 %v3347, %v3345
        %v3422 = vpack.c.b16 %v3350, %v3348
        %v3423 = vpack.c.b16 %v3351, %v3349
        %v3424 = vpack.c.b16 %v3354, %v3352
        %v3425 = vpack.c.b16 %v3355, %v3353
        %v3426 = vpack.c.b16 %v3358, %v3356
        %v3427 = vpack.c.b16 %v3359, %v3357
        %v3428 = vpack.c.b16 %v3362, %v3360
        %v3429 = vpack.c.b16 %v3363, %v3361
        %v3430 = vpack.c.b16 %v3366, %v3364
        %v3431 = vpack.c.b16 %v3367, %v3365
        %v3432 = vpack.c.b16 %v3370, %v3368
        %v3433 = vpack.c.b16 %v3371, %v3369
        %v3434 = vpack.c.b16 %v3374, %v3372
        %v3435 = vpack.c.b16 %v3375, %v3373
        %v3436 = vpack.c.b16 %v3378, %v3376
        %v3437 = vpack.c.b16 %v3379, %v3377
        %v3438 = vpack.c.b16 %v3382, %v3380
        %v3439 = vpack.c.b16 %v3383, %v3381
        %v3440 = vpack.c.b16 %v3386, %v3384
        %v3441 = vpack.c.b16 %v3387, %v3385
        %v3442 = vpack.c.b16 %v3390, %v3388
        %v3443 = vpack.c.b16 %v3391, %v3389
        %v3444 = vpack.c.b16 %v3394, %v3392
        %v3445 = vpack.c.b16 %v3395, %v3393
        %v3446 = vpack.c.b16 %v3398, %v3396
        %v3447 = vpack.c.b16 %v3399, %v3397
        %v3473 = vsel %vm1246, %v3401, 0
        %v3476 = vsel %vm1246, %v3403, 0
        %v3479 = vsel %vm1246, %v3405, 0
        %v3482 = vsel %vm1246, %v3407, 0
        %v3485 = vsel %vm1246, %v3409, 0
        %v3488 = vsel %vm1246, %v3411, 0
        %v3491 = vsel %vm1246, %v3413, 0
        %v3494 = vsel %vm1246, %v3415, 0
        %v3497 = vsel %vm1246, %v3417, 0
        %v3500 = vsel %vm1246, %v3419, 0
        %v3503 = vsel %vm1246, %v3421, 0
        %v3506 = vsel %vm1246, %v3423, 0
        %v3509 = vsel %vm1246, %v3425, 0
        %v3512 = vsel %vm1246, %v3427, 0
        %v3515 = vsel %vm1246, %v3429, 0
        %v3518 = vsel %vm1246, %v3431, 0
        %v3521 = vsel %vm1246, %v3433, 0
        %v3524 = vsel %vm1246, %v3435, 0
        %v3527 = vsel %vm1246, %v3437, 0
        %v3530 = vsel %vm1246, %v3439, 0
        %v3533 = vsel %vm1246, %v3441, 0
        %v3536 = vsel %vm1246, %v3443, 0
        %v3539 = vsel %vm1246, %v3445, 0
        %v3542 = vsel %vm1246, %v3447, 0
        %3544 = vmatpush.bf16.msra.mxu0 %v1216
        %3545 = vmatpush.bf16.msra.mxu0 %v1213
        %3546 = vmatpush.bf16.msra.mxu0 %v1210
        %3547 = vmatpush.bf16.msra.mxu0 %v1207
        %3548 = vmatpush.bf16.msra.mxu0 %v1204
        %3549 = vmatpush.bf16.msra.mxu0 %v1201
        %3550 = vmatpush.bf16.msra.mxu0 %v1198
        %3551 = vmatpush.bf16.msra.mxu0 %v1195
        %3552 = vmatmul.bf16.gmra.mxu0 %v3400
        %v3553 = vpop.f32.mrf.mxu0
        %v3554 = vadd.f32 0.0, %v3553
        %v3555 = vpop.f32.mrf.mxu0
        %v3556 = vadd.f32 0.0, %v3555
        %3557 = vmatmul.bf16.gmra.mxu0 %v3402
        %v3558 = vpop.f32.mrf.mxu0
        %v3559 = vadd.f32 0.0, %v3558
        %v3560 = vpop.f32.mrf.mxu0
        %v3561 = vadd.f32 0.0, %v3560
        %3562 = vmatmul.bf16.gmra.mxu0 %v3404
        %v3563 = vpop.f32.mrf.mxu0
        %v3564 = vadd.f32 0.0, %v3563
        %v3565 = vpop.f32.mrf.mxu0
        %v3566 = vadd.f32 0.0, %v3565
        %3567 = vmatmul.bf16.gmra.mxu0 %v3406
        %v3568 = vpop.f32.mrf.mxu0
        %v3569 = vadd.f32 0.0, %v3568
        %v3570 = vpop.f32.mrf.mxu0
        %v3571 = vadd.f32 0.0, %v3570
        %3572 = vmatmul.bf16.gmra.mxu0 %v3408
        %v3573 = vpop.f32.mrf.mxu0
        %v3574 = vadd.f32 0.0, %v3573
        %v3575 = vpop.f32.mrf.mxu0
        %v3576 = vadd.f32 0.0, %v3575
        %3577 = vmatmul.bf16.gmra.mxu0 %v3410
        %v3578 = vpop.f32.mrf.mxu0
        %v3579 = vadd.f32 0.0, %v3578
        %v3580 = vpop.f32.mrf.mxu0
        %v3581 = vadd.f32 0.0, %v3580
        %3582 = vmatmul.bf16.gmra.mxu0 %v3412
        %v3583 = vpop.f32.mrf.mxu0
        %v3584 = vadd.f32 0.0, %v3583
        %v3585 = vpop.f32.mrf.mxu0
        %v3586 = vadd.f32 0.0, %v3585
        %3587 = vmatmul.bf16.gmra.mxu0 %v3414
        %v3588 = vpop.f32.mrf.mxu0
        %v3589 = vadd.f32 0.0, %v3588
        %v3590 = vpop.f32.mrf.mxu0
        %v3591 = vadd.f32 0.0, %v3590
        %3592 = vmatmul.bf16.gmra.mxu0 %v3416
        %v3593 = vpop.f32.mrf.mxu0
        %v3594 = vadd.f32 0.0, %v3593
        %v3595 = vpop.f32.mrf.mxu0
        %v3596 = vadd.f32 0.0, %v3595
        %3597 = vmatmul.bf16.gmra.mxu0 %v3418
        %v3598 = vpop.f32.mrf.mxu0
        %v3599 = vadd.f32 0.0, %v3598
        %v3600 = vpop.f32.mrf.mxu0
        %v3601 = vadd.f32 0.0, %v3600
        %3602 = vmatmul.bf16.gmra.mxu0 %v3420
        %v3603 = vpop.f32.mrf.mxu0
        %v3604 = vadd.f32 0.0, %v3603
        %v3605 = vpop.f32.mrf.mxu0
        %v3606 = vadd.f32 0.0, %v3605
        %3607 = vmatmul.bf16.gmra.mxu0 %v3422
        %v3608 = vpop.f32.mrf.mxu0
        %v3609 = vadd.f32 0.0, %v3608
        %v3610 = vpop.f32.mrf.mxu0
        %v3611 = vadd.f32 0.0, %v3610
        %3612 = vmatmul.bf16.gmra.mxu0 %v3424
        %v3613 = vpop.f32.mrf.mxu0
        %v3614 = vadd.f32 0.0, %v3613
        %v3615 = vpop.f32.mrf.mxu0
        %v3616 = vadd.f32 0.0, %v3615
        %3617 = vmatmul.bf16.gmra.mxu0 %v3426
        %v3618 = vpop.f32.mrf.mxu0
        %v3619 = vadd.f32 0.0, %v3618
        %v3620 = vpop.f32.mrf.mxu0
        %v3621 = vadd.f32 0.0, %v3620
        %3622 = vmatmul.bf16.gmra.mxu0 %v3428
        %v3623 = vpop.f32.mrf.mxu0
        %v3624 = vadd.f32 0.0, %v3623
        %v3625 = vpop.f32.mrf.mxu0
        %v3626 = vadd.f32 0.0, %v3625
        %3627 = vmatmul.bf16.gmra.mxu0 %v3430
        %v3628 = vpop.f32.mrf.mxu0
        %v3629 = vadd.f32 0.0, %v3628
        %v3630 = vpop.f32.mrf.mxu0
        %v3631 = vadd.f32 0.0, %v3630
        %3632 = vmatmul.bf16.gmra.mxu0 %v3432
        %v3633 = vpop.f32.mrf.mxu0
        %v3634 = vadd.f32 0.0, %v3633
        %v3635 = vpop.f32.mrf.mxu0
        %v3636 = vadd.f32 0.0, %v3635
        %3637 = vmatmul.bf16.gmra.mxu0 %v3434
        %v3638 = vpop.f32.mrf.mxu0
        %v3639 = vadd.f32 0.0, %v3638
        %v3640 = vpop.f32.mrf.mxu0
        %v3641 = vadd.f32 0.0, %v3640
        %3642 = vmatmul.bf16.gmra.mxu0 %v3436
        %v3643 = vpop.f32.mrf.mxu0
        %v3644 = vadd.f32 0.0, %v3643
        %v3645 = vpop.f32.mrf.mxu0
        %v3646 = vadd.f32 0.0, %v3645
        %3647 = vmatmul.bf16.gmra.mxu0 %v3438
        %v3648 = vpop.f32.mrf.mxu0
        %v3649 = vadd.f32 0.0, %v3648
        %v3650 = vpop.f32.mrf.mxu0
        %v3651 = vadd.f32 0.0, %v3650
        %3652 = vmatmul.bf16.gmra.mxu0 %v3440
        %v3653 = vpop.f32.mrf.mxu0
        %v3654 = vadd.f32 0.0, %v3653
        %v3655 = vpop.f32.mrf.mxu0
        %v3656 = vadd.f32 0.0, %v3655
        %3657 = vmatmul.bf16.gmra.mxu0 %v3442
        %v3658 = vpop.f32.mrf.mxu0
        %v3659 = vadd.f32 0.0, %v3658
        %v3660 = vpop.f32.mrf.mxu0
        %v3661 = vadd.f32 0.0, %v3660
        %3662 = vmatmul.bf16.gmra.mxu0 %v3444
        %v3663 = vpop.f32.mrf.mxu0
        %v3664 = vadd.f32 0.0, %v3663
        %v3665 = vpop.f32.mrf.mxu0
        %v3666 = vadd.f32 0.0, %v3665
        %3667 = vmatmul.bf16.gmra.mxu0 %v3446
        %v3668 = vpop.f32.mrf.mxu0
        %v3669 = vadd.f32 0.0, %v3668
        %v3670 = vpop.f32.mrf.mxu0
        %v3671 = vadd.f32 0.0, %v3670
        %3672 = vdwg.mxu0
        %3673 = vmatpush.bf16.msra.mxu0 0
        %3674 = vmatpush.bf16.msra.mxu0 0
        %3675 = vmatpush.bf16.msra.mxu0 0
        %3676 = vmatpush.bf16.msra.mxu0 0
        %3677 = vmatpush.bf16.msra.mxu0 0
        %3678 = vmatpush.bf16.msra.mxu0 0
        %3679 = vmatpush.bf16.msra.mxu0 0
        %3680 = vmatpush.bf16.msra.mxu0 %v1321
        %3681 = vmatmul.bf16.gmra.mxu0 %v3473
        %v3682 = vpop.f32.mrf.mxu0
        %v3683 = vadd.f32 %v3554, %v3682
        %v3684 = vpop.f32.mrf.mxu0
        %v3685 = vadd.f32 %v3556, %v3684
        %3686 = vmatmul.bf16.gmra.mxu0 %v3476
        %v3687 = vpop.f32.mrf.mxu0
        %v3688 = vadd.f32 %v3559, %v3687
        %v3689 = vpop.f32.mrf.mxu0
        %v3690 = vadd.f32 %v3561, %v3689
        %3691 = vmatmul.bf16.gmra.mxu0 %v3479
        %v3692 = vpop.f32.mrf.mxu0
        %v3693 = vadd.f32 %v3564, %v3692
        %v3694 = vpop.f32.mrf.mxu0
        %v3695 = vadd.f32 %v3566, %v3694
        %3696 = vmatmul.bf16.gmra.mxu0 %v3482
        %v3697 = vpop.f32.mrf.mxu0
        %v3698 = vadd.f32 %v3569, %v3697
        %v3699 = vpop.f32.mrf.mxu0
        %v3700 = vadd.f32 %v3571, %v3699
        %3701 = vmatmul.bf16.gmra.mxu0 %v3485
        %v3702 = vpop.f32.mrf.mxu0
        %v3703 = vadd.f32 %v3574, %v3702
        %v3704 = vpop.f32.mrf.mxu0
        %v3705 = vadd.f32 %v3576, %v3704
        %3706 = vmatmul.bf16.gmra.mxu0 %v3488
        %v3707 = vpop.f32.mrf.mxu0
        %v3708 = vadd.f32 %v3579, %v3707
        %v3709 = vpop.f32.mrf.mxu0
        %v3710 = vadd.f32 %v3581, %v3709
        %3711 = vmatmul.bf16.gmra.mxu0 %v3491
        %v3712 = vpop.f32.mrf.mxu0
        %v3713 = vadd.f32 %v3584, %v3712
        %v3714 = vpop.f32.mrf.mxu0
        %v3715 = vadd.f32 %v3586, %v3714
        %3716 = vmatmul.bf16.gmra.mxu0 %v3494
        %v3717 = vpop.f32.mrf.mxu0
        %v3718 = vadd.f32 %v3589, %v3717
        %v3719 = vpop.f32.mrf.mxu0
        %v3720 = vadd.f32 %v3591, %v3719
        %3721 = vmatmul.bf16.gmra.mxu0 %v3497
        %v3722 = vpop.f32.mrf.mxu0
        %v3723 = vadd.f32 %v3594, %v3722
        %v3724 = vpop.f32.mrf.mxu0
        %v3725 = vadd.f32 %v3596, %v3724
        %3726 = vmatmul.bf16.gmra.mxu0 %v3500
        %v3727 = vpop.f32.mrf.mxu0
        %v3728 = vadd.f32 %v3599, %v3727
        %v3729 = vpop.f32.mrf.mxu0
        %v3730 = vadd.f32 %v3601, %v3729
        %3731 = vmatmul.bf16.gmra.mxu0 %v3503
        %v3732 = vpop.f32.mrf.mxu0
        %v3733 = vadd.f32 %v3604, %v3732
        %v3734 = vpop.f32.mrf.mxu0
        %v3735 = vadd.f32 %v3606, %v3734
        %3736 = vmatmul.bf16.gmra.mxu0 %v3506
        %v3737 = vpop.f32.mrf.mxu0
        %v3738 = vadd.f32 %v3609, %v3737
        %v3739 = vpop.f32.mrf.mxu0
        %v3740 = vadd.f32 %v3611, %v3739
        %3741 = vmatmul.bf16.gmra.mxu0 %v3509
        %v3742 = vpop.f32.mrf.mxu0
        %v3743 = vadd.f32 %v3614, %v3742
        %v3744 = vpop.f32.mrf.mxu0
        %v3745 = vadd.f32 %v3616, %v3744
        %3746 = vmatmul.bf16.gmra.mxu0 %v3512
        %v3747 = vpop.f32.mrf.mxu0
        %v3748 = vadd.f32 %v3619, %v3747
        %v3749 = vpop.f32.mrf.mxu0
        %v3750 = vadd.f32 %v3621, %v3749
        %3751 = vmatmul.bf16.gmra.mxu0 %v3515
        %v3752 = vpop.f32.mrf.mxu0
        %v3753 = vadd.f32 %v3624, %v3752
        %v3754 = vpop.f32.mrf.mxu0
        %v3755 = vadd.f32 %v3626, %v3754
        %3756 = vmatmul.bf16.gmra.mxu0 %v3518
        %v3757 = vpop.f32.mrf.mxu0
        %v3758 = vadd.f32 %v3629, %v3757
        %v3759 = vpop.f32.mrf.mxu0
        %v3760 = vadd.f32 %v3631, %v3759
        %3761 = vmatmul.bf16.gmra.mxu0 %v3521
        %v3762 = vpop.f32.mrf.mxu0
        %v3763 = vadd.f32 %v3634, %v3762
        %v3764 = vpop.f32.mrf.mxu0
        %v3765 = vadd.f32 %v3636, %v3764
        %3766 = vmatmul.bf16.gmra.mxu0 %v3524
        %v3767 = vpop.f32.mrf.mxu0
        %v3768 = vadd.f32 %v3639, %v3767
        %v3769 = vpop.f32.mrf.mxu0
        %v3770 = vadd.f32 %v3641, %v3769
        %3771 = vmatmul.bf16.gmra.mxu0 %v3527
        %v3772 = vpop.f32.mrf.mxu0
        %v3773 = vadd.f32 %v3644, %v3772
        %v3774 = vpop.f32.mrf.mxu0
        %v3775 = vadd.f32 %v3646, %v3774
        %3776 = vmatmul.bf16.gmra.mxu0 %v3530
        %v3777 = vpop.f32.mrf.mxu0
        %v3778 = vadd.f32 %v3649, %v3777
        %v3779 = vpop.f32.mrf.mxu0
        %v3780 = vadd.f32 %v3651, %v3779
        %3781 = vmatmul.bf16.gmra.mxu0 %v3533
        %v3782 = vpop.f32.mrf.mxu0
        %v3783 = vadd.f32 %v3654, %v3782
        %v3784 = vpop.f32.mrf.mxu0
        %v3785 = vadd.f32 %v3656, %v3784
        %3786 = vmatmul.bf16.gmra.mxu0 %v3536
        %v3787 = vpop.f32.mrf.mxu0
        %v3788 = vadd.f32 %v3659, %v3787
        %v3789 = vpop.f32.mrf.mxu0
        %v3790 = vadd.f32 %v3661, %v3789
        %3791 = vmatmul.bf16.gmra.mxu0 %v3539
        %v3792 = vpop.f32.mrf.mxu0
        %v3793 = vadd.f32 %v3664, %v3792
        %v3794 = vpop.f32.mrf.mxu0
        %v3795 = vadd.f32 %v3666, %v3794
        %3796 = vmatmul.bf16.gmra.mxu0 %v3542
        %v3797 = vpop.f32.mrf.mxu0
        %v3798 = vadd.f32 %v3669, %v3797
        %v3799 = vpop.f32.mrf.mxu0
        %v3800 = vadd.f32 %v3671, %v3799
        %3801 = vdwg.mxu0
        %3802 = vmatpush.bf16.msra.mxu0 %v1217
        %3803 = vmatpush.bf16.msra.mxu0 %v1214
        %3804 = vmatpush.bf16.msra.mxu0 %v1211
        %3805 = vmatpush.bf16.msra.mxu0 %v1208
        %3806 = vmatpush.bf16.msra.mxu0 %v1205
        %3807 = vmatpush.bf16.msra.mxu0 %v1202
        %3808 = vmatpush.bf16.msra.mxu0 %v1199
        %3809 = vmatpush.bf16.msra.mxu0 %v1196
        %3810 = vmatmul.bf16.gmra.mxu0 %v3400
        %v3811 = vpop.f32.mrf.mxu0
        %v3812 = vadd.f32 0.0, %v3811
        %v3813 = vpop.f32.mrf.mxu0
        %v3814 = vadd.f32 0.0, %v3813
        %3815 = vmatmul.bf16.gmra.mxu0 %v3402
        %v3816 = vpop.f32.mrf.mxu0
        %v3817 = vadd.f32 0.0, %v3816
        %v3818 = vpop.f32.mrf.mxu0
        %v3819 = vadd.f32 0.0, %v3818
        %3820 = vmatmul.bf16.gmra.mxu0 %v3404
        %v3821 = vpop.f32.mrf.mxu0
        %v3822 = vadd.f32 0.0, %v3821
        %v3823 = vpop.f32.mrf.mxu0
        %v3824 = vadd.f32 0.0, %v3823
        %3825 = vmatmul.bf16.gmra.mxu0 %v3406
        %v3826 = vpop.f32.mrf.mxu0
        %v3827 = vadd.f32 0.0, %v3826
        %v3828 = vpop.f32.mrf.mxu0
        %v3829 = vadd.f32 0.0, %v3828
        %3830 = vmatmul.bf16.gmra.mxu0 %v3408
        %v3831 = vpop.f32.mrf.mxu0
        %v3832 = vadd.f32 0.0, %v3831
        %v3833 = vpop.f32.mrf.mxu0
        %v3834 = vadd.f32 0.0, %v3833
        %3835 = vmatmul.bf16.gmra.mxu0 %v3410
        %v3836 = vpop.f32.mrf.mxu0
        %v3837 = vadd.f32 0.0, %v3836
        %v3838 = vpop.f32.mrf.mxu0
        %v3839 = vadd.f32 0.0, %v3838
        %3840 = vmatmul.bf16.gmra.mxu0 %v3412
        %v3841 = vpop.f32.mrf.mxu0
        %v3842 = vadd.f32 0.0, %v3841
        %v3843 = vpop.f32.mrf.mxu0
        %v3844 = vadd.f32 0.0, %v3843
        %3845 = vmatmul.bf16.gmra.mxu0 %v3414
        %v3846 = vpop.f32.mrf.mxu0
        %v3847 = vadd.f32 0.0, %v3846
        %v3848 = vpop.f32.mrf.mxu0
        %v3849 = vadd.f32 0.0, %v3848
        %3850 = vmatmul.bf16.gmra.mxu0 %v3416
        %v3851 = vpop.f32.mrf.mxu0
        %v3852 = vadd.f32 0.0, %v3851
        %v3853 = vpop.f32.mrf.mxu0
        %v3854 = vadd.f32 0.0, %v3853
        %3855 = vmatmul.bf16.gmra.mxu0 %v3418
        %v3856 = vpop.f32.mrf.mxu0
        %v3857 = vadd.f32 0.0, %v3856
        %v3858 = vpop.f32.mrf.mxu0
        %v3859 = vadd.f32 0.0, %v3858
        %3860 = vmatmul.bf16.gmra.mxu0 %v3420
        %v3861 = vpop.f32.mrf.mxu0
        %v3862 = vadd.f32 0.0, %v3861
        %v3863 = vpop.f32.mrf.mxu0
        %v3864 = vadd.f32 0.0, %v3863
        %3865 = vmatmul.bf16.gmra.mxu0 %v3422
        %v3866 = vpop.f32.mrf.mxu0
        %v3867 = vadd.f32 0.0, %v3866
        %v3868 = vpop.f32.mrf.mxu0
        %v3869 = vadd.f32 0.0, %v3868
        %3870 = vmatmul.bf16.gmra.mxu0 %v3424
        %v3871 = vpop.f32.mrf.mxu0
        %v3872 = vadd.f32 0.0, %v3871
        %v3873 = vpop.f32.mrf.mxu0
        %v3874 = vadd.f32 0.0, %v3873
        %3875 = vmatmul.bf16.gmra.mxu0 %v3426
        %v3876 = vpop.f32.mrf.mxu0
        %v3877 = vadd.f32 0.0, %v3876
        %v3878 = vpop.f32.mrf.mxu0
        %v3879 = vadd.f32 0.0, %v3878
        %3880 = vmatmul.bf16.gmra.mxu0 %v3428
        %v3881 = vpop.f32.mrf.mxu0
        %v3882 = vadd.f32 0.0, %v3881
        %v3883 = vpop.f32.mrf.mxu0
        %v3884 = vadd.f32 0.0, %v3883
        %3885 = vmatmul.bf16.gmra.mxu0 %v3430
        %v3886 = vpop.f32.mrf.mxu0
        %v3887 = vadd.f32 0.0, %v3886
        %v3888 = vpop.f32.mrf.mxu0
        %v3889 = vadd.f32 0.0, %v3888
        %3890 = vmatmul.bf16.gmra.mxu0 %v3432
        %v3891 = vpop.f32.mrf.mxu0
        %v3892 = vadd.f32 0.0, %v3891
        %v3893 = vpop.f32.mrf.mxu0
        %v3894 = vadd.f32 0.0, %v3893
        %3895 = vmatmul.bf16.gmra.mxu0 %v3434
        %v3896 = vpop.f32.mrf.mxu0
        %v3897 = vadd.f32 0.0, %v3896
        %v3898 = vpop.f32.mrf.mxu0
        %v3899 = vadd.f32 0.0, %v3898
        %3900 = vmatmul.bf16.gmra.mxu0 %v3436
        %v3901 = vpop.f32.mrf.mxu0
        %v3902 = vadd.f32 0.0, %v3901
        %v3903 = vpop.f32.mrf.mxu0
        %v3904 = vadd.f32 0.0, %v3903
        %3905 = vmatmul.bf16.gmra.mxu0 %v3438
        %v3906 = vpop.f32.mrf.mxu0
        %v3907 = vadd.f32 0.0, %v3906
        %v3908 = vpop.f32.mrf.mxu0
        %v3909 = vadd.f32 0.0, %v3908
        %3910 = vmatmul.bf16.gmra.mxu0 %v3440
        %v3911 = vpop.f32.mrf.mxu0
        %v3912 = vadd.f32 0.0, %v3911
        %v3913 = vpop.f32.mrf.mxu0
        %v3914 = vadd.f32 0.0, %v3913
        %3915 = vmatmul.bf16.gmra.mxu0 %v3442
        %v3916 = vpop.f32.mrf.mxu0
        %v3917 = vadd.f32 0.0, %v3916
        %v3918 = vpop.f32.mrf.mxu0
        %v3919 = vadd.f32 0.0, %v3918
        %3920 = vmatmul.bf16.gmra.mxu0 %v3444
        %v3921 = vpop.f32.mrf.mxu0
        %v3922 = vadd.f32 0.0, %v3921
        %v3923 = vpop.f32.mrf.mxu0
        %v3924 = vadd.f32 0.0, %v3923
        %3925 = vmatmul.bf16.gmra.mxu0 %v3446
        %v3926 = vpop.f32.mrf.mxu0
        %v3927 = vadd.f32 0.0, %v3926
        %v3928 = vpop.f32.mrf.mxu0
        %v3929 = vadd.f32 0.0, %v3928
        %3930 = vdwg.mxu0
        %3931 = vmatpush.bf16.msra.mxu0 0
        %3932 = vmatpush.bf16.msra.mxu0 0
        %3933 = vmatpush.bf16.msra.mxu0 0
        %3934 = vmatpush.bf16.msra.mxu0 0
        %3935 = vmatpush.bf16.msra.mxu0 0
        %3936 = vmatpush.bf16.msra.mxu0 0
        %3937 = vmatpush.bf16.msra.mxu0 0
        %3938 = vmatpush.bf16.msra.mxu0 %v1324
        %3939 = vmatmul.bf16.gmra.mxu0 %v3473
        %v3940 = vpop.f32.mrf.mxu0
        %v3941 = vadd.f32 %v3812, %v3940
        %v3942 = vpop.f32.mrf.mxu0
        %v3943 = vadd.f32 %v3814, %v3942
        %3944 = vmatmul.bf16.gmra.mxu0 %v3476
        %v3945 = vpop.f32.mrf.mxu0
        %v3946 = vadd.f32 %v3817, %v3945
        %v3947 = vpop.f32.mrf.mxu0
        %v3948 = vadd.f32 %v3819, %v3947
        %3949 = vmatmul.bf16.gmra.mxu0 %v3479
        %v3950 = vpop.f32.mrf.mxu0
        %v3951 = vadd.f32 %v3822, %v3950
        %v3952 = vpop.f32.mrf.mxu0
        %v3953 = vadd.f32 %v3824, %v3952
        %3954 = vmatmul.bf16.gmra.mxu0 %v3482
        %v3955 = vpop.f32.mrf.mxu0
        %v3956 = vadd.f32 %v3827, %v3955
        %v3957 = vpop.f32.mrf.mxu0
        %v3958 = vadd.f32 %v3829, %v3957
        %3959 = vmatmul.bf16.gmra.mxu0 %v3485
        %v3960 = vpop.f32.mrf.mxu0
        %v3961 = vadd.f32 %v3832, %v3960
        %v3962 = vpop.f32.mrf.mxu0
        %v3963 = vadd.f32 %v3834, %v3962
        %3964 = vmatmul.bf16.gmra.mxu0 %v3488
        %v3965 = vpop.f32.mrf.mxu0
        %v3966 = vadd.f32 %v3837, %v3965
        %v3967 = vpop.f32.mrf.mxu0
        %v3968 = vadd.f32 %v3839, %v3967
        %3969 = vmatmul.bf16.gmra.mxu0 %v3491
        %v3970 = vpop.f32.mrf.mxu0
        %v3971 = vadd.f32 %v3842, %v3970
        %v3972 = vpop.f32.mrf.mxu0
        %v3973 = vadd.f32 %v3844, %v3972
        %3974 = vmatmul.bf16.gmra.mxu0 %v3494
        %v3975 = vpop.f32.mrf.mxu0
        %v3976 = vadd.f32 %v3847, %v3975
        %v3977 = vpop.f32.mrf.mxu0
        %v3978 = vadd.f32 %v3849, %v3977
        %3979 = vmatmul.bf16.gmra.mxu0 %v3497
        %v3980 = vpop.f32.mrf.mxu0
        %v3981 = vadd.f32 %v3852, %v3980
        %v3982 = vpop.f32.mrf.mxu0
        %v3983 = vadd.f32 %v3854, %v3982
        %3984 = vmatmul.bf16.gmra.mxu0 %v3500
        %v3985 = vpop.f32.mrf.mxu0
        %v3986 = vadd.f32 %v3857, %v3985
        %v3987 = vpop.f32.mrf.mxu0
        %v3988 = vadd.f32 %v3859, %v3987
        %3989 = vmatmul.bf16.gmra.mxu0 %v3503
        %v3990 = vpop.f32.mrf.mxu0
        %v3991 = vadd.f32 %v3862, %v3990
        %v3992 = vpop.f32.mrf.mxu0
        %v3993 = vadd.f32 %v3864, %v3992
        %3994 = vmatmul.bf16.gmra.mxu0 %v3506
        %v3995 = vpop.f32.mrf.mxu0
        %v3996 = vadd.f32 %v3867, %v3995
        %v3997 = vpop.f32.mrf.mxu0
        %v3998 = vadd.f32 %v3869, %v3997
        %3999 = vmatmul.bf16.gmra.mxu0 %v3509
        %v4000 = vpop.f32.mrf.mxu0
        %v4001 = vadd.f32 %v3872, %v4000
        %v4002 = vpop.f32.mrf.mxu0
        %v4003 = vadd.f32 %v3874, %v4002
        %4004 = vmatmul.bf16.gmra.mxu0 %v3512
        %v4005 = vpop.f32.mrf.mxu0
        %v4006 = vadd.f32 %v3877, %v4005
        %v4007 = vpop.f32.mrf.mxu0
        %v4008 = vadd.f32 %v3879, %v4007
        %4009 = vmatmul.bf16.gmra.mxu0 %v3515
        %v4010 = vpop.f32.mrf.mxu0
        %v4011 = vadd.f32 %v3882, %v4010
        %v4012 = vpop.f32.mrf.mxu0
        %v4013 = vadd.f32 %v3884, %v4012
        %4014 = vmatmul.bf16.gmra.mxu0 %v3518
        %v4015 = vpop.f32.mrf.mxu0
        %v4016 = vadd.f32 %v3887, %v4015
        %v4017 = vpop.f32.mrf.mxu0
        %v4018 = vadd.f32 %v3889, %v4017
        %4019 = vmatmul.bf16.gmra.mxu0 %v3521
        %v4020 = vpop.f32.mrf.mxu0
        %v4021 = vadd.f32 %v3892, %v4020
        %v4022 = vpop.f32.mrf.mxu0
        %v4023 = vadd.f32 %v3894, %v4022
        %4024 = vmatmul.bf16.gmra.mxu0 %v3524
        %v4025 = vpop.f32.mrf.mxu0
        %v4026 = vadd.f32 %v3897, %v4025
        %v4027 = vpop.f32.mrf.mxu0
        %v4028 = vadd.f32 %v3899, %v4027
        %4029 = vmatmul.bf16.gmra.mxu0 %v3527
        %v4030 = vpop.f32.mrf.mxu0
        %v4031 = vadd.f32 %v3902, %v4030
        %v4032 = vpop.f32.mrf.mxu0
        %v4033 = vadd.f32 %v3904, %v4032
        %4034 = vmatmul.bf16.gmra.mxu0 %v3530
        %v4035 = vpop.f32.mrf.mxu0
        %v4036 = vadd.f32 %v3907, %v4035
        %v4037 = vpop.f32.mrf.mxu0
        %v4038 = vadd.f32 %v3909, %v4037
        %4039 = vmatmul.bf16.gmra.mxu0 %v3533
        %v4040 = vpop.f32.mrf.mxu0
        %v4041 = vadd.f32 %v3912, %v4040
        %v4042 = vpop.f32.mrf.mxu0
        %v4043 = vadd.f32 %v3914, %v4042
        %4044 = vmatmul.bf16.gmra.mxu0 %v3536
        %v4045 = vpop.f32.mrf.mxu0
        %v4046 = vadd.f32 %v3917, %v4045
        %v4047 = vpop.f32.mrf.mxu0
        %v4048 = vadd.f32 %v3919, %v4047
        %4049 = vmatmul.bf16.gmra.mxu0 %v3539
        %v4050 = vpop.f32.mrf.mxu0
        %v4051 = vadd.f32 %v3922, %v4050
        %v4052 = vpop.f32.mrf.mxu0
        %v4053 = vadd.f32 %v3924, %v4052
        %4054 = vmatmul.bf16.gmra.mxu0 %v3542
        %v4055 = vpop.f32.mrf.mxu0
        %v4056 = vadd.f32 %v3927, %v4055
        %v4057 = vpop.f32.mrf.mxu0
        %v4058 = vadd.f32 %v3929, %v4057
        %4059 = vdwg.mxu0
        %4060 = vmatpush.bf16.msra.mxu0 %v1218
        %4061 = vmatpush.bf16.msra.mxu0 %v1215
        %4062 = vmatpush.bf16.msra.mxu0 %v1212
        %4063 = vmatpush.bf16.msra.mxu0 %v1209
        %4064 = vmatpush.bf16.msra.mxu0 %v1206
        %4065 = vmatpush.bf16.msra.mxu0 %v1203
        %4066 = vmatpush.bf16.msra.mxu0 %v1200
        %4067 = vmatpush.bf16.msra.mxu0 %v1197
        %4068 = vmatmul.bf16.gmra.mxu0 %v3400
        %v4069 = vpop.f32.mrf.mxu0
        %v4070 = vadd.f32 0.0, %v4069
        %v4071 = vpop.f32.mrf.mxu0
        %v4072 = vadd.f32 0.0, %v4071
        %4073 = vmatmul.bf16.gmra.mxu0 %v3402
        %v4074 = vpop.f32.mrf.mxu0
        %v4075 = vadd.f32 0.0, %v4074
        %v4076 = vpop.f32.mrf.mxu0
        %v4077 = vadd.f32 0.0, %v4076
        %4078 = vmatmul.bf16.gmra.mxu0 %v3404
        %v4079 = vpop.f32.mrf.mxu0
        %v4080 = vadd.f32 0.0, %v4079
        %v4081 = vpop.f32.mrf.mxu0
        %v4082 = vadd.f32 0.0, %v4081
        %4083 = vmatmul.bf16.gmra.mxu0 %v3406
        %v4084 = vpop.f32.mrf.mxu0
        %v4085 = vadd.f32 0.0, %v4084
        %v4086 = vpop.f32.mrf.mxu0
        %v4087 = vadd.f32 0.0, %v4086
        %4088 = vmatmul.bf16.gmra.mxu0 %v3408
        %v4089 = vpop.f32.mrf.mxu0
        %v4090 = vadd.f32 0.0, %v4089
        %v4091 = vpop.f32.mrf.mxu0
        %v4092 = vadd.f32 0.0, %v4091
        %4093 = vmatmul.bf16.gmra.mxu0 %v3410
        %v4094 = vpop.f32.mrf.mxu0
        %v4095 = vadd.f32 0.0, %v4094
        %v4096 = vpop.f32.mrf.mxu0
        %v4097 = vadd.f32 0.0, %v4096
        %4098 = vmatmul.bf16.gmra.mxu0 %v3412
        %v4099 = vpop.f32.mrf.mxu0
        %v4100 = vadd.f32 0.0, %v4099
        %v4101 = vpop.f32.mrf.mxu0
        %v4102 = vadd.f32 0.0, %v4101
        %4103 = vmatmul.bf16.gmra.mxu0 %v3414
        %v4104 = vpop.f32.mrf.mxu0
        %v4105 = vadd.f32 0.0, %v4104
        %v4106 = vpop.f32.mrf.mxu0
        %v4107 = vadd.f32 0.0, %v4106
        %4108 = vmatmul.bf16.gmra.mxu0 %v3416
        %v4109 = vpop.f32.mrf.mxu0
        %v4110 = vadd.f32 0.0, %v4109
        %v4111 = vpop.f32.mrf.mxu0
        %v4112 = vadd.f32 0.0, %v4111
        %4113 = vmatmul.bf16.gmra.mxu0 %v3418
        %v4114 = vpop.f32.mrf.mxu0
        %v4115 = vadd.f32 0.0, %v4114
        %v4116 = vpop.f32.mrf.mxu0
        %v4117 = vadd.f32 0.0, %v4116
        %4118 = vmatmul.bf16.gmra.mxu0 %v3420
        %v4119 = vpop.f32.mrf.mxu0
        %v4120 = vadd.f32 0.0, %v4119
        %v4121 = vpop.f32.mrf.mxu0
        %v4122 = vadd.f32 0.0, %v4121
        %4123 = vmatmul.bf16.gmra.mxu0 %v3422
        %v4124 = vpop.f32.mrf.mxu0
        %v4125 = vadd.f32 0.0, %v4124
        %v4126 = vpop.f32.mrf.mxu0
        %v4127 = vadd.f32 0.0, %v4126
        %4128 = vmatmul.bf16.gmra.mxu0 %v3424
        %v4129 = vpop.f32.mrf.mxu0
        %v4130 = vadd.f32 0.0, %v4129
        %v4131 = vpop.f32.mrf.mxu0
        %v4132 = vadd.f32 0.0, %v4131
        %4133 = vmatmul.bf16.gmra.mxu0 %v3426
        %v4134 = vpop.f32.mrf.mxu0
        %v4135 = vadd.f32 0.0, %v4134
        %v4136 = vpop.f32.mrf.mxu0
        %v4137 = vadd.f32 0.0, %v4136
        %4138 = vmatmul.bf16.gmra.mxu0 %v3428
        %v4139 = vpop.f32.mrf.mxu0
        %v4140 = vadd.f32 0.0, %v4139
        %v4141 = vpop.f32.mrf.mxu0
        %v4142 = vadd.f32 0.0, %v4141
        %4143 = vmatmul.bf16.gmra.mxu0 %v3430
        %v4144 = vpop.f32.mrf.mxu0
        %v4145 = vadd.f32 0.0, %v4144
        %v4146 = vpop.f32.mrf.mxu0
        %v4147 = vadd.f32 0.0, %v4146
        %4148 = vmatmul.bf16.gmra.mxu0 %v3432
        %v4149 = vpop.f32.mrf.mxu0
        %v4150 = vadd.f32 0.0, %v4149
        %v4151 = vpop.f32.mrf.mxu0
        %v4152 = vadd.f32 0.0, %v4151
        %4153 = vmatmul.bf16.gmra.mxu0 %v3434
        %v4154 = vpop.f32.mrf.mxu0
        %v4155 = vadd.f32 0.0, %v4154
        %v4156 = vpop.f32.mrf.mxu0
        %v4157 = vadd.f32 0.0, %v4156
        %4158 = vmatmul.bf16.gmra.mxu0 %v3436
        %v4159 = vpop.f32.mrf.mxu0
        %v4160 = vadd.f32 0.0, %v4159
        %v4161 = vpop.f32.mrf.mxu0
        %v4162 = vadd.f32 0.0, %v4161
        %4163 = vmatmul.bf16.gmra.mxu0 %v3438
        %v4164 = vpop.f32.mrf.mxu0
        %v4165 = vadd.f32 0.0, %v4164
        %v4166 = vpop.f32.mrf.mxu0
        %v4167 = vadd.f32 0.0, %v4166
        %4168 = vmatmul.bf16.gmra.mxu0 %v3440
        %v4169 = vpop.f32.mrf.mxu0
        %v4170 = vadd.f32 0.0, %v4169
        %v4171 = vpop.f32.mrf.mxu0
        %v4172 = vadd.f32 0.0, %v4171
        %4173 = vmatmul.bf16.gmra.mxu0 %v3442
        %v4174 = vpop.f32.mrf.mxu0
        %v4175 = vadd.f32 0.0, %v4174
        %v4176 = vpop.f32.mrf.mxu0
        %v4177 = vadd.f32 0.0, %v4176
        %4178 = vmatmul.bf16.gmra.mxu0 %v3444
        %v4179 = vpop.f32.mrf.mxu0
        %v4180 = vadd.f32 0.0, %v4179
        %v4181 = vpop.f32.mrf.mxu0
        %v4182 = vadd.f32 0.0, %v4181
        %4183 = vmatmul.bf16.gmra.mxu0 %v3446
        %v4184 = vpop.f32.mrf.mxu0
        %v4185 = vadd.f32 0.0, %v4184
        %v4186 = vpop.f32.mrf.mxu0
        %v4187 = vadd.f32 0.0, %v4186
        %4188 = vdwg.mxu0
        %4189 = vmatpush.bf16.msra.mxu0 0
        %4190 = vmatpush.bf16.msra.mxu0 0
        %4191 = vmatpush.bf16.msra.mxu0 0
        %4192 = vmatpush.bf16.msra.mxu0 0
        %4193 = vmatpush.bf16.msra.mxu0 0
        %4194 = vmatpush.bf16.msra.mxu0 0
        %4195 = vmatpush.bf16.msra.mxu0 0
        %4196 = vmatpush.bf16.msra.mxu0 %v1327
        %4197 = vmatmul.bf16.gmra.mxu0 %v3473
        %v4198 = vpop.f32.mrf.mxu0
        %v4199 = vadd.f32 %v4070, %v4198
        %v4200 = vpop.f32.mrf.mxu0
        %v4201 = vadd.f32 %v4072, %v4200
        %4202 = vmatmul.bf16.gmra.mxu0 %v3476
        %v4203 = vpop.f32.mrf.mxu0
        %v4204 = vadd.f32 %v4075, %v4203
        %v4205 = vpop.f32.mrf.mxu0
        %v4206 = vadd.f32 %v4077, %v4205
        %4207 = vmatmul.bf16.gmra.mxu0 %v3479
        %v4208 = vpop.f32.mrf.mxu0
        %v4209 = vadd.f32 %v4080, %v4208
        %v4210 = vpop.f32.mrf.mxu0
        %v4211 = vadd.f32 %v4082, %v4210
        %4212 = vmatmul.bf16.gmra.mxu0 %v3482
        %v4213 = vpop.f32.mrf.mxu0
        %v4214 = vadd.f32 %v4085, %v4213
        %v4215 = vpop.f32.mrf.mxu0
        %v4216 = vadd.f32 %v4087, %v4215
        %4217 = vmatmul.bf16.gmra.mxu0 %v3485
        %v4218 = vpop.f32.mrf.mxu0
        %v4219 = vadd.f32 %v4090, %v4218
        %v4220 = vpop.f32.mrf.mxu0
        %v4221 = vadd.f32 %v4092, %v4220
        %4222 = vmatmul.bf16.gmra.mxu0 %v3488
        %v4223 = vpop.f32.mrf.mxu0
        %v4224 = vadd.f32 %v4095, %v4223
        %v4225 = vpop.f32.mrf.mxu0
        %v4226 = vadd.f32 %v4097, %v4225
        %4227 = vmatmul.bf16.gmra.mxu0 %v3491
        %v4228 = vpop.f32.mrf.mxu0
        %v4229 = vadd.f32 %v4100, %v4228
        %v4230 = vpop.f32.mrf.mxu0
        %v4231 = vadd.f32 %v4102, %v4230
        %4232 = vmatmul.bf16.gmra.mxu0 %v3494
        %v4233 = vpop.f32.mrf.mxu0
        %v4234 = vadd.f32 %v4105, %v4233
        %v4235 = vpop.f32.mrf.mxu0
        %v4236 = vadd.f32 %v4107, %v4235
        %4237 = vmatmul.bf16.gmra.mxu0 %v3497
        %v4238 = vpop.f32.mrf.mxu0
        %v4239 = vadd.f32 %v4110, %v4238
        %v4240 = vpop.f32.mrf.mxu0
        %v4241 = vadd.f32 %v4112, %v4240
        %4242 = vmatmul.bf16.gmra.mxu0 %v3500
        %v4243 = vpop.f32.mrf.mxu0
        %v4244 = vadd.f32 %v4115, %v4243
        %v4245 = vpop.f32.mrf.mxu0
        %v4246 = vadd.f32 %v4117, %v4245
        %4247 = vmatmul.bf16.gmra.mxu0 %v3503
        %v4248 = vpop.f32.mrf.mxu0
        %v4249 = vadd.f32 %v4120, %v4248
        %v4250 = vpop.f32.mrf.mxu0
        %v4251 = vadd.f32 %v4122, %v4250
        %4252 = vmatmul.bf16.gmra.mxu0 %v3506
        %v4253 = vpop.f32.mrf.mxu0
        %v4254 = vadd.f32 %v4125, %v4253
        %v4255 = vpop.f32.mrf.mxu0
        %v4256 = vadd.f32 %v4127, %v4255
        %4257 = vmatmul.bf16.gmra.mxu0 %v3509
        %v4258 = vpop.f32.mrf.mxu0
        %v4259 = vadd.f32 %v4130, %v4258
        %v4260 = vpop.f32.mrf.mxu0
        %v4261 = vadd.f32 %v4132, %v4260
        %4262 = vmatmul.bf16.gmra.mxu0 %v3512
        %v4263 = vpop.f32.mrf.mxu0
        %v4264 = vadd.f32 %v4135, %v4263
        %v4265 = vpop.f32.mrf.mxu0
        %v4266 = vadd.f32 %v4137, %v4265
        %4267 = vmatmul.bf16.gmra.mxu0 %v3515
        %v4268 = vpop.f32.mrf.mxu0
        %v4269 = vadd.f32 %v4140, %v4268
        %v4270 = vpop.f32.mrf.mxu0
        %v4271 = vadd.f32 %v4142, %v4270
        %4272 = vmatmul.bf16.gmra.mxu0 %v3518
        %v4273 = vpop.f32.mrf.mxu0
        %v4274 = vadd.f32 %v4145, %v4273
        %v4275 = vpop.f32.mrf.mxu0
        %v4276 = vadd.f32 %v4147, %v4275
        %4277 = vmatmul.bf16.gmra.mxu0 %v3521
        %v4278 = vpop.f32.mrf.mxu0
        %v4279 = vadd.f32 %v4150, %v4278
        %v4280 = vpop.f32.mrf.mxu0
        %v4281 = vadd.f32 %v4152, %v4280
        %4282 = vmatmul.bf16.gmra.mxu0 %v3524
        %v4283 = vpop.f32.mrf.mxu0
        %v4284 = vadd.f32 %v4155, %v4283
        %v4285 = vpop.f32.mrf.mxu0
        %v4286 = vadd.f32 %v4157, %v4285
        %4287 = vmatmul.bf16.gmra.mxu0 %v3527
        %v4288 = vpop.f32.mrf.mxu0
        %v4289 = vadd.f32 %v4160, %v4288
        %v4290 = vpop.f32.mrf.mxu0
        %v4291 = vadd.f32 %v4162, %v4290
        %4292 = vmatmul.bf16.gmra.mxu0 %v3530
        %v4293 = vpop.f32.mrf.mxu0
        %v4294 = vadd.f32 %v4165, %v4293
        %v4295 = vpop.f32.mrf.mxu0
        %v4296 = vadd.f32 %v4167, %v4295
        %4297 = vmatmul.bf16.gmra.mxu0 %v3533
        %v4298 = vpop.f32.mrf.mxu0
        %v4299 = vadd.f32 %v4170, %v4298
        %v4300 = vpop.f32.mrf.mxu0
        %v4301 = vadd.f32 %v4172, %v4300
        %4302 = vmatmul.bf16.gmra.mxu0 %v3536
        %v4303 = vpop.f32.mrf.mxu0
        %v4304 = vadd.f32 %v4175, %v4303
        %v4305 = vpop.f32.mrf.mxu0
        %v4306 = vadd.f32 %v4177, %v4305
        %4307 = vmatmul.bf16.gmra.mxu0 %v3539
        %v4308 = vpop.f32.mrf.mxu0
        %v4309 = vadd.f32 %v4180, %v4308
        %v4310 = vpop.f32.mrf.mxu0
        %v4311 = vadd.f32 %v4182, %v4310
        %4312 = vmatmul.bf16.gmra.mxu0 %v3542
        %v4313 = vpop.f32.mrf.mxu0
        %v4314 = vadd.f32 %v4185, %v4313
        %v4315 = vpop.f32.mrf.mxu0
        %v4316 = vadd.f32 %v4187, %v4315
        %4317 = vdwg.mxu0
        %4318 = vmatpush.bf16.msra.mxu0 %v2250
        %4319 = vmatpush.bf16.msra.mxu0 %v2247
        %4320 = vmatpush.bf16.msra.mxu0 %v2244
        %4321 = vmatpush.bf16.msra.mxu0 %v2241
        %4322 = vmatpush.bf16.msra.mxu0 %v2238
        %4323 = vmatpush.bf16.msra.mxu0 %v2235
        %4324 = vmatpush.bf16.msra.mxu0 %v2232
        %4325 = vmatpush.bf16.msra.mxu0 %v2229
        %4326 = vmatmul.bf16.gmra.mxu0 %v3400
        %v4327 = vpop.f32.mrf.mxu0
        %v4328 = vadd.f32 0.0, %v4327
        %v4329 = vpop.f32.mrf.mxu0
        %v4330 = vadd.f32 0.0, %v4329
        %4331 = vmatmul.bf16.gmra.mxu0 %v3402
        %v4332 = vpop.f32.mrf.mxu0
        %v4333 = vadd.f32 0.0, %v4332
        %v4334 = vpop.f32.mrf.mxu0
        %v4335 = vadd.f32 0.0, %v4334
        %4336 = vmatmul.bf16.gmra.mxu0 %v3404
        %v4337 = vpop.f32.mrf.mxu0
        %v4338 = vadd.f32 0.0, %v4337
        %v4339 = vpop.f32.mrf.mxu0
        %v4340 = vadd.f32 0.0, %v4339
        %4341 = vmatmul.bf16.gmra.mxu0 %v3406
        %v4342 = vpop.f32.mrf.mxu0
        %v4343 = vadd.f32 0.0, %v4342
        %v4344 = vpop.f32.mrf.mxu0
        %v4345 = vadd.f32 0.0, %v4344
        %4346 = vmatmul.bf16.gmra.mxu0 %v3408
        %v4347 = vpop.f32.mrf.mxu0
        %v4348 = vadd.f32 0.0, %v4347
        %v4349 = vpop.f32.mrf.mxu0
        %v4350 = vadd.f32 0.0, %v4349
        %4351 = vmatmul.bf16.gmra.mxu0 %v3410
        %v4352 = vpop.f32.mrf.mxu0
        %v4353 = vadd.f32 0.0, %v4352
        %v4354 = vpop.f32.mrf.mxu0
        %v4355 = vadd.f32 0.0, %v4354
        %4356 = vmatmul.bf16.gmra.mxu0 %v3412
        %v4357 = vpop.f32.mrf.mxu0
        %v4358 = vadd.f32 0.0, %v4357
        %v4359 = vpop.f32.mrf.mxu0
        %v4360 = vadd.f32 0.0, %v4359
        %4361 = vmatmul.bf16.gmra.mxu0 %v3414
        %v4362 = vpop.f32.mrf.mxu0
        %v4363 = vadd.f32 0.0, %v4362
        %v4364 = vpop.f32.mrf.mxu0
        %v4365 = vadd.f32 0.0, %v4364
        %4366 = vmatmul.bf16.gmra.mxu0 %v3416
        %v4367 = vpop.f32.mrf.mxu0
        %v4368 = vadd.f32 0.0, %v4367
        %v4369 = vpop.f32.mrf.mxu0
        %v4370 = vadd.f32 0.0, %v4369
        %4371 = vmatmul.bf16.gmra.mxu0 %v3418
        %v4372 = vpop.f32.mrf.mxu0
        %v4373 = vadd.f32 0.0, %v4372
        %v4374 = vpop.f32.mrf.mxu0
        %v4375 = vadd.f32 0.0, %v4374
        %4376 = vmatmul.bf16.gmra.mxu0 %v3420
        %v4377 = vpop.f32.mrf.mxu0
        %v4378 = vadd.f32 0.0, %v4377
        %v4379 = vpop.f32.mrf.mxu0
        %v4380 = vadd.f32 0.0, %v4379
        %4381 = vmatmul.bf16.gmra.mxu0 %v3422
        %v4382 = vpop.f32.mrf.mxu0
        %v4383 = vadd.f32 0.0, %v4382
        %v4384 = vpop.f32.mrf.mxu0
        %v4385 = vadd.f32 0.0, %v4384
        %4386 = vmatmul.bf16.gmra.mxu0 %v3424
        %v4387 = vpop.f32.mrf.mxu0
        %v4388 = vadd.f32 0.0, %v4387
        %v4389 = vpop.f32.mrf.mxu0
        %v4390 = vadd.f32 0.0, %v4389
        %4391 = vmatmul.bf16.gmra.mxu0 %v3426
        %v4392 = vpop.f32.mrf.mxu0
        %v4393 = vadd.f32 0.0, %v4392
        %v4394 = vpop.f32.mrf.mxu0
        %v4395 = vadd.f32 0.0, %v4394
        %4396 = vmatmul.bf16.gmra.mxu0 %v3428
        %v4397 = vpop.f32.mrf.mxu0
        %v4398 = vadd.f32 0.0, %v4397
        %v4399 = vpop.f32.mrf.mxu0
        %v4400 = vadd.f32 0.0, %v4399
        %4401 = vmatmul.bf16.gmra.mxu0 %v3430
        %v4402 = vpop.f32.mrf.mxu0
        %v4403 = vadd.f32 0.0, %v4402
        %v4404 = vpop.f32.mrf.mxu0
        %v4405 = vadd.f32 0.0, %v4404
        %4406 = vmatmul.bf16.gmra.mxu0 %v3432
        %v4407 = vpop.f32.mrf.mxu0
        %v4408 = vadd.f32 0.0, %v4407
        %v4409 = vpop.f32.mrf.mxu0
        %v4410 = vadd.f32 0.0, %v4409
        %4411 = vmatmul.bf16.gmra.mxu0 %v3434
        %v4412 = vpop.f32.mrf.mxu0
        %v4413 = vadd.f32 0.0, %v4412
        %v4414 = vpop.f32.mrf.mxu0
        %v4415 = vadd.f32 0.0, %v4414
        %4416 = vmatmul.bf16.gmra.mxu0 %v3436
        %v4417 = vpop.f32.mrf.mxu0
        %v4418 = vadd.f32 0.0, %v4417
        %v4419 = vpop.f32.mrf.mxu0
        %v4420 = vadd.f32 0.0, %v4419
        %4421 = vmatmul.bf16.gmra.mxu0 %v3438
        %v4422 = vpop.f32.mrf.mxu0
        %v4423 = vadd.f32 0.0, %v4422
        %v4424 = vpop.f32.mrf.mxu0
        %v4425 = vadd.f32 0.0, %v4424
        %4426 = vmatmul.bf16.gmra.mxu0 %v3440
        %v4427 = vpop.f32.mrf.mxu0
        %v4428 = vadd.f32 0.0, %v4427
        %v4429 = vpop.f32.mrf.mxu0
        %v4430 = vadd.f32 0.0, %v4429
        %4431 = vmatmul.bf16.gmra.mxu0 %v3442
        %v4432 = vpop.f32.mrf.mxu0
        %v4433 = vadd.f32 0.0, %v4432
        %v4434 = vpop.f32.mrf.mxu0
        %v4435 = vadd.f32 0.0, %v4434
        %4436 = vmatmul.bf16.gmra.mxu0 %v3444
        %v4437 = vpop.f32.mrf.mxu0
        %v4438 = vadd.f32 0.0, %v4437
        %v4439 = vpop.f32.mrf.mxu0
        %v4440 = vadd.f32 0.0, %v4439
        %4441 = vmatmul.bf16.gmra.mxu0 %v3446
        %v4442 = vpop.f32.mrf.mxu0
        %v4443 = vadd.f32 0.0, %v4442
        %v4444 = vpop.f32.mrf.mxu0
        %v4445 = vadd.f32 0.0, %v4444
        %4446 = vdwg.mxu0
        %4447 = vmatpush.bf16.msra.mxu0 0
        %4448 = vmatpush.bf16.msra.mxu0 0
        %4449 = vmatpush.bf16.msra.mxu0 0
        %4450 = vmatpush.bf16.msra.mxu0 0
        %4451 = vmatpush.bf16.msra.mxu0 0
        %4452 = vmatpush.bf16.msra.mxu0 0
        %4453 = vmatpush.bf16.msra.mxu0 0
        %4454 = vmatpush.bf16.msra.mxu0 %v2281
        %4455 = vmatmul.bf16.gmra.mxu0 %v3473
        %v4456 = vpop.f32.mrf.mxu0
        %v4457 = vadd.f32 %v4328, %v4456
        %v4458 = vpop.f32.mrf.mxu0
        %v4459 = vadd.f32 %v4330, %v4458
        %4460 = vmatmul.bf16.gmra.mxu0 %v3476
        %v4461 = vpop.f32.mrf.mxu0
        %v4462 = vadd.f32 %v4333, %v4461
        %v4463 = vpop.f32.mrf.mxu0
        %v4464 = vadd.f32 %v4335, %v4463
        %4465 = vmatmul.bf16.gmra.mxu0 %v3479
        %v4466 = vpop.f32.mrf.mxu0
        %v4467 = vadd.f32 %v4338, %v4466
        %v4468 = vpop.f32.mrf.mxu0
        %v4469 = vadd.f32 %v4340, %v4468
        %4470 = vmatmul.bf16.gmra.mxu0 %v3482
        %v4471 = vpop.f32.mrf.mxu0
        %v4472 = vadd.f32 %v4343, %v4471
        %v4473 = vpop.f32.mrf.mxu0
        %v4474 = vadd.f32 %v4345, %v4473
        %4475 = vmatmul.bf16.gmra.mxu0 %v3485
        %v4476 = vpop.f32.mrf.mxu0
        %v4477 = vadd.f32 %v4348, %v4476
        %v4478 = vpop.f32.mrf.mxu0
        %v4479 = vadd.f32 %v4350, %v4478
        %4480 = vmatmul.bf16.gmra.mxu0 %v3488
        %v4481 = vpop.f32.mrf.mxu0
        %v4482 = vadd.f32 %v4353, %v4481
        %v4483 = vpop.f32.mrf.mxu0
        %v4484 = vadd.f32 %v4355, %v4483
        %4485 = vmatmul.bf16.gmra.mxu0 %v3491
        %v4486 = vpop.f32.mrf.mxu0
        %v4487 = vadd.f32 %v4358, %v4486
        %v4488 = vpop.f32.mrf.mxu0
        %v4489 = vadd.f32 %v4360, %v4488
        %4490 = vmatmul.bf16.gmra.mxu0 %v3494
        %v4491 = vpop.f32.mrf.mxu0
        %v4492 = vadd.f32 %v4363, %v4491
        %v4493 = vpop.f32.mrf.mxu0
        %v4494 = vadd.f32 %v4365, %v4493
        %4495 = vmatmul.bf16.gmra.mxu0 %v3497
        %v4496 = vpop.f32.mrf.mxu0
        %v4497 = vadd.f32 %v4368, %v4496
        %v4498 = vpop.f32.mrf.mxu0
        %v4499 = vadd.f32 %v4370, %v4498
        %4500 = vmatmul.bf16.gmra.mxu0 %v3500
        %v4501 = vpop.f32.mrf.mxu0
        %v4502 = vadd.f32 %v4373, %v4501
        %v4503 = vpop.f32.mrf.mxu0
        %v4504 = vadd.f32 %v4375, %v4503
        %4505 = vmatmul.bf16.gmra.mxu0 %v3503
        %v4506 = vpop.f32.mrf.mxu0
        %v4507 = vadd.f32 %v4378, %v4506
        %v4508 = vpop.f32.mrf.mxu0
        %v4509 = vadd.f32 %v4380, %v4508
        %4510 = vmatmul.bf16.gmra.mxu0 %v3506
        %v4511 = vpop.f32.mrf.mxu0
        %v4512 = vadd.f32 %v4383, %v4511
        %v4513 = vpop.f32.mrf.mxu0
        %v4514 = vadd.f32 %v4385, %v4513
        %4515 = vmatmul.bf16.gmra.mxu0 %v3509
        %v4516 = vpop.f32.mrf.mxu0
        %v4517 = vadd.f32 %v4388, %v4516
        %v4518 = vpop.f32.mrf.mxu0
        %v4519 = vadd.f32 %v4390, %v4518
        %4520 = vmatmul.bf16.gmra.mxu0 %v3512
        %v4521 = vpop.f32.mrf.mxu0
        %v4522 = vadd.f32 %v4393, %v4521
        %v4523 = vpop.f32.mrf.mxu0
        %v4524 = vadd.f32 %v4395, %v4523
        %4525 = vmatmul.bf16.gmra.mxu0 %v3515
        %v4526 = vpop.f32.mrf.mxu0
        %v4527 = vadd.f32 %v4398, %v4526
        %v4528 = vpop.f32.mrf.mxu0
        %v4529 = vadd.f32 %v4400, %v4528
        %4530 = vmatmul.bf16.gmra.mxu0 %v3518
        %v4531 = vpop.f32.mrf.mxu0
        %v4532 = vadd.f32 %v4403, %v4531
        %v4533 = vpop.f32.mrf.mxu0
        %v4534 = vadd.f32 %v4405, %v4533
        %4535 = vmatmul.bf16.gmra.mxu0 %v3521
        %v4536 = vpop.f32.mrf.mxu0
        %v4537 = vadd.f32 %v4408, %v4536
        %v4538 = vpop.f32.mrf.mxu0
        %v4539 = vadd.f32 %v4410, %v4538
        %4540 = vmatmul.bf16.gmra.mxu0 %v3524
        %v4541 = vpop.f32.mrf.mxu0
        %v4542 = vadd.f32 %v4413, %v4541
        %v4543 = vpop.f32.mrf.mxu0
        %v4544 = vadd.f32 %v4415, %v4543
        %4545 = vmatmul.bf16.gmra.mxu0 %v3527
        %v4546 = vpop.f32.mrf.mxu0
        %v4547 = vadd.f32 %v4418, %v4546
        %v4548 = vpop.f32.mrf.mxu0
        %v4549 = vadd.f32 %v4420, %v4548
        %4550 = vmatmul.bf16.gmra.mxu0 %v3530
        %v4551 = vpop.f32.mrf.mxu0
        %v4552 = vadd.f32 %v4423, %v4551
        %v4553 = vpop.f32.mrf.mxu0
        %v4554 = vadd.f32 %v4425, %v4553
        %4555 = vmatmul.bf16.gmra.mxu0 %v3533
        %v4556 = vpop.f32.mrf.mxu0
        %v4557 = vadd.f32 %v4428, %v4556
        %v4558 = vpop.f32.mrf.mxu0
        %v4559 = vadd.f32 %v4430, %v4558
        %4560 = vmatmul.bf16.gmra.mxu0 %v3536
        %v4561 = vpop.f32.mrf.mxu0
        %v4562 = vadd.f32 %v4433, %v4561
        %v4563 = vpop.f32.mrf.mxu0
        %v4564 = vadd.f32 %v4435, %v4563
        %4565 = vmatmul.bf16.gmra.mxu0 %v3539
        %v4566 = vpop.f32.mrf.mxu0
        %v4567 = vadd.f32 %v4438, %v4566
        %v4568 = vpop.f32.mrf.mxu0
        %v4569 = vadd.f32 %v4440, %v4568
        %4570 = vmatmul.bf16.gmra.mxu0 %v3542
        %v4571 = vpop.f32.mrf.mxu0
        %v4572 = vadd.f32 %v4443, %v4571
        %v4573 = vpop.f32.mrf.mxu0
        %v4574 = vadd.f32 %v4445, %v4573
        %4575 = vdwg.mxu0
        %4576 = vmatpush.bf16.msra.mxu0 %v2251
        %4577 = vmatpush.bf16.msra.mxu0 %v2248
        %4578 = vmatpush.bf16.msra.mxu0 %v2245
        %4579 = vmatpush.bf16.msra.mxu0 %v2242
        %4580 = vmatpush.bf16.msra.mxu0 %v2239
        %4581 = vmatpush.bf16.msra.mxu0 %v2236
        %4582 = vmatpush.bf16.msra.mxu0 %v2233
        %4583 = vmatpush.bf16.msra.mxu0 %v2230
        %4584 = vmatmul.bf16.gmra.mxu0 %v3400
        %v4585 = vpop.f32.mrf.mxu0
        %v4586 = vadd.f32 0.0, %v4585
        %v4587 = vpop.f32.mrf.mxu0
        %v4588 = vadd.f32 0.0, %v4587
        %4589 = vmatmul.bf16.gmra.mxu0 %v3402
        %v4590 = vpop.f32.mrf.mxu0
        %v4591 = vadd.f32 0.0, %v4590
        %v4592 = vpop.f32.mrf.mxu0
        %v4593 = vadd.f32 0.0, %v4592
        %4594 = vmatmul.bf16.gmra.mxu0 %v3404
        %v4595 = vpop.f32.mrf.mxu0
        %v4596 = vadd.f32 0.0, %v4595
        %v4597 = vpop.f32.mrf.mxu0
        %v4598 = vadd.f32 0.0, %v4597
        %4599 = vmatmul.bf16.gmra.mxu0 %v3406
        %v4600 = vpop.f32.mrf.mxu0
        %v4601 = vadd.f32 0.0, %v4600
        %v4602 = vpop.f32.mrf.mxu0
        %v4603 = vadd.f32 0.0, %v4602
        %4604 = vmatmul.bf16.gmra.mxu0 %v3408
        %v4605 = vpop.f32.mrf.mxu0
        %v4606 = vadd.f32 0.0, %v4605
        %v4607 = vpop.f32.mrf.mxu0
        %v4608 = vadd.f32 0.0, %v4607
        %4609 = vmatmul.bf16.gmra.mxu0 %v3410
        %v4610 = vpop.f32.mrf.mxu0
        %v4611 = vadd.f32 0.0, %v4610
        %v4612 = vpop.f32.mrf.mxu0
        %v4613 = vadd.f32 0.0, %v4612
        %4614 = vmatmul.bf16.gmra.mxu0 %v3412
        %v4615 = vpop.f32.mrf.mxu0
        %v4616 = vadd.f32 0.0, %v4615
        %v4617 = vpop.f32.mrf.mxu0
        %v4618 = vadd.f32 0.0, %v4617
        %4619 = vmatmul.bf16.gmra.mxu0 %v3414
        %v4620 = vpop.f32.mrf.mxu0
        %v4621 = vadd.f32 0.0, %v4620
        %v4622 = vpop.f32.mrf.mxu0
        %v4623 = vadd.f32 0.0, %v4622
        %4624 = vmatmul.bf16.gmra.mxu0 %v3416
        %v4625 = vpop.f32.mrf.mxu0
        %v4626 = vadd.f32 0.0, %v4625
        %v4627 = vpop.f32.mrf.mxu0
        %v4628 = vadd.f32 0.0, %v4627
        %4629 = vmatmul.bf16.gmra.mxu0 %v3418
        %v4630 = vpop.f32.mrf.mxu0
        %v4631 = vadd.f32 0.0, %v4630
        %v4632 = vpop.f32.mrf.mxu0
        %v4633 = vadd.f32 0.0, %v4632
        %4634 = vmatmul.bf16.gmra.mxu0 %v3420
        %v4635 = vpop.f32.mrf.mxu0
        %v4636 = vadd.f32 0.0, %v4635
        %v4637 = vpop.f32.mrf.mxu0
        %v4638 = vadd.f32 0.0, %v4637
        %4639 = vmatmul.bf16.gmra.mxu0 %v3422
        %v4640 = vpop.f32.mrf.mxu0
        %v4641 = vadd.f32 0.0, %v4640
        %v4642 = vpop.f32.mrf.mxu0
        %v4643 = vadd.f32 0.0, %v4642
        %4644 = vmatmul.bf16.gmra.mxu0 %v3424
        %v4645 = vpop.f32.mrf.mxu0
        %v4646 = vadd.f32 0.0, %v4645
        %v4647 = vpop.f32.mrf.mxu0
        %v4648 = vadd.f32 0.0, %v4647
        %4649 = vmatmul.bf16.gmra.mxu0 %v3426
        %v4650 = vpop.f32.mrf.mxu0
        %v4651 = vadd.f32 0.0, %v4650
        %v4652 = vpop.f32.mrf.mxu0
        %v4653 = vadd.f32 0.0, %v4652
        %4654 = vmatmul.bf16.gmra.mxu0 %v3428
        %v4655 = vpop.f32.mrf.mxu0
        %v4656 = vadd.f32 0.0, %v4655
        %v4657 = vpop.f32.mrf.mxu0
        %v4658 = vadd.f32 0.0, %v4657
        %4659 = vmatmul.bf16.gmra.mxu0 %v3430
        %v4660 = vpop.f32.mrf.mxu0
        %v4661 = vadd.f32 0.0, %v4660
        %v4662 = vpop.f32.mrf.mxu0
        %v4663 = vadd.f32 0.0, %v4662
        %4664 = vmatmul.bf16.gmra.mxu0 %v3432
        %v4665 = vpop.f32.mrf.mxu0
        %v4666 = vadd.f32 0.0, %v4665
        %v4667 = vpop.f32.mrf.mxu0
        %v4668 = vadd.f32 0.0, %v4667
        %4669 = vmatmul.bf16.gmra.mxu0 %v3434
        %v4670 = vpop.f32.mrf.mxu0
        %v4671 = vadd.f32 0.0, %v4670
        %v4672 = vpop.f32.mrf.mxu0
        %v4673 = vadd.f32 0.0, %v4672
        %4674 = vmatmul.bf16.gmra.mxu0 %v3436
        %v4675 = vpop.f32.mrf.mxu0
        %v4676 = vadd.f32 0.0, %v4675
        %v4677 = vpop.f32.mrf.mxu0
        %v4678 = vadd.f32 0.0, %v4677
        %4679 = vmatmul.bf16.gmra.mxu0 %v3438
        %v4680 = vpop.f32.mrf.mxu0
        %v4681 = vadd.f32 0.0, %v4680
        %v4682 = vpop.f32.mrf.mxu0
        %v4683 = vadd.f32 0.0, %v4682
        %4684 = vmatmul.bf16.gmra.mxu0 %v3440
        %v4685 = vpop.f32.mrf.mxu0
        %v4686 = vadd.f32 0.0, %v4685
        %v4687 = vpop.f32.mrf.mxu0
        %v4688 = vadd.f32 0.0, %v4687
        %4689 = vmatmul.bf16.gmra.mxu0 %v3442
        %v4690 = vpop.f32.mrf.mxu0
        %v4691 = vadd.f32 0.0, %v4690
        %v4692 = vpop.f32.mrf.mxu0
        %v4693 = vadd.f32 0.0, %v4692
        %4694 = vmatmul.bf16.gmra.mxu0 %v3444
        %v4695 = vpop.f32.mrf.mxu0
        %v4696 = vadd.f32 0.0, %v4695
        %v4697 = vpop.f32.mrf.mxu0
        %v4698 = vadd.f32 0.0, %v4697
        %4699 = vmatmul.bf16.gmra.mxu0 %v3446
        %v4700 = vpop.f32.mrf.mxu0
        %v4701 = vadd.f32 0.0, %v4700
        %v4702 = vpop.f32.mrf.mxu0
        %v4703 = vadd.f32 0.0, %v4702
        %4704 = vdwg.mxu0
        %4705 = vmatpush.bf16.msra.mxu0 0
        %4706 = vmatpush.bf16.msra.mxu0 0
        %4707 = vmatpush.bf16.msra.mxu0 0
        %4708 = vmatpush.bf16.msra.mxu0 0
        %4709 = vmatpush.bf16.msra.mxu0 0
        %4710 = vmatpush.bf16.msra.mxu0 0
        %4711 = vmatpush.bf16.msra.mxu0 0
        %4712 = vmatpush.bf16.msra.mxu0 %v2284
        %4713 = vmatmul.bf16.gmra.mxu0 %v3473
        %v4714 = vpop.f32.mrf.mxu0
        %v4715 = vadd.f32 %v4586, %v4714
        %v4716 = vpop.f32.mrf.mxu0
        %v4717 = vadd.f32 %v4588, %v4716
        %4718 = vmatmul.bf16.gmra.mxu0 %v3476
        %v4719 = vpop.f32.mrf.mxu0
        %v4720 = vadd.f32 %v4591, %v4719
        %v4721 = vpop.f32.mrf.mxu0
        %v4722 = vadd.f32 %v4593, %v4721
        %4723 = vmatmul.bf16.gmra.mxu0 %v3479
        %v4724 = vpop.f32.mrf.mxu0
        %v4725 = vadd.f32 %v4596, %v4724
        %v4726 = vpop.f32.mrf.mxu0
        %v4727 = vadd.f32 %v4598, %v4726
        %4728 = vmatmul.bf16.gmra.mxu0 %v3482
        %v4729 = vpop.f32.mrf.mxu0
        %v4730 = vadd.f32 %v4601, %v4729
        %v4731 = vpop.f32.mrf.mxu0
        %v4732 = vadd.f32 %v4603, %v4731
        %4733 = vmatmul.bf16.gmra.mxu0 %v3485
        %v4734 = vpop.f32.mrf.mxu0
        %v4735 = vadd.f32 %v4606, %v4734
        %v4736 = vpop.f32.mrf.mxu0
        %v4737 = vadd.f32 %v4608, %v4736
        %4738 = vmatmul.bf16.gmra.mxu0 %v3488
        %v4739 = vpop.f32.mrf.mxu0
        %v4740 = vadd.f32 %v4611, %v4739
        %v4741 = vpop.f32.mrf.mxu0
        %v4742 = vadd.f32 %v4613, %v4741
        %4743 = vmatmul.bf16.gmra.mxu0 %v3491
        %v4744 = vpop.f32.mrf.mxu0
        %v4745 = vadd.f32 %v4616, %v4744
        %v4746 = vpop.f32.mrf.mxu0
        %v4747 = vadd.f32 %v4618, %v4746
        %4748 = vmatmul.bf16.gmra.mxu0 %v3494
        %v4749 = vpop.f32.mrf.mxu0
        %v4750 = vadd.f32 %v4621, %v4749
        %v4751 = vpop.f32.mrf.mxu0
        %v4752 = vadd.f32 %v4623, %v4751
        %4753 = vmatmul.bf16.gmra.mxu0 %v3497
        %v4754 = vpop.f32.mrf.mxu0
        %v4755 = vadd.f32 %v4626, %v4754
        %v4756 = vpop.f32.mrf.mxu0
        %v4757 = vadd.f32 %v4628, %v4756
        %4758 = vmatmul.bf16.gmra.mxu0 %v3500
        %v4759 = vpop.f32.mrf.mxu0
        %v4760 = vadd.f32 %v4631, %v4759
        %v4761 = vpop.f32.mrf.mxu0
        %v4762 = vadd.f32 %v4633, %v4761
        %4763 = vmatmul.bf16.gmra.mxu0 %v3503
        %v4764 = vpop.f32.mrf.mxu0
        %v4765 = vadd.f32 %v4636, %v4764
        %v4766 = vpop.f32.mrf.mxu0
        %v4767 = vadd.f32 %v4638, %v4766
        %4768 = vmatmul.bf16.gmra.mxu0 %v3506
        %v4769 = vpop.f32.mrf.mxu0
        %v4770 = vadd.f32 %v4641, %v4769
        %v4771 = vpop.f32.mrf.mxu0
        %v4772 = vadd.f32 %v4643, %v4771
        %4773 = vmatmul.bf16.gmra.mxu0 %v3509
        %v4774 = vpop.f32.mrf.mxu0
        %v4775 = vadd.f32 %v4646, %v4774
        %v4776 = vpop.f32.mrf.mxu0
        %v4777 = vadd.f32 %v4648, %v4776
        %4778 = vmatmul.bf16.gmra.mxu0 %v3512
        %v4779 = vpop.f32.mrf.mxu0
        %v4780 = vadd.f32 %v4651, %v4779
        %v4781 = vpop.f32.mrf.mxu0
        %v4782 = vadd.f32 %v4653, %v4781
        %4783 = vmatmul.bf16.gmra.mxu0 %v3515
        %v4784 = vpop.f32.mrf.mxu0
        %v4785 = vadd.f32 %v4656, %v4784
        %v4786 = vpop.f32.mrf.mxu0
        %v4787 = vadd.f32 %v4658, %v4786
        %4788 = vmatmul.bf16.gmra.mxu0 %v3518
        %v4789 = vpop.f32.mrf.mxu0
        %v4790 = vadd.f32 %v4661, %v4789
        %v4791 = vpop.f32.mrf.mxu0
        %v4792 = vadd.f32 %v4663, %v4791
        %4793 = vmatmul.bf16.gmra.mxu0 %v3521
        %v4794 = vpop.f32.mrf.mxu0
        %v4795 = vadd.f32 %v4666, %v4794
        %v4796 = vpop.f32.mrf.mxu0
        %v4797 = vadd.f32 %v4668, %v4796
        %4798 = vmatmul.bf16.gmra.mxu0 %v3524
        %v4799 = vpop.f32.mrf.mxu0
        %v4800 = vadd.f32 %v4671, %v4799
        %v4801 = vpop.f32.mrf.mxu0
        %v4802 = vadd.f32 %v4673, %v4801
        %4803 = vmatmul.bf16.gmra.mxu0 %v3527
        %v4804 = vpop.f32.mrf.mxu0
        %v4805 = vadd.f32 %v4676, %v4804
        %v4806 = vpop.f32.mrf.mxu0
        %v4807 = vadd.f32 %v4678, %v4806
        %4808 = vmatmul.bf16.gmra.mxu0 %v3530
        %v4809 = vpop.f32.mrf.mxu0
        %v4810 = vadd.f32 %v4681, %v4809
        %v4811 = vpop.f32.mrf.mxu0
        %v4812 = vadd.f32 %v4683, %v4811
        %4813 = vmatmul.bf16.gmra.mxu0 %v3533
        %v4814 = vpop.f32.mrf.mxu0
        %v4815 = vadd.f32 %v4686, %v4814
        %v4816 = vpop.f32.mrf.mxu0
        %v4817 = vadd.f32 %v4688, %v4816
        %4818 = vmatmul.bf16.gmra.mxu0 %v3536
        %v4819 = vpop.f32.mrf.mxu0
        %v4820 = vadd.f32 %v4691, %v4819
        %v4821 = vpop.f32.mrf.mxu0
        %v4822 = vadd.f32 %v4693, %v4821
        %4823 = vmatmul.bf16.gmra.mxu0 %v3539
        %v4824 = vpop.f32.mrf.mxu0
        %v4825 = vadd.f32 %v4696, %v4824
        %v4826 = vpop.f32.mrf.mxu0
        %v4827 = vadd.f32 %v4698, %v4826
        %4828 = vmatmul.bf16.gmra.mxu0 %v3542
        %v4829 = vpop.f32.mrf.mxu0
        %v4830 = vadd.f32 %v4701, %v4829
        %v4831 = vpop.f32.mrf.mxu0
        %v4832 = vadd.f32 %v4703, %v4831
        %4833 = vdwg.mxu0
        %4834 = vmatpush.bf16.msra.mxu0 %v2252
        %4835 = vmatpush.bf16.msra.mxu0 %v2249
        %4836 = vmatpush.bf16.msra.mxu0 %v2246
        %4837 = vmatpush.bf16.msra.mxu0 %v2243
        %4838 = vmatpush.bf16.msra.mxu0 %v2240
        %4839 = vmatpush.bf16.msra.mxu0 %v2237
        %4840 = vmatpush.bf16.msra.mxu0 %v2234
        %4841 = vmatpush.bf16.msra.mxu0 %v2231
        %4842 = vmatmul.bf16.gmra.mxu0 %v3400
        %v4843 = vpop.f32.mrf.mxu0
        %v4844 = vadd.f32 0.0, %v4843
        %v4845 = vpop.f32.mrf.mxu0
        %v4846 = vadd.f32 0.0, %v4845
        %4847 = vmatmul.bf16.gmra.mxu0 %v3402
        %v4848 = vpop.f32.mrf.mxu0
        %v4849 = vadd.f32 0.0, %v4848
        %v4850 = vpop.f32.mrf.mxu0
        %v4851 = vadd.f32 0.0, %v4850
        %4852 = vmatmul.bf16.gmra.mxu0 %v3404
        %v4853 = vpop.f32.mrf.mxu0
        %v4854 = vadd.f32 0.0, %v4853
        %v4855 = vpop.f32.mrf.mxu0
        %v4856 = vadd.f32 0.0, %v4855
        %4857 = vmatmul.bf16.gmra.mxu0 %v3406
        %v4858 = vpop.f32.mrf.mxu0
        %v4859 = vadd.f32 0.0, %v4858
        %v4860 = vpop.f32.mrf.mxu0
        %v4861 = vadd.f32 0.0, %v4860
        %4862 = vmatmul.bf16.gmra.mxu0 %v3408
        %v4863 = vpop.f32.mrf.mxu0
        %v4864 = vadd.f32 0.0, %v4863
        %v4865 = vpop.f32.mrf.mxu0
        %v4866 = vadd.f32 0.0, %v4865
        %4867 = vmatmul.bf16.gmra.mxu0 %v3410
        %v4868 = vpop.f32.mrf.mxu0
        %v4869 = vadd.f32 0.0, %v4868
        %v4870 = vpop.f32.mrf.mxu0
        %v4871 = vadd.f32 0.0, %v4870
        %4872 = vmatmul.bf16.gmra.mxu0 %v3412
        %v4873 = vpop.f32.mrf.mxu0
        %v4874 = vadd.f32 0.0, %v4873
        %v4875 = vpop.f32.mrf.mxu0
        %v4876 = vadd.f32 0.0, %v4875
        %4877 = vmatmul.bf16.gmra.mxu0 %v3414
        %v4878 = vpop.f32.mrf.mxu0
        %v4879 = vadd.f32 0.0, %v4878
        %v4880 = vpop.f32.mrf.mxu0
        %v4881 = vadd.f32 0.0, %v4880
        %4882 = vmatmul.bf16.gmra.mxu0 %v3416
        %v4883 = vpop.f32.mrf.mxu0
        %v4884 = vadd.f32 0.0, %v4883
        %v4885 = vpop.f32.mrf.mxu0
        %v4886 = vadd.f32 0.0, %v4885
        %4887 = vmatmul.bf16.gmra.mxu0 %v3418
        %v4888 = vpop.f32.mrf.mxu0
        %v4889 = vadd.f32 0.0, %v4888
        %v4890 = vpop.f32.mrf.mxu0
        %v4891 = vadd.f32 0.0, %v4890
        %4892 = vmatmul.bf16.gmra.mxu0 %v3420
        %v4893 = vpop.f32.mrf.mxu0
        %v4894 = vadd.f32 0.0, %v4893
        %v4895 = vpop.f32.mrf.mxu0
        %v4896 = vadd.f32 0.0, %v4895
        %4897 = vmatmul.bf16.gmra.mxu0 %v3422
        %v4898 = vpop.f32.mrf.mxu0
        %v4899 = vadd.f32 0.0, %v4898
        %v4900 = vpop.f32.mrf.mxu0
        %v4901 = vadd.f32 0.0, %v4900
        %4902 = vmatmul.bf16.gmra.mxu0 %v3424
        %v4903 = vpop.f32.mrf.mxu0
        %v4904 = vadd.f32 0.0, %v4903
        %v4905 = vpop.f32.mrf.mxu0
        %v4906 = vadd.f32 0.0, %v4905
        %4907 = vmatmul.bf16.gmra.mxu0 %v3426
        %v4908 = vpop.f32.mrf.mxu0
        %v4909 = vadd.f32 0.0, %v4908
        %v4910 = vpop.f32.mrf.mxu0
        %v4911 = vadd.f32 0.0, %v4910
        %4912 = vmatmul.bf16.gmra.mxu0 %v3428
        %v4913 = vpop.f32.mrf.mxu0
        %v4914 = vadd.f32 0.0, %v4913
        %v4915 = vpop.f32.mrf.mxu0
        %v4916 = vadd.f32 0.0, %v4915
        %4917 = vmatmul.bf16.gmra.mxu0 %v3430
        %v4918 = vpop.f32.mrf.mxu0
        %v4919 = vadd.f32 0.0, %v4918
        %v4920 = vpop.f32.mrf.mxu0
        %v4921 = vadd.f32 0.0, %v4920
        %4922 = vmatmul.bf16.gmra.mxu0 %v3432
        %v4923 = vpop.f32.mrf.mxu0
        %v4924 = vadd.f32 0.0, %v4923
        %v4925 = vpop.f32.mrf.mxu0
        %v4926 = vadd.f32 0.0, %v4925
        %4927 = vmatmul.bf16.gmra.mxu0 %v3434
        %v4928 = vpop.f32.mrf.mxu0
        %v4929 = vadd.f32 0.0, %v4928
        %v4930 = vpop.f32.mrf.mxu0
        %v4931 = vadd.f32 0.0, %v4930
        %4932 = vmatmul.bf16.gmra.mxu0 %v3436
        %v4933 = vpop.f32.mrf.mxu0
        %v4934 = vadd.f32 0.0, %v4933
        %v4935 = vpop.f32.mrf.mxu0
        %v4936 = vadd.f32 0.0, %v4935
        %4937 = vmatmul.bf16.gmra.mxu0 %v3438
        %v4938 = vpop.f32.mrf.mxu0
        %v4939 = vadd.f32 0.0, %v4938
        %v4940 = vpop.f32.mrf.mxu0
        %v4941 = vadd.f32 0.0, %v4940
        %4942 = vmatmul.bf16.gmra.mxu0 %v3440
        %v4943 = vpop.f32.mrf.mxu0
        %v4944 = vadd.f32 0.0, %v4943
        %v4945 = vpop.f32.mrf.mxu0
        %v4946 = vadd.f32 0.0, %v4945
        %4947 = vmatmul.bf16.gmra.mxu0 %v3442
        %v4948 = vpop.f32.mrf.mxu0
        %v4949 = vadd.f32 0.0, %v4948
        %v4950 = vpop.f32.mrf.mxu0
        %v4951 = vadd.f32 0.0, %v4950
        %4952 = vmatmul.bf16.gmra.mxu0 %v3444
        %v4953 = vpop.f32.mrf.mxu0
        %v4954 = vadd.f32 0.0, %v4953
        %v4955 = vpop.f32.mrf.mxu0
        %v4956 = vadd.f32 0.0, %v4955
        %4957 = vmatmul.bf16.gmra.mxu0 %v3446
        %v4958 = vpop.f32.mrf.mxu0
        %v4959 = vadd.f32 0.0, %v4958
        %v4960 = vpop.f32.mrf.mxu0
        %v4961 = vadd.f32 0.0, %v4960
        %4962 = vdwg.mxu0
        %4963 = vmatpush.bf16.msra.mxu0 0
        %4964 = vmatpush.bf16.msra.mxu0 0
        %4965 = vmatpush.bf16.msra.mxu0 0
        %4966 = vmatpush.bf16.msra.mxu0 0
        %4967 = vmatpush.bf16.msra.mxu0 0
        %4968 = vmatpush.bf16.msra.mxu0 0
        %4969 = vmatpush.bf16.msra.mxu0 0
        %4970 = vmatpush.bf16.msra.mxu0 %v2287
        %4971 = vmatmul.bf16.gmra.mxu0 %v3473
        %v4972 = vpop.f32.mrf.mxu0
        %v4973 = vadd.f32 %v4844, %v4972
        %v4974 = vpop.f32.mrf.mxu0
        %v4975 = vadd.f32 %v4846, %v4974
        %4976 = vmatmul.bf16.gmra.mxu0 %v3476
        %v4977 = vpop.f32.mrf.mxu0
        %v4978 = vadd.f32 %v4849, %v4977
        %v4979 = vpop.f32.mrf.mxu0
        %v4980 = vadd.f32 %v4851, %v4979
        %4981 = vmatmul.bf16.gmra.mxu0 %v3479
        %v4982 = vpop.f32.mrf.mxu0
        %v4983 = vadd.f32 %v4854, %v4982
        %v4984 = vpop.f32.mrf.mxu0
        %v4985 = vadd.f32 %v4856, %v4984
        %4986 = vmatmul.bf16.gmra.mxu0 %v3482
        %v4987 = vpop.f32.mrf.mxu0
        %v4988 = vadd.f32 %v4859, %v4987
        %v4989 = vpop.f32.mrf.mxu0
        %v4990 = vadd.f32 %v4861, %v4989
        %4991 = vmatmul.bf16.gmra.mxu0 %v3485
        %v4992 = vpop.f32.mrf.mxu0
        %v4993 = vadd.f32 %v4864, %v4992
        %v4994 = vpop.f32.mrf.mxu0
        %v4995 = vadd.f32 %v4866, %v4994
        %4996 = vmatmul.bf16.gmra.mxu0 %v3488
        %v4997 = vpop.f32.mrf.mxu0
        %v4998 = vadd.f32 %v4869, %v4997
        %v4999 = vpop.f32.mrf.mxu0
        %v5000 = vadd.f32 %v4871, %v4999
        %5001 = vmatmul.bf16.gmra.mxu0 %v3491
        %v5002 = vpop.f32.mrf.mxu0
        %v5003 = vadd.f32 %v4874, %v5002
        %v5004 = vpop.f32.mrf.mxu0
        %v5005 = vadd.f32 %v4876, %v5004
        %5006 = vmatmul.bf16.gmra.mxu0 %v3494
        %v5007 = vpop.f32.mrf.mxu0
        %v5008 = vadd.f32 %v4879, %v5007
        %v5009 = vpop.f32.mrf.mxu0
        %v5010 = vadd.f32 %v4881, %v5009
        %5011 = vmatmul.bf16.gmra.mxu0 %v3497
        %v5012 = vpop.f32.mrf.mxu0
        %v5013 = vadd.f32 %v4884, %v5012
        %v5014 = vpop.f32.mrf.mxu0
        %v5015 = vadd.f32 %v4886, %v5014
        %5016 = vmatmul.bf16.gmra.mxu0 %v3500
        %v5017 = vpop.f32.mrf.mxu0
        %v5018 = vadd.f32 %v4889, %v5017
        %v5019 = vpop.f32.mrf.mxu0
        %v5020 = vadd.f32 %v4891, %v5019
        %5021 = vmatmul.bf16.gmra.mxu0 %v3503
        %v5022 = vpop.f32.mrf.mxu0
        %v5023 = vadd.f32 %v4894, %v5022
        %v5024 = vpop.f32.mrf.mxu0
        %v5025 = vadd.f32 %v4896, %v5024
        %5026 = vmatmul.bf16.gmra.mxu0 %v3506
        %v5027 = vpop.f32.mrf.mxu0
        %v5028 = vadd.f32 %v4899, %v5027
        %v5029 = vpop.f32.mrf.mxu0
        %v5030 = vadd.f32 %v4901, %v5029
        %5031 = vmatmul.bf16.gmra.mxu0 %v3509
        %v5032 = vpop.f32.mrf.mxu0
        %v5033 = vadd.f32 %v4904, %v5032
        %v5034 = vpop.f32.mrf.mxu0
        %v5035 = vadd.f32 %v4906, %v5034
        %5036 = vmatmul.bf16.gmra.mxu0 %v3512
        %v5037 = vpop.f32.mrf.mxu0
        %v5038 = vadd.f32 %v4909, %v5037
        %v5039 = vpop.f32.mrf.mxu0
        %v5040 = vadd.f32 %v4911, %v5039
        %5041 = vmatmul.bf16.gmra.mxu0 %v3515
        %v5042 = vpop.f32.mrf.mxu0
        %v5043 = vadd.f32 %v4914, %v5042
        %v5044 = vpop.f32.mrf.mxu0
        %v5045 = vadd.f32 %v4916, %v5044
        %5046 = vmatmul.bf16.gmra.mxu0 %v3518
        %v5047 = vpop.f32.mrf.mxu0
        %v5048 = vadd.f32 %v4919, %v5047
        %v5049 = vpop.f32.mrf.mxu0
        %v5050 = vadd.f32 %v4921, %v5049
        %5051 = vmatmul.bf16.gmra.mxu0 %v3521
        %v5052 = vpop.f32.mrf.mxu0
        %v5053 = vadd.f32 %v4924, %v5052
        %v5054 = vpop.f32.mrf.mxu0
        %v5055 = vadd.f32 %v4926, %v5054
        %5056 = vmatmul.bf16.gmra.mxu0 %v3524
        %v5057 = vpop.f32.mrf.mxu0
        %v5058 = vadd.f32 %v4929, %v5057
        %v5059 = vpop.f32.mrf.mxu0
        %v5060 = vadd.f32 %v4931, %v5059
        %5061 = vmatmul.bf16.gmra.mxu0 %v3527
        %v5062 = vpop.f32.mrf.mxu0
        %v5063 = vadd.f32 %v4934, %v5062
        %v5064 = vpop.f32.mrf.mxu0
        %v5065 = vadd.f32 %v4936, %v5064
        %5066 = vmatmul.bf16.gmra.mxu0 %v3530
        %v5067 = vpop.f32.mrf.mxu0
        %v5068 = vadd.f32 %v4939, %v5067
        %v5069 = vpop.f32.mrf.mxu0
        %v5070 = vadd.f32 %v4941, %v5069
        %5071 = vmatmul.bf16.gmra.mxu0 %v3533
        %v5072 = vpop.f32.mrf.mxu0
        %v5073 = vadd.f32 %v4944, %v5072
        %v5074 = vpop.f32.mrf.mxu0
        %v5075 = vadd.f32 %v4946, %v5074
        %5076 = vmatmul.bf16.gmra.mxu0 %v3536
        %v5077 = vpop.f32.mrf.mxu0
        %v5078 = vadd.f32 %v4949, %v5077
        %v5079 = vpop.f32.mrf.mxu0
        %v5080 = vadd.f32 %v4951, %v5079
        %5081 = vmatmul.bf16.gmra.mxu0 %v3539
        %v5082 = vpop.f32.mrf.mxu0
        %v5083 = vadd.f32 %v4954, %v5082
        %v5084 = vpop.f32.mrf.mxu0
        %v5085 = vadd.f32 %v4956, %v5084
        %5086 = vmatmul.bf16.gmra.mxu0 %v3542
        %v5087 = vpop.f32.mrf.mxu0
        %v5088 = vadd.f32 %v4959, %v5087
        %v5089 = vpop.f32.mrf.mxu0
        %v5090 = vadd.f32 %v4961, %v5089
        %5091 = vdwg.mxu0
        %v5092 = vmax.f32 %v3683, %v4457
        %v5093 = vmax.f32 %v3941, %v4715
        %v5094 = vmax.f32 %v4199, %v4973
        %v5095 = vmax.f32 %v3685, %v4459
        %v5096 = vmax.f32 %v3943, %v4717
        %v5097 = vmax.f32 %v4201, %v4975
        %v5098 = vmax.f32 %v3688, %v4462
        %v5099 = vmax.f32 %v3946, %v4720
        %v5100 = vmax.f32 %v4204, %v4978
        %v5101 = vmax.f32 %v3690, %v4464
        %v5102 = vmax.f32 %v3948, %v4722
        %v5103 = vmax.f32 %v4206, %v4980
        %v5104 = vmax.f32 %v3693, %v4467
        %v5105 = vmax.f32 %v3951, %v4725
        %v5106 = vmax.f32 %v4209, %v4983
        %v5107 = vmax.f32 %v3695, %v4469
        %v5108 = vmax.f32 %v3953, %v4727
        %v5109 = vmax.f32 %v4211, %v4985
        %v5110 = vmax.f32 %v3698, %v4472
        %v5111 = vmax.f32 %v3956, %v4730
        %v5112 = vmax.f32 %v4214, %v4988
        %v5113 = vmax.f32 %v3700, %v4474
        %v5114 = vmax.f32 %v3958, %v4732
        %v5115 = vmax.f32 %v4216, %v4990
        %v5116 = vmax.f32 %v3703, %v4477
        %v5117 = vmax.f32 %v3961, %v4735
        %v5118 = vmax.f32 %v4219, %v4993
        %v5119 = vmax.f32 %v3705, %v4479
        %v5120 = vmax.f32 %v3963, %v4737
        %v5121 = vmax.f32 %v4221, %v4995
        %v5122 = vmax.f32 %v3708, %v4482
        %v5123 = vmax.f32 %v3966, %v4740
        %v5124 = vmax.f32 %v4224, %v4998
        %v5125 = vmax.f32 %v3710, %v4484
        %v5126 = vmax.f32 %v3968, %v4742
        %v5127 = vmax.f32 %v4226, %v5000
        %v5128 = vmax.f32 %v3713, %v4487
        %v5129 = vmax.f32 %v3971, %v4745
        %v5130 = vmax.f32 %v4229, %v5003
        %v5131 = vmax.f32 %v3715, %v4489
        %v5132 = vmax.f32 %v3973, %v4747
        %v5133 = vmax.f32 %v4231, %v5005
        %v5134 = vmax.f32 %v3718, %v4492
        %v5135 = vmax.f32 %v3976, %v4750
        %v5136 = vmax.f32 %v4234, %v5008
        %v5137 = vmax.f32 %v3720, %v4494
        %v5138 = vmax.f32 %v3978, %v4752
        %v5139 = vmax.f32 %v4236, %v5010
        %v5140 = vmax.f32 %v3723, %v4497
        %v5141 = vmax.f32 %v3981, %v4755
        %v5142 = vmax.f32 %v4239, %v5013
        %v5143 = vmax.f32 %v3725, %v4499
        %v5144 = vmax.f32 %v3983, %v4757
        %v5145 = vmax.f32 %v4241, %v5015
        %v5146 = vmax.f32 %v3728, %v4502
        %v5147 = vmax.f32 %v3986, %v4760
        %v5148 = vmax.f32 %v4244, %v5018
        %v5149 = vmax.f32 %v3730, %v4504
        %v5150 = vmax.f32 %v3988, %v4762
        %v5151 = vmax.f32 %v4246, %v5020
        %v5152 = vmax.f32 %v3733, %v4507
        %v5153 = vmax.f32 %v3991, %v4765
        %v5154 = vmax.f32 %v4249, %v5023
        %v5155 = vmax.f32 %v3735, %v4509
        %v5156 = vmax.f32 %v3993, %v4767
        %v5157 = vmax.f32 %v4251, %v5025
        %v5158 = vmax.f32 %v3738, %v4512
        %v5159 = vmax.f32 %v3996, %v4770
        %v5160 = vmax.f32 %v4254, %v5028
        %v5161 = vmax.f32 %v3740, %v4514
        %v5162 = vmax.f32 %v3998, %v4772
        %v5163 = vmax.f32 %v4256, %v5030
        %v5164 = vmax.f32 %v3743, %v4517
        %v5165 = vmax.f32 %v4001, %v4775
        %v5166 = vmax.f32 %v4259, %v5033
        %v5167 = vmax.f32 %v3745, %v4519
        %v5168 = vmax.f32 %v4003, %v4777
        %v5169 = vmax.f32 %v4261, %v5035
        %v5170 = vmax.f32 %v3748, %v4522
        %v5171 = vmax.f32 %v4006, %v4780
        %v5172 = vmax.f32 %v4264, %v5038
        %v5173 = vmax.f32 %v3750, %v4524
        %v5174 = vmax.f32 %v4008, %v4782
        %v5175 = vmax.f32 %v4266, %v5040
        %v5176 = vmax.f32 %v3753, %v4527
        %v5177 = vmax.f32 %v4011, %v4785
        %v5178 = vmax.f32 %v4269, %v5043
        %v5179 = vmax.f32 %v3755, %v4529
        %v5180 = vmax.f32 %v4013, %v4787
        %v5181 = vmax.f32 %v4271, %v5045
        %v5182 = vmax.f32 %v3758, %v4532
        %v5183 = vmax.f32 %v4016, %v4790
        %v5184 = vmax.f32 %v4274, %v5048
        %v5185 = vmax.f32 %v3760, %v4534
        %v5186 = vmax.f32 %v4018, %v4792
        %v5187 = vmax.f32 %v4276, %v5050
        %v5188 = vmax.f32 %v3763, %v4537
        %v5189 = vmax.f32 %v4021, %v4795
        %v5190 = vmax.f32 %v4279, %v5053
        %v5191 = vmax.f32 %v3765, %v4539
        %v5192 = vmax.f32 %v4023, %v4797
        %v5193 = vmax.f32 %v4281, %v5055
        %v5194 = vmax.f32 %v3768, %v4542
        %v5195 = vmax.f32 %v4026, %v4800
        %v5196 = vmax.f32 %v4284, %v5058
        %v5197 = vmax.f32 %v3770, %v4544
        %v5198 = vmax.f32 %v4028, %v4802
        %v5199 = vmax.f32 %v4286, %v5060
        %v5200 = vmax.f32 %v3773, %v4547
        %v5201 = vmax.f32 %v4031, %v4805
        %v5202 = vmax.f32 %v4289, %v5063
        %v5203 = vmax.f32 %v3775, %v4549
        %v5204 = vmax.f32 %v4033, %v4807
        %v5205 = vmax.f32 %v4291, %v5065
        %v5206 = vmax.f32 %v3778, %v4552
        %v5207 = vmax.f32 %v4036, %v4810
        %v5208 = vmax.f32 %v4294, %v5068
        %v5209 = vmax.f32 %v3780, %v4554
        %v5210 = vmax.f32 %v4038, %v4812
        %v5211 = vmax.f32 %v4296, %v5070
        %v5212 = vmax.f32 %v3783, %v4557
        %v5213 = vmax.f32 %v4041, %v4815
        %v5214 = vmax.f32 %v4299, %v5073
        %v5215 = vmax.f32 %v3785, %v4559
        %v5216 = vmax.f32 %v4043, %v4817
        %v5217 = vmax.f32 %v4301, %v5075
        %v5218 = vmax.f32 %v3788, %v4562
        %v5219 = vmax.f32 %v4046, %v4820
        %v5220 = vmax.f32 %v4304, %v5078
        %v5221 = vmax.f32 %v3790, %v4564
        %v5222 = vmax.f32 %v4048, %v4822
        %v5223 = vmax.f32 %v4306, %v5080
        %v5224 = vmax.f32 %v3793, %v4567
        %v5225 = vmax.f32 %v4051, %v4825
        %v5226 = vmax.f32 %v4309, %v5083
        %v5227 = vmax.f32 %v3795, %v4569
        %v5228 = vmax.f32 %v4053, %v4827
        %v5229 = vmax.f32 %v4311, %v5085
        %v5230 = vmax.f32 %v3798, %v4572
        %v5231 = vmax.f32 %v4056, %v4830
        %v5232 = vmax.f32 %v4314, %v5088
        %v5233 = vmax.f32 %v3800, %v4574
        %v5234 = vmax.f32 %v4058, %v4832
        %v5235 = vmax.f32 %v4316, %v5090
        %v5236 = vmax.f32 %v3063, %v5092
        %v5237 = vmax.f32 %v3064, %v5093
        %v5238 = vmax.f32 %v3065, %v5094
        %v5239 = vmax.f32 %v3066, %v5095
        %v5240 = vmax.f32 %v3067, %v5096
        %v5241 = vmax.f32 %v3068, %v5097
        %v5242 = vmax.f32 %v3069, %v5098
        %v5243 = vmax.f32 %v3070, %v5099
        %v5244 = vmax.f32 %v3071, %v5100
        %v5245 = vmax.f32 %v3072, %v5101
        %v5246 = vmax.f32 %v3073, %v5102
        %v5247 = vmax.f32 %v3074, %v5103
        %v5248 = vmax.f32 %v3075, %v5104
        %v5249 = vmax.f32 %v3076, %v5105
        %v5250 = vmax.f32 %v3077, %v5106
        %v5251 = vmax.f32 %v3078, %v5107
        %v5252 = vmax.f32 %v3079, %v5108
        %v5253 = vmax.f32 %v3080, %v5109
        %v5254 = vmax.f32 %v3081, %v5110
        %v5255 = vmax.f32 %v3082, %v5111
        %v5256 = vmax.f32 %v3083, %v5112
        %v5257 = vmax.f32 %v3084, %v5113
        %v5258 = vmax.f32 %v3085, %v5114
        %v5259 = vmax.f32 %v3086, %v5115
        %v5260 = vmax.f32 %v3087, %v5116
        %v5261 = vmax.f32 %v3088, %v5117
        %v5262 = vmax.f32 %v3089, %v5118
        %v5263 = vmax.f32 %v3090, %v5119
        %v5264 = vmax.f32 %v3091, %v5120
        %v5265 = vmax.f32 %v3092, %v5121
        %v5266 = vmax.f32 %v3093, %v5122
        %v5267 = vmax.f32 %v3094, %v5123
        %v5268 = vmax.f32 %v3095, %v5124
        %v5269 = vmax.f32 %v3096, %v5125
        %v5270 = vmax.f32 %v3097, %v5126
        %v5271 = vmax.f32 %v3098, %v5127
        %v5272 = vmax.f32 %v3099, %v5128
        %v5273 = vmax.f32 %v3100, %v5129
        %v5274 = vmax.f32 %v3101, %v5130
        %v5275 = vmax.f32 %v3102, %v5131
        %v5276 = vmax.f32 %v3103, %v5132
        %v5277 = vmax.f32 %v3104, %v5133
        %v5278 = vmax.f32 %v3105, %v5134
        %v5279 = vmax.f32 %v3106, %v5135
        %v5280 = vmax.f32 %v3107, %v5136
        %v5281 = vmax.f32 %v3108, %v5137
        %v5282 = vmax.f32 %v3109, %v5138
        %v5283 = vmax.f32 %v3110, %v5139
        %v5284 = vmax.f32 %v3111, %v5140
        %v5285 = vmax.f32 %v3112, %v5141
        %v5286 = vmax.f32 %v3113, %v5142
        %v5287 = vmax.f32 %v3114, %v5143
        %v5288 = vmax.f32 %v3115, %v5144
        %v5289 = vmax.f32 %v3116, %v5145
        %v5290 = vmax.f32 %v3117, %v5146
        %v5291 = vmax.f32 %v3118, %v5147
        %v5292 = vmax.f32 %v3119, %v5148
        %v5293 = vmax.f32 %v3120, %v5149
        %v5294 = vmax.f32 %v3121, %v5150
        %v5295 = vmax.f32 %v3122, %v5151
        %v5296 = vmax.f32 %v3123, %v5152
        %v5297 = vmax.f32 %v3124, %v5153
        %v5298 = vmax.f32 %v3125, %v5154
        %v5299 = vmax.f32 %v3126, %v5155
        %v5300 = vmax.f32 %v3127, %v5156
        %v5301 = vmax.f32 %v3128, %v5157
        %v5302 = vmax.f32 %v3129, %v5158
        %v5303 = vmax.f32 %v3130, %v5159
        %v5304 = vmax.f32 %v3131, %v5160
        %v5305 = vmax.f32 %v3132, %v5161
        %v5306 = vmax.f32 %v3133, %v5162
        %v5307 = vmax.f32 %v3134, %v5163
        %v5308 = vmax.f32 %v3135, %v5164
        %v5309 = vmax.f32 %v3136, %v5165
        %v5310 = vmax.f32 %v3137, %v5166
        %v5311 = vmax.f32 %v3138, %v5167
        %v5312 = vmax.f32 %v3139, %v5168
        %v5313 = vmax.f32 %v3140, %v5169
        %v5314 = vmax.f32 %v3141, %v5170
        %v5315 = vmax.f32 %v3142, %v5171
        %v5316 = vmax.f32 %v3143, %v5172
        %v5317 = vmax.f32 %v3144, %v5173
        %v5318 = vmax.f32 %v3145, %v5174
        %v5319 = vmax.f32 %v3146, %v5175
        %v5320 = vmax.f32 %v3147, %v5176
        %v5321 = vmax.f32 %v3148, %v5177
        %v5322 = vmax.f32 %v3149, %v5178
        %v5323 = vmax.f32 %v3150, %v5179
        %v5324 = vmax.f32 %v3151, %v5180
        %v5325 = vmax.f32 %v3152, %v5181
        %v5326 = vmax.f32 %v3153, %v5182
        %v5327 = vmax.f32 %v3154, %v5183
        %v5328 = vmax.f32 %v3155, %v5184
        %v5329 = vmax.f32 %v3156, %v5185
        %v5330 = vmax.f32 %v3157, %v5186
        %v5331 = vmax.f32 %v3158, %v5187
        %v5332 = vmax.f32 %v3159, %v5188
        %v5333 = vmax.f32 %v3160, %v5189
        %v5334 = vmax.f32 %v3161, %v5190
        %v5335 = vmax.f32 %v3162, %v5191
        %v5336 = vmax.f32 %v3163, %v5192
        %v5337 = vmax.f32 %v3164, %v5193
        %v5338 = vmax.f32 %v3165, %v5194
        %v5339 = vmax.f32 %v3166, %v5195
        %v5340 = vmax.f32 %v3167, %v5196
        %v5341 = vmax.f32 %v3168, %v5197
        %v5342 = vmax.f32 %v3169, %v5198
        %v5343 = vmax.f32 %v3170, %v5199
        %v5344 = vmax.f32 %v3171, %v5200
        %v5345 = vmax.f32 %v3172, %v5201
        %v5346 = vmax.f32 %v3173, %v5202
        %v5347 = vmax.f32 %v3174, %v5203
        %v5348 = vmax.f32 %v3175, %v5204
        %v5349 = vmax.f32 %v3176, %v5205
        %v5350 = vmax.f32 %v3177, %v5206
        %v5351 = vmax.f32 %v3178, %v5207
        %v5352 = vmax.f32 %v3179, %v5208
        %v5353 = vmax.f32 %v3180, %v5209
        %v5354 = vmax.f32 %v3181, %v5210
        %v5355 = vmax.f32 %v3182, %v5211
        %v5356 = vmax.f32 %v3183, %v5212
        %v5357 = vmax.f32 %v3184, %v5213
        %v5358 = vmax.f32 %v3185, %v5214
        %v5359 = vmax.f32 %v3186, %v5215
        %v5360 = vmax.f32 %v3187, %v5216
        %v5361 = vmax.f32 %v3188, %v5217
        %v5362 = vmax.f32 %v3189, %v5218
        %v5363 = vmax.f32 %v3190, %v5219
        %v5364 = vmax.f32 %v3191, %v5220
        %v5365 = vmax.f32 %v3192, %v5221
        %v5366 = vmax.f32 %v3193, %v5222
        %v5367 = vmax.f32 %v3194, %v5223
        %v5368 = vmax.f32 %v3195, %v5224
        %v5369 = vmax.f32 %v3196, %v5225
        %v5370 = vmax.f32 %v3197, %v5226
        %v5371 = vmax.f32 %v3198, %v5227
        %v5372 = vmax.f32 %v3199, %v5228
        %v5373 = vmax.f32 %v3200, %v5229
        %v5374 = vmax.f32 %v3201, %v5230
        %v5375 = vmax.f32 %v3202, %v5231
        %v5376 = vmax.f32 %v3203, %v5232
        %v5377 = vmax.f32 %v3204, %v5233
        %v5378 = vmax.f32 %v3205, %v5234
        %v5379 = vmax.f32 %v3206, %v5235
        %v5380 = vld [vmem:[%s3] sm:$0x7]
        %v5382 = vperm.slane %v5380, 0
        %v5383 = vperm.slane %v5380, 1
        %v5384 = vperm.slane %v5380, 2
        %v5388 = vadd.f32 %v5236, %v5382
        %v5389 = vadd.f32 %v5237, %v5383
        %v5390 = vadd.f32 %v5238, %v5384
        %v5391 = vadd.f32 %v5239, %v5382
        %v5392 = vadd.f32 %v5240, %v5383
        %v5393 = vadd.f32 %v5241, %v5384
        %v5394 = vadd.f32 %v5242, %v5382
        %v5395 = vadd.f32 %v5243, %v5383
        %v5396 = vadd.f32 %v5244, %v5384
        %v5397 = vadd.f32 %v5245, %v5382
        %v5398 = vadd.f32 %v5246, %v5383
        %v5399 = vadd.f32 %v5247, %v5384
        %v5400 = vadd.f32 %v5248, %v5382
        %v5401 = vadd.f32 %v5249, %v5383
        %v5402 = vadd.f32 %v5250, %v5384
        %v5403 = vadd.f32 %v5251, %v5382
        %v5404 = vadd.f32 %v5252, %v5383
        %v5405 = vadd.f32 %v5253, %v5384
        %v5406 = vadd.f32 %v5254, %v5382
        %v5407 = vadd.f32 %v5255, %v5383
        %v5408 = vadd.f32 %v5256, %v5384
        %v5409 = vadd.f32 %v5257, %v5382
        %v5410 = vadd.f32 %v5258, %v5383
        %v5411 = vadd.f32 %v5259, %v5384
        %v5412 = vadd.f32 %v5260, %v5382
        %v5413 = vadd.f32 %v5261, %v5383
        %v5414 = vadd.f32 %v5262, %v5384
        %v5415 = vadd.f32 %v5263, %v5382
        %v5416 = vadd.f32 %v5264, %v5383
        %v5417 = vadd.f32 %v5265, %v5384
        %v5418 = vadd.f32 %v5266, %v5382
        %v5419 = vadd.f32 %v5267, %v5383
        %v5420 = vadd.f32 %v5268, %v5384
        %v5421 = vadd.f32 %v5269, %v5382
        %v5422 = vadd.f32 %v5270, %v5383
        %v5423 = vadd.f32 %v5271, %v5384
        %v5424 = vadd.f32 %v5272, %v5382
        %v5425 = vadd.f32 %v5273, %v5383
        %v5426 = vadd.f32 %v5274, %v5384
        %v5427 = vadd.f32 %v5275, %v5382
        %v5428 = vadd.f32 %v5276, %v5383
        %v5429 = vadd.f32 %v5277, %v5384
        %v5430 = vadd.f32 %v5278, %v5382
        %v5431 = vadd.f32 %v5279, %v5383
        %v5432 = vadd.f32 %v5280, %v5384
        %v5433 = vadd.f32 %v5281, %v5382
        %v5434 = vadd.f32 %v5282, %v5383
        %v5435 = vadd.f32 %v5283, %v5384
        %v5436 = vadd.f32 %v5284, %v5382
        %v5437 = vadd.f32 %v5285, %v5383
        %v5438 = vadd.f32 %v5286, %v5384
        %v5439 = vadd.f32 %v5287, %v5382
        %v5440 = vadd.f32 %v5288, %v5383
        %v5441 = vadd.f32 %v5289, %v5384
        %v5442 = vadd.f32 %v5290, %v5382
        %v5443 = vadd.f32 %v5291, %v5383
        %v5444 = vadd.f32 %v5292, %v5384
        %v5445 = vadd.f32 %v5293, %v5382
        %v5446 = vadd.f32 %v5294, %v5383
        %v5447 = vadd.f32 %v5295, %v5384
        %v5448 = vadd.f32 %v5296, %v5382
        %v5449 = vadd.f32 %v5297, %v5383
        %v5450 = vadd.f32 %v5298, %v5384
        %v5451 = vadd.f32 %v5299, %v5382
        %v5452 = vadd.f32 %v5300, %v5383
        %v5453 = vadd.f32 %v5301, %v5384
        %v5454 = vadd.f32 %v5302, %v5382
        %v5455 = vadd.f32 %v5303, %v5383
        %v5456 = vadd.f32 %v5304, %v5384
        %v5457 = vadd.f32 %v5305, %v5382
        %v5458 = vadd.f32 %v5306, %v5383
        %v5459 = vadd.f32 %v5307, %v5384
        %v5460 = vadd.f32 %v5308, %v5382
        %v5461 = vadd.f32 %v5309, %v5383
        %v5462 = vadd.f32 %v5310, %v5384
        %v5463 = vadd.f32 %v5311, %v5382
        %v5464 = vadd.f32 %v5312, %v5383
        %v5465 = vadd.f32 %v5313, %v5384
        %v5466 = vadd.f32 %v5314, %v5382
        %v5467 = vadd.f32 %v5315, %v5383
        %v5468 = vadd.f32 %v5316, %v5384
        %v5469 = vadd.f32 %v5317, %v5382
        %v5470 = vadd.f32 %v5318, %v5383
        %v5471 = vadd.f32 %v5319, %v5384
        %v5472 = vadd.f32 %v5320, %v5382
        %v5473 = vadd.f32 %v5321, %v5383
        %v5474 = vadd.f32 %v5322, %v5384
        %v5475 = vadd.f32 %v5323, %v5382
        %v5476 = vadd.f32 %v5324, %v5383
        %v5477 = vadd.f32 %v5325, %v5384
        %v5478 = vadd.f32 %v5326, %v5382
        %v5479 = vadd.f32 %v5327, %v5383
        %v5480 = vadd.f32 %v5328, %v5384
        %v5481 = vadd.f32 %v5329, %v5382
        %v5482 = vadd.f32 %v5330, %v5383
        %v5483 = vadd.f32 %v5331, %v5384
        %v5484 = vadd.f32 %v5332, %v5382
        %v5485 = vadd.f32 %v5333, %v5383
        %v5486 = vadd.f32 %v5334, %v5384
        %v5487 = vadd.f32 %v5335, %v5382
        %v5488 = vadd.f32 %v5336, %v5383
        %v5489 = vadd.f32 %v5337, %v5384
        %v5490 = vadd.f32 %v5338, %v5382
        %v5491 = vadd.f32 %v5339, %v5383
        %v5492 = vadd.f32 %v5340, %v5384
        %v5493 = vadd.f32 %v5341, %v5382
        %v5494 = vadd.f32 %v5342, %v5383
        %v5495 = vadd.f32 %v5343, %v5384
        %v5496 = vadd.f32 %v5344, %v5382
        %v5497 = vadd.f32 %v5345, %v5383
        %v5498 = vadd.f32 %v5346, %v5384
        %v5499 = vadd.f32 %v5347, %v5382
        %v5500 = vadd.f32 %v5348, %v5383
        %v5501 = vadd.f32 %v5349, %v5384
        %v5502 = vadd.f32 %v5350, %v5382
        %v5503 = vadd.f32 %v5351, %v5383
        %v5504 = vadd.f32 %v5352, %v5384
        %v5505 = vadd.f32 %v5353, %v5382
        %v5506 = vadd.f32 %v5354, %v5383
        %v5507 = vadd.f32 %v5355, %v5384
        %v5508 = vadd.f32 %v5356, %v5382
        %v5509 = vadd.f32 %v5357, %v5383
        %v5510 = vadd.f32 %v5358, %v5384
        %v5511 = vadd.f32 %v5359, %v5382
        %v5512 = vadd.f32 %v5360, %v5383
        %v5513 = vadd.f32 %v5361, %v5384
        %v5514 = vadd.f32 %v5362, %v5382
        %v5515 = vadd.f32 %v5363, %v5383
        %v5516 = vadd.f32 %v5364, %v5384
        %v5517 = vadd.f32 %v5365, %v5382
        %v5518 = vadd.f32 %v5366, %v5383
        %v5519 = vadd.f32 %v5367, %v5384
        %v5520 = vadd.f32 %v5368, %v5382
        %v5521 = vadd.f32 %v5369, %v5383
        %v5522 = vadd.f32 %v5370, %v5384
        %v5523 = vadd.f32 %v5371, %v5382
        %v5524 = vadd.f32 %v5372, %v5383
        %v5525 = vadd.f32 %v5373, %v5384
        %v5526 = vadd.f32 %v5374, %v5382
        %v5527 = vadd.f32 %v5375, %v5383
        %v5528 = vadd.f32 %v5376, %v5384
        %v5529 = vadd.f32 %v5377, %v5382
        %v5530 = vadd.f32 %v5378, %v5383
        %v5531 = vadd.f32 %v5379, %v5384
        %v5532 = vmax.f32 %v5388, 0.0
        %v5533 = vmax.f32 %v5389, 0.0
        %v5534 = vmax.f32 %v5390, 0.0
        %v5535 = vmax.f32 %v5391, 0.0
        %v5536 = vmax.f32 %v5392, 0.0
        %v5537 = vmax.f32 %v5393, 0.0
        %v5538 = vmax.f32 %v5394, 0.0
        %v5539 = vmax.f32 %v5395, 0.0
        %v5540 = vmax.f32 %v5396, 0.0
        %v5541 = vmax.f32 %v5397, 0.0
        %v5542 = vmax.f32 %v5398, 0.0
        %v5543 = vmax.f32 %v5399, 0.0
        %v5544 = vmax.f32 %v5400, 0.0
        %v5545 = vmax.f32 %v5401, 0.0
        %v5546 = vmax.f32 %v5402, 0.0
        %v5547 = vmax.f32 %v5403, 0.0
        %v5548 = vmax.f32 %v5404, 0.0
        %v5549 = vmax.f32 %v5405, 0.0
        %v5550 = vmax.f32 %v5406, 0.0
        %v5551 = vmax.f32 %v5407, 0.0
        %v5552 = vmax.f32 %v5408, 0.0
        %v5553 = vmax.f32 %v5409, 0.0
        %v5554 = vmax.f32 %v5410, 0.0
        %v5555 = vmax.f32 %v5411, 0.0
        %v5556 = vmax.f32 %v5412, 0.0
        %v5557 = vmax.f32 %v5413, 0.0
        %v5558 = vmax.f32 %v5414, 0.0
        %v5559 = vmax.f32 %v5415, 0.0
        %v5560 = vmax.f32 %v5416, 0.0
        %v5561 = vmax.f32 %v5417, 0.0
        %v5562 = vmax.f32 %v5418, 0.0
        %v5563 = vmax.f32 %v5419, 0.0
        %v5564 = vmax.f32 %v5420, 0.0
        %v5565 = vmax.f32 %v5421, 0.0
        %v5566 = vmax.f32 %v5422, 0.0
        %v5567 = vmax.f32 %v5423, 0.0
        %v5568 = vmax.f32 %v5424, 0.0
        %v5569 = vmax.f32 %v5425, 0.0
        %v5570 = vmax.f32 %v5426, 0.0
        %v5571 = vmax.f32 %v5427, 0.0
        %v5572 = vmax.f32 %v5428, 0.0
        %v5573 = vmax.f32 %v5429, 0.0
        %v5574 = vmax.f32 %v5430, 0.0
        %v5575 = vmax.f32 %v5431, 0.0
        %v5576 = vmax.f32 %v5432, 0.0
        %v5577 = vmax.f32 %v5433, 0.0
        %v5578 = vmax.f32 %v5434, 0.0
        %v5579 = vmax.f32 %v5435, 0.0
        %v5580 = vmax.f32 %v5436, 0.0
        %v5581 = vmax.f32 %v5437, 0.0
        %v5582 = vmax.f32 %v5438, 0.0
        %v5583 = vmax.f32 %v5439, 0.0
        %v5584 = vmax.f32 %v5440, 0.0
        %v5585 = vmax.f32 %v5441, 0.0
        %v5586 = vmax.f32 %v5442, 0.0
        %v5587 = vmax.f32 %v5443, 0.0
        %v5588 = vmax.f32 %v5444, 0.0
        %v5589 = vmax.f32 %v5445, 0.0
        %v5590 = vmax.f32 %v5446, 0.0
        %v5591 = vmax.f32 %v5447, 0.0
        %v5592 = vmax.f32 %v5448, 0.0
        %v5593 = vmax.f32 %v5449, 0.0
        %v5594 = vmax.f32 %v5450, 0.0
        %v5595 = vmax.f32 %v5451, 0.0
        %v5596 = vmax.f32 %v5452, 0.0
        %v5597 = vmax.f32 %v5453, 0.0
        %v5598 = vmax.f32 %v5454, 0.0
        %v5599 = vmax.f32 %v5455, 0.0
        %v5600 = vmax.f32 %v5456, 0.0
        %v5601 = vmax.f32 %v5457, 0.0
        %v5602 = vmax.f32 %v5458, 0.0
        %v5603 = vmax.f32 %v5459, 0.0
        %v5604 = vmax.f32 %v5460, 0.0
        %v5605 = vmax.f32 %v5461, 0.0
        %v5606 = vmax.f32 %v5462, 0.0
        %v5607 = vmax.f32 %v5463, 0.0
        %v5608 = vmax.f32 %v5464, 0.0
        %v5609 = vmax.f32 %v5465, 0.0
        %v5610 = vmax.f32 %v5466, 0.0
        %v5611 = vmax.f32 %v5467, 0.0
        %v5612 = vmax.f32 %v5468, 0.0
        %v5613 = vmax.f32 %v5469, 0.0
        %v5614 = vmax.f32 %v5470, 0.0
        %v5615 = vmax.f32 %v5471, 0.0
        %v5616 = vmax.f32 %v5472, 0.0
        %v5617 = vmax.f32 %v5473, 0.0
        %v5618 = vmax.f32 %v5474, 0.0
        %v5619 = vmax.f32 %v5475, 0.0
        %v5620 = vmax.f32 %v5476, 0.0
        %v5621 = vmax.f32 %v5477, 0.0
        %v5622 = vmax.f32 %v5478, 0.0
        %v5623 = vmax.f32 %v5479, 0.0
        %v5624 = vmax.f32 %v5480, 0.0
        %v5625 = vmax.f32 %v5481, 0.0
        %v5626 = vmax.f32 %v5482, 0.0
        %v5627 = vmax.f32 %v5483, 0.0
        %v5628 = vmax.f32 %v5484, 0.0
        %v5629 = vmax.f32 %v5485, 0.0
        %v5630 = vmax.f32 %v5486, 0.0
        %v5631 = vmax.f32 %v5487, 0.0
        %v5632 = vmax.f32 %v5488, 0.0
        %v5633 = vmax.f32 %v5489, 0.0
        %v5634 = vmax.f32 %v5490, 0.0
        %v5635 = vmax.f32 %v5491, 0.0
        %v5636 = vmax.f32 %v5492, 0.0
        %v5637 = vmax.f32 %v5493, 0.0
        %v5638 = vmax.f32 %v5494, 0.0
        %v5639 = vmax.f32 %v5495, 0.0
        %v5640 = vmax.f32 %v5496, 0.0
        %v5641 = vmax.f32 %v5497, 0.0
        %v5642 = vmax.f32 %v5498, 0.0
        %v5643 = vmax.f32 %v5499, 0.0
        %v5644 = vmax.f32 %v5500, 0.0
        %v5645 = vmax.f32 %v5501, 0.0
        %v5646 = vmax.f32 %v5502, 0.0
        %v5647 = vmax.f32 %v5503, 0.0
        %v5648 = vmax.f32 %v5504, 0.0
        %v5649 = vmax.f32 %v5505, 0.0
        %v5650 = vmax.f32 %v5506, 0.0
        %v5651 = vmax.f32 %v5507, 0.0
        %v5652 = vmax.f32 %v5508, 0.0
        %v5653 = vmax.f32 %v5509, 0.0
        %v5654 = vmax.f32 %v5510, 0.0
        %v5655 = vmax.f32 %v5511, 0.0
        %v5656 = vmax.f32 %v5512, 0.0
        %v5657 = vmax.f32 %v5513, 0.0
        %v5658 = vmax.f32 %v5514, 0.0
        %v5659 = vmax.f32 %v5515, 0.0
        %v5660 = vmax.f32 %v5516, 0.0
        %v5661 = vmax.f32 %v5517, 0.0
        %v5662 = vmax.f32 %v5518, 0.0
        %v5663 = vmax.f32 %v5519, 0.0
        %v5664 = vmax.f32 %v5520, 0.0
        %v5665 = vmax.f32 %v5521, 0.0
        %v5666 = vmax.f32 %v5522, 0.0
        %v5667 = vmax.f32 %v5523, 0.0
        %v5668 = vmax.f32 %v5524, 0.0
        %v5669 = vmax.f32 %v5525, 0.0
        %v5670 = vmax.f32 %v5526, 0.0
        %v5671 = vmax.f32 %v5527, 0.0
        %v5672 = vmax.f32 %v5528, 0.0
        %v5673 = vmax.f32 %v5529, 0.0
        %v5674 = vmax.f32 %v5530, 0.0
        %v5675 = vmax.f32 %v5531, 0.0
        %v5676 = vpack.c.bf16 %v5533, %v5532
        %v5677 = vpack.c.bf16 %v5534, %v5534
        %v5678 = vpack.c.bf16 %v5536, %v5535
        %v5679 = vpack.c.bf16 %v5537, %v5537
        %v5680 = vpack.c.bf16 %v5539, %v5538
        %v5681 = vpack.c.bf16 %v5540, %v5540
        %v5682 = vpack.c.bf16 %v5542, %v5541
        %v5683 = vpack.c.bf16 %v5543, %v5543
        %v5684 = vpack.c.bf16 %v5545, %v5544
        %v5685 = vpack.c.bf16 %v5546, %v5546
        %v5686 = vpack.c.bf16 %v5548, %v5547
        %v5687 = vpack.c.bf16 %v5549, %v5549
        %v5688 = vpack.c.bf16 %v5551, %v5550
        %v5689 = vpack.c.bf16 %v5552, %v5552
        %v5690 = vpack.c.bf16 %v5554, %v5553
        %v5691 = vpack.c.bf16 %v5555, %v5555
        %v5692 = vpack.c.bf16 %v5557, %v5556
        %v5693 = vpack.c.bf16 %v5558, %v5558
        %v5694 = vpack.c.bf16 %v5560, %v5559
        %v5695 = vpack.c.bf16 %v5561, %v5561
        %v5696 = vpack.c.bf16 %v5563, %v5562
        %v5697 = vpack.c.bf16 %v5564, %v5564
        %v5698 = vpack.c.bf16 %v5566, %v5565
        %v5699 = vpack.c.bf16 %v5567, %v5567
        %v5700 = vpack.c.bf16 %v5569, %v5568
        %v5701 = vpack.c.bf16 %v5570, %v5570
        %v5702 = vpack.c.bf16 %v5572, %v5571
        %v5703 = vpack.c.bf16 %v5573, %v5573
        %v5704 = vpack.c.bf16 %v5575, %v5574
        %v5705 = vpack.c.bf16 %v5576, %v5576
        %v5706 = vpack.c.bf16 %v5578, %v5577
        %v5707 = vpack.c.bf16 %v5579, %v5579
        %v5708 = vpack.c.bf16 %v5581, %v5580
        %v5709 = vpack.c.bf16 %v5582, %v5582
        %v5710 = vpack.c.bf16 %v5584, %v5583
        %v5711 = vpack.c.bf16 %v5585, %v5585
        %v5712 = vpack.c.bf16 %v5587, %v5586
        %v5713 = vpack.c.bf16 %v5588, %v5588
        %v5714 = vpack.c.bf16 %v5590, %v5589
        %v5715 = vpack.c.bf16 %v5591, %v5591
        %v5716 = vpack.c.bf16 %v5593, %v5592
        %v5717 = vpack.c.bf16 %v5594, %v5594
        %v5718 = vpack.c.bf16 %v5596, %v5595
        %v5719 = vpack.c.bf16 %v5597, %v5597
        %v5720 = vpack.c.bf16 %v5599, %v5598
        %v5721 = vpack.c.bf16 %v5600, %v5600
        %v5722 = vpack.c.bf16 %v5602, %v5601
        %v5723 = vpack.c.bf16 %v5603, %v5603
        %v5724 = vpack.c.bf16 %v5605, %v5604
        %v5725 = vpack.c.bf16 %v5606, %v5606
        %v5726 = vpack.c.bf16 %v5608, %v5607
        %v5727 = vpack.c.bf16 %v5609, %v5609
        %v5728 = vpack.c.bf16 %v5611, %v5610
        %v5729 = vpack.c.bf16 %v5612, %v5612
        %v5730 = vpack.c.bf16 %v5614, %v5613
        %v5731 = vpack.c.bf16 %v5615, %v5615
        %v5732 = vpack.c.bf16 %v5617, %v5616
        %v5733 = vpack.c.bf16 %v5618, %v5618
        %v5734 = vpack.c.bf16 %v5620, %v5619
        %v5735 = vpack.c.bf16 %v5621, %v5621
        %v5736 = vpack.c.bf16 %v5623, %v5622
        %v5737 = vpack.c.bf16 %v5624, %v5624
        %v5738 = vpack.c.bf16 %v5626, %v5625
        %v5739 = vpack.c.bf16 %v5627, %v5627
        %v5740 = vpack.c.bf16 %v5629, %v5628
        %v5741 = vpack.c.bf16 %v5630, %v5630
        %v5742 = vpack.c.bf16 %v5632, %v5631
        %v5743 = vpack.c.bf16 %v5633, %v5633
        %v5744 = vpack.c.bf16 %v5635, %v5634
        %v5745 = vpack.c.bf16 %v5636, %v5636
        %v5746 = vpack.c.bf16 %v5638, %v5637
        %v5747 = vpack.c.bf16 %v5639, %v5639
        %v5748 = vpack.c.bf16 %v5641, %v5640
        %v5749 = vpack.c.bf16 %v5642, %v5642
        %v5750 = vpack.c.bf16 %v5644, %v5643
        %v5751 = vpack.c.bf16 %v5645, %v5645
        %v5752 = vpack.c.bf16 %v5647, %v5646
        %v5753 = vpack.c.bf16 %v5648, %v5648
        %v5754 = vpack.c.bf16 %v5650, %v5649
        %v5755 = vpack.c.bf16 %v5651, %v5651
        %v5756 = vpack.c.bf16 %v5653, %v5652
        %v5757 = vpack.c.bf16 %v5654, %v5654
        %v5758 = vpack.c.bf16 %v5656, %v5655
        %v5759 = vpack.c.bf16 %v5657, %v5657
        %v5760 = vpack.c.bf16 %v5659, %v5658
        %v5761 = vpack.c.bf16 %v5660, %v5660
        %v5762 = vpack.c.bf16 %v5662, %v5661
        %v5763 = vpack.c.bf16 %v5663, %v5663
        %v5764 = vpack.c.bf16 %v5665, %v5664
        %v5765 = vpack.c.bf16 %v5666, %v5666
        %v5766 = vpack.c.bf16 %v5668, %v5667
        %v5767 = vpack.c.bf16 %v5669, %v5669
        %v5768 = vpack.c.bf16 %v5671, %v5670
        %v5769 = vpack.c.bf16 %v5672, %v5672
        %v5770 = vpack.c.bf16 %v5674, %v5673
        %v5771 = vpack.c.bf16 %v5675, %v5675
        %v5772 = vld [vmem:[%s4] sm:$0xf]
        %v5773 = vld [vmem:[%s4 + $0x4] sm:$0xf]
        %v5774 = vld [vmem:[%s4 + $0x8] sm:$0xf]
        %v5775 = vld [vmem:[%s4 + $0xc] sm:$0xf]
        %v5776 = vld [vmem:[%s4 + $0x10] sm:$0xf]
        %v5777 = vld [vmem:[%s4 + $0x14] sm:$0xf]
        %v5778 = vld [vmem:[%s4 + $0x18] sm:$0xf]
        %v5779 = vld [vmem:[%s4 + $0x1c] sm:$0xf]
        %v5780 = vld [vmem:[%s4 + $0x20] sm:$0xf]
        %v5781 = vld [vmem:[%s4 + $0x24] sm:$0xf]
        %v5782 = vld [vmem:[%s4 + $0x28] sm:$0xf]
        %v5783 = vld [vmem:[%s4 + $0x2c] sm:$0xf]
        %v5784 = vld [vmem:[%s4 + $0x30] sm:$0xf]
        %v5785 = vld [vmem:[%s4 + $0x34] sm:$0xf]
        %v5786 = vld [vmem:[%s4 + $0x38] sm:$0xf]
        %v5787 = vld [vmem:[%s4 + $0x3c] sm:$0xf]
        %v5788 = vld [vmem:[%s4 + $0x40] sm:$0xf]
        %v5789 = vld [vmem:[%s4 + $0x44] sm:$0xf]
        %v5790 = vld [vmem:[%s4 + $0x48] sm:$0xf]
        %v5791 = vld [vmem:[%s4 + $0x4c] sm:$0xf]
        %v5792 = vld [vmem:[%s4 + $0x50] sm:$0xf]
        %v5793 = vld [vmem:[%s4 + $0x54] sm:$0xf]
        %v5794 = vld [vmem:[%s4 + $0x58] sm:$0xf]
        %v5795 = vld [vmem:[%s4 + $0x5c] sm:$0xf]
        %v5796 = vld [vmem:[%s4 + $0x60] sm:$0xf]
        %v5797 = vld [vmem:[%s4 + $0x64] sm:$0xf]
        %v5798 = vld [vmem:[%s4 + $0x68] sm:$0xf]
        %v5799 = vld [vmem:[%s4 + $0x6c] sm:$0xf]
        %v5800 = vld [vmem:[%s4 + $0x70] sm:$0xf]
        %v5801 = vld [vmem:[%s4 + $0x74] sm:$0xf]
        %v5802 = vld [vmem:[%s4 + $0x78] sm:$0xf]
        %v5803 = vld [vmem:[%s4 + $0x7c] sm:$0xf]
        %v5804 = vld [vmem:[%s4 + $0x80] sm:$0xf]
        %v5805 = vld [vmem:[%s4 + $0x84] sm:$0xf]
        %v5806 = vld [vmem:[%s4 + $0x88] sm:$0xf]
        %v5807 = vld [vmem:[%s4 + $0x8c] sm:$0xf]
        %v5808 = vld [vmem:[%s4 + $0x90] sm:$0xf]
        %v5809 = vld [vmem:[%s4 + $0x94] sm:$0xf]
        %v5810 = vld [vmem:[%s4 + $0x98] sm:$0xf]
        %v5811 = vld [vmem:[%s4 + $0x9c] sm:$0xf]
        %v5812 = vld [vmem:[%s4 + $0xa0] sm:$0xf]
        %v5813 = vld [vmem:[%s4 + $0xa4] sm:$0xf]
        %v5814 = vld [vmem:[%s4 + $0xa8] sm:$0xf]
        %v5815 = vld [vmem:[%s4 + $0xac] sm:$0xf]
        %v5816 = vld [vmem:[%s4 + $0xb0] sm:$0xf]
        %v5817 = vld [vmem:[%s4 + $0xb4] sm:$0xf]
        %v5818 = vld [vmem:[%s4 + $0xb8] sm:$0xf]
        %v5819 = vld [vmem:[%s4 + $0xbc] sm:$0xf]
        %v5820 = vld [vmem:[%s5] sm:$0xf]
        %v5821 = vld [vmem:[%s5 + $0x4] sm:$0xf]
        %v5822 = vld [vmem:[%s5 + $0x8] sm:$0xf]
        %v5823 = vld [vmem:[%s5 + $0xc] sm:$0xf]
        %v5824 = vld [vmem:[%s5 + $0x10] sm:$0xf]
        %v5825 = vld [vmem:[%s5 + $0x14] sm:$0xf]
        %v5826 = vld [vmem:[%s5 + $0x18] sm:$0xf]
        %v5827 = vld [vmem:[%s5 + $0x1c] sm:$0xf]
        %v5828 = vld [vmem:[%s5 + $0x20] sm:$0xf]
        %v5829 = vld [vmem:[%s5 + $0x24] sm:$0xf]
        %v5830 = vld [vmem:[%s5 + $0x28] sm:$0xf]
        %v5831 = vld [vmem:[%s5 + $0x2c] sm:$0xf]
        %v5832 = vld [vmem:[%s5 + $0x30] sm:$0xf]
        %v5833 = vld [vmem:[%s5 + $0x34] sm:$0xf]
        %v5834 = vld [vmem:[%s5 + $0x38] sm:$0xf]
        %v5835 = vld [vmem:[%s5 + $0x3c] sm:$0xf]
        %v5836 = vld [vmem:[%s5 + $0x40] sm:$0xf]
        %v5837 = vld [vmem:[%s5 + $0x44] sm:$0xf]
        %v5838 = vld [vmem:[%s5 + $0x48] sm:$0xf]
        %v5839 = vld [vmem:[%s5 + $0x4c] sm:$0xf]
        %v5840 = vld [vmem:[%s5 + $0x50] sm:$0xf]
        %v5841 = vld [vmem:[%s5 + $0x54] sm:$0xf]
        %v5842 = vld [vmem:[%s5 + $0x58] sm:$0xf]
        %v5843 = vld [vmem:[%s5 + $0x5c] sm:$0xf]
        %v5844 = vld [vmem:[%s5 + $0x60] sm:$0xf]
        %v5845 = vld [vmem:[%s5 + $0x64] sm:$0xf]
        %v5846 = vld [vmem:[%s5 + $0x68] sm:$0xf]
        %v5847 = vld [vmem:[%s5 + $0x6c] sm:$0xf]
        %v5848 = vld [vmem:[%s5 + $0x70] sm:$0xf]
        %v5849 = vld [vmem:[%s5 + $0x74] sm:$0xf]
        %v5850 = vld [vmem:[%s5 + $0x78] sm:$0xf]
        %v5851 = vld [vmem:[%s5 + $0x7c] sm:$0xf]
        %v5852 = vld [vmem:[%s5 + $0x80] sm:$0xf]
        %v5853 = vld [vmem:[%s5 + $0x84] sm:$0xf]
        %v5854 = vld [vmem:[%s5 + $0x88] sm:$0xf]
        %v5855 = vld [vmem:[%s5 + $0x8c] sm:$0xf]
        %v5856 = vld [vmem:[%s5 + $0x90] sm:$0xf]
        %v5857 = vld [vmem:[%s5 + $0x94] sm:$0xf]
        %v5858 = vld [vmem:[%s5 + $0x98] sm:$0xf]
        %v5859 = vld [vmem:[%s5 + $0x9c] sm:$0xf]
        %v5860 = vld [vmem:[%s5 + $0xa0] sm:$0xf]
        %v5861 = vld [vmem:[%s5 + $0xa4] sm:$0xf]
        %v5862 = vld [vmem:[%s5 + $0xa8] sm:$0xf]
        %v5863 = vld [vmem:[%s5 + $0xac] sm:$0xf]
        %v5864 = vld [vmem:[%s5 + $0xb0] sm:$0xf]
        %v5865 = vld [vmem:[%s5 + $0xb4] sm:$0xf]
        %v5866 = vld [vmem:[%s5 + $0xb8] sm:$0xf]
        %v5867 = vld [vmem:[%s5 + $0xbc] sm:$0xf]
        %s5868 = scalar_lea.vmem %s4, 192
        %v5869 = vld [vmem:[%s5868] sm:$0xf]
        %v5870 = vld [vmem:[%s5868 + $0x4] sm:$0xf]
        %v5871 = vld [vmem:[%s5868 + $0x8] sm:$0xf]
        %v5872 = vld [vmem:[%s5868 + $0xc] sm:$0xf]
        %v5873 = vld [vmem:[%s5868 + $0x10] sm:$0xf]
        %v5874 = vld [vmem:[%s5868 + $0x14] sm:$0xf]
        %v5875 = vld [vmem:[%s5868 + $0x18] sm:$0xf]
        %v5876 = vld [vmem:[%s5868 + $0x1c] sm:$0xf]
        %v5877 = vld [vmem:[%s5868 + $0x20] sm:$0xf]
        %v5878 = vld [vmem:[%s5868 + $0x24] sm:$0xf]
        %v5879 = vld [vmem:[%s5868 + $0x28] sm:$0xf]
        %v5880 = vld [vmem:[%s5868 + $0x2c] sm:$0xf]
        %v5881 = vld [vmem:[%s5868 + $0x30] sm:$0xf]
        %v5882 = vld [vmem:[%s5868 + $0x34] sm:$0xf]
        %v5883 = vld [vmem:[%s5868 + $0x38] sm:$0xf]
        %v5884 = vld [vmem:[%s5868 + $0x3c] sm:$0xf]
        %v5885 = vld [vmem:[%s5868 + $0x40] sm:$0xf]
        %v5886 = vld [vmem:[%s5868 + $0x44] sm:$0xf]
        %v5887 = vld [vmem:[%s5868 + $0x48] sm:$0xf]
        %v5888 = vld [vmem:[%s5868 + $0x4c] sm:$0xf]
        %v5889 = vld [vmem:[%s5868 + $0x50] sm:$0xf]
        %v5890 = vld [vmem:[%s5868 + $0x54] sm:$0xf]
        %v5891 = vld [vmem:[%s5868 + $0x58] sm:$0xf]
        %v5892 = vld [vmem:[%s5868 + $0x5c] sm:$0xf]
        %v5893 = vld [vmem:[%s5868 + $0x60] sm:$0xf]
        %v5894 = vld [vmem:[%s5868 + $0x64] sm:$0xf]
        %v5895 = vld [vmem:[%s5868 + $0x68] sm:$0xf]
        %v5896 = vld [vmem:[%s5868 + $0x6c] sm:$0xf]
        %v5897 = vld [vmem:[%s5868 + $0x70] sm:$0xf]
        %v5898 = vld [vmem:[%s5868 + $0x74] sm:$0xf]
        %v5899 = vld [vmem:[%s5868 + $0x78] sm:$0xf]
        %v5900 = vld [vmem:[%s5868 + $0x7c] sm:$0xf]
        %v5901 = vld [vmem:[%s5868 + $0x80] sm:$0xf]
        %v5902 = vld [vmem:[%s5868 + $0x84] sm:$0xf]
        %v5903 = vld [vmem:[%s5868 + $0x88] sm:$0xf]
        %v5904 = vld [vmem:[%s5868 + $0x8c] sm:$0xf]
        %v5905 = vld [vmem:[%s5868 + $0x90] sm:$0xf]
        %v5906 = vld [vmem:[%s5868 + $0x94] sm:$0xf]
        %v5907 = vld [vmem:[%s5868 + $0x98] sm:$0xf]
        %v5908 = vld [vmem:[%s5868 + $0x9c] sm:$0xf]
        %v5909 = vld [vmem:[%s5868 + $0xa0] sm:$0xf]
        %v5910 = vld [vmem:[%s5868 + $0xa4] sm:$0xf]
        %v5911 = vld [vmem:[%s5868 + $0xa8] sm:$0xf]
        %v5912 = vld [vmem:[%s5868 + $0xac] sm:$0xf]
        %v5913 = vld [vmem:[%s5868 + $0xb0] sm:$0xf]
        %v5914 = vld [vmem:[%s5868 + $0xb4] sm:$0xf]
        %v5915 = vld [vmem:[%s5868 + $0xb8] sm:$0xf]
        %v5916 = vld [vmem:[%s5868 + $0xbc] sm:$0xf]
        %v5981 = vunpack.c.l.b16 %v5684
        %v5982 = vunpack.c.h.b16 %v5684
        %v5983 = vunpack.c.l.b16 %v5685
        %v5984 = vunpack.c.l.b16 %v5686
        %v5985 = vunpack.c.h.b16 %v5686
        %v5986 = vunpack.c.l.b16 %v5687
        %v5987 = vunpack.c.l.b16 %v5688
        %v5988 = vunpack.c.h.b16 %v5688
        %v5989 = vunpack.c.l.b16 %v5689
        %v5990 = vunpack.c.l.b16 %v5690
        %v5991 = vunpack.c.h.b16 %v5690
        %v5992 = vunpack.c.l.b16 %v5691
        %v5993 = vunpack.c.l.b16 %v5692
        %v5994 = vunpack.c.h.b16 %v5692
        %v5995 = vunpack.c.l.b16 %v5693
        %v5996 = vunpack.c.l.b16 %v5694
        %v5997 = vunpack.c.h.b16 %v5694
        %v5998 = vunpack.c.l.b16 %v5695
        %v5999 = vunpack.c.l.b16 %v5696
        %v6000 = vunpack.c.h.b16 %v5696
        %v6001 = vunpack.c.l.b16 %v5697
        %v6002 = vunpack.c.l.b16 %v5698
        %v6003 = vunpack.c.h.b16 %v5698
        %v6004 = vunpack.c.l.b16 %v5699
        %v6005 = vunpack.c.l.b16 %v5700
        %v6006 = vunpack.c.h.b16 %v5700
        %v6007 = vunpack.c.l.b16 %v5701
        %v6008 = vunpack.c.l.b16 %v5702
        %v6009 = vunpack.c.h.b16 %v5702
        %v6010 = vunpack.c.l.b16 %v5703
        %v6011 = vunpack.c.l.b16 %v5704
        %v6012 = vunpack.c.h.b16 %v5704
        %v6013 = vunpack.c.l.b16 %v5705
        %v6014 = vunpack.c.l.b16 %v5706
        %v6015 = vunpack.c.h.b16 %v5706
        %v6016 = vunpack.c.l.b16 %v5707
        %v6017 = vunpack.c.l.b16 %v5708
        %v6018 = vunpack.c.h.b16 %v5708
        %v6019 = vunpack.c.l.b16 %v5709
        %v6020 = vunpack.c.l.b16 %v5710
        %v6021 = vunpack.c.h.b16 %v5710
        %v6022 = vunpack.c.l.b16 %v5711
        %v6023 = vunpack.c.l.b16 %v5712
        %v6024 = vunpack.c.h.b16 %v5712
        %v6025 = vunpack.c.l.b16 %v5713
        %v6026 = vunpack.c.l.b16 %v5714
        %v6027 = vunpack.c.h.b16 %v5714
        %v6028 = vunpack.c.l.b16 %v5715
        %v6029 = vunpack.c.l.b16 %v5716
        %v6030 = vunpack.c.h.b16 %v5716
        %v6031 = vunpack.c.l.b16 %v5717
        %v6032 = vunpack.c.l.b16 %v5718
        %v6033 = vunpack.c.h.b16 %v5718
        %v6034 = vunpack.c.l.b16 %v5719
        %v6035 = vunpack.c.l.b16 %v5720
        %v6036 = vunpack.c.h.b16 %v5720
        %v6037 = vunpack.c.l.b16 %v5721
        %v6038 = vunpack.c.l.b16 %v5722
        %v6039 = vunpack.c.h.b16 %v5722
        %v6040 = vunpack.c.l.b16 %v5723
        %v6041 = vunpack.c.l.b16 %v5724
        %v6042 = vunpack.c.h.b16 %v5724
        %v6043 = vunpack.c.l.b16 %v5725
        %v6044 = vunpack.c.l.b16 %v5726
        %v6045 = vunpack.c.h.b16 %v5726
        %v6046 = vunpack.c.l.b16 %v5727
        %v6047 = vunpack.c.l.b16 %v5728
        %v6048 = vunpack.c.h.b16 %v5728
        %v6049 = vunpack.c.l.b16 %v5729
        %v6050 = vunpack.c.l.b16 %v5730
        %v6051 = vunpack.c.h.b16 %v5730
        %v6052 = vunpack.c.l.b16 %v5731
        %v6053 = vunpack.c.l.b16 %v5732
        %v6054 = vunpack.c.h.b16 %v5732
        %v6055 = vunpack.c.l.b16 %v5733
        %v6056 = vunpack.c.l.b16 %v5734
        %v6057 = vunpack.c.h.b16 %v5734
        %v6058 = vunpack.c.l.b16 %v5735
        %v6059 = vunpack.c.l.b16 %v5736
        %v6060 = vunpack.c.h.b16 %v5736
        %v6061 = vunpack.c.l.b16 %v5737
        %v6062 = vunpack.c.l.b16 %v5738
        %v6063 = vunpack.c.h.b16 %v5738
        %v6064 = vunpack.c.l.b16 %v5739
        %v6065 = vunpack.c.l.b16 %v5740
        %v6066 = vunpack.c.h.b16 %v5740
        %v6067 = vunpack.c.l.b16 %v5741
        %v6068 = vunpack.c.l.b16 %v5742
        %v6069 = vunpack.c.h.b16 %v5742
        %v6070 = vunpack.c.l.b16 %v5743
        %v6071 = vunpack.c.l.b16 %v5744
        %v6072 = vunpack.c.h.b16 %v5744
        %v6073 = vunpack.c.l.b16 %v5745
        %v6074 = vunpack.c.l.b16 %v5746
        %v6075 = vunpack.c.h.b16 %v5746
        %v6076 = vunpack.c.l.b16 %v5747
        %v6077 = vpack.c.b16 %v5984, %v5981
        %v6078 = vpack.c.b16 %v5985, %v5982
        %v6079 = vpack.c.b16 %v5986, %v5983
        %v6080 = vpack.c.b16 %v5990, %v5987
        %v6081 = vpack.c.b16 %v5991, %v5988
        %v6082 = vpack.c.b16 %v5992, %v5989
        %v6083 = vpack.c.b16 %v5996, %v5993
        %v6084 = vpack.c.b16 %v5997, %v5994
        %v6085 = vpack.c.b16 %v5998, %v5995
        %v6086 = vpack.c.b16 %v6002, %v5999
        %v6087 = vpack.c.b16 %v6003, %v6000
        %v6088 = vpack.c.b16 %v6004, %v6001
        %v6089 = vpack.c.b16 %v6008, %v6005
        %v6090 = vpack.c.b16 %v6009, %v6006
        %v6091 = vpack.c.b16 %v6010, %v6007
        %v6092 = vpack.c.b16 %v6014, %v6011
        %v6093 = vpack.c.b16 %v6015, %v6012
        %v6094 = vpack.c.b16 %v6016, %v6013
        %v6095 = vpack.c.b16 %v6020, %v6017
        %v6096 = vpack.c.b16 %v6021, %v6018
        %v6097 = vpack.c.b16 %v6022, %v6019
        %v6098 = vpack.c.b16 %v6026, %v6023
        %v6099 = vpack.c.b16 %v6027, %v6024
        %v6100 = vpack.c.b16 %v6028, %v6025
        %v6101 = vpack.c.b16 %v6032, %v6029
        %v6102 = vpack.c.b16 %v6033, %v6030
        %v6103 = vpack.c.b16 %v6034, %v6031
        %v6104 = vpack.c.b16 %v6038, %v6035
        %v6105 = vpack.c.b16 %v6039, %v6036
        %v6106 = vpack.c.b16 %v6040, %v6037
        %v6107 = vpack.c.b16 %v6044, %v6041
        %v6108 = vpack.c.b16 %v6045, %v6042
        %v6109 = vpack.c.b16 %v6046, %v6043
        %v6110 = vpack.c.b16 %v6050, %v6047
        %v6111 = vpack.c.b16 %v6051, %v6048
        %v6112 = vpack.c.b16 %v6052, %v6049
        %v6113 = vpack.c.b16 %v6056, %v6053
        %v6114 = vpack.c.b16 %v6057, %v6054
        %v6115 = vpack.c.b16 %v6058, %v6055
        %v6116 = vpack.c.b16 %v6062, %v6059
        %v6117 = vpack.c.b16 %v6063, %v6060
        %v6118 = vpack.c.b16 %v6064, %v6061
        %v6119 = vpack.c.b16 %v6068, %v6065
        %v6120 = vpack.c.b16 %v6069, %v6066
        %v6121 = vpack.c.b16 %v6070, %v6067
        %v6122 = vpack.c.b16 %v6074, %v6071
        %v6123 = vpack.c.b16 %v6075, %v6072
        %v6124 = vpack.c.b16 %v6076, %v6073
        %v6221 = vunpack.c.l.b16 %v5869
        %v6222 = vunpack.c.l.b16 %v5870
        %v6223 = vunpack.c.l.b16 %v5871
        %v6224 = vunpack.c.l.b16 %v5872
        %v6225 = vunpack.c.l.b16 %v5873
        %v6226 = vunpack.c.l.b16 %v5874
        %v6227 = vunpack.c.l.b16 %v5875
        %v6228 = vunpack.c.l.b16 %v5876
        %v6229 = vunpack.c.l.b16 %v5877
        %v6230 = vunpack.c.l.b16 %v5878
        %v6231 = vunpack.c.l.b16 %v5879
        %v6232 = vunpack.c.l.b16 %v5880
        %v6233 = vunpack.c.l.b16 %v5881
        %v6234 = vunpack.c.l.b16 %v5882
        %v6235 = vunpack.c.l.b16 %v5883
        %v6236 = vunpack.c.l.b16 %v5884
        %v6237 = vunpack.c.l.b16 %v5885
        %v6238 = vunpack.c.l.b16 %v5886
        %v6239 = vunpack.c.l.b16 %v5887
        %v6240 = vunpack.c.l.b16 %v5888
        %v6241 = vunpack.c.l.b16 %v5889
        %v6242 = vunpack.c.l.b16 %v5890
        %v6243 = vunpack.c.l.b16 %v5891
        %v6244 = vunpack.c.l.b16 %v5892
        %v6245 = vunpack.c.l.b16 %v5893
        %v6246 = vunpack.c.l.b16 %v5894
        %v6247 = vunpack.c.l.b16 %v5895
        %v6248 = vunpack.c.l.b16 %v5896
        %v6249 = vunpack.c.l.b16 %v5897
        %v6250 = vunpack.c.l.b16 %v5898
        %v6251 = vunpack.c.l.b16 %v5899
        %v6252 = vunpack.c.l.b16 %v5900
        %v6253 = vunpack.c.l.b16 %v5901
        %v6254 = vunpack.c.l.b16 %v5902
        %v6255 = vunpack.c.l.b16 %v5903
        %v6256 = vunpack.c.l.b16 %v5904
        %v6257 = vunpack.c.l.b16 %v5905
        %v6258 = vunpack.c.l.b16 %v5906
        %v6259 = vunpack.c.l.b16 %v5907
        %v6260 = vunpack.c.l.b16 %v5908
        %v6261 = vunpack.c.l.b16 %v5909
        %v6262 = vunpack.c.l.b16 %v5910
        %v6263 = vunpack.c.l.b16 %v5911
        %v6264 = vunpack.c.l.b16 %v5912
        %v6265 = vunpack.c.l.b16 %v5913
        %v6266 = vunpack.c.l.b16 %v5914
        %v6267 = vunpack.c.l.b16 %v5915
        %v6268 = vunpack.c.l.b16 %v5916
        %v6269 = vpack.c.b16 %v6222, %v6221
        %v6270 = vpack.c.b16 %v6224, %v6223
        %v6271 = vpack.c.b16 %v6226, %v6225
        %v6272 = vpack.c.b16 %v6228, %v6227
        %v6273 = vpack.c.b16 %v6230, %v6229
        %v6274 = vpack.c.b16 %v6232, %v6231
        %v6275 = vpack.c.b16 %v6234, %v6233
        %v6276 = vpack.c.b16 %v6236, %v6235
        %v6277 = vpack.c.b16 %v6238, %v6237
        %v6278 = vpack.c.b16 %v6240, %v6239
        %v6279 = vpack.c.b16 %v6242, %v6241
        %v6280 = vpack.c.b16 %v6244, %v6243
        %v6281 = vpack.c.b16 %v6246, %v6245
        %v6282 = vpack.c.b16 %v6248, %v6247
        %v6283 = vpack.c.b16 %v6250, %v6249
        %v6284 = vpack.c.b16 %v6252, %v6251
        %v6285 = vpack.c.b16 %v6254, %v6253
        %v6286 = vpack.c.b16 %v6256, %v6255
        %v6287 = vpack.c.b16 %v6258, %v6257
        %v6288 = vpack.c.b16 %v6260, %v6259
        %v6289 = vpack.c.b16 %v6262, %v6261
        %v6290 = vpack.c.b16 %v6264, %v6263
        %v6291 = vpack.c.b16 %v6266, %v6265
        %v6292 = vpack.c.b16 %v6268, %v6267
        %6317 = vmatpush.bf16.msra.mxu0 %v6276
        %6318 = vmatpush.bf16.msra.mxu0 %v6275
        %6319 = vmatpush.bf16.msra.mxu0 %v6274
        %6320 = vmatpush.bf16.msra.mxu0 %v6273
        %6321 = vmatpush.bf16.msra.mxu0 %v6272
        %6322 = vmatpush.bf16.msra.mxu0 %v6271
        %6323 = vmatpush.bf16.msra.mxu0 %v6270
        %6324 = vmatpush.bf16.msra.mxu0 %v6269
        %6325 = vmatmul.bf16.gmra.mxu0 %v6077
        %v6326 = vpop.f32.mrf.mxu0
        %v6327 = vadd.f32 0.0, %v6326
        %v6328 = vpop.f32.mrf.mxu0
        %v6329 = vadd.f32 0.0, %v6328
        %6330 = vmatmul.bf16.gmra.mxu0 %v6080
        %v6331 = vpop.f32.mrf.mxu0
        %v6332 = vadd.f32 0.0, %v6331
        %v6333 = vpop.f32.mrf.mxu0
        %v6334 = vadd.f32 0.0, %v6333
        %6335 = vmatmul.bf16.gmra.mxu0 %v6083
        %v6336 = vpop.f32.mrf.mxu0
        %v6337 = vadd.f32 0.0, %v6336
        %v6338 = vpop.f32.mrf.mxu0
        %v6339 = vadd.f32 0.0, %v6338
        %6340 = vmatmul.bf16.gmra.mxu0 %v6086
        %v6341 = vpop.f32.mrf.mxu0
        %v6342 = vadd.f32 0.0, %v6341
        %v6343 = vpop.f32.mrf.mxu0
        %v6344 = vadd.f32 0.0, %v6343
        %6345 = vmatmul.bf16.gmra.mxu0 %v6089
        %v6346 = vpop.f32.mrf.mxu0
        %v6347 = vadd.f32 0.0, %v6346
        %v6348 = vpop.f32.mrf.mxu0
        %v6349 = vadd.f32 0.0, %v6348
        %6350 = vmatmul.bf16.gmra.mxu0 %v6092
        %v6351 = vpop.f32.mrf.mxu0
        %v6352 = vadd.f32 0.0, %v6351
        %v6353 = vpop.f32.mrf.mxu0
        %v6354 = vadd.f32 0.0, %v6353
        %6355 = vmatmul.bf16.gmra.mxu0 %v6095
        %v6356 = vpop.f32.mrf.mxu0
        %v6357 = vadd.f32 0.0, %v6356
        %v6358 = vpop.f32.mrf.mxu0
        %v6359 = vadd.f32 0.0, %v6358
        %6360 = vmatmul.bf16.gmra.mxu0 %v6098
        %v6361 = vpop.f32.mrf.mxu0
        %v6362 = vadd.f32 0.0, %v6361
        %v6363 = vpop.f32.mrf.mxu0
        %v6364 = vadd.f32 0.0, %v6363
        %6365 = vmatmul.bf16.gmra.mxu0 %v6101
        %v6366 = vpop.f32.mrf.mxu0
        %v6367 = vadd.f32 0.0, %v6366
        %v6368 = vpop.f32.mrf.mxu0
        %v6369 = vadd.f32 0.0, %v6368
        %6370 = vmatmul.bf16.gmra.mxu0 %v6104
        %v6371 = vpop.f32.mrf.mxu0
        %v6372 = vadd.f32 0.0, %v6371
        %v6373 = vpop.f32.mrf.mxu0
        %v6374 = vadd.f32 0.0, %v6373
        %6375 = vmatmul.bf16.gmra.mxu0 %v6107
        %v6376 = vpop.f32.mrf.mxu0
        %v6377 = vadd.f32 0.0, %v6376
        %v6378 = vpop.f32.mrf.mxu0
        %v6379 = vadd.f32 0.0, %v6378
        %6380 = vmatmul.bf16.gmra.mxu0 %v6110
        %v6381 = vpop.f32.mrf.mxu0
        %v6382 = vadd.f32 0.0, %v6381
        %v6383 = vpop.f32.mrf.mxu0
        %v6384 = vadd.f32 0.0, %v6383
        %6385 = vmatmul.bf16.gmra.mxu0 %v6113
        %v6386 = vpop.f32.mrf.mxu0
        %v6387 = vadd.f32 0.0, %v6386
        %v6388 = vpop.f32.mrf.mxu0
        %v6389 = vadd.f32 0.0, %v6388
        %6390 = vmatmul.bf16.gmra.mxu0 %v6116
        %v6391 = vpop.f32.mrf.mxu0
        %v6392 = vadd.f32 0.0, %v6391
        %v6393 = vpop.f32.mrf.mxu0
        %v6394 = vadd.f32 0.0, %v6393
        %6395 = vmatmul.bf16.gmra.mxu0 %v6119
        %v6396 = vpop.f32.mrf.mxu0
        %v6397 = vadd.f32 0.0, %v6396
        %v6398 = vpop.f32.mrf.mxu0
        %v6399 = vadd.f32 0.0, %v6398
        %6400 = vmatmul.bf16.gmra.mxu0 %v6122
        %v6401 = vpop.f32.mrf.mxu0
        %v6402 = vadd.f32 0.0, %v6401
        %v6403 = vpop.f32.mrf.mxu0
        %v6404 = vadd.f32 0.0, %v6403
        %6405 = vdwg.mxu0
        %6406 = vmatpush.bf16.msra.mxu0 %v6284
        %6407 = vmatpush.bf16.msra.mxu0 %v6283
        %6408 = vmatpush.bf16.msra.mxu0 %v6282
        %6409 = vmatpush.bf16.msra.mxu0 %v6281
        %6410 = vmatpush.bf16.msra.mxu0 %v6280
        %6411 = vmatpush.bf16.msra.mxu0 %v6279
        %6412 = vmatpush.bf16.msra.mxu0 %v6278
        %6413 = vmatpush.bf16.msra.mxu0 %v6277
        %6414 = vmatmul.bf16.gmra.mxu0 %v6078
        %v6415 = vpop.f32.mrf.mxu0
        %v6416 = vadd.f32 %v6327, %v6415
        %v6417 = vpop.f32.mrf.mxu0
        %v6418 = vadd.f32 %v6329, %v6417
        %6419 = vmatmul.bf16.gmra.mxu0 %v6081
        %v6420 = vpop.f32.mrf.mxu0
        %v6421 = vadd.f32 %v6332, %v6420
        %v6422 = vpop.f32.mrf.mxu0
        %v6423 = vadd.f32 %v6334, %v6422
        %6424 = vmatmul.bf16.gmra.mxu0 %v6084
        %v6425 = vpop.f32.mrf.mxu0
        %v6426 = vadd.f32 %v6337, %v6425
        %v6427 = vpop.f32.mrf.mxu0
        %v6428 = vadd.f32 %v6339, %v6427
        %6429 = vmatmul.bf16.gmra.mxu0 %v6087
        %v6430 = vpop.f32.mrf.mxu0
        %v6431 = vadd.f32 %v6342, %v6430
        %v6432 = vpop.f32.mrf.mxu0
        %v6433 = vadd.f32 %v6344, %v6432
        %6434 = vmatmul.bf16.gmra.mxu0 %v6090
        %v6435 = vpop.f32.mrf.mxu0
        %v6436 = vadd.f32 %v6347, %v6435
        %v6437 = vpop.f32.mrf.mxu0
        %v6438 = vadd.f32 %v6349, %v6437
        %6439 = vmatmul.bf16.gmra.mxu0 %v6093
        %v6440 = vpop.f32.mrf.mxu0
        %v6441 = vadd.f32 %v6352, %v6440
        %v6442 = vpop.f32.mrf.mxu0
        %v6443 = vadd.f32 %v6354, %v6442
        %6444 = vmatmul.bf16.gmra.mxu0 %v6096
        %v6445 = vpop.f32.mrf.mxu0
        %v6446 = vadd.f32 %v6357, %v6445
        %v6447 = vpop.f32.mrf.mxu0
        %v6448 = vadd.f32 %v6359, %v6447
        %6449 = vmatmul.bf16.gmra.mxu0 %v6099
        %v6450 = vpop.f32.mrf.mxu0
        %v6451 = vadd.f32 %v6362, %v6450
        %v6452 = vpop.f32.mrf.mxu0
        %v6453 = vadd.f32 %v6364, %v6452
        %6454 = vmatmul.bf16.gmra.mxu0 %v6102
        %v6455 = vpop.f32.mrf.mxu0
        %v6456 = vadd.f32 %v6367, %v6455
        %v6457 = vpop.f32.mrf.mxu0
        %v6458 = vadd.f32 %v6369, %v6457
        %6459 = vmatmul.bf16.gmra.mxu0 %v6105
        %v6460 = vpop.f32.mrf.mxu0
        %v6461 = vadd.f32 %v6372, %v6460
        %v6462 = vpop.f32.mrf.mxu0
        %v6463 = vadd.f32 %v6374, %v6462
        %6464 = vmatmul.bf16.gmra.mxu0 %v6108
        %v6465 = vpop.f32.mrf.mxu0
        %v6466 = vadd.f32 %v6377, %v6465
        %v6467 = vpop.f32.mrf.mxu0
        %v6468 = vadd.f32 %v6379, %v6467
        %6469 = vmatmul.bf16.gmra.mxu0 %v6111
        %v6470 = vpop.f32.mrf.mxu0
        %v6471 = vadd.f32 %v6382, %v6470
        %v6472 = vpop.f32.mrf.mxu0
        %v6473 = vadd.f32 %v6384, %v6472
        %6474 = vmatmul.bf16.gmra.mxu0 %v6114
        %v6475 = vpop.f32.mrf.mxu0
        %v6476 = vadd.f32 %v6387, %v6475
        %v6477 = vpop.f32.mrf.mxu0
        %v6478 = vadd.f32 %v6389, %v6477
        %6479 = vmatmul.bf16.gmra.mxu0 %v6117
        %v6480 = vpop.f32.mrf.mxu0
        %v6481 = vadd.f32 %v6392, %v6480
        %v6482 = vpop.f32.mrf.mxu0
        %v6483 = vadd.f32 %v6394, %v6482
        %6484 = vmatmul.bf16.gmra.mxu0 %v6120
        %v6485 = vpop.f32.mrf.mxu0
        %v6486 = vadd.f32 %v6397, %v6485
        %v6487 = vpop.f32.mrf.mxu0
        %v6488 = vadd.f32 %v6399, %v6487
        %6489 = vmatmul.bf16.gmra.mxu0 %v6123
        %v6490 = vpop.f32.mrf.mxu0
        %v6491 = vadd.f32 %v6402, %v6490
        %v6492 = vpop.f32.mrf.mxu0
        %v6493 = vadd.f32 %v6404, %v6492
        %6494 = vdwg.mxu0
        %6495 = vmatpush.bf16.msra.mxu0 %v6292
        %6496 = vmatpush.bf16.msra.mxu0 %v6291
        %6497 = vmatpush.bf16.msra.mxu0 %v6290
        %6498 = vmatpush.bf16.msra.mxu0 %v6289
        %6499 = vmatpush.bf16.msra.mxu0 %v6288
        %6500 = vmatpush.bf16.msra.mxu0 %v6287
        %6501 = vmatpush.bf16.msra.mxu0 %v6286
        %6502 = vmatpush.bf16.msra.mxu0 %v6285
        %6503 = vmatmul.bf16.gmra.mxu0 %v6079
        %v6504 = vpop.f32.mrf.mxu0
        %v6505 = vadd.f32 %v6416, %v6504
        %v6506 = vpop.f32.mrf.mxu0
        %v6507 = vadd.f32 %v6418, %v6506
        %6508 = vmatmul.bf16.gmra.mxu0 %v6082
        %v6509 = vpop.f32.mrf.mxu0
        %v6510 = vadd.f32 %v6421, %v6509
        %v6511 = vpop.f32.mrf.mxu0
        %v6512 = vadd.f32 %v6423, %v6511
        %6513 = vmatmul.bf16.gmra.mxu0 %v6085
        %v6514 = vpop.f32.mrf.mxu0
        %v6515 = vadd.f32 %v6426, %v6514
        %v6516 = vpop.f32.mrf.mxu0
        %v6517 = vadd.f32 %v6428, %v6516
        %6518 = vmatmul.bf16.gmra.mxu0 %v6088
        %v6519 = vpop.f32.mrf.mxu0
        %v6520 = vadd.f32 %v6431, %v6519
        %v6521 = vpop.f32.mrf.mxu0
        %v6522 = vadd.f32 %v6433, %v6521
        %6523 = vmatmul.bf16.gmra.mxu0 %v6091
        %v6524 = vpop.f32.mrf.mxu0
        %v6525 = vadd.f32 %v6436, %v6524
        %v6526 = vpop.f32.mrf.mxu0
        %v6527 = vadd.f32 %v6438, %v6526
        %6528 = vmatmul.bf16.gmra.mxu0 %v6094
        %v6529 = vpop.f32.mrf.mxu0
        %v6530 = vadd.f32 %v6441, %v6529
        %v6531 = vpop.f32.mrf.mxu0
        %v6532 = vadd.f32 %v6443, %v6531
        %6533 = vmatmul.bf16.gmra.mxu0 %v6097
        %v6534 = vpop.f32.mrf.mxu0
        %v6535 = vadd.f32 %v6446, %v6534
        %v6536 = vpop.f32.mrf.mxu0
        %v6537 = vadd.f32 %v6448, %v6536
        %6538 = vmatmul.bf16.gmra.mxu0 %v6100
        %v6539 = vpop.f32.mrf.mxu0
        %v6540 = vadd.f32 %v6451, %v6539
        %v6541 = vpop.f32.mrf.mxu0
        %v6542 = vadd.f32 %v6453, %v6541
        %6543 = vmatmul.bf16.gmra.mxu0 %v6103
        %v6544 = vpop.f32.mrf.mxu0
        %v6545 = vadd.f32 %v6456, %v6544
        %v6546 = vpop.f32.mrf.mxu0
        %v6547 = vadd.f32 %v6458, %v6546
        %6548 = vmatmul.bf16.gmra.mxu0 %v6106
        %v6549 = vpop.f32.mrf.mxu0
        %v6550 = vadd.f32 %v6461, %v6549
        %v6551 = vpop.f32.mrf.mxu0
        %v6552 = vadd.f32 %v6463, %v6551
        %6553 = vmatmul.bf16.gmra.mxu0 %v6109
        %v6554 = vpop.f32.mrf.mxu0
        %v6555 = vadd.f32 %v6466, %v6554
        %v6556 = vpop.f32.mrf.mxu0
        %v6557 = vadd.f32 %v6468, %v6556
        %6558 = vmatmul.bf16.gmra.mxu0 %v6112
        %v6559 = vpop.f32.mrf.mxu0
        %v6560 = vadd.f32 %v6471, %v6559
        %v6561 = vpop.f32.mrf.mxu0
        %v6562 = vadd.f32 %v6473, %v6561
        %6563 = vmatmul.bf16.gmra.mxu0 %v6115
        %v6564 = vpop.f32.mrf.mxu0
        %v6565 = vadd.f32 %v6476, %v6564
        %v6566 = vpop.f32.mrf.mxu0
        %v6567 = vadd.f32 %v6478, %v6566
        %6568 = vmatmul.bf16.gmra.mxu0 %v6118
        %v6569 = vpop.f32.mrf.mxu0
        %v6570 = vadd.f32 %v6481, %v6569
        %v6571 = vpop.f32.mrf.mxu0
        %v6572 = vadd.f32 %v6483, %v6571
        %6573 = vmatmul.bf16.gmra.mxu0 %v6121
        %v6574 = vpop.f32.mrf.mxu0
        %v6575 = vadd.f32 %v6486, %v6574
        %v6576 = vpop.f32.mrf.mxu0
        %v6577 = vadd.f32 %v6488, %v6576
        %6578 = vmatmul.bf16.gmra.mxu0 %v6124
        %v6579 = vpop.f32.mrf.mxu0
        %v6580 = vadd.f32 %v6491, %v6579
        %v6581 = vpop.f32.mrf.mxu0
        %v6582 = vadd.f32 %v6493, %v6581
        %6583 = vdwg.mxu0
        %v6592 = vunpack.c.l.b16 %v5676
        %v6593 = vunpack.c.h.b16 %v5676
        %v6594 = vunpack.c.l.b16 %v5677
        %v6595 = vunpack.c.l.b16 %v5678
        %v6596 = vunpack.c.h.b16 %v5678
        %v6597 = vunpack.c.l.b16 %v5679
        %v6598 = vunpack.c.l.b16 %v5680
        %v6599 = vunpack.c.h.b16 %v5680
        %v6600 = vunpack.c.l.b16 %v5681
        %v6601 = vunpack.c.l.b16 %v5682
        %v6602 = vunpack.c.h.b16 %v5682
        %v6603 = vunpack.c.l.b16 %v5683
        %v6604 = vpack.c.b16 %v6595, %v6592
        %v6605 = vpack.c.b16 %v6596, %v6593
        %v6606 = vpack.c.b16 %v6597, %v6594
        %v6607 = vpack.c.b16 %v6601, %v6598
        %v6608 = vpack.c.b16 %v6602, %v6599
        %v6609 = vpack.c.b16 %v6603, %v6600
        %v6664 = vunpack.c.l.b16 %v5772
        %v6665 = vunpack.c.l.b16 %v5773
        %v6666 = vunpack.c.l.b16 %v5774
        %v6667 = vunpack.c.l.b16 %v5775
        %v6668 = vunpack.c.l.b16 %v5776
        %v6669 = vunpack.c.l.b16 %v5777
        %v6670 = vunpack.c.l.b16 %v5778
        %v6671 = vunpack.c.l.b16 %v5779
        %v6672 = vunpack.c.l.b16 %v5780
        %v6673 = vunpack.c.l.b16 %v5781
        %v6674 = vunpack.c.l.b16 %v5782
        %v6675 = vunpack.c.l.b16 %v5783
        %v6676 = vunpack.c.l.b16 %v5784
        %v6677 = vunpack.c.l.b16 %v5785
        %v6678 = vunpack.c.l.b16 %v5786
        %v6679 = vunpack.c.l.b16 %v5787
        %v6680 = vunpack.c.l.b16 %v5788
        %v6681 = vunpack.c.l.b16 %v5789
        %v6682 = vunpack.c.l.b16 %v5790
        %v6683 = vunpack.c.l.b16 %v5791
        %v6684 = vunpack.c.l.b16 %v5792
        %v6685 = vunpack.c.l.b16 %v5793
        %v6686 = vunpack.c.l.b16 %v5794
        %v6687 = vunpack.c.l.b16 %v5795
        %v6688 = vunpack.c.l.b16 %v5796
        %v6689 = vunpack.c.l.b16 %v5797
        %v6690 = vunpack.c.l.b16 %v5798
        %v6691 = vunpack.c.l.b16 %v5799
        %v6692 = vunpack.c.l.b16 %v5800
        %v6693 = vunpack.c.l.b16 %v5801
        %v6694 = vunpack.c.l.b16 %v5802
        %v6695 = vunpack.c.l.b16 %v5803
        %v6696 = vunpack.c.l.b16 %v5804
        %v6697 = vunpack.c.l.b16 %v5805
        %v6698 = vunpack.c.l.b16 %v5806
        %v6699 = vunpack.c.l.b16 %v5807
        %v6700 = vunpack.c.l.b16 %v5808
        %v6701 = vunpack.c.l.b16 %v5809
        %v6702 = vunpack.c.l.b16 %v5810
        %v6703 = vunpack.c.l.b16 %v5811
        %v6704 = vunpack.c.l.b16 %v5812
        %v6705 = vunpack.c.l.b16 %v5813
        %v6706 = vunpack.c.l.b16 %v5814
        %v6707 = vunpack.c.l.b16 %v5815
        %v6708 = vunpack.c.l.b16 %v5816
        %v6709 = vunpack.c.l.b16 %v5817
        %v6710 = vunpack.c.l.b16 %v5818
        %v6711 = vunpack.c.l.b16 %v5819
        %v6712 = vpack.c.b16 %v6665, %v6664
        %v6713 = vpack.c.b16 %v6667, %v6666
        %v6714 = vpack.c.b16 %v6669, %v6668
        %v6715 = vpack.c.b16 %v6671, %v6670
        %v6716 = vpack.c.b16 %v6673, %v6672
        %v6717 = vpack.c.b16 %v6675, %v6674
        %v6718 = vpack.c.b16 %v6677, %v6676
        %v6719 = vpack.c.b16 %v6679, %v6678
        %v6720 = vpack.c.b16 %v6681, %v6680
        %v6721 = vpack.c.b16 %v6683, %v6682
        %v6722 = vpack.c.b16 %v6685, %v6684
        %v6723 = vpack.c.b16 %v6687, %v6686
        %v6724 = vpack.c.b16 %v6689, %v6688
        %v6725 = vpack.c.b16 %v6691, %v6690
        %v6726 = vpack.c.b16 %v6693, %v6692
        %v6727 = vpack.c.b16 %v6695, %v6694
        %v6728 = vpack.c.b16 %v6697, %v6696
        %v6729 = vpack.c.b16 %v6699, %v6698
        %v6730 = vpack.c.b16 %v6701, %v6700
        %v6731 = vpack.c.b16 %v6703, %v6702
        %v6732 = vpack.c.b16 %v6705, %v6704
        %v6733 = vpack.c.b16 %v6707, %v6706
        %v6734 = vpack.c.b16 %v6709, %v6708
        %v6735 = vpack.c.b16 %v6711, %v6710
        %6760 = vmatpush.bf16.msra.mxu0 %v6719
        %6761 = vmatpush.bf16.msra.mxu0 %v6718
        %6762 = vmatpush.bf16.msra.mxu0 %v6717
        %6763 = vmatpush.bf16.msra.mxu0 %v6716
        %6764 = vmatpush.bf16.msra.mxu0 %v6715
        %6765 = vmatpush.bf16.msra.mxu0 %v6714
        %6766 = vmatpush.bf16.msra.mxu0 %v6713
        %6767 = vmatpush.bf16.msra.mxu0 %v6712
        %6768 = vmatmul.bf16.gmra.mxu0 %v6604
        %v6769 = vpop.f32.mrf.mxu0
        %v6770 = vadd.f32 %v6505, %v6769
        %v6771 = vpop.f32.mrf.mxu0
        %v6772 = vadd.f32 %v6507, %v6771
        %6773 = vmatmul.bf16.gmra.mxu0 %v6607
        %v6774 = vpop.f32.mrf.mxu0
        %v6775 = vadd.f32 %v6510, %v6774
        %v6776 = vpop.f32.mrf.mxu0
        %v6777 = vadd.f32 %v6512, %v6776
        %6778 = vmatmul.bf16.gmra.mxu0 %v6077
        %v6779 = vpop.f32.mrf.mxu0
        %v6780 = vadd.f32 %v6515, %v6779
        %v6781 = vpop.f32.mrf.mxu0
        %v6782 = vadd.f32 %v6517, %v6781
        %6783 = vmatmul.bf16.gmra.mxu0 %v6080
        %v6784 = vpop.f32.mrf.mxu0
        %v6785 = vadd.f32 %v6520, %v6784
        %v6786 = vpop.f32.mrf.mxu0
        %v6787 = vadd.f32 %v6522, %v6786
        %6788 = vmatmul.bf16.gmra.mxu0 %v6083
        %v6789 = vpop.f32.mrf.mxu0
        %v6790 = vadd.f32 %v6525, %v6789
        %v6791 = vpop.f32.mrf.mxu0
        %v6792 = vadd.f32 %v6527, %v6791
        %6793 = vmatmul.bf16.gmra.mxu0 %v6086
        %v6794 = vpop.f32.mrf.mxu0
        %v6795 = vadd.f32 %v6530, %v6794
        %v6796 = vpop.f32.mrf.mxu0
        %v6797 = vadd.f32 %v6532, %v6796
        %6798 = vmatmul.bf16.gmra.mxu0 %v6089
        %v6799 = vpop.f32.mrf.mxu0
        %v6800 = vadd.f32 %v6535, %v6799
        %v6801 = vpop.f32.mrf.mxu0
        %v6802 = vadd.f32 %v6537, %v6801
        %6803 = vmatmul.bf16.gmra.mxu0 %v6092
        %v6804 = vpop.f32.mrf.mxu0
        %v6805 = vadd.f32 %v6540, %v6804
        %v6806 = vpop.f32.mrf.mxu0
        %v6807 = vadd.f32 %v6542, %v6806
        %6808 = vmatmul.bf16.gmra.mxu0 %v6095
        %v6809 = vpop.f32.mrf.mxu0
        %v6810 = vadd.f32 %v6545, %v6809
        %v6811 = vpop.f32.mrf.mxu0
        %v6812 = vadd.f32 %v6547, %v6811
        %6813 = vmatmul.bf16.gmra.mxu0 %v6098
        %v6814 = vpop.f32.mrf.mxu0
        %v6815 = vadd.f32 %v6550, %v6814
        %v6816 = vpop.f32.mrf.mxu0
        %v6817 = vadd.f32 %v6552, %v6816
        %6818 = vmatmul.bf16.gmra.mxu0 %v6101
        %v6819 = vpop.f32.mrf.mxu0
        %v6820 = vadd.f32 %v6555, %v6819
        %v6821 = vpop.f32.mrf.mxu0
        %v6822 = vadd.f32 %v6557, %v6821
        %6823 = vmatmul.bf16.gmra.mxu0 %v6104
        %v6824 = vpop.f32.mrf.mxu0
        %v6825 = vadd.f32 %v6560, %v6824
        %v6826 = vpop.f32.mrf.mxu0
        %v6827 = vadd.f32 %v6562, %v6826
        %6828 = vmatmul.bf16.gmra.mxu0 %v6107
        %v6829 = vpop.f32.mrf.mxu0
        %v6830 = vadd.f32 %v6565, %v6829
        %v6831 = vpop.f32.mrf.mxu0
        %v6832 = vadd.f32 %v6567, %v6831
        %6833 = vmatmul.bf16.gmra.mxu0 %v6110
        %v6834 = vpop.f32.mrf.mxu0
        %v6835 = vadd.f32 %v6570, %v6834
        %v6836 = vpop.f32.mrf.mxu0
        %v6837 = vadd.f32 %v6572, %v6836
        %6838 = vmatmul.bf16.gmra.mxu0 %v6113
        %v6839 = vpop.f32.mrf.mxu0
        %v6840 = vadd.f32 %v6575, %v6839
        %v6841 = vpop.f32.mrf.mxu0
        %v6842 = vadd.f32 %v6577, %v6841
        %6843 = vmatmul.bf16.gmra.mxu0 %v6116
        %v6844 = vpop.f32.mrf.mxu0
        %v6845 = vadd.f32 %v6580, %v6844
        %v6846 = vpop.f32.mrf.mxu0
        %v6847 = vadd.f32 %v6582, %v6846
        %6848 = vdwg.mxu0
        %6849 = vmatpush.bf16.msra.mxu0 %v6727
        %6850 = vmatpush.bf16.msra.mxu0 %v6726
        %6851 = vmatpush.bf16.msra.mxu0 %v6725
        %6852 = vmatpush.bf16.msra.mxu0 %v6724
        %6853 = vmatpush.bf16.msra.mxu0 %v6723
        %6854 = vmatpush.bf16.msra.mxu0 %v6722
        %6855 = vmatpush.bf16.msra.mxu0 %v6721
        %6856 = vmatpush.bf16.msra.mxu0 %v6720
        %6857 = vmatmul.bf16.gmra.mxu0 %v6605
        %v6858 = vpop.f32.mrf.mxu0
        %v6859 = vadd.f32 %v6770, %v6858
        %v6860 = vpop.f32.mrf.mxu0
        %v6861 = vadd.f32 %v6772, %v6860
        %6862 = vmatmul.bf16.gmra.mxu0 %v6608
        %v6863 = vpop.f32.mrf.mxu0
        %v6864 = vadd.f32 %v6775, %v6863
        %v6865 = vpop.f32.mrf.mxu0
        %v6866 = vadd.f32 %v6777, %v6865
        %6867 = vmatmul.bf16.gmra.mxu0 %v6078
        %v6868 = vpop.f32.mrf.mxu0
        %v6869 = vadd.f32 %v6780, %v6868
        %v6870 = vpop.f32.mrf.mxu0
        %v6871 = vadd.f32 %v6782, %v6870
        %6872 = vmatmul.bf16.gmra.mxu0 %v6081
        %v6873 = vpop.f32.mrf.mxu0
        %v6874 = vadd.f32 %v6785, %v6873
        %v6875 = vpop.f32.mrf.mxu0
        %v6876 = vadd.f32 %v6787, %v6875
        %6877 = vmatmul.bf16.gmra.mxu0 %v6084
        %v6878 = vpop.f32.mrf.mxu0
        %v6879 = vadd.f32 %v6790, %v6878
        %v6880 = vpop.f32.mrf.mxu0
        %v6881 = vadd.f32 %v6792, %v6880
        %6882 = vmatmul.bf16.gmra.mxu0 %v6087
        %v6883 = vpop.f32.mrf.mxu0
        %v6884 = vadd.f32 %v6795, %v6883
        %v6885 = vpop.f32.mrf.mxu0
        %v6886 = vadd.f32 %v6797, %v6885
        %6887 = vmatmul.bf16.gmra.mxu0 %v6090
        %v6888 = vpop.f32.mrf.mxu0
        %v6889 = vadd.f32 %v6800, %v6888
        %v6890 = vpop.f32.mrf.mxu0
        %v6891 = vadd.f32 %v6802, %v6890
        %6892 = vmatmul.bf16.gmra.mxu0 %v6093
        %v6893 = vpop.f32.mrf.mxu0
        %v6894 = vadd.f32 %v6805, %v6893
        %v6895 = vpop.f32.mrf.mxu0
        %v6896 = vadd.f32 %v6807, %v6895
        %6897 = vmatmul.bf16.gmra.mxu0 %v6096
        %v6898 = vpop.f32.mrf.mxu0
        %v6899 = vadd.f32 %v6810, %v6898
        %v6900 = vpop.f32.mrf.mxu0
        %v6901 = vadd.f32 %v6812, %v6900
        %6902 = vmatmul.bf16.gmra.mxu0 %v6099
        %v6903 = vpop.f32.mrf.mxu0
        %v6904 = vadd.f32 %v6815, %v6903
        %v6905 = vpop.f32.mrf.mxu0
        %v6906 = vadd.f32 %v6817, %v6905
        %6907 = vmatmul.bf16.gmra.mxu0 %v6102
        %v6908 = vpop.f32.mrf.mxu0
        %v6909 = vadd.f32 %v6820, %v6908
        %v6910 = vpop.f32.mrf.mxu0
        %v6911 = vadd.f32 %v6822, %v6910
        %6912 = vmatmul.bf16.gmra.mxu0 %v6105
        %v6913 = vpop.f32.mrf.mxu0
        %v6914 = vadd.f32 %v6825, %v6913
        %v6915 = vpop.f32.mrf.mxu0
        %v6916 = vadd.f32 %v6827, %v6915
        %6917 = vmatmul.bf16.gmra.mxu0 %v6108
        %v6918 = vpop.f32.mrf.mxu0
        %v6919 = vadd.f32 %v6830, %v6918
        %v6920 = vpop.f32.mrf.mxu0
        %v6921 = vadd.f32 %v6832, %v6920
        %6922 = vmatmul.bf16.gmra.mxu0 %v6111
        %v6923 = vpop.f32.mrf.mxu0
        %v6924 = vadd.f32 %v6835, %v6923
        %v6925 = vpop.f32.mrf.mxu0
        %v6926 = vadd.f32 %v6837, %v6925
        %6927 = vmatmul.bf16.gmra.mxu0 %v6114
        %v6928 = vpop.f32.mrf.mxu0
        %v6929 = vadd.f32 %v6840, %v6928
        %v6930 = vpop.f32.mrf.mxu0
        %v6931 = vadd.f32 %v6842, %v6930
        %6932 = vmatmul.bf16.gmra.mxu0 %v6117
        %v6933 = vpop.f32.mrf.mxu0
        %v6934 = vadd.f32 %v6845, %v6933
        %v6935 = vpop.f32.mrf.mxu0
        %v6936 = vadd.f32 %v6847, %v6935
        %6937 = vdwg.mxu0
        %6938 = vmatpush.bf16.msra.mxu0 %v6735
        %6939 = vmatpush.bf16.msra.mxu0 %v6734
        %6940 = vmatpush.bf16.msra.mxu0 %v6733
        %6941 = vmatpush.bf16.msra.mxu0 %v6732
        %6942 = vmatpush.bf16.msra.mxu0 %v6731
        %6943 = vmatpush.bf16.msra.mxu0 %v6730
        %6944 = vmatpush.bf16.msra.mxu0 %v6729
        %6945 = vmatpush.bf16.msra.mxu0 %v6728
        %6946 = vmatmul.bf16.gmra.mxu0 %v6606
        %v6947 = vpop.f32.mrf.mxu0
        %v6948 = vadd.f32 %v6859, %v6947
        %v6949 = vpop.f32.mrf.mxu0
        %v6950 = vadd.f32 %v6861, %v6949
        %6951 = vmatmul.bf16.gmra.mxu0 %v6609
        %v6952 = vpop.f32.mrf.mxu0
        %v6953 = vadd.f32 %v6864, %v6952
        %v6954 = vpop.f32.mrf.mxu0
        %v6955 = vadd.f32 %v6866, %v6954
        %6956 = vmatmul.bf16.gmra.mxu0 %v6079
        %v6957 = vpop.f32.mrf.mxu0
        %v6958 = vadd.f32 %v6869, %v6957
        %v6959 = vpop.f32.mrf.mxu0
        %v6960 = vadd.f32 %v6871, %v6959
        %6961 = vmatmul.bf16.gmra.mxu0 %v6082
        %v6962 = vpop.f32.mrf.mxu0
        %v6963 = vadd.f32 %v6874, %v6962
        %v6964 = vpop.f32.mrf.mxu0
        %v6965 = vadd.f32 %v6876, %v6964
        %6966 = vmatmul.bf16.gmra.mxu0 %v6085
        %v6967 = vpop.f32.mrf.mxu0
        %v6968 = vadd.f32 %v6879, %v6967
        %v6969 = vpop.f32.mrf.mxu0
        %v6970 = vadd.f32 %v6881, %v6969
        %6971 = vmatmul.bf16.gmra.mxu0 %v6088
        %v6972 = vpop.f32.mrf.mxu0
        %v6973 = vadd.f32 %v6884, %v6972
        %v6974 = vpop.f32.mrf.mxu0
        %v6975 = vadd.f32 %v6886, %v6974
        %6976 = vmatmul.bf16.gmra.mxu0 %v6091
        %v6977 = vpop.f32.mrf.mxu0
        %v6978 = vadd.f32 %v6889, %v6977
        %v6979 = vpop.f32.mrf.mxu0
        %v6980 = vadd.f32 %v6891, %v6979
        %6981 = vmatmul.bf16.gmra.mxu0 %v6094
        %v6982 = vpop.f32.mrf.mxu0
        %v6983 = vadd.f32 %v6894, %v6982
        %v6984 = vpop.f32.mrf.mxu0
        %v6985 = vadd.f32 %v6896, %v6984
        %6986 = vmatmul.bf16.gmra.mxu0 %v6097
        %v6987 = vpop.f32.mrf.mxu0
        %v6988 = vadd.f32 %v6899, %v6987
        %v6989 = vpop.f32.mrf.mxu0
        %v6990 = vadd.f32 %v6901, %v6989
        %6991 = vmatmul.bf16.gmra.mxu0 %v6100
        %v6992 = vpop.f32.mrf.mxu0
        %v6993 = vadd.f32 %v6904, %v6992
        %v6994 = vpop.f32.mrf.mxu0
        %v6995 = vadd.f32 %v6906, %v6994
        %6996 = vmatmul.bf16.gmra.mxu0 %v6103
        %v6997 = vpop.f32.mrf.mxu0
        %v6998 = vadd.f32 %v6909, %v6997
        %v6999 = vpop.f32.mrf.mxu0
        %v7000 = vadd.f32 %v6911, %v6999
        %7001 = vmatmul.bf16.gmra.mxu0 %v6106
        %v7002 = vpop.f32.mrf.mxu0
        %v7003 = vadd.f32 %v6914, %v7002
        %v7004 = vpop.f32.mrf.mxu0
        %v7005 = vadd.f32 %v6916, %v7004
        %7006 = vmatmul.bf16.gmra.mxu0 %v6109
        %v7007 = vpop.f32.mrf.mxu0
        %v7008 = vadd.f32 %v6919, %v7007
        %v7009 = vpop.f32.mrf.mxu0
        %v7010 = vadd.f32 %v6921, %v7009
        %7011 = vmatmul.bf16.gmra.mxu0 %v6112
        %v7012 = vpop.f32.mrf.mxu0
        %v7013 = vadd.f32 %v6924, %v7012
        %v7014 = vpop.f32.mrf.mxu0
        %v7015 = vadd.f32 %v6926, %v7014
        %7016 = vmatmul.bf16.gmra.mxu0 %v6115
        %v7017 = vpop.f32.mrf.mxu0
        %v7018 = vadd.f32 %v6929, %v7017
        %v7019 = vpop.f32.mrf.mxu0
        %v7020 = vadd.f32 %v6931, %v7019
        %7021 = vmatmul.bf16.gmra.mxu0 %v6118
        %v7022 = vpop.f32.mrf.mxu0
        %v7023 = vadd.f32 %v6934, %v7022
        %v7024 = vpop.f32.mrf.mxu0
        %v7025 = vadd.f32 %v6936, %v7024
        %7026 = vdwg.mxu0
        %s7027 = scalar_lea.vmem %s5, 192
        %v7028 = vld [vmem:[%s7027] sm:$0xf]
        %v7029 = vld [vmem:[%s7027 + $0x4] sm:$0xf]
        %v7030 = vld [vmem:[%s7027 + $0x8] sm:$0xf]
        %v7031 = vld [vmem:[%s7027 + $0xc] sm:$0xf]
        %v7032 = vld [vmem:[%s7027 + $0x10] sm:$0xf]
        %v7033 = vld [vmem:[%s7027 + $0x14] sm:$0xf]
        %v7034 = vld [vmem:[%s7027 + $0x18] sm:$0xf]
        %v7035 = vld [vmem:[%s7027 + $0x1c] sm:$0xf]
        %v7036 = vld [vmem:[%s7027 + $0x20] sm:$0xf]
        %v7037 = vld [vmem:[%s7027 + $0x24] sm:$0xf]
        %v7038 = vld [vmem:[%s7027 + $0x28] sm:$0xf]
        %v7039 = vld [vmem:[%s7027 + $0x2c] sm:$0xf]
        %v7040 = vld [vmem:[%s7027 + $0x30] sm:$0xf]
        %v7041 = vld [vmem:[%s7027 + $0x34] sm:$0xf]
        %v7042 = vld [vmem:[%s7027 + $0x38] sm:$0xf]
        %v7043 = vld [vmem:[%s7027 + $0x3c] sm:$0xf]
        %v7044 = vld [vmem:[%s7027 + $0x40] sm:$0xf]
        %v7045 = vld [vmem:[%s7027 + $0x44] sm:$0xf]
        %v7046 = vld [vmem:[%s7027 + $0x48] sm:$0xf]
        %v7047 = vld [vmem:[%s7027 + $0x4c] sm:$0xf]
        %v7048 = vld [vmem:[%s7027 + $0x50] sm:$0xf]
        %v7049 = vld [vmem:[%s7027 + $0x54] sm:$0xf]
        %v7050 = vld [vmem:[%s7027 + $0x58] sm:$0xf]
        %v7051 = vld [vmem:[%s7027 + $0x5c] sm:$0xf]
        %v7052 = vld [vmem:[%s7027 + $0x60] sm:$0xf]
        %v7053 = vld [vmem:[%s7027 + $0x64] sm:$0xf]
        %v7054 = vld [vmem:[%s7027 + $0x68] sm:$0xf]
        %v7055 = vld [vmem:[%s7027 + $0x6c] sm:$0xf]
        %v7056 = vld [vmem:[%s7027 + $0x70] sm:$0xf]
        %v7057 = vld [vmem:[%s7027 + $0x74] sm:$0xf]
        %v7058 = vld [vmem:[%s7027 + $0x78] sm:$0xf]
        %v7059 = vld [vmem:[%s7027 + $0x7c] sm:$0xf]
        %v7060 = vld [vmem:[%s7027 + $0x80] sm:$0xf]
        %v7061 = vld [vmem:[%s7027 + $0x84] sm:$0xf]
        %v7062 = vld [vmem:[%s7027 + $0x88] sm:$0xf]
        %v7063 = vld [vmem:[%s7027 + $0x8c] sm:$0xf]
        %v7064 = vld [vmem:[%s7027 + $0x90] sm:$0xf]
        %v7065 = vld [vmem:[%s7027 + $0x94] sm:$0xf]
        %v7066 = vld [vmem:[%s7027 + $0x98] sm:$0xf]
        %v7067 = vld [vmem:[%s7027 + $0x9c] sm:$0xf]
        %v7068 = vld [vmem:[%s7027 + $0xa0] sm:$0xf]
        %v7069 = vld [vmem:[%s7027 + $0xa4] sm:$0xf]
        %v7070 = vld [vmem:[%s7027 + $0xa8] sm:$0xf]
        %v7071 = vld [vmem:[%s7027 + $0xac] sm:$0xf]
        %v7072 = vld [vmem:[%s7027 + $0xb0] sm:$0xf]
        %v7073 = vld [vmem:[%s7027 + $0xb4] sm:$0xf]
        %v7074 = vld [vmem:[%s7027 + $0xb8] sm:$0xf]
        %v7075 = vld [vmem:[%s7027 + $0xbc] sm:$0xf]
        %v7124 = vunpack.c.l.b16 %v7028
        %v7125 = vunpack.c.l.b16 %v7029
        %v7126 = vunpack.c.l.b16 %v7030
        %v7127 = vunpack.c.l.b16 %v7031
        %v7128 = vunpack.c.l.b16 %v7032
        %v7129 = vunpack.c.l.b16 %v7033
        %v7130 = vunpack.c.l.b16 %v7034
        %v7131 = vunpack.c.l.b16 %v7035
        %v7132 = vunpack.c.l.b16 %v7036
        %v7133 = vunpack.c.l.b16 %v7037
        %v7134 = vunpack.c.l.b16 %v7038
        %v7135 = vunpack.c.l.b16 %v7039
        %v7136 = vunpack.c.l.b16 %v7040
        %v7137 = vunpack.c.l.b16 %v7041
        %v7138 = vunpack.c.l.b16 %v7042
        %v7139 = vunpack.c.l.b16 %v7043
        %v7140 = vunpack.c.l.b16 %v7044
        %v7141 = vunpack.c.l.b16 %v7045
        %v7142 = vunpack.c.l.b16 %v7046
        %v7143 = vunpack.c.l.b16 %v7047
        %v7144 = vunpack.c.l.b16 %v7048
        %v7145 = vunpack.c.l.b16 %v7049
        %v7146 = vunpack.c.l.b16 %v7050
        %v7147 = vunpack.c.l.b16 %v7051
        %v7148 = vunpack.c.l.b16 %v7052
        %v7149 = vunpack.c.l.b16 %v7053
        %v7150 = vunpack.c.l.b16 %v7054
        %v7151 = vunpack.c.l.b16 %v7055
        %v7152 = vunpack.c.l.b16 %v7056
        %v7153 = vunpack.c.l.b16 %v7057
        %v7154 = vunpack.c.l.b16 %v7058
        %v7155 = vunpack.c.l.b16 %v7059
        %v7156 = vunpack.c.l.b16 %v7060
        %v7157 = vunpack.c.l.b16 %v7061
        %v7158 = vunpack.c.l.b16 %v7062
        %v7159 = vunpack.c.l.b16 %v7063
        %v7160 = vunpack.c.l.b16 %v7064
        %v7161 = vunpack.c.l.b16 %v7065
        %v7162 = vunpack.c.l.b16 %v7066
        %v7163 = vunpack.c.l.b16 %v7067
        %v7164 = vunpack.c.l.b16 %v7068
        %v7165 = vunpack.c.l.b16 %v7069
        %v7166 = vunpack.c.l.b16 %v7070
        %v7167 = vunpack.c.l.b16 %v7071
        %v7168 = vunpack.c.l.b16 %v7072
        %v7169 = vunpack.c.l.b16 %v7073
        %v7170 = vunpack.c.l.b16 %v7074
        %v7171 = vunpack.c.l.b16 %v7075
        %v7172 = vpack.c.b16 %v7125, %v7124
        %v7173 = vpack.c.b16 %v7127, %v7126
        %v7174 = vpack.c.b16 %v7129, %v7128
        %v7175 = vpack.c.b16 %v7131, %v7130
        %v7176 = vpack.c.b16 %v7133, %v7132
        %v7177 = vpack.c.b16 %v7135, %v7134
        %v7178 = vpack.c.b16 %v7137, %v7136
        %v7179 = vpack.c.b16 %v7139, %v7138
        %v7180 = vpack.c.b16 %v7141, %v7140
        %v7181 = vpack.c.b16 %v7143, %v7142
        %v7182 = vpack.c.b16 %v7145, %v7144
        %v7183 = vpack.c.b16 %v7147, %v7146
        %v7184 = vpack.c.b16 %v7149, %v7148
        %v7185 = vpack.c.b16 %v7151, %v7150
        %v7186 = vpack.c.b16 %v7153, %v7152
        %v7187 = vpack.c.b16 %v7155, %v7154
        %v7188 = vpack.c.b16 %v7157, %v7156
        %v7189 = vpack.c.b16 %v7159, %v7158
        %v7190 = vpack.c.b16 %v7161, %v7160
        %v7191 = vpack.c.b16 %v7163, %v7162
        %v7192 = vpack.c.b16 %v7165, %v7164
        %v7193 = vpack.c.b16 %v7167, %v7166
        %v7194 = vpack.c.b16 %v7169, %v7168
        %v7195 = vpack.c.b16 %v7171, %v7170
        %7220 = vmatpush.bf16.msra.mxu0 %v7179
        %7221 = vmatpush.bf16.msra.mxu0 %v7178
        %7222 = vmatpush.bf16.msra.mxu0 %v7177
        %7223 = vmatpush.bf16.msra.mxu0 %v7176
        %7224 = vmatpush.bf16.msra.mxu0 %v7175
        %7225 = vmatpush.bf16.msra.mxu0 %v7174
        %7226 = vmatpush.bf16.msra.mxu0 %v7173
        %7227 = vmatpush.bf16.msra.mxu0 %v7172
        %7228 = vmatmul.bf16.gmra.mxu0 %v6077
        %v7229 = vpop.f32.mrf.mxu0
        %v7230 = vadd.f32 0.0, %v7229
        %v7231 = vpop.f32.mrf.mxu0
        %v7232 = vadd.f32 0.0, %v7231
        %7233 = vmatmul.bf16.gmra.mxu0 %v6080
        %v7234 = vpop.f32.mrf.mxu0
        %v7235 = vadd.f32 0.0, %v7234
        %v7236 = vpop.f32.mrf.mxu0
        %v7237 = vadd.f32 0.0, %v7236
        %7238 = vmatmul.bf16.gmra.mxu0 %v6083
        %v7239 = vpop.f32.mrf.mxu0
        %v7240 = vadd.f32 0.0, %v7239
        %v7241 = vpop.f32.mrf.mxu0
        %v7242 = vadd.f32 0.0, %v7241
        %7243 = vmatmul.bf16.gmra.mxu0 %v6086
        %v7244 = vpop.f32.mrf.mxu0
        %v7245 = vadd.f32 0.0, %v7244
        %v7246 = vpop.f32.mrf.mxu0
        %v7247 = vadd.f32 0.0, %v7246
        %7248 = vmatmul.bf16.gmra.mxu0 %v6089
        %v7249 = vpop.f32.mrf.mxu0
        %v7250 = vadd.f32 0.0, %v7249
        %v7251 = vpop.f32.mrf.mxu0
        %v7252 = vadd.f32 0.0, %v7251
        %7253 = vmatmul.bf16.gmra.mxu0 %v6092
        %v7254 = vpop.f32.mrf.mxu0
        %v7255 = vadd.f32 0.0, %v7254
        %v7256 = vpop.f32.mrf.mxu0
        %v7257 = vadd.f32 0.0, %v7256
        %7258 = vmatmul.bf16.gmra.mxu0 %v6095
        %v7259 = vpop.f32.mrf.mxu0
        %v7260 = vadd.f32 0.0, %v7259
        %v7261 = vpop.f32.mrf.mxu0
        %v7262 = vadd.f32 0.0, %v7261
        %7263 = vmatmul.bf16.gmra.mxu0 %v6098
        %v7264 = vpop.f32.mrf.mxu0
        %v7265 = vadd.f32 0.0, %v7264
        %v7266 = vpop.f32.mrf.mxu0
        %v7267 = vadd.f32 0.0, %v7266
        %7268 = vmatmul.bf16.gmra.mxu0 %v6101
        %v7269 = vpop.f32.mrf.mxu0
        %v7270 = vadd.f32 0.0, %v7269
        %v7271 = vpop.f32.mrf.mxu0
        %v7272 = vadd.f32 0.0, %v7271
        %7273 = vmatmul.bf16.gmra.mxu0 %v6104
        %v7274 = vpop.f32.mrf.mxu0
        %v7275 = vadd.f32 0.0, %v7274
        %v7276 = vpop.f32.mrf.mxu0
        %v7277 = vadd.f32 0.0, %v7276
        %7278 = vmatmul.bf16.gmra.mxu0 %v6107
        %v7279 = vpop.f32.mrf.mxu0
        %v7280 = vadd.f32 0.0, %v7279
        %v7281 = vpop.f32.mrf.mxu0
        %v7282 = vadd.f32 0.0, %v7281
        %7283 = vmatmul.bf16.gmra.mxu0 %v6110
        %v7284 = vpop.f32.mrf.mxu0
        %v7285 = vadd.f32 0.0, %v7284
        %v7286 = vpop.f32.mrf.mxu0
        %v7287 = vadd.f32 0.0, %v7286
        %7288 = vmatmul.bf16.gmra.mxu0 %v6113
        %v7289 = vpop.f32.mrf.mxu0
        %v7290 = vadd.f32 0.0, %v7289
        %v7291 = vpop.f32.mrf.mxu0
        %v7292 = vadd.f32 0.0, %v7291
        %7293 = vmatmul.bf16.gmra.mxu0 %v6116
        %v7294 = vpop.f32.mrf.mxu0
        %v7295 = vadd.f32 0.0, %v7294
        %v7296 = vpop.f32.mrf.mxu0
        %v7297 = vadd.f32 0.0, %v7296
        %7298 = vmatmul.bf16.gmra.mxu0 %v6119
        %v7299 = vpop.f32.mrf.mxu0
        %v7300 = vadd.f32 0.0, %v7299
        %v7301 = vpop.f32.mrf.mxu0
        %v7302 = vadd.f32 0.0, %v7301
        %7303 = vmatmul.bf16.gmra.mxu0 %v6122
        %v7304 = vpop.f32.mrf.mxu0
        %v7305 = vadd.f32 0.0, %v7304
        %v7306 = vpop.f32.mrf.mxu0
        %v7307 = vadd.f32 0.0, %v7306
        %7308 = vdwg.mxu0
        %7309 = vmatpush.bf16.msra.mxu0 %v7187
        %7310 = vmatpush.bf16.msra.mxu0 %v7186
        %7311 = vmatpush.bf16.msra.mxu0 %v7185
        %7312 = vmatpush.bf16.msra.mxu0 %v7184
        %7313 = vmatpush.bf16.msra.mxu0 %v7183
        %7314 = vmatpush.bf16.msra.mxu0 %v7182
        %7315 = vmatpush.bf16.msra.mxu0 %v7181
        %7316 = vmatpush.bf16.msra.mxu0 %v7180
        %7317 = vmatmul.bf16.gmra.mxu0 %v6078
        %v7318 = vpop.f32.mrf.mxu0
        %v7319 = vadd.f32 %v7230, %v7318
        %v7320 = vpop.f32.mrf.mxu0
        %v7321 = vadd.f32 %v7232, %v7320
        %7322 = vmatmul.bf16.gmra.mxu0 %v6081
        %v7323 = vpop.f32.mrf.mxu0
        %v7324 = vadd.f32 %v7235, %v7323
        %v7325 = vpop.f32.mrf.mxu0
        %v7326 = vadd.f32 %v7237, %v7325
        %7327 = vmatmul.bf16.gmra.mxu0 %v6084
        %v7328 = vpop.f32.mrf.mxu0
        %v7329 = vadd.f32 %v7240, %v7328
        %v7330 = vpop.f32.mrf.mxu0
        %v7331 = vadd.f32 %v7242, %v7330
        %7332 = vmatmul.bf16.gmra.mxu0 %v6087
        %v7333 = vpop.f32.mrf.mxu0
        %v7334 = vadd.f32 %v7245, %v7333
        %v7335 = vpop.f32.mrf.mxu0
        %v7336 = vadd.f32 %v7247, %v7335
        %7337 = vmatmul.bf16.gmra.mxu0 %v6090
        %v7338 = vpop.f32.mrf.mxu0
        %v7339 = vadd.f32 %v7250, %v7338
        %v7340 = vpop.f32.mrf.mxu0
        %v7341 = vadd.f32 %v7252, %v7340
        %7342 = vmatmul.bf16.gmra.mxu0 %v6093
        %v7343 = vpop.f32.mrf.mxu0
        %v7344 = vadd.f32 %v7255, %v7343
        %v7345 = vpop.f32.mrf.mxu0
        %v7346 = vadd.f32 %v7257, %v7345
        %7347 = vmatmul.bf16.gmra.mxu0 %v6096
        %v7348 = vpop.f32.mrf.mxu0
        %v7349 = vadd.f32 %v7260, %v7348
        %v7350 = vpop.f32.mrf.mxu0
        %v7351 = vadd.f32 %v7262, %v7350
        %7352 = vmatmul.bf16.gmra.mxu0 %v6099
        %v7353 = vpop.f32.mrf.mxu0
        %v7354 = vadd.f32 %v7265, %v7353
        %v7355 = vpop.f32.mrf.mxu0
        %v7356 = vadd.f32 %v7267, %v7355
        %7357 = vmatmul.bf16.gmra.mxu0 %v6102
        %v7358 = vpop.f32.mrf.mxu0
        %v7359 = vadd.f32 %v7270, %v7358
        %v7360 = vpop.f32.mrf.mxu0
        %v7361 = vadd.f32 %v7272, %v7360
        %7362 = vmatmul.bf16.gmra.mxu0 %v6105
        %v7363 = vpop.f32.mrf.mxu0
        %v7364 = vadd.f32 %v7275, %v7363
        %v7365 = vpop.f32.mrf.mxu0
        %v7366 = vadd.f32 %v7277, %v7365
        %7367 = vmatmul.bf16.gmra.mxu0 %v6108
        %v7368 = vpop.f32.mrf.mxu0
        %v7369 = vadd.f32 %v7280, %v7368
        %v7370 = vpop.f32.mrf.mxu0
        %v7371 = vadd.f32 %v7282, %v7370
        %7372 = vmatmul.bf16.gmra.mxu0 %v6111
        %v7373 = vpop.f32.mrf.mxu0
        %v7374 = vadd.f32 %v7285, %v7373
        %v7375 = vpop.f32.mrf.mxu0
        %v7376 = vadd.f32 %v7287, %v7375
        %7377 = vmatmul.bf16.gmra.mxu0 %v6114
        %v7378 = vpop.f32.mrf.mxu0
        %v7379 = vadd.f32 %v7290, %v7378
        %v7380 = vpop.f32.mrf.mxu0
        %v7381 = vadd.f32 %v7292, %v7380
        %7382 = vmatmul.bf16.gmra.mxu0 %v6117
        %v7383 = vpop.f32.mrf.mxu0
        %v7384 = vadd.f32 %v7295, %v7383
        %v7385 = vpop.f32.mrf.mxu0
        %v7386 = vadd.f32 %v7297, %v7385
        %7387 = vmatmul.bf16.gmra.mxu0 %v6120
        %v7388 = vpop.f32.mrf.mxu0
        %v7389 = vadd.f32 %v7300, %v7388
        %v7390 = vpop.f32.mrf.mxu0
        %v7391 = vadd.f32 %v7302, %v7390
        %7392 = vmatmul.bf16.gmra.mxu0 %v6123
        %v7393 = vpop.f32.mrf.mxu0
        %v7394 = vadd.f32 %v7305, %v7393
        %v7395 = vpop.f32.mrf.mxu0
        %v7396 = vadd.f32 %v7307, %v7395
        %7397 = vdwg.mxu0
        %7398 = vmatpush.bf16.msra.mxu0 %v7195
        %7399 = vmatpush.bf16.msra.mxu0 %v7194
        %7400 = vmatpush.bf16.msra.mxu0 %v7193
        %7401 = vmatpush.bf16.msra.mxu0 %v7192
        %7402 = vmatpush.bf16.msra.mxu0 %v7191
        %7403 = vmatpush.bf16.msra.mxu0 %v7190
        %7404 = vmatpush.bf16.msra.mxu0 %v7189
        %7405 = vmatpush.bf16.msra.mxu0 %v7188
        %7406 = vmatmul.bf16.gmra.mxu0 %v6079
        %v7407 = vpop.f32.mrf.mxu0
        %v7408 = vadd.f32 %v7319, %v7407
        %v7409 = vpop.f32.mrf.mxu0
        %v7410 = vadd.f32 %v7321, %v7409
        %7411 = vmatmul.bf16.gmra.mxu0 %v6082
        %v7412 = vpop.f32.mrf.mxu0
        %v7413 = vadd.f32 %v7324, %v7412
        %v7414 = vpop.f32.mrf.mxu0
        %v7415 = vadd.f32 %v7326, %v7414
        %7416 = vmatmul.bf16.gmra.mxu0 %v6085
        %v7417 = vpop.f32.mrf.mxu0
        %v7418 = vadd.f32 %v7329, %v7417
        %v7419 = vpop.f32.mrf.mxu0
        %v7420 = vadd.f32 %v7331, %v7419
        %7421 = vmatmul.bf16.gmra.mxu0 %v6088
        %v7422 = vpop.f32.mrf.mxu0
        %v7423 = vadd.f32 %v7334, %v7422
        %v7424 = vpop.f32.mrf.mxu0
        %v7425 = vadd.f32 %v7336, %v7424
        %7426 = vmatmul.bf16.gmra.mxu0 %v6091
        %v7427 = vpop.f32.mrf.mxu0
        %v7428 = vadd.f32 %v7339, %v7427
        %v7429 = vpop.f32.mrf.mxu0
        %v7430 = vadd.f32 %v7341, %v7429
        %7431 = vmatmul.bf16.gmra.mxu0 %v6094
        %v7432 = vpop.f32.mrf.mxu0
        %v7433 = vadd.f32 %v7344, %v7432
        %v7434 = vpop.f32.mrf.mxu0
        %v7435 = vadd.f32 %v7346, %v7434
        %7436 = vmatmul.bf16.gmra.mxu0 %v6097
        %v7437 = vpop.f32.mrf.mxu0
        %v7438 = vadd.f32 %v7349, %v7437
        %v7439 = vpop.f32.mrf.mxu0
        %v7440 = vadd.f32 %v7351, %v7439
        %7441 = vmatmul.bf16.gmra.mxu0 %v6100
        %v7442 = vpop.f32.mrf.mxu0
        %v7443 = vadd.f32 %v7354, %v7442
        %v7444 = vpop.f32.mrf.mxu0
        %v7445 = vadd.f32 %v7356, %v7444
        %7446 = vmatmul.bf16.gmra.mxu0 %v6103
        %v7447 = vpop.f32.mrf.mxu0
        %v7448 = vadd.f32 %v7359, %v7447
        %v7449 = vpop.f32.mrf.mxu0
        %v7450 = vadd.f32 %v7361, %v7449
        %7451 = vmatmul.bf16.gmra.mxu0 %v6106
        %v7452 = vpop.f32.mrf.mxu0
        %v7453 = vadd.f32 %v7364, %v7452
        %v7454 = vpop.f32.mrf.mxu0
        %v7455 = vadd.f32 %v7366, %v7454
        %7456 = vmatmul.bf16.gmra.mxu0 %v6109
        %v7457 = vpop.f32.mrf.mxu0
        %v7458 = vadd.f32 %v7369, %v7457
        %v7459 = vpop.f32.mrf.mxu0
        %v7460 = vadd.f32 %v7371, %v7459
        %7461 = vmatmul.bf16.gmra.mxu0 %v6112
        %v7462 = vpop.f32.mrf.mxu0
        %v7463 = vadd.f32 %v7374, %v7462
        %v7464 = vpop.f32.mrf.mxu0
        %v7465 = vadd.f32 %v7376, %v7464
        %7466 = vmatmul.bf16.gmra.mxu0 %v6115
        %v7467 = vpop.f32.mrf.mxu0
        %v7468 = vadd.f32 %v7379, %v7467
        %v7469 = vpop.f32.mrf.mxu0
        %v7470 = vadd.f32 %v7381, %v7469
        %7471 = vmatmul.bf16.gmra.mxu0 %v6118
        %v7472 = vpop.f32.mrf.mxu0
        %v7473 = vadd.f32 %v7384, %v7472
        %v7474 = vpop.f32.mrf.mxu0
        %v7475 = vadd.f32 %v7386, %v7474
        %7476 = vmatmul.bf16.gmra.mxu0 %v6121
        %v7477 = vpop.f32.mrf.mxu0
        %v7478 = vadd.f32 %v7389, %v7477
        %v7479 = vpop.f32.mrf.mxu0
        %v7480 = vadd.f32 %v7391, %v7479
        %7481 = vmatmul.bf16.gmra.mxu0 %v6124
        %v7482 = vpop.f32.mrf.mxu0
        %v7483 = vadd.f32 %v7394, %v7482
        %v7484 = vpop.f32.mrf.mxu0
        %v7485 = vadd.f32 %v7396, %v7484
        %7486 = vdwg.mxu0
        %v7535 = vunpack.c.l.b16 %v5820
        %v7536 = vunpack.c.l.b16 %v5821
        %v7537 = vunpack.c.l.b16 %v5822
        %v7538 = vunpack.c.l.b16 %v5823
        %v7539 = vunpack.c.l.b16 %v5824
        %v7540 = vunpack.c.l.b16 %v5825
        %v7541 = vunpack.c.l.b16 %v5826
        %v7542 = vunpack.c.l.b16 %v5827
        %v7543 = vunpack.c.l.b16 %v5828
        %v7544 = vunpack.c.l.b16 %v5829
        %v7545 = vunpack.c.l.b16 %v5830
        %v7546 = vunpack.c.l.b16 %v5831
        %v7547 = vunpack.c.l.b16 %v5832
        %v7548 = vunpack.c.l.b16 %v5833
        %v7549 = vunpack.c.l.b16 %v5834
        %v7550 = vunpack.c.l.b16 %v5835
        %v7551 = vunpack.c.l.b16 %v5836
        %v7552 = vunpack.c.l.b16 %v5837
        %v7553 = vunpack.c.l.b16 %v5838
        %v7554 = vunpack.c.l.b16 %v5839
        %v7555 = vunpack.c.l.b16 %v5840
        %v7556 = vunpack.c.l.b16 %v5841
        %v7557 = vunpack.c.l.b16 %v5842
        %v7558 = vunpack.c.l.b16 %v5843
        %v7559 = vunpack.c.l.b16 %v5844
        %v7560 = vunpack.c.l.b16 %v5845
        %v7561 = vunpack.c.l.b16 %v5846
        %v7562 = vunpack.c.l.b16 %v5847
        %v7563 = vunpack.c.l.b16 %v5848
        %v7564 = vunpack.c.l.b16 %v5849
        %v7565 = vunpack.c.l.b16 %v5850
        %v7566 = vunpack.c.l.b16 %v5851
        %v7567 = vunpack.c.l.b16 %v5852
        %v7568 = vunpack.c.l.b16 %v5853
        %v7569 = vunpack.c.l.b16 %v5854
        %v7570 = vunpack.c.l.b16 %v5855
        %v7571 = vunpack.c.l.b16 %v5856
        %v7572 = vunpack.c.l.b16 %v5857
        %v7573 = vunpack.c.l.b16 %v5858
        %v7574 = vunpack.c.l.b16 %v5859
        %v7575 = vunpack.c.l.b16 %v5860
        %v7576 = vunpack.c.l.b16 %v5861
        %v7577 = vunpack.c.l.b16 %v5862
        %v7578 = vunpack.c.l.b16 %v5863
        %v7579 = vunpack.c.l.b16 %v5864
        %v7580 = vunpack.c.l.b16 %v5865
        %v7581 = vunpack.c.l.b16 %v5866
        %v7582 = vunpack.c.l.b16 %v5867
        %v7583 = vpack.c.b16 %v7536, %v7535
        %v7584 = vpack.c.b16 %v7538, %v7537
        %v7585 = vpack.c.b16 %v7540, %v7539
        %v7586 = vpack.c.b16 %v7542, %v7541
        %v7587 = vpack.c.b16 %v7544, %v7543
        %v7588 = vpack.c.b16 %v7546, %v7545
        %v7589 = vpack.c.b16 %v7548, %v7547
        %v7590 = vpack.c.b16 %v7550, %v7549
        %v7591 = vpack.c.b16 %v7552, %v7551
        %v7592 = vpack.c.b16 %v7554, %v7553
        %v7593 = vpack.c.b16 %v7556, %v7555
        %v7594 = vpack.c.b16 %v7558, %v7557
        %v7595 = vpack.c.b16 %v7560, %v7559
        %v7596 = vpack.c.b16 %v7562, %v7561
        %v7597 = vpack.c.b16 %v7564, %v7563
        %v7598 = vpack.c.b16 %v7566, %v7565
        %v7599 = vpack.c.b16 %v7568, %v7567
        %v7600 = vpack.c.b16 %v7570, %v7569
        %v7601 = vpack.c.b16 %v7572, %v7571
        %v7602 = vpack.c.b16 %v7574, %v7573
        %v7603 = vpack.c.b16 %v7576, %v7575
        %v7604 = vpack.c.b16 %v7578, %v7577
        %v7605 = vpack.c.b16 %v7580, %v7579
        %v7606 = vpack.c.b16 %v7582, %v7581
        %7631 = vmatpush.bf16.msra.mxu0 %v7590
        %7632 = vmatpush.bf16.msra.mxu0 %v7589
        %7633 = vmatpush.bf16.msra.mxu0 %v7588
        %7634 = vmatpush.bf16.msra.mxu0 %v7587
        %7635 = vmatpush.bf16.msra.mxu0 %v7586
        %7636 = vmatpush.bf16.msra.mxu0 %v7585
        %7637 = vmatpush.bf16.msra.mxu0 %v7584
        %7638 = vmatpush.bf16.msra.mxu0 %v7583
        %7639 = vmatmul.bf16.gmra.mxu0 %v6604
        %v7640 = vpop.f32.mrf.mxu0
        %v7641 = vadd.f32 %v7408, %v7640
        %v7642 = vpop.f32.mrf.mxu0
        %v7643 = vadd.f32 %v7410, %v7642
        %7644 = vmatmul.bf16.gmra.mxu0 %v6607
        %v7645 = vpop.f32.mrf.mxu0
        %v7646 = vadd.f32 %v7413, %v7645
        %v7647 = vpop.f32.mrf.mxu0
        %v7648 = vadd.f32 %v7415, %v7647
        %7649 = vmatmul.bf16.gmra.mxu0 %v6077
        %v7650 = vpop.f32.mrf.mxu0
        %v7651 = vadd.f32 %v7418, %v7650
        %v7652 = vpop.f32.mrf.mxu0
        %v7653 = vadd.f32 %v7420, %v7652
        %7654 = vmatmul.bf16.gmra.mxu0 %v6080
        %v7655 = vpop.f32.mrf.mxu0
        %v7656 = vadd.f32 %v7423, %v7655
        %v7657 = vpop.f32.mrf.mxu0
        %v7658 = vadd.f32 %v7425, %v7657
        %7659 = vmatmul.bf16.gmra.mxu0 %v6083
        %v7660 = vpop.f32.mrf.mxu0
        %v7661 = vadd.f32 %v7428, %v7660
        %v7662 = vpop.f32.mrf.mxu0
        %v7663 = vadd.f32 %v7430, %v7662
        %7664 = vmatmul.bf16.gmra.mxu0 %v6086
        %v7665 = vpop.f32.mrf.mxu0
        %v7666 = vadd.f32 %v7433, %v7665
        %v7667 = vpop.f32.mrf.mxu0
        %v7668 = vadd.f32 %v7435, %v7667
        %7669 = vmatmul.bf16.gmra.mxu0 %v6089
        %v7670 = vpop.f32.mrf.mxu0
        %v7671 = vadd.f32 %v7438, %v7670
        %v7672 = vpop.f32.mrf.mxu0
        %v7673 = vadd.f32 %v7440, %v7672
        %7674 = vmatmul.bf16.gmra.mxu0 %v6092
        %v7675 = vpop.f32.mrf.mxu0
        %v7676 = vadd.f32 %v7443, %v7675
        %v7677 = vpop.f32.mrf.mxu0
        %v7678 = vadd.f32 %v7445, %v7677
        %7679 = vmatmul.bf16.gmra.mxu0 %v6095
        %v7680 = vpop.f32.mrf.mxu0
        %v7681 = vadd.f32 %v7448, %v7680
        %v7682 = vpop.f32.mrf.mxu0
        %v7683 = vadd.f32 %v7450, %v7682
        %7684 = vmatmul.bf16.gmra.mxu0 %v6098
        %v7685 = vpop.f32.mrf.mxu0
        %v7686 = vadd.f32 %v7453, %v7685
        %v7687 = vpop.f32.mrf.mxu0
        %v7688 = vadd.f32 %v7455, %v7687
        %7689 = vmatmul.bf16.gmra.mxu0 %v6101
        %v7690 = vpop.f32.mrf.mxu0
        %v7691 = vadd.f32 %v7458, %v7690
        %v7692 = vpop.f32.mrf.mxu0
        %v7693 = vadd.f32 %v7460, %v7692
        %7694 = vmatmul.bf16.gmra.mxu0 %v6104
        %v7695 = vpop.f32.mrf.mxu0
        %v7696 = vadd.f32 %v7463, %v7695
        %v7697 = vpop.f32.mrf.mxu0
        %v7698 = vadd.f32 %v7465, %v7697
        %7699 = vmatmul.bf16.gmra.mxu0 %v6107
        %v7700 = vpop.f32.mrf.mxu0
        %v7701 = vadd.f32 %v7468, %v7700
        %v7702 = vpop.f32.mrf.mxu0
        %v7703 = vadd.f32 %v7470, %v7702
        %7704 = vmatmul.bf16.gmra.mxu0 %v6110
        %v7705 = vpop.f32.mrf.mxu0
        %v7706 = vadd.f32 %v7473, %v7705
        %v7707 = vpop.f32.mrf.mxu0
        %v7708 = vadd.f32 %v7475, %v7707
        %7709 = vmatmul.bf16.gmra.mxu0 %v6113
        %v7710 = vpop.f32.mrf.mxu0
        %v7711 = vadd.f32 %v7478, %v7710
        %v7712 = vpop.f32.mrf.mxu0
        %v7713 = vadd.f32 %v7480, %v7712
        %7714 = vmatmul.bf16.gmra.mxu0 %v6116
        %v7715 = vpop.f32.mrf.mxu0
        %v7716 = vadd.f32 %v7483, %v7715
        %v7717 = vpop.f32.mrf.mxu0
        %v7718 = vadd.f32 %v7485, %v7717
        %7719 = vdwg.mxu0
        %7720 = vmatpush.bf16.msra.mxu0 %v7598
        %7721 = vmatpush.bf16.msra.mxu0 %v7597
        %7722 = vmatpush.bf16.msra.mxu0 %v7596
        %7723 = vmatpush.bf16.msra.mxu0 %v7595
        %7724 = vmatpush.bf16.msra.mxu0 %v7594
        %7725 = vmatpush.bf16.msra.mxu0 %v7593
        %7726 = vmatpush.bf16.msra.mxu0 %v7592
        %7727 = vmatpush.bf16.msra.mxu0 %v7591
        %7728 = vmatmul.bf16.gmra.mxu0 %v6605
        %v7729 = vpop.f32.mrf.mxu0
        %v7730 = vadd.f32 %v7641, %v7729
        %v7731 = vpop.f32.mrf.mxu0
        %v7732 = vadd.f32 %v7643, %v7731
        %7733 = vmatmul.bf16.gmra.mxu0 %v6608
        %v7734 = vpop.f32.mrf.mxu0
        %v7735 = vadd.f32 %v7646, %v7734
        %v7736 = vpop.f32.mrf.mxu0
        %v7737 = vadd.f32 %v7648, %v7736
        %7738 = vmatmul.bf16.gmra.mxu0 %v6078
        %v7739 = vpop.f32.mrf.mxu0
        %v7740 = vadd.f32 %v7651, %v7739
        %v7741 = vpop.f32.mrf.mxu0
        %v7742 = vadd.f32 %v7653, %v7741
        %7743 = vmatmul.bf16.gmra.mxu0 %v6081
        %v7744 = vpop.f32.mrf.mxu0
        %v7745 = vadd.f32 %v7656, %v7744
        %v7746 = vpop.f32.mrf.mxu0
        %v7747 = vadd.f32 %v7658, %v7746
        %7748 = vmatmul.bf16.gmra.mxu0 %v6084
        %v7749 = vpop.f32.mrf.mxu0
        %v7750 = vadd.f32 %v7661, %v7749
        %v7751 = vpop.f32.mrf.mxu0
        %v7752 = vadd.f32 %v7663, %v7751
        %7753 = vmatmul.bf16.gmra.mxu0 %v6087
        %v7754 = vpop.f32.mrf.mxu0
        %v7755 = vadd.f32 %v7666, %v7754
        %v7756 = vpop.f32.mrf.mxu0
        %v7757 = vadd.f32 %v7668, %v7756
        %7758 = vmatmul.bf16.gmra.mxu0 %v6090
        %v7759 = vpop.f32.mrf.mxu0
        %v7760 = vadd.f32 %v7671, %v7759
        %v7761 = vpop.f32.mrf.mxu0
        %v7762 = vadd.f32 %v7673, %v7761
        %7763 = vmatmul.bf16.gmra.mxu0 %v6093
        %v7764 = vpop.f32.mrf.mxu0
        %v7765 = vadd.f32 %v7676, %v7764
        %v7766 = vpop.f32.mrf.mxu0
        %v7767 = vadd.f32 %v7678, %v7766
        %7768 = vmatmul.bf16.gmra.mxu0 %v6096
        %v7769 = vpop.f32.mrf.mxu0
        %v7770 = vadd.f32 %v7681, %v7769
        %v7771 = vpop.f32.mrf.mxu0
        %v7772 = vadd.f32 %v7683, %v7771
        %7773 = vmatmul.bf16.gmra.mxu0 %v6099
        %v7774 = vpop.f32.mrf.mxu0
        %v7775 = vadd.f32 %v7686, %v7774
        %v7776 = vpop.f32.mrf.mxu0
        %v7777 = vadd.f32 %v7688, %v7776
        %7778 = vmatmul.bf16.gmra.mxu0 %v6102
        %v7779 = vpop.f32.mrf.mxu0
        %v7780 = vadd.f32 %v7691, %v7779
        %v7781 = vpop.f32.mrf.mxu0
        %v7782 = vadd.f32 %v7693, %v7781
        %7783 = vmatmul.bf16.gmra.mxu0 %v6105
        %v7784 = vpop.f32.mrf.mxu0
        %v7785 = vadd.f32 %v7696, %v7784
        %v7786 = vpop.f32.mrf.mxu0
        %v7787 = vadd.f32 %v7698, %v7786
        %7788 = vmatmul.bf16.gmra.mxu0 %v6108
        %v7789 = vpop.f32.mrf.mxu0
        %v7790 = vadd.f32 %v7701, %v7789
        %v7791 = vpop.f32.mrf.mxu0
        %v7792 = vadd.f32 %v7703, %v7791
        %7793 = vmatmul.bf16.gmra.mxu0 %v6111
        %v7794 = vpop.f32.mrf.mxu0
        %v7795 = vadd.f32 %v7706, %v7794
        %v7796 = vpop.f32.mrf.mxu0
        %v7797 = vadd.f32 %v7708, %v7796
        %7798 = vmatmul.bf16.gmra.mxu0 %v6114
        %v7799 = vpop.f32.mrf.mxu0
        %v7800 = vadd.f32 %v7711, %v7799
        %v7801 = vpop.f32.mrf.mxu0
        %v7802 = vadd.f32 %v7713, %v7801
        %7803 = vmatmul.bf16.gmra.mxu0 %v6117
        %v7804 = vpop.f32.mrf.mxu0
        %v7805 = vadd.f32 %v7716, %v7804
        %v7806 = vpop.f32.mrf.mxu0
        %v7807 = vadd.f32 %v7718, %v7806
        %7808 = vdwg.mxu0
        %7809 = vmatpush.bf16.msra.mxu0 %v7606
        %7810 = vmatpush.bf16.msra.mxu0 %v7605
        %7811 = vmatpush.bf16.msra.mxu0 %v7604
        %7812 = vmatpush.bf16.msra.mxu0 %v7603
        %7813 = vmatpush.bf16.msra.mxu0 %v7602
        %7814 = vmatpush.bf16.msra.mxu0 %v7601
        %7815 = vmatpush.bf16.msra.mxu0 %v7600
        %7816 = vmatpush.bf16.msra.mxu0 %v7599
        %7817 = vmatmul.bf16.gmra.mxu0 %v6606
        %v7818 = vpop.f32.mrf.mxu0
        %v7819 = vadd.f32 %v7730, %v7818
        %v7820 = vpop.f32.mrf.mxu0
        %v7821 = vadd.f32 %v7732, %v7820
        %7822 = vmatmul.bf16.gmra.mxu0 %v6609
        %v7823 = vpop.f32.mrf.mxu0
        %v7824 = vadd.f32 %v7735, %v7823
        %v7825 = vpop.f32.mrf.mxu0
        %v7826 = vadd.f32 %v7737, %v7825
        %7827 = vmatmul.bf16.gmra.mxu0 %v6079
        %v7828 = vpop.f32.mrf.mxu0
        %v7829 = vadd.f32 %v7740, %v7828
        %v7830 = vpop.f32.mrf.mxu0
        %v7831 = vadd.f32 %v7742, %v7830
        %7832 = vmatmul.bf16.gmra.mxu0 %v6082
        %v7833 = vpop.f32.mrf.mxu0
        %v7834 = vadd.f32 %v7745, %v7833
        %v7835 = vpop.f32.mrf.mxu0
        %v7836 = vadd.f32 %v7747, %v7835
        %7837 = vmatmul.bf16.gmra.mxu0 %v6085
        %v7838 = vpop.f32.mrf.mxu0
        %v7839 = vadd.f32 %v7750, %v7838
        %v7840 = vpop.f32.mrf.mxu0
        %v7841 = vadd.f32 %v7752, %v7840
        %7842 = vmatmul.bf16.gmra.mxu0 %v6088
        %v7843 = vpop.f32.mrf.mxu0
        %v7844 = vadd.f32 %v7755, %v7843
        %v7845 = vpop.f32.mrf.mxu0
        %v7846 = vadd.f32 %v7757, %v7845
        %7847 = vmatmul.bf16.gmra.mxu0 %v6091
        %v7848 = vpop.f32.mrf.mxu0
        %v7849 = vadd.f32 %v7760, %v7848
        %v7850 = vpop.f32.mrf.mxu0
        %v7851 = vadd.f32 %v7762, %v7850
        %7852 = vmatmul.bf16.gmra.mxu0 %v6094
        %v7853 = vpop.f32.mrf.mxu0
        %v7854 = vadd.f32 %v7765, %v7853
        %v7855 = vpop.f32.mrf.mxu0
        %v7856 = vadd.f32 %v7767, %v7855
        %7857 = vmatmul.bf16.gmra.mxu0 %v6097
        %v7858 = vpop.f32.mrf.mxu0
        %v7859 = vadd.f32 %v7770, %v7858
        %v7860 = vpop.f32.mrf.mxu0
        %v7861 = vadd.f32 %v7772, %v7860
        %7862 = vmatmul.bf16.gmra.mxu0 %v6100
        %v7863 = vpop.f32.mrf.mxu0
        %v7864 = vadd.f32 %v7775, %v7863
        %v7865 = vpop.f32.mrf.mxu0
        %v7866 = vadd.f32 %v7777, %v7865
        %7867 = vmatmul.bf16.gmra.mxu0 %v6103
        %v7868 = vpop.f32.mrf.mxu0
        %v7869 = vadd.f32 %v7780, %v7868
        %v7870 = vpop.f32.mrf.mxu0
        %v7871 = vadd.f32 %v7782, %v7870
        %7872 = vmatmul.bf16.gmra.mxu0 %v6106
        %v7873 = vpop.f32.mrf.mxu0
        %v7874 = vadd.f32 %v7785, %v7873
        %v7875 = vpop.f32.mrf.mxu0
        %v7876 = vadd.f32 %v7787, %v7875
        %7877 = vmatmul.bf16.gmra.mxu0 %v6109
        %v7878 = vpop.f32.mrf.mxu0
        %v7879 = vadd.f32 %v7790, %v7878
        %v7880 = vpop.f32.mrf.mxu0
        %v7881 = vadd.f32 %v7792, %v7880
        %7882 = vmatmul.bf16.gmra.mxu0 %v6112
        %v7883 = vpop.f32.mrf.mxu0
        %v7884 = vadd.f32 %v7795, %v7883
        %v7885 = vpop.f32.mrf.mxu0
        %v7886 = vadd.f32 %v7797, %v7885
        %7887 = vmatmul.bf16.gmra.mxu0 %v6115
        %v7888 = vpop.f32.mrf.mxu0
        %v7889 = vadd.f32 %v7800, %v7888
        %v7890 = vpop.f32.mrf.mxu0
        %v7891 = vadd.f32 %v7802, %v7890
        %7892 = vmatmul.bf16.gmra.mxu0 %v6118
        %v7893 = vpop.f32.mrf.mxu0
        %v7894 = vadd.f32 %v7805, %v7893
        %v7895 = vpop.f32.mrf.mxu0
        %v7896 = vadd.f32 %v7807, %v7895
        %7897 = vdwg.mxu0
        %s7898 = scalar_lea.vmem %s4, 384
        %v7899 = vld [vmem:[%s7898] sm:$0xf]
        %v7900 = vld [vmem:[%s7898 + $0x4] sm:$0xf]
        %v7901 = vld [vmem:[%s7898 + $0x8] sm:$0xf]
        %v7902 = vld [vmem:[%s7898 + $0xc] sm:$0xf]
        %v7903 = vld [vmem:[%s7898 + $0x10] sm:$0xf]
        %v7904 = vld [vmem:[%s7898 + $0x14] sm:$0xf]
        %v7905 = vld [vmem:[%s7898 + $0x18] sm:$0xf]
        %v7906 = vld [vmem:[%s7898 + $0x1c] sm:$0xf]
        %v7907 = vld [vmem:[%s7898 + $0x20] sm:$0xf]
        %v7908 = vld [vmem:[%s7898 + $0x24] sm:$0xf]
        %v7909 = vld [vmem:[%s7898 + $0x28] sm:$0xf]
        %v7910 = vld [vmem:[%s7898 + $0x2c] sm:$0xf]
        %v7911 = vld [vmem:[%s7898 + $0x30] sm:$0xf]
        %v7912 = vld [vmem:[%s7898 + $0x34] sm:$0xf]
        %v7913 = vld [vmem:[%s7898 + $0x38] sm:$0xf]
        %v7914 = vld [vmem:[%s7898 + $0x3c] sm:$0xf]
        %v7915 = vld [vmem:[%s7898 + $0x40] sm:$0xf]
        %v7916 = vld [vmem:[%s7898 + $0x44] sm:$0xf]
        %v7917 = vld [vmem:[%s7898 + $0x48] sm:$0xf]
        %v7918 = vld [vmem:[%s7898 + $0x4c] sm:$0xf]
        %v7919 = vld [vmem:[%s7898 + $0x50] sm:$0xf]
        %v7920 = vld [vmem:[%s7898 + $0x54] sm:$0xf]
        %v7921 = vld [vmem:[%s7898 + $0x58] sm:$0xf]
        %v7922 = vld [vmem:[%s7898 + $0x5c] sm:$0xf]
        %v7923 = vld [vmem:[%s7898 + $0x60] sm:$0xf]
        %v7924 = vld [vmem:[%s7898 + $0x64] sm:$0xf]
        %v7925 = vld [vmem:[%s7898 + $0x68] sm:$0xf]
        %v7926 = vld [vmem:[%s7898 + $0x6c] sm:$0xf]
        %v7927 = vld [vmem:[%s7898 + $0x70] sm:$0xf]
        %v7928 = vld [vmem:[%s7898 + $0x74] sm:$0xf]
        %v7929 = vld [vmem:[%s7898 + $0x78] sm:$0xf]
        %v7930 = vld [vmem:[%s7898 + $0x7c] sm:$0xf]
        %v7931 = vld [vmem:[%s7898 + $0x80] sm:$0xf]
        %v7932 = vld [vmem:[%s7898 + $0x84] sm:$0xf]
        %v7933 = vld [vmem:[%s7898 + $0x88] sm:$0xf]
        %v7934 = vld [vmem:[%s7898 + $0x8c] sm:$0xf]
        %v7935 = vld [vmem:[%s7898 + $0x90] sm:$0xf]
        %v7936 = vld [vmem:[%s7898 + $0x94] sm:$0xf]
        %v7937 = vld [vmem:[%s7898 + $0x98] sm:$0xf]
        %v7938 = vld [vmem:[%s7898 + $0x9c] sm:$0xf]
        %v7939 = vld [vmem:[%s7898 + $0xa0] sm:$0xf]
        %v7940 = vld [vmem:[%s7898 + $0xa4] sm:$0xf]
        %v7941 = vld [vmem:[%s7898 + $0xa8] sm:$0xf]
        %v7942 = vld [vmem:[%s7898 + $0xac] sm:$0xf]
        %v7943 = vld [vmem:[%s7898 + $0xb0] sm:$0xf]
        %v7944 = vld [vmem:[%s7898 + $0xb4] sm:$0xf]
        %v7945 = vld [vmem:[%s7898 + $0xb8] sm:$0xf]
        %v7946 = vld [vmem:[%s7898 + $0xbc] sm:$0xf]
        %v7955 = vunpack.c.l.b16 %v5748
        %v7956 = vunpack.c.h.b16 %v5748
        %v7957 = vunpack.c.l.b16 %v5749
        %v7958 = vunpack.c.l.b16 %v5750
        %v7959 = vunpack.c.h.b16 %v5750
        %v7960 = vunpack.c.l.b16 %v5751
        %v7961 = vunpack.c.l.b16 %v5752
        %v7962 = vunpack.c.h.b16 %v5752
        %v7963 = vunpack.c.l.b16 %v5753
        %v7964 = vunpack.c.l.b16 %v5754
        %v7965 = vunpack.c.h.b16 %v5754
        %v7966 = vunpack.c.l.b16 %v5755
        %v7967 = vpack.c.b16 %v7958, %v7955
        %v7968 = vpack.c.b16 %v7959, %v7956
        %v7969 = vpack.c.b16 %v7960, %v7957
        %v7970 = vpack.c.b16 %v7964, %v7961
        %v7971 = vpack.c.b16 %v7965, %v7962
        %v7972 = vpack.c.b16 %v7966, %v7963
        %v8027 = vunpack.c.l.b16 %v7899
        %v8028 = vunpack.c.l.b16 %v7900
        %v8029 = vunpack.c.l.b16 %v7901
        %v8030 = vunpack.c.l.b16 %v7902
        %v8031 = vunpack.c.l.b16 %v7903
        %v8032 = vunpack.c.l.b16 %v7904
        %v8033 = vunpack.c.l.b16 %v7905
        %v8034 = vunpack.c.l.b16 %v7906
        %v8035 = vunpack.c.l.b16 %v7907
        %v8036 = vunpack.c.l.b16 %v7908
        %v8037 = vunpack.c.l.b16 %v7909
        %v8038 = vunpack.c.l.b16 %v7910
        %v8039 = vunpack.c.l.b16 %v7911
        %v8040 = vunpack.c.l.b16 %v7912
        %v8041 = vunpack.c.l.b16 %v7913
        %v8042 = vunpack.c.l.b16 %v7914
        %v8043 = vunpack.c.l.b16 %v7915
        %v8044 = vunpack.c.l.b16 %v7916
        %v8045 = vunpack.c.l.b16 %v7917
        %v8046 = vunpack.c.l.b16 %v7918
        %v8047 = vunpack.c.l.b16 %v7919
        %v8048 = vunpack.c.l.b16 %v7920
        %v8049 = vunpack.c.l.b16 %v7921
        %v8050 = vunpack.c.l.b16 %v7922
        %v8051 = vunpack.c.l.b16 %v7923
        %v8052 = vunpack.c.l.b16 %v7924
        %v8053 = vunpack.c.l.b16 %v7925
        %v8054 = vunpack.c.l.b16 %v7926
        %v8055 = vunpack.c.l.b16 %v7927
        %v8056 = vunpack.c.l.b16 %v7928
        %v8057 = vunpack.c.l.b16 %v7929
        %v8058 = vunpack.c.l.b16 %v7930
        %v8059 = vunpack.c.l.b16 %v7931
        %v8060 = vunpack.c.l.b16 %v7932
        %v8061 = vunpack.c.l.b16 %v7933
        %v8062 = vunpack.c.l.b16 %v7934
        %v8063 = vunpack.c.l.b16 %v7935
        %v8064 = vunpack.c.l.b16 %v7936
        %v8065 = vunpack.c.l.b16 %v7937
        %v8066 = vunpack.c.l.b16 %v7938
        %v8067 = vunpack.c.l.b16 %v7939
        %v8068 = vunpack.c.l.b16 %v7940
        %v8069 = vunpack.c.l.b16 %v7941
        %v8070 = vunpack.c.l.b16 %v7942
        %v8071 = vunpack.c.l.b16 %v7943
        %v8072 = vunpack.c.l.b16 %v7944
        %v8073 = vunpack.c.l.b16 %v7945
        %v8074 = vunpack.c.l.b16 %v7946
        %v8075 = vpack.c.b16 %v8028, %v8027
        %v8076 = vpack.c.b16 %v8030, %v8029
        %v8077 = vpack.c.b16 %v8032, %v8031
        %v8078 = vpack.c.b16 %v8034, %v8033
        %v8079 = vpack.c.b16 %v8036, %v8035
        %v8080 = vpack.c.b16 %v8038, %v8037
        %v8081 = vpack.c.b16 %v8040, %v8039
        %v8082 = vpack.c.b16 %v8042, %v8041
        %v8083 = vpack.c.b16 %v8044, %v8043
        %v8084 = vpack.c.b16 %v8046, %v8045
        %v8085 = vpack.c.b16 %v8048, %v8047
        %v8086 = vpack.c.b16 %v8050, %v8049
        %v8087 = vpack.c.b16 %v8052, %v8051
        %v8088 = vpack.c.b16 %v8054, %v8053
        %v8089 = vpack.c.b16 %v8056, %v8055
        %v8090 = vpack.c.b16 %v8058, %v8057
        %v8091 = vpack.c.b16 %v8060, %v8059
        %v8092 = vpack.c.b16 %v8062, %v8061
        %v8093 = vpack.c.b16 %v8064, %v8063
        %v8094 = vpack.c.b16 %v8066, %v8065
        %v8095 = vpack.c.b16 %v8068, %v8067
        %v8096 = vpack.c.b16 %v8070, %v8069
        %v8097 = vpack.c.b16 %v8072, %v8071
        %v8098 = vpack.c.b16 %v8074, %v8073
        %8123 = vmatpush.bf16.msra.mxu0 %v8082
        %8124 = vmatpush.bf16.msra.mxu0 %v8081
        %8125 = vmatpush.bf16.msra.mxu0 %v8080
        %8126 = vmatpush.bf16.msra.mxu0 %v8079
        %8127 = vmatpush.bf16.msra.mxu0 %v8078
        %8128 = vmatpush.bf16.msra.mxu0 %v8077
        %8129 = vmatpush.bf16.msra.mxu0 %v8076
        %8130 = vmatpush.bf16.msra.mxu0 %v8075
        %8131 = vmatmul.bf16.gmra.mxu0 %v6083
        %v8132 = vpop.f32.mrf.mxu0
        %v8133 = vadd.f32 0.0, %v8132
        %v8134 = vpop.f32.mrf.mxu0
        %v8135 = vadd.f32 0.0, %v8134
        %8136 = vmatmul.bf16.gmra.mxu0 %v6086
        %v8137 = vpop.f32.mrf.mxu0
        %v8138 = vadd.f32 0.0, %v8137
        %v8139 = vpop.f32.mrf.mxu0
        %v8140 = vadd.f32 0.0, %v8139
        %8141 = vmatmul.bf16.gmra.mxu0 %v6089
        %v8142 = vpop.f32.mrf.mxu0
        %v8143 = vadd.f32 0.0, %v8142
        %v8144 = vpop.f32.mrf.mxu0
        %v8145 = vadd.f32 0.0, %v8144
        %8146 = vmatmul.bf16.gmra.mxu0 %v6092
        %v8147 = vpop.f32.mrf.mxu0
        %v8148 = vadd.f32 0.0, %v8147
        %v8149 = vpop.f32.mrf.mxu0
        %v8150 = vadd.f32 0.0, %v8149
        %8151 = vmatmul.bf16.gmra.mxu0 %v6095
        %v8152 = vpop.f32.mrf.mxu0
        %v8153 = vadd.f32 0.0, %v8152
        %v8154 = vpop.f32.mrf.mxu0
        %v8155 = vadd.f32 0.0, %v8154
        %8156 = vmatmul.bf16.gmra.mxu0 %v6098
        %v8157 = vpop.f32.mrf.mxu0
        %v8158 = vadd.f32 0.0, %v8157
        %v8159 = vpop.f32.mrf.mxu0
        %v8160 = vadd.f32 0.0, %v8159
        %8161 = vmatmul.bf16.gmra.mxu0 %v6101
        %v8162 = vpop.f32.mrf.mxu0
        %v8163 = vadd.f32 0.0, %v8162
        %v8164 = vpop.f32.mrf.mxu0
        %v8165 = vadd.f32 0.0, %v8164
        %8166 = vmatmul.bf16.gmra.mxu0 %v6104
        %v8167 = vpop.f32.mrf.mxu0
        %v8168 = vadd.f32 0.0, %v8167
        %v8169 = vpop.f32.mrf.mxu0
        %v8170 = vadd.f32 0.0, %v8169
        %8171 = vmatmul.bf16.gmra.mxu0 %v6107
        %v8172 = vpop.f32.mrf.mxu0
        %v8173 = vadd.f32 0.0, %v8172
        %v8174 = vpop.f32.mrf.mxu0
        %v8175 = vadd.f32 0.0, %v8174
        %8176 = vmatmul.bf16.gmra.mxu0 %v6110
        %v8177 = vpop.f32.mrf.mxu0
        %v8178 = vadd.f32 0.0, %v8177
        %v8179 = vpop.f32.mrf.mxu0
        %v8180 = vadd.f32 0.0, %v8179
        %8181 = vmatmul.bf16.gmra.mxu0 %v6113
        %v8182 = vpop.f32.mrf.mxu0
        %v8183 = vadd.f32 0.0, %v8182
        %v8184 = vpop.f32.mrf.mxu0
        %v8185 = vadd.f32 0.0, %v8184
        %8186 = vmatmul.bf16.gmra.mxu0 %v6116
        %v8187 = vpop.f32.mrf.mxu0
        %v8188 = vadd.f32 0.0, %v8187
        %v8189 = vpop.f32.mrf.mxu0
        %v8190 = vadd.f32 0.0, %v8189
        %8191 = vmatmul.bf16.gmra.mxu0 %v6119
        %v8192 = vpop.f32.mrf.mxu0
        %v8193 = vadd.f32 0.0, %v8192
        %v8194 = vpop.f32.mrf.mxu0
        %v8195 = vadd.f32 0.0, %v8194
        %8196 = vmatmul.bf16.gmra.mxu0 %v6122
        %v8197 = vpop.f32.mrf.mxu0
        %v8198 = vadd.f32 0.0, %v8197
        %v8199 = vpop.f32.mrf.mxu0
        %v8200 = vadd.f32 0.0, %v8199
        %8201 = vmatmul.bf16.gmra.mxu0 %v7967
        %v8202 = vpop.f32.mrf.mxu0
        %v8203 = vadd.f32 0.0, %v8202
        %v8204 = vpop.f32.mrf.mxu0
        %v8205 = vadd.f32 0.0, %v8204
        %8206 = vmatmul.bf16.gmra.mxu0 %v7970
        %v8207 = vpop.f32.mrf.mxu0
        %v8208 = vadd.f32 0.0, %v8207
        %v8209 = vpop.f32.mrf.mxu0
        %v8210 = vadd.f32 0.0, %v8209
        %8211 = vdwg.mxu0
        %8212 = vmatpush.bf16.msra.mxu0 %v8090
        %8213 = vmatpush.bf16.msra.mxu0 %v8089
        %8214 = vmatpush.bf16.msra.mxu0 %v8088
        %8215 = vmatpush.bf16.msra.mxu0 %v8087
        %8216 = vmatpush.bf16.msra.mxu0 %v8086
        %8217 = vmatpush.bf16.msra.mxu0 %v8085
        %8218 = vmatpush.bf16.msra.mxu0 %v8084
        %8219 = vmatpush.bf16.msra.mxu0 %v8083
        %8220 = vmatmul.bf16.gmra.mxu0 %v6084
        %v8221 = vpop.f32.mrf.mxu0
        %v8222 = vadd.f32 %v8133, %v8221
        %v8223 = vpop.f32.mrf.mxu0
        %v8224 = vadd.f32 %v8135, %v8223
        %8225 = vmatmul.bf16.gmra.mxu0 %v6087
        %v8226 = vpop.f32.mrf.mxu0
        %v8227 = vadd.f32 %v8138, %v8226
        %v8228 = vpop.f32.mrf.mxu0
        %v8229 = vadd.f32 %v8140, %v8228
        %8230 = vmatmul.bf16.gmra.mxu0 %v6090
        %v8231 = vpop.f32.mrf.mxu0
        %v8232 = vadd.f32 %v8143, %v8231
        %v8233 = vpop.f32.mrf.mxu0
        %v8234 = vadd.f32 %v8145, %v8233
        %8235 = vmatmul.bf16.gmra.mxu0 %v6093
        %v8236 = vpop.f32.mrf.mxu0
        %v8237 = vadd.f32 %v8148, %v8236
        %v8238 = vpop.f32.mrf.mxu0
        %v8239 = vadd.f32 %v8150, %v8238
        %8240 = vmatmul.bf16.gmra.mxu0 %v6096
        %v8241 = vpop.f32.mrf.mxu0
        %v8242 = vadd.f32 %v8153, %v8241
        %v8243 = vpop.f32.mrf.mxu0
        %v8244 = vadd.f32 %v8155, %v8243
        %8245 = vmatmul.bf16.gmra.mxu0 %v6099
        %v8246 = vpop.f32.mrf.mxu0
        %v8247 = vadd.f32 %v8158, %v8246
        %v8248 = vpop.f32.mrf.mxu0
        %v8249 = vadd.f32 %v8160, %v8248
        %8250 = vmatmul.bf16.gmra.mxu0 %v6102
        %v8251 = vpop.f32.mrf.mxu0
        %v8252 = vadd.f32 %v8163, %v8251
        %v8253 = vpop.f32.mrf.mxu0
        %v8254 = vadd.f32 %v8165, %v8253
        %8255 = vmatmul.bf16.gmra.mxu0 %v6105
        %v8256 = vpop.f32.mrf.mxu0
        %v8257 = vadd.f32 %v8168, %v8256
        %v8258 = vpop.f32.mrf.mxu0
        %v8259 = vadd.f32 %v8170, %v8258
        %8260 = vmatmul.bf16.gmra.mxu0 %v6108
        %v8261 = vpop.f32.mrf.mxu0
        %v8262 = vadd.f32 %v8173, %v8261
        %v8263 = vpop.f32.mrf.mxu0
        %v8264 = vadd.f32 %v8175, %v8263
        %8265 = vmatmul.bf16.gmra.mxu0 %v6111
        %v8266 = vpop.f32.mrf.mxu0
        %v8267 = vadd.f32 %v8178, %v8266
        %v8268 = vpop.f32.mrf.mxu0
        %v8269 = vadd.f32 %v8180, %v8268
        %8270 = vmatmul.bf16.gmra.mxu0 %v6114
        %v8271 = vpop.f32.mrf.mxu0
        %v8272 = vadd.f32 %v8183, %v8271
        %v8273 = vpop.f32.mrf.mxu0
        %v8274 = vadd.f32 %v8185, %v8273
        %8275 = vmatmul.bf16.gmra.mxu0 %v6117
        %v8276 = vpop.f32.mrf.mxu0
        %v8277 = vadd.f32 %v8188, %v8276
        %v8278 = vpop.f32.mrf.mxu0
        %v8279 = vadd.f32 %v8190, %v8278
        %8280 = vmatmul.bf16.gmra.mxu0 %v6120
        %v8281 = vpop.f32.mrf.mxu0
        %v8282 = vadd.f32 %v8193, %v8281
        %v8283 = vpop.f32.mrf.mxu0
        %v8284 = vadd.f32 %v8195, %v8283
        %8285 = vmatmul.bf16.gmra.mxu0 %v6123
        %v8286 = vpop.f32.mrf.mxu0
        %v8287 = vadd.f32 %v8198, %v8286
        %v8288 = vpop.f32.mrf.mxu0
        %v8289 = vadd.f32 %v8200, %v8288
        %8290 = vmatmul.bf16.gmra.mxu0 %v7968
        %v8291 = vpop.f32.mrf.mxu0
        %v8292 = vadd.f32 %v8203, %v8291
        %v8293 = vpop.f32.mrf.mxu0
        %v8294 = vadd.f32 %v8205, %v8293
        %8295 = vmatmul.bf16.gmra.mxu0 %v7971
        %v8296 = vpop.f32.mrf.mxu0
        %v8297 = vadd.f32 %v8208, %v8296
        %v8298 = vpop.f32.mrf.mxu0
        %v8299 = vadd.f32 %v8210, %v8298
        %8300 = vdwg.mxu0
        %8301 = vmatpush.bf16.msra.mxu0 %v8098
        %8302 = vmatpush.bf16.msra.mxu0 %v8097
        %8303 = vmatpush.bf16.msra.mxu0 %v8096
        %8304 = vmatpush.bf16.msra.mxu0 %v8095
        %8305 = vmatpush.bf16.msra.mxu0 %v8094
        %8306 = vmatpush.bf16.msra.mxu0 %v8093
        %8307 = vmatpush.bf16.msra.mxu0 %v8092
        %8308 = vmatpush.bf16.msra.mxu0 %v8091
        %8309 = vmatmul.bf16.gmra.mxu0 %v6085
        %v8310 = vpop.f32.mrf.mxu0
        %v8311 = vadd.f32 %v8222, %v8310
        %v8312 = vpop.f32.mrf.mxu0
        %v8313 = vadd.f32 %v8224, %v8312
        %8314 = vmatmul.bf16.gmra.mxu0 %v6088
        %v8315 = vpop.f32.mrf.mxu0
        %v8316 = vadd.f32 %v8227, %v8315
        %v8317 = vpop.f32.mrf.mxu0
        %v8318 = vadd.f32 %v8229, %v8317
        %8319 = vmatmul.bf16.gmra.mxu0 %v6091
        %v8320 = vpop.f32.mrf.mxu0
        %v8321 = vadd.f32 %v8232, %v8320
        %v8322 = vpop.f32.mrf.mxu0
        %v8323 = vadd.f32 %v8234, %v8322
        %8324 = vmatmul.bf16.gmra.mxu0 %v6094
        %v8325 = vpop.f32.mrf.mxu0
        %v8326 = vadd.f32 %v8237, %v8325
        %v8327 = vpop.f32.mrf.mxu0
        %v8328 = vadd.f32 %v8239, %v8327
        %8329 = vmatmul.bf16.gmra.mxu0 %v6097
        %v8330 = vpop.f32.mrf.mxu0
        %v8331 = vadd.f32 %v8242, %v8330
        %v8332 = vpop.f32.mrf.mxu0
        %v8333 = vadd.f32 %v8244, %v8332
        %8334 = vmatmul.bf16.gmra.mxu0 %v6100
        %v8335 = vpop.f32.mrf.mxu0
        %v8336 = vadd.f32 %v8247, %v8335
        %v8337 = vpop.f32.mrf.mxu0
        %v8338 = vadd.f32 %v8249, %v8337
        %8339 = vmatmul.bf16.gmra.mxu0 %v6103
        %v8340 = vpop.f32.mrf.mxu0
        %v8341 = vadd.f32 %v8252, %v8340
        %v8342 = vpop.f32.mrf.mxu0
        %v8343 = vadd.f32 %v8254, %v8342
        %8344 = vmatmul.bf16.gmra.mxu0 %v6106
        %v8345 = vpop.f32.mrf.mxu0
        %v8346 = vadd.f32 %v8257, %v8345
        %v8347 = vpop.f32.mrf.mxu0
        %v8348 = vadd.f32 %v8259, %v8347
        %8349 = vmatmul.bf16.gmra.mxu0 %v6109
        %v8350 = vpop.f32.mrf.mxu0
        %v8351 = vadd.f32 %v8262, %v8350
        %v8352 = vpop.f32.mrf.mxu0
        %v8353 = vadd.f32 %v8264, %v8352
        %8354 = vmatmul.bf16.gmra.mxu0 %v6112
        %v8355 = vpop.f32.mrf.mxu0
        %v8356 = vadd.f32 %v8267, %v8355
        %v8357 = vpop.f32.mrf.mxu0
        %v8358 = vadd.f32 %v8269, %v8357
        %8359 = vmatmul.bf16.gmra.mxu0 %v6115
        %v8360 = vpop.f32.mrf.mxu0
        %v8361 = vadd.f32 %v8272, %v8360
        %v8362 = vpop.f32.mrf.mxu0
        %v8363 = vadd.f32 %v8274, %v8362
        %8364 = vmatmul.bf16.gmra.mxu0 %v6118
        %v8365 = vpop.f32.mrf.mxu0
        %v8366 = vadd.f32 %v8277, %v8365
        %v8367 = vpop.f32.mrf.mxu0
        %v8368 = vadd.f32 %v8279, %v8367
        %8369 = vmatmul.bf16.gmra.mxu0 %v6121
        %v8370 = vpop.f32.mrf.mxu0
        %v8371 = vadd.f32 %v8282, %v8370
        %v8372 = vpop.f32.mrf.mxu0
        %v8373 = vadd.f32 %v8284, %v8372
        %8374 = vmatmul.bf16.gmra.mxu0 %v6124
        %v8375 = vpop.f32.mrf.mxu0
        %v8376 = vadd.f32 %v8287, %v8375
        %v8377 = vpop.f32.mrf.mxu0
        %v8378 = vadd.f32 %v8289, %v8377
        %8379 = vmatmul.bf16.gmra.mxu0 %v7969
        %v8380 = vpop.f32.mrf.mxu0
        %v8381 = vadd.f32 %v8292, %v8380
        %v8382 = vpop.f32.mrf.mxu0
        %v8383 = vadd.f32 %v8294, %v8382
        %8384 = vmatmul.bf16.gmra.mxu0 %v7972
        %v8385 = vpop.f32.mrf.mxu0
        %v8386 = vadd.f32 %v8297, %v8385
        %v8387 = vpop.f32.mrf.mxu0
        %v8388 = vadd.f32 %v8299, %v8387
        %8389 = vdwg.mxu0
        %v8390 = vadd.f32 %v6948, %v8311
        %v8391 = vadd.f32 %v6950, %v8313
        %v8392 = vadd.f32 %v6953, %v8316
        %v8393 = vadd.f32 %v6955, %v8318
        %v8394 = vadd.f32 %v6958, %v8321
        %v8395 = vadd.f32 %v6960, %v8323
        %v8396 = vadd.f32 %v6963, %v8326
        %v8397 = vadd.f32 %v6965, %v8328
        %v8398 = vadd.f32 %v6968, %v8331
        %v8399 = vadd.f32 %v6970, %v8333
        %v8400 = vadd.f32 %v6973, %v8336
        %v8401 = vadd.f32 %v6975, %v8338
        %v8402 = vadd.f32 %v6978, %v8341
        %v8403 = vadd.f32 %v6980, %v8343
        %v8404 = vadd.f32 %v6983, %v8346
        %v8405 = vadd.f32 %v6985, %v8348
        %v8406 = vadd.f32 %v6988, %v8351
        %v8407 = vadd.f32 %v6990, %v8353
        %v8408 = vadd.f32 %v6993, %v8356
        %v8409 = vadd.f32 %v6995, %v8358
        %v8410 = vadd.f32 %v6998, %v8361
        %v8411 = vadd.f32 %v7000, %v8363
        %v8412 = vadd.f32 %v7003, %v8366
        %v8413 = vadd.f32 %v7005, %v8368
        %v8414 = vadd.f32 %v7008, %v8371
        %v8415 = vadd.f32 %v7010, %v8373
        %v8416 = vadd.f32 %v7013, %v8376
        %v8417 = vadd.f32 %v7015, %v8378
        %v8418 = vadd.f32 %v7018, %v8381
        %v8419 = vadd.f32 %v7020, %v8383
        %v8420 = vadd.f32 %v7023, %v8386
        %v8421 = vadd.f32 %v7025, %v8388
        %s8422 = scalar_lea.vmem %s5, 384
        %v8423 = vld [vmem:[%s8422] sm:$0xf]
        %v8424 = vld [vmem:[%s8422 + $0x4] sm:$0xf]
        %v8425 = vld [vmem:[%s8422 + $0x8] sm:$0xf]
        %v8426 = vld [vmem:[%s8422 + $0xc] sm:$0xf]
        %v8427 = vld [vmem:[%s8422 + $0x10] sm:$0xf]
        %v8428 = vld [vmem:[%s8422 + $0x14] sm:$0xf]
        %v8429 = vld [vmem:[%s8422 + $0x18] sm:$0xf]
        %v8430 = vld [vmem:[%s8422 + $0x1c] sm:$0xf]
        %v8431 = vld [vmem:[%s8422 + $0x20] sm:$0xf]
        %v8432 = vld [vmem:[%s8422 + $0x24] sm:$0xf]
        %v8433 = vld [vmem:[%s8422 + $0x28] sm:$0xf]
        %v8434 = vld [vmem:[%s8422 + $0x2c] sm:$0xf]
        %v8435 = vld [vmem:[%s8422 + $0x30] sm:$0xf]
        %v8436 = vld [vmem:[%s8422 + $0x34] sm:$0xf]
        %v8437 = vld [vmem:[%s8422 + $0x38] sm:$0xf]
        %v8438 = vld [vmem:[%s8422 + $0x3c] sm:$0xf]
        %v8439 = vld [vmem:[%s8422 + $0x40] sm:$0xf]
        %v8440 = vld [vmem:[%s8422 + $0x44] sm:$0xf]
        %v8441 = vld [vmem:[%s8422 + $0x48] sm:$0xf]
        %v8442 = vld [vmem:[%s8422 + $0x4c] sm:$0xf]
        %v8443 = vld [vmem:[%s8422 + $0x50] sm:$0xf]
        %v8444 = vld [vmem:[%s8422 + $0x54] sm:$0xf]
        %v8445 = vld [vmem:[%s8422 + $0x58] sm:$0xf]
        %v8446 = vld [vmem:[%s8422 + $0x5c] sm:$0xf]
        %v8447 = vld [vmem:[%s8422 + $0x60] sm:$0xf]
        %v8448 = vld [vmem:[%s8422 + $0x64] sm:$0xf]
        %v8449 = vld [vmem:[%s8422 + $0x68] sm:$0xf]
        %v8450 = vld [vmem:[%s8422 + $0x6c] sm:$0xf]
        %v8451 = vld [vmem:[%s8422 + $0x70] sm:$0xf]
        %v8452 = vld [vmem:[%s8422 + $0x74] sm:$0xf]
        %v8453 = vld [vmem:[%s8422 + $0x78] sm:$0xf]
        %v8454 = vld [vmem:[%s8422 + $0x7c] sm:$0xf]
        %v8455 = vld [vmem:[%s8422 + $0x80] sm:$0xf]
        %v8456 = vld [vmem:[%s8422 + $0x84] sm:$0xf]
        %v8457 = vld [vmem:[%s8422 + $0x88] sm:$0xf]
        %v8458 = vld [vmem:[%s8422 + $0x8c] sm:$0xf]
        %v8459 = vld [vmem:[%s8422 + $0x90] sm:$0xf]
        %v8460 = vld [vmem:[%s8422 + $0x94] sm:$0xf]
        %v8461 = vld [vmem:[%s8422 + $0x98] sm:$0xf]
        %v8462 = vld [vmem:[%s8422 + $0x9c] sm:$0xf]
        %v8463 = vld [vmem:[%s8422 + $0xa0] sm:$0xf]
        %v8464 = vld [vmem:[%s8422 + $0xa4] sm:$0xf]
        %v8465 = vld [vmem:[%s8422 + $0xa8] sm:$0xf]
        %v8466 = vld [vmem:[%s8422 + $0xac] sm:$0xf]
        %v8467 = vld [vmem:[%s8422 + $0xb0] sm:$0xf]
        %v8468 = vld [vmem:[%s8422 + $0xb4] sm:$0xf]
        %v8469 = vld [vmem:[%s8422 + $0xb8] sm:$0xf]
        %v8470 = vld [vmem:[%s8422 + $0xbc] sm:$0xf]
        %v8519 = vunpack.c.l.b16 %v8423
        %v8520 = vunpack.c.l.b16 %v8424
        %v8521 = vunpack.c.l.b16 %v8425
        %v8522 = vunpack.c.l.b16 %v8426
        %v8523 = vunpack.c.l.b16 %v8427
        %v8524 = vunpack.c.l.b16 %v8428
        %v8525 = vunpack.c.l.b16 %v8429
        %v8526 = vunpack.c.l.b16 %v8430
        %v8527 = vunpack.c.l.b16 %v8431
        %v8528 = vunpack.c.l.b16 %v8432
        %v8529 = vunpack.c.l.b16 %v8433
        %v8530 = vunpack.c.l.b16 %v8434
        %v8531 = vunpack.c.l.b16 %v8435
        %v8532 = vunpack.c.l.b16 %v8436
        %v8533 = vunpack.c.l.b16 %v8437
        %v8534 = vunpack.c.l.b16 %v8438
        %v8535 = vunpack.c.l.b16 %v8439
        %v8536 = vunpack.c.l.b16 %v8440
        %v8537 = vunpack.c.l.b16 %v8441
        %v8538 = vunpack.c.l.b16 %v8442
        %v8539 = vunpack.c.l.b16 %v8443
        %v8540 = vunpack.c.l.b16 %v8444
        %v8541 = vunpack.c.l.b16 %v8445
        %v8542 = vunpack.c.l.b16 %v8446
        %v8543 = vunpack.c.l.b16 %v8447
        %v8544 = vunpack.c.l.b16 %v8448
        %v8545 = vunpack.c.l.b16 %v8449
        %v8546 = vunpack.c.l.b16 %v8450
        %v8547 = vunpack.c.l.b16 %v8451
        %v8548 = vunpack.c.l.b16 %v8452
        %v8549 = vunpack.c.l.b16 %v8453
        %v8550 = vunpack.c.l.b16 %v8454
        %v8551 = vunpack.c.l.b16 %v8455
        %v8552 = vunpack.c.l.b16 %v8456
        %v8553 = vunpack.c.l.b16 %v8457
        %v8554 = vunpack.c.l.b16 %v8458
        %v8555 = vunpack.c.l.b16 %v8459
        %v8556 = vunpack.c.l.b16 %v8460
        %v8557 = vunpack.c.l.b16 %v8461
        %v8558 = vunpack.c.l.b16 %v8462
        %v8559 = vunpack.c.l.b16 %v8463
        %v8560 = vunpack.c.l.b16 %v8464
        %v8561 = vunpack.c.l.b16 %v8465
        %v8562 = vunpack.c.l.b16 %v8466
        %v8563 = vunpack.c.l.b16 %v8467
        %v8564 = vunpack.c.l.b16 %v8468
        %v8565 = vunpack.c.l.b16 %v8469
        %v8566 = vunpack.c.l.b16 %v8470
        %v8567 = vpack.c.b16 %v8520, %v8519
        %v8568 = vpack.c.b16 %v8522, %v8521
        %v8569 = vpack.c.b16 %v8524, %v8523
        %v8570 = vpack.c.b16 %v8526, %v8525
        %v8571 = vpack.c.b16 %v8528, %v8527
        %v8572 = vpack.c.b16 %v8530, %v8529
        %v8573 = vpack.c.b16 %v8532, %v8531
        %v8574 = vpack.c.b16 %v8534, %v8533
        %v8575 = vpack.c.b16 %v8536, %v8535
        %v8576 = vpack.c.b16 %v8538, %v8537
        %v8577 = vpack.c.b16 %v8540, %v8539
        %v8578 = vpack.c.b16 %v8542, %v8541
        %v8579 = vpack.c.b16 %v8544, %v8543
        %v8580 = vpack.c.b16 %v8546, %v8545
        %v8581 = vpack.c.b16 %v8548, %v8547
        %v8582 = vpack.c.b16 %v8550, %v8549
        %v8583 = vpack.c.b16 %v8552, %v8551
        %v8584 = vpack.c.b16 %v8554, %v8553
        %v8585 = vpack.c.b16 %v8556, %v8555
        %v8586 = vpack.c.b16 %v8558, %v8557
        %v8587 = vpack.c.b16 %v8560, %v8559
        %v8588 = vpack.c.b16 %v8562, %v8561
        %v8589 = vpack.c.b16 %v8564, %v8563
        %v8590 = vpack.c.b16 %v8566, %v8565
        %8615 = vmatpush.bf16.msra.mxu0 %v8574
        %8616 = vmatpush.bf16.msra.mxu0 %v8573
        %8617 = vmatpush.bf16.msra.mxu0 %v8572
        %8618 = vmatpush.bf16.msra.mxu0 %v8571
        %8619 = vmatpush.bf16.msra.mxu0 %v8570
        %8620 = vmatpush.bf16.msra.mxu0 %v8569
        %8621 = vmatpush.bf16.msra.mxu0 %v8568
        %8622 = vmatpush.bf16.msra.mxu0 %v8567
        %8623 = vmatmul.bf16.gmra.mxu0 %v6083
        %v8624 = vpop.f32.mrf.mxu0
        %v8625 = vadd.f32 0.0, %v8624
        %v8626 = vpop.f32.mrf.mxu0
        %v8627 = vadd.f32 0.0, %v8626
        %8628 = vmatmul.bf16.gmra.mxu0 %v6086
        %v8629 = vpop.f32.mrf.mxu0
        %v8630 = vadd.f32 0.0, %v8629
        %v8631 = vpop.f32.mrf.mxu0
        %v8632 = vadd.f32 0.0, %v8631
        %8633 = vmatmul.bf16.gmra.mxu0 %v6089
        %v8634 = vpop.f32.mrf.mxu0
        %v8635 = vadd.f32 0.0, %v8634
        %v8636 = vpop.f32.mrf.mxu0
        %v8637 = vadd.f32 0.0, %v8636
        %8638 = vmatmul.bf16.gmra.mxu0 %v6092
        %v8639 = vpop.f32.mrf.mxu0
        %v8640 = vadd.f32 0.0, %v8639
        %v8641 = vpop.f32.mrf.mxu0
        %v8642 = vadd.f32 0.0, %v8641
        %8643 = vmatmul.bf16.gmra.mxu0 %v6095
        %v8644 = vpop.f32.mrf.mxu0
        %v8645 = vadd.f32 0.0, %v8644
        %v8646 = vpop.f32.mrf.mxu0
        %v8647 = vadd.f32 0.0, %v8646
        %8648 = vmatmul.bf16.gmra.mxu0 %v6098
        %v8649 = vpop.f32.mrf.mxu0
        %v8650 = vadd.f32 0.0, %v8649
        %v8651 = vpop.f32.mrf.mxu0
        %v8652 = vadd.f32 0.0, %v8651
        %8653 = vmatmul.bf16.gmra.mxu0 %v6101
        %v8654 = vpop.f32.mrf.mxu0
        %v8655 = vadd.f32 0.0, %v8654
        %v8656 = vpop.f32.mrf.mxu0
        %v8657 = vadd.f32 0.0, %v8656
        %8658 = vmatmul.bf16.gmra.mxu0 %v6104
        %v8659 = vpop.f32.mrf.mxu0
        %v8660 = vadd.f32 0.0, %v8659
        %v8661 = vpop.f32.mrf.mxu0
        %v8662 = vadd.f32 0.0, %v8661
        %8663 = vmatmul.bf16.gmra.mxu0 %v6107
        %v8664 = vpop.f32.mrf.mxu0
        %v8665 = vadd.f32 0.0, %v8664
        %v8666 = vpop.f32.mrf.mxu0
        %v8667 = vadd.f32 0.0, %v8666
        %8668 = vmatmul.bf16.gmra.mxu0 %v6110
        %v8669 = vpop.f32.mrf.mxu0
        %v8670 = vadd.f32 0.0, %v8669
        %v8671 = vpop.f32.mrf.mxu0
        %v8672 = vadd.f32 0.0, %v8671
        %8673 = vmatmul.bf16.gmra.mxu0 %v6113
        %v8674 = vpop.f32.mrf.mxu0
        %v8675 = vadd.f32 0.0, %v8674
        %v8676 = vpop.f32.mrf.mxu0
        %v8677 = vadd.f32 0.0, %v8676
        %8678 = vmatmul.bf16.gmra.mxu0 %v6116
        %v8679 = vpop.f32.mrf.mxu0
        %v8680 = vadd.f32 0.0, %v8679
        %v8681 = vpop.f32.mrf.mxu0
        %v8682 = vadd.f32 0.0, %v8681
        %8683 = vmatmul.bf16.gmra.mxu0 %v6119
        %v8684 = vpop.f32.mrf.mxu0
        %v8685 = vadd.f32 0.0, %v8684
        %v8686 = vpop.f32.mrf.mxu0
        %v8687 = vadd.f32 0.0, %v8686
        %8688 = vmatmul.bf16.gmra.mxu0 %v6122
        %v8689 = vpop.f32.mrf.mxu0
        %v8690 = vadd.f32 0.0, %v8689
        %v8691 = vpop.f32.mrf.mxu0
        %v8692 = vadd.f32 0.0, %v8691
        %8693 = vmatmul.bf16.gmra.mxu0 %v7967
        %v8694 = vpop.f32.mrf.mxu0
        %v8695 = vadd.f32 0.0, %v8694
        %v8696 = vpop.f32.mrf.mxu0
        %v8697 = vadd.f32 0.0, %v8696
        %8698 = vmatmul.bf16.gmra.mxu0 %v7970
        %v8699 = vpop.f32.mrf.mxu0
        %v8700 = vadd.f32 0.0, %v8699
        %v8701 = vpop.f32.mrf.mxu0
        %v8702 = vadd.f32 0.0, %v8701
        %8703 = vdwg.mxu0
        %8704 = vmatpush.bf16.msra.mxu0 %v8582
        %8705 = vmatpush.bf16.msra.mxu0 %v8581
        %8706 = vmatpush.bf16.msra.mxu0 %v8580
        %8707 = vmatpush.bf16.msra.mxu0 %v8579
        %8708 = vmatpush.bf16.msra.mxu0 %v8578
        %8709 = vmatpush.bf16.msra.mxu0 %v8577
        %8710 = vmatpush.bf16.msra.mxu0 %v8576
        %8711 = vmatpush.bf16.msra.mxu0 %v8575
        %8712 = vmatmul.bf16.gmra.mxu0 %v6084
        %v8713 = vpop.f32.mrf.mxu0
        %v8714 = vadd.f32 %v8625, %v8713
        %v8715 = vpop.f32.mrf.mxu0
        %v8716 = vadd.f32 %v8627, %v8715
        %8717 = vmatmul.bf16.gmra.mxu0 %v6087
        %v8718 = vpop.f32.mrf.mxu0
        %v8719 = vadd.f32 %v8630, %v8718
        %v8720 = vpop.f32.mrf.mxu0
        %v8721 = vadd.f32 %v8632, %v8720
        %8722 = vmatmul.bf16.gmra.mxu0 %v6090
        %v8723 = vpop.f32.mrf.mxu0
        %v8724 = vadd.f32 %v8635, %v8723
        %v8725 = vpop.f32.mrf.mxu0
        %v8726 = vadd.f32 %v8637, %v8725
        %8727 = vmatmul.bf16.gmra.mxu0 %v6093
        %v8728 = vpop.f32.mrf.mxu0
        %v8729 = vadd.f32 %v8640, %v8728
        %v8730 = vpop.f32.mrf.mxu0
        %v8731 = vadd.f32 %v8642, %v8730
        %8732 = vmatmul.bf16.gmra.mxu0 %v6096
        %v8733 = vpop.f32.mrf.mxu0
        %v8734 = vadd.f32 %v8645, %v8733
        %v8735 = vpop.f32.mrf.mxu0
        %v8736 = vadd.f32 %v8647, %v8735
        %8737 = vmatmul.bf16.gmra.mxu0 %v6099
        %v8738 = vpop.f32.mrf.mxu0
        %v8739 = vadd.f32 %v8650, %v8738
        %v8740 = vpop.f32.mrf.mxu0
        %v8741 = vadd.f32 %v8652, %v8740
        %8742 = vmatmul.bf16.gmra.mxu0 %v6102
        %v8743 = vpop.f32.mrf.mxu0
        %v8744 = vadd.f32 %v8655, %v8743
        %v8745 = vpop.f32.mrf.mxu0
        %v8746 = vadd.f32 %v8657, %v8745
        %8747 = vmatmul.bf16.gmra.mxu0 %v6105
        %v8748 = vpop.f32.mrf.mxu0
        %v8749 = vadd.f32 %v8660, %v8748
        %v8750 = vpop.f32.mrf.mxu0
        %v8751 = vadd.f32 %v8662, %v8750
        %8752 = vmatmul.bf16.gmra.mxu0 %v6108
        %v8753 = vpop.f32.mrf.mxu0
        %v8754 = vadd.f32 %v8665, %v8753
        %v8755 = vpop.f32.mrf.mxu0
        %v8756 = vadd.f32 %v8667, %v8755
        %8757 = vmatmul.bf16.gmra.mxu0 %v6111
        %v8758 = vpop.f32.mrf.mxu0
        %v8759 = vadd.f32 %v8670, %v8758
        %v8760 = vpop.f32.mrf.mxu0
        %v8761 = vadd.f32 %v8672, %v8760
        %8762 = vmatmul.bf16.gmra.mxu0 %v6114
        %v8763 = vpop.f32.mrf.mxu0
        %v8764 = vadd.f32 %v8675, %v8763
        %v8765 = vpop.f32.mrf.mxu0
        %v8766 = vadd.f32 %v8677, %v8765
        %8767 = vmatmul.bf16.gmra.mxu0 %v6117
        %v8768 = vpop.f32.mrf.mxu0
        %v8769 = vadd.f32 %v8680, %v8768
        %v8770 = vpop.f32.mrf.mxu0
        %v8771 = vadd.f32 %v8682, %v8770
        %8772 = vmatmul.bf16.gmra.mxu0 %v6120
        %v8773 = vpop.f32.mrf.mxu0
        %v8774 = vadd.f32 %v8685, %v8773
        %v8775 = vpop.f32.mrf.mxu0
        %v8776 = vadd.f32 %v8687, %v8775
        %8777 = vmatmul.bf16.gmra.mxu0 %v6123
        %v8778 = vpop.f32.mrf.mxu0
        %v8779 = vadd.f32 %v8690, %v8778
        %v8780 = vpop.f32.mrf.mxu0
        %v8781 = vadd.f32 %v8692, %v8780
        %8782 = vmatmul.bf16.gmra.mxu0 %v7968
        %v8783 = vpop.f32.mrf.mxu0
        %v8784 = vadd.f32 %v8695, %v8783
        %v8785 = vpop.f32.mrf.mxu0
        %v8786 = vadd.f32 %v8697, %v8785
        %8787 = vmatmul.bf16.gmra.mxu0 %v7971
        %v8788 = vpop.f32.mrf.mxu0
        %v8789 = vadd.f32 %v8700, %v8788
        %v8790 = vpop.f32.mrf.mxu0
        %v8791 = vadd.f32 %v8702, %v8790
        %8792 = vdwg.mxu0
        %8793 = vmatpush.bf16.msra.mxu0 %v8590
        %8794 = vmatpush.bf16.msra.mxu0 %v8589
        %8795 = vmatpush.bf16.msra.mxu0 %v8588
        %8796 = vmatpush.bf16.msra.mxu0 %v8587
        %8797 = vmatpush.bf16.msra.mxu0 %v8586
        %8798 = vmatpush.bf16.msra.mxu0 %v8585
        %8799 = vmatpush.bf16.msra.mxu0 %v8584
        %8800 = vmatpush.bf16.msra.mxu0 %v8583
        %8801 = vmatmul.bf16.gmra.mxu0 %v6085
        %v8802 = vpop.f32.mrf.mxu0
        %v8803 = vadd.f32 %v8714, %v8802
        %v8804 = vpop.f32.mrf.mxu0
        %v8805 = vadd.f32 %v8716, %v8804
        %8806 = vmatmul.bf16.gmra.mxu0 %v6088
        %v8807 = vpop.f32.mrf.mxu0
        %v8808 = vadd.f32 %v8719, %v8807
        %v8809 = vpop.f32.mrf.mxu0
        %v8810 = vadd.f32 %v8721, %v8809
        %8811 = vmatmul.bf16.gmra.mxu0 %v6091
        %v8812 = vpop.f32.mrf.mxu0
        %v8813 = vadd.f32 %v8724, %v8812
        %v8814 = vpop.f32.mrf.mxu0
        %v8815 = vadd.f32 %v8726, %v8814
        %8816 = vmatmul.bf16.gmra.mxu0 %v6094
        %v8817 = vpop.f32.mrf.mxu0
        %v8818 = vadd.f32 %v8729, %v8817
        %v8819 = vpop.f32.mrf.mxu0
        %v8820 = vadd.f32 %v8731, %v8819
        %8821 = vmatmul.bf16.gmra.mxu0 %v6097
        %v8822 = vpop.f32.mrf.mxu0
        %v8823 = vadd.f32 %v8734, %v8822
        %v8824 = vpop.f32.mrf.mxu0
        %v8825 = vadd.f32 %v8736, %v8824
        %8826 = vmatmul.bf16.gmra.mxu0 %v6100
        %v8827 = vpop.f32.mrf.mxu0
        %v8828 = vadd.f32 %v8739, %v8827
        %v8829 = vpop.f32.mrf.mxu0
        %v8830 = vadd.f32 %v8741, %v8829
        %8831 = vmatmul.bf16.gmra.mxu0 %v6103
        %v8832 = vpop.f32.mrf.mxu0
        %v8833 = vadd.f32 %v8744, %v8832
        %v8834 = vpop.f32.mrf.mxu0
        %v8835 = vadd.f32 %v8746, %v8834
        %8836 = vmatmul.bf16.gmra.mxu0 %v6106
        %v8837 = vpop.f32.mrf.mxu0
        %v8838 = vadd.f32 %v8749, %v8837
        %v8839 = vpop.f32.mrf.mxu0
        %v8840 = vadd.f32 %v8751, %v8839
        %8841 = vmatmul.bf16.gmra.mxu0 %v6109
        %v8842 = vpop.f32.mrf.mxu0
        %v8843 = vadd.f32 %v8754, %v8842
        %v8844 = vpop.f32.mrf.mxu0
        %v8845 = vadd.f32 %v8756, %v8844
        %8846 = vmatmul.bf16.gmra.mxu0 %v6112
        %v8847 = vpop.f32.mrf.mxu0
        %v8848 = vadd.f32 %v8759, %v8847
        %v8849 = vpop.f32.mrf.mxu0
        %v8850 = vadd.f32 %v8761, %v8849
        %8851 = vmatmul.bf16.gmra.mxu0 %v6115
        %v8852 = vpop.f32.mrf.mxu0
        %v8853 = vadd.f32 %v8764, %v8852
        %v8854 = vpop.f32.mrf.mxu0
        %v8855 = vadd.f32 %v8766, %v8854
        %8856 = vmatmul.bf16.gmra.mxu0 %v6118
        %v8857 = vpop.f32.mrf.mxu0
        %v8858 = vadd.f32 %v8769, %v8857
        %v8859 = vpop.f32.mrf.mxu0
        %v8860 = vadd.f32 %v8771, %v8859
        %8861 = vmatmul.bf16.gmra.mxu0 %v6121
        %v8862 = vpop.f32.mrf.mxu0
        %v8863 = vadd.f32 %v8774, %v8862
        %v8864 = vpop.f32.mrf.mxu0
        %v8865 = vadd.f32 %v8776, %v8864
        %8866 = vmatmul.bf16.gmra.mxu0 %v6124
        %v8867 = vpop.f32.mrf.mxu0
        %v8868 = vadd.f32 %v8779, %v8867
        %v8869 = vpop.f32.mrf.mxu0
        %v8870 = vadd.f32 %v8781, %v8869
        %8871 = vmatmul.bf16.gmra.mxu0 %v7969
        %v8872 = vpop.f32.mrf.mxu0
        %v8873 = vadd.f32 %v8784, %v8872
        %v8874 = vpop.f32.mrf.mxu0
        %v8875 = vadd.f32 %v8786, %v8874
        %8876 = vmatmul.bf16.gmra.mxu0 %v7972
        %v8877 = vpop.f32.mrf.mxu0
        %v8878 = vadd.f32 %v8789, %v8877
        %v8879 = vpop.f32.mrf.mxu0
        %v8880 = vadd.f32 %v8791, %v8879
        %8881 = vdwg.mxu0
        %v8882 = vadd.f32 %v7819, %v8803
        %v8883 = vadd.f32 %v7821, %v8805
        %v8884 = vadd.f32 %v7824, %v8808
        %v8885 = vadd.f32 %v7826, %v8810
        %v8886 = vadd.f32 %v7829, %v8813
        %v8887 = vadd.f32 %v7831, %v8815
        %v8888 = vadd.f32 %v7834, %v8818
        %v8889 = vadd.f32 %v7836, %v8820
        %v8890 = vadd.f32 %v7839, %v8823
        %v8891 = vadd.f32 %v7841, %v8825
        %v8892 = vadd.f32 %v7844, %v8828
        %v8893 = vadd.f32 %v7846, %v8830
        %v8894 = vadd.f32 %v7849, %v8833
        %v8895 = vadd.f32 %v7851, %v8835
        %v8896 = vadd.f32 %v7854, %v8838
        %v8897 = vadd.f32 %v7856, %v8840
        %v8898 = vadd.f32 %v7859, %v8843
        %v8899 = vadd.f32 %v7861, %v8845
        %v8900 = vadd.f32 %v7864, %v8848
        %v8901 = vadd.f32 %v7866, %v8850
        %v8902 = vadd.f32 %v7869, %v8853
        %v8903 = vadd.f32 %v7871, %v8855
        %v8904 = vadd.f32 %v7874, %v8858
        %v8905 = vadd.f32 %v7876, %v8860
        %v8906 = vadd.f32 %v7879, %v8863
        %v8907 = vadd.f32 %v7881, %v8865
        %v8908 = vadd.f32 %v7884, %v8868
        %v8909 = vadd.f32 %v7886, %v8870
        %v8910 = vadd.f32 %v7889, %v8873
        %v8911 = vadd.f32 %v7891, %v8875
        %v8912 = vadd.f32 %v7894, %v8878
        %v8913 = vadd.f32 %v7896, %v8880
        %s8914 = scalar_lea.vmem %s4, 576
        %v8915 = vld [vmem:[%s8914] sm:$0xf]
        %v8916 = vld [vmem:[%s8914 + $0x4] sm:$0xf]
        %v8917 = vld [vmem:[%s8914 + $0x8] sm:$0xf]
        %v8918 = vld [vmem:[%s8914 + $0xc] sm:$0xf]
        %v8919 = vld [vmem:[%s8914 + $0x10] sm:$0xf]
        %v8920 = vld [vmem:[%s8914 + $0x14] sm:$0xf]
        %v8921 = vld [vmem:[%s8914 + $0x18] sm:$0xf]
        %v8922 = vld [vmem:[%s8914 + $0x1c] sm:$0xf]
        %v8923 = vld [vmem:[%s8914 + $0x20] sm:$0xf]
        %v8924 = vld [vmem:[%s8914 + $0x24] sm:$0xf]
        %v8925 = vld [vmem:[%s8914 + $0x28] sm:$0xf]
        %v8926 = vld [vmem:[%s8914 + $0x2c] sm:$0xf]
        %v8927 = vld [vmem:[%s8914 + $0x30] sm:$0xf]
        %v8928 = vld [vmem:[%s8914 + $0x34] sm:$0xf]
        %v8929 = vld [vmem:[%s8914 + $0x38] sm:$0xf]
        %v8930 = vld [vmem:[%s8914 + $0x3c] sm:$0xf]
        %v8931 = vld [vmem:[%s8914 + $0x40] sm:$0xf]
        %v8932 = vld [vmem:[%s8914 + $0x44] sm:$0xf]
        %v8933 = vld [vmem:[%s8914 + $0x48] sm:$0xf]
        %v8934 = vld [vmem:[%s8914 + $0x4c] sm:$0xf]
        %v8935 = vld [vmem:[%s8914 + $0x50] sm:$0xf]
        %v8936 = vld [vmem:[%s8914 + $0x54] sm:$0xf]
        %v8937 = vld [vmem:[%s8914 + $0x58] sm:$0xf]
        %v8938 = vld [vmem:[%s8914 + $0x5c] sm:$0xf]
        %v8939 = vld [vmem:[%s8914 + $0x60] sm:$0xf]
        %v8940 = vld [vmem:[%s8914 + $0x64] sm:$0xf]
        %v8941 = vld [vmem:[%s8914 + $0x68] sm:$0xf]
        %v8942 = vld [vmem:[%s8914 + $0x6c] sm:$0xf]
        %v8943 = vld [vmem:[%s8914 + $0x70] sm:$0xf]
        %v8944 = vld [vmem:[%s8914 + $0x74] sm:$0xf]
        %v8945 = vld [vmem:[%s8914 + $0x78] sm:$0xf]
        %v8946 = vld [vmem:[%s8914 + $0x7c] sm:$0xf]
        %v8947 = vld [vmem:[%s8914 + $0x80] sm:$0xf]
        %v8948 = vld [vmem:[%s8914 + $0x84] sm:$0xf]
        %v8949 = vld [vmem:[%s8914 + $0x88] sm:$0xf]
        %v8950 = vld [vmem:[%s8914 + $0x8c] sm:$0xf]
        %v8951 = vld [vmem:[%s8914 + $0x90] sm:$0xf]
        %v8952 = vld [vmem:[%s8914 + $0x94] sm:$0xf]
        %v8953 = vld [vmem:[%s8914 + $0x98] sm:$0xf]
        %v8954 = vld [vmem:[%s8914 + $0x9c] sm:$0xf]
        %v8955 = vld [vmem:[%s8914 + $0xa0] sm:$0xf]
        %v8956 = vld [vmem:[%s8914 + $0xa4] sm:$0xf]
        %v8957 = vld [vmem:[%s8914 + $0xa8] sm:$0xf]
        %v8958 = vld [vmem:[%s8914 + $0xac] sm:$0xf]
        %v8959 = vld [vmem:[%s8914 + $0xb0] sm:$0xf]
        %v8960 = vld [vmem:[%s8914 + $0xb4] sm:$0xf]
        %v8961 = vld [vmem:[%s8914 + $0xb8] sm:$0xf]
        %v8962 = vld [vmem:[%s8914 + $0xbc] sm:$0xf]
        %v8971 = vunpack.c.l.b16 %v5756
        %v8972 = vunpack.c.h.b16 %v5756
        %v8973 = vunpack.c.l.b16 %v5757
        %v8974 = vunpack.c.l.b16 %v5758
        %v8975 = vunpack.c.h.b16 %v5758
        %v8976 = vunpack.c.l.b16 %v5759
        %v8977 = vunpack.c.l.b16 %v5760
        %v8978 = vunpack.c.h.b16 %v5760
        %v8979 = vunpack.c.l.b16 %v5761
        %v8980 = vunpack.c.l.b16 %v5762
        %v8981 = vunpack.c.h.b16 %v5762
        %v8982 = vunpack.c.l.b16 %v5763
        %v8983 = vpack.c.b16 %v8974, %v8971
        %v8984 = vpack.c.b16 %v8975, %v8972
        %v8985 = vpack.c.b16 %v8976, %v8973
        %v8986 = vpack.c.b16 %v8980, %v8977
        %v8987 = vpack.c.b16 %v8981, %v8978
        %v8988 = vpack.c.b16 %v8982, %v8979
        %v9043 = vunpack.c.l.b16 %v8915
        %v9044 = vunpack.c.l.b16 %v8916
        %v9045 = vunpack.c.l.b16 %v8917
        %v9046 = vunpack.c.l.b16 %v8918
        %v9047 = vunpack.c.l.b16 %v8919
        %v9048 = vunpack.c.l.b16 %v8920
        %v9049 = vunpack.c.l.b16 %v8921
        %v9050 = vunpack.c.l.b16 %v8922
        %v9051 = vunpack.c.l.b16 %v8923
        %v9052 = vunpack.c.l.b16 %v8924
        %v9053 = vunpack.c.l.b16 %v8925
        %v9054 = vunpack.c.l.b16 %v8926
        %v9055 = vunpack.c.l.b16 %v8927
        %v9056 = vunpack.c.l.b16 %v8928
        %v9057 = vunpack.c.l.b16 %v8929
        %v9058 = vunpack.c.l.b16 %v8930
        %v9059 = vunpack.c.l.b16 %v8931
        %v9060 = vunpack.c.l.b16 %v8932
        %v9061 = vunpack.c.l.b16 %v8933
        %v9062 = vunpack.c.l.b16 %v8934
        %v9063 = vunpack.c.l.b16 %v8935
        %v9064 = vunpack.c.l.b16 %v8936
        %v9065 = vunpack.c.l.b16 %v8937
        %v9066 = vunpack.c.l.b16 %v8938
        %v9067 = vunpack.c.l.b16 %v8939
        %v9068 = vunpack.c.l.b16 %v8940
        %v9069 = vunpack.c.l.b16 %v8941
        %v9070 = vunpack.c.l.b16 %v8942
        %v9071 = vunpack.c.l.b16 %v8943
        %v9072 = vunpack.c.l.b16 %v8944
        %v9073 = vunpack.c.l.b16 %v8945
        %v9074 = vunpack.c.l.b16 %v8946
        %v9075 = vunpack.c.l.b16 %v8947
        %v9076 = vunpack.c.l.b16 %v8948
        %v9077 = vunpack.c.l.b16 %v8949
        %v9078 = vunpack.c.l.b16 %v8950
        %v9079 = vunpack.c.l.b16 %v8951
        %v9080 = vunpack.c.l.b16 %v8952
        %v9081 = vunpack.c.l.b16 %v8953
        %v9082 = vunpack.c.l.b16 %v8954
        %v9083 = vunpack.c.l.b16 %v8955
        %v9084 = vunpack.c.l.b16 %v8956
        %v9085 = vunpack.c.l.b16 %v8957
        %v9086 = vunpack.c.l.b16 %v8958
        %v9087 = vunpack.c.l.b16 %v8959
        %v9088 = vunpack.c.l.b16 %v8960
        %v9089 = vunpack.c.l.b16 %v8961
        %v9090 = vunpack.c.l.b16 %v8962
        %v9091 = vpack.c.b16 %v9044, %v9043
        %v9092 = vpack.c.b16 %v9046, %v9045
        %v9093 = vpack.c.b16 %v9048, %v9047
        %v9094 = vpack.c.b16 %v9050, %v9049
        %v9095 = vpack.c.b16 %v9052, %v9051
        %v9096 = vpack.c.b16 %v9054, %v9053
        %v9097 = vpack.c.b16 %v9056, %v9055
        %v9098 = vpack.c.b16 %v9058, %v9057
        %v9099 = vpack.c.b16 %v9060, %v9059
        %v9100 = vpack.c.b16 %v9062, %v9061
        %v9101 = vpack.c.b16 %v9064, %v9063
        %v9102 = vpack.c.b16 %v9066, %v9065
        %v9103 = vpack.c.b16 %v9068, %v9067
        %v9104 = vpack.c.b16 %v9070, %v9069
        %v9105 = vpack.c.b16 %v9072, %v9071
        %v9106 = vpack.c.b16 %v9074, %v9073
        %v9107 = vpack.c.b16 %v9076, %v9075
        %v9108 = vpack.c.b16 %v9078, %v9077
        %v9109 = vpack.c.b16 %v9080, %v9079
        %v9110 = vpack.c.b16 %v9082, %v9081
        %v9111 = vpack.c.b16 %v9084, %v9083
        %v9112 = vpack.c.b16 %v9086, %v9085
        %v9113 = vpack.c.b16 %v9088, %v9087
        %v9114 = vpack.c.b16 %v9090, %v9089
        %9139 = vmatpush.bf16.msra.mxu0 %v9098
        %9140 = vmatpush.bf16.msra.mxu0 %v9097
        %9141 = vmatpush.bf16.msra.mxu0 %v9096
        %9142 = vmatpush.bf16.msra.mxu0 %v9095
        %9143 = vmatpush.bf16.msra.mxu0 %v9094
        %9144 = vmatpush.bf16.msra.mxu0 %v9093
        %9145 = vmatpush.bf16.msra.mxu0 %v9092
        %9146 = vmatpush.bf16.msra.mxu0 %v9091
        %9147 = vmatmul.bf16.gmra.mxu0 %v6089
        %v9148 = vpop.f32.mrf.mxu0
        %v9149 = vadd.f32 0.0, %v9148
        %v9150 = vpop.f32.mrf.mxu0
        %v9151 = vadd.f32 0.0, %v9150
        %9152 = vmatmul.bf16.gmra.mxu0 %v6092
        %v9153 = vpop.f32.mrf.mxu0
        %v9154 = vadd.f32 0.0, %v9153
        %v9155 = vpop.f32.mrf.mxu0
        %v9156 = vadd.f32 0.0, %v9155
        %9157 = vmatmul.bf16.gmra.mxu0 %v6095
        %v9158 = vpop.f32.mrf.mxu0
        %v9159 = vadd.f32 0.0, %v9158
        %v9160 = vpop.f32.mrf.mxu0
        %v9161 = vadd.f32 0.0, %v9160
        %9162 = vmatmul.bf16.gmra.mxu0 %v6098
        %v9163 = vpop.f32.mrf.mxu0
        %v9164 = vadd.f32 0.0, %v9163
        %v9165 = vpop.f32.mrf.mxu0
        %v9166 = vadd.f32 0.0, %v9165
        %9167 = vmatmul.bf16.gmra.mxu0 %v6101
        %v9168 = vpop.f32.mrf.mxu0
        %v9169 = vadd.f32 0.0, %v9168
        %v9170 = vpop.f32.mrf.mxu0
        %v9171 = vadd.f32 0.0, %v9170
        %9172 = vmatmul.bf16.gmra.mxu0 %v6104
        %v9173 = vpop.f32.mrf.mxu0
        %v9174 = vadd.f32 0.0, %v9173
        %v9175 = vpop.f32.mrf.mxu0
        %v9176 = vadd.f32 0.0, %v9175
        %9177 = vmatmul.bf16.gmra.mxu0 %v6107
        %v9178 = vpop.f32.mrf.mxu0
        %v9179 = vadd.f32 0.0, %v9178
        %v9180 = vpop.f32.mrf.mxu0
        %v9181 = vadd.f32 0.0, %v9180
        %9182 = vmatmul.bf16.gmra.mxu0 %v6110
        %v9183 = vpop.f32.mrf.mxu0
        %v9184 = vadd.f32 0.0, %v9183
        %v9185 = vpop.f32.mrf.mxu0
        %v9186 = vadd.f32 0.0, %v9185
        %9187 = vmatmul.bf16.gmra.mxu0 %v6113
        %v9188 = vpop.f32.mrf.mxu0
        %v9189 = vadd.f32 0.0, %v9188
        %v9190 = vpop.f32.mrf.mxu0
        %v9191 = vadd.f32 0.0, %v9190
        %9192 = vmatmul.bf16.gmra.mxu0 %v6116
        %v9193 = vpop.f32.mrf.mxu0
        %v9194 = vadd.f32 0.0, %v9193
        %v9195 = vpop.f32.mrf.mxu0
        %v9196 = vadd.f32 0.0, %v9195
        %9197 = vmatmul.bf16.gmra.mxu0 %v6119
        %v9198 = vpop.f32.mrf.mxu0
        %v9199 = vadd.f32 0.0, %v9198
        %v9200 = vpop.f32.mrf.mxu0
        %v9201 = vadd.f32 0.0, %v9200
        %9202 = vmatmul.bf16.gmra.mxu0 %v6122
        %v9203 = vpop.f32.mrf.mxu0
        %v9204 = vadd.f32 0.0, %v9203
        %v9205 = vpop.f32.mrf.mxu0
        %v9206 = vadd.f32 0.0, %v9205
        %9207 = vmatmul.bf16.gmra.mxu0 %v7967
        %v9208 = vpop.f32.mrf.mxu0
        %v9209 = vadd.f32 0.0, %v9208
        %v9210 = vpop.f32.mrf.mxu0
        %v9211 = vadd.f32 0.0, %v9210
        %9212 = vmatmul.bf16.gmra.mxu0 %v7970
        %v9213 = vpop.f32.mrf.mxu0
        %v9214 = vadd.f32 0.0, %v9213
        %v9215 = vpop.f32.mrf.mxu0
        %v9216 = vadd.f32 0.0, %v9215
        %9217 = vmatmul.bf16.gmra.mxu0 %v8983
        %v9218 = vpop.f32.mrf.mxu0
        %v9219 = vadd.f32 0.0, %v9218
        %v9220 = vpop.f32.mrf.mxu0
        %v9221 = vadd.f32 0.0, %v9220
        %9222 = vmatmul.bf16.gmra.mxu0 %v8986
        %v9223 = vpop.f32.mrf.mxu0
        %v9224 = vadd.f32 0.0, %v9223
        %v9225 = vpop.f32.mrf.mxu0
        %v9226 = vadd.f32 0.0, %v9225
        %9227 = vdwg.mxu0
        %9228 = vmatpush.bf16.msra.mxu0 %v9106
        %9229 = vmatpush.bf16.msra.mxu0 %v9105
        %9230 = vmatpush.bf16.msra.mxu0 %v9104
        %9231 = vmatpush.bf16.msra.mxu0 %v9103
        %9232 = vmatpush.bf16.msra.mxu0 %v9102
        %9233 = vmatpush.bf16.msra.mxu0 %v9101
        %9234 = vmatpush.bf16.msra.mxu0 %v9100
        %9235 = vmatpush.bf16.msra.mxu0 %v9099
        %9236 = vmatmul.bf16.gmra.mxu0 %v6090
        %v9237 = vpop.f32.mrf.mxu0
        %v9238 = vadd.f32 %v9149, %v9237
        %v9239 = vpop.f32.mrf.mxu0
        %v9240 = vadd.f32 %v9151, %v9239
        %9241 = vmatmul.bf16.gmra.mxu0 %v6093
        %v9242 = vpop.f32.mrf.mxu0
        %v9243 = vadd.f32 %v9154, %v9242
        %v9244 = vpop.f32.mrf.mxu0
        %v9245 = vadd.f32 %v9156, %v9244
        %9246 = vmatmul.bf16.gmra.mxu0 %v6096
        %v9247 = vpop.f32.mrf.mxu0
        %v9248 = vadd.f32 %v9159, %v9247
        %v9249 = vpop.f32.mrf.mxu0
        %v9250 = vadd.f32 %v9161, %v9249
        %9251 = vmatmul.bf16.gmra.mxu0 %v6099
        %v9252 = vpop.f32.mrf.mxu0
        %v9253 = vadd.f32 %v9164, %v9252
        %v9254 = vpop.f32.mrf.mxu0
        %v9255 = vadd.f32 %v9166, %v9254
        %9256 = vmatmul.bf16.gmra.mxu0 %v6102
        %v9257 = vpop.f32.mrf.mxu0
        %v9258 = vadd.f32 %v9169, %v9257
        %v9259 = vpop.f32.mrf.mxu0
        %v9260 = vadd.f32 %v9171, %v9259
        %9261 = vmatmul.bf16.gmra.mxu0 %v6105
        %v9262 = vpop.f32.mrf.mxu0
        %v9263 = vadd.f32 %v9174, %v9262
        %v9264 = vpop.f32.mrf.mxu0
        %v9265 = vadd.f32 %v9176, %v9264
        %9266 = vmatmul.bf16.gmra.mxu0 %v6108
        %v9267 = vpop.f32.mrf.mxu0
        %v9268 = vadd.f32 %v9179, %v9267
        %v9269 = vpop.f32.mrf.mxu0
        %v9270 = vadd.f32 %v9181, %v9269
        %9271 = vmatmul.bf16.gmra.mxu0 %v6111
        %v9272 = vpop.f32.mrf.mxu0
        %v9273 = vadd.f32 %v9184, %v9272
        %v9274 = vpop.f32.mrf.mxu0
        %v9275 = vadd.f32 %v9186, %v9274
        %9276 = vmatmul.bf16.gmra.mxu0 %v6114
        %v9277 = vpop.f32.mrf.mxu0
        %v9278 = vadd.f32 %v9189, %v9277
        %v9279 = vpop.f32.mrf.mxu0
        %v9280 = vadd.f32 %v9191, %v9279
        %9281 = vmatmul.bf16.gmra.mxu0 %v6117
        %v9282 = vpop.f32.mrf.mxu0
        %v9283 = vadd.f32 %v9194, %v9282
        %v9284 = vpop.f32.mrf.mxu0
        %v9285 = vadd.f32 %v9196, %v9284
        %9286 = vmatmul.bf16.gmra.mxu0 %v6120
        %v9287 = vpop.f32.mrf.mxu0
        %v9288 = vadd.f32 %v9199, %v9287
        %v9289 = vpop.f32.mrf.mxu0
        %v9290 = vadd.f32 %v9201, %v9289
        %9291 = vmatmul.bf16.gmra.mxu0 %v6123
        %v9292 = vpop.f32.mrf.mxu0
        %v9293 = vadd.f32 %v9204, %v9292
        %v9294 = vpop.f32.mrf.mxu0
        %v9295 = vadd.f32 %v9206, %v9294
        %9296 = vmatmul.bf16.gmra.mxu0 %v7968
        %v9297 = vpop.f32.mrf.mxu0
        %v9298 = vadd.f32 %v9209, %v9297
        %v9299 = vpop.f32.mrf.mxu0
        %v9300 = vadd.f32 %v9211, %v9299
        %9301 = vmatmul.bf16.gmra.mxu0 %v7971
        %v9302 = vpop.f32.mrf.mxu0
        %v9303 = vadd.f32 %v9214, %v9302
        %v9304 = vpop.f32.mrf.mxu0
        %v9305 = vadd.f32 %v9216, %v9304
        %9306 = vmatmul.bf16.gmra.mxu0 %v8984
        %v9307 = vpop.f32.mrf.mxu0
        %v9308 = vadd.f32 %v9219, %v9307
        %v9309 = vpop.f32.mrf.mxu0
        %v9310 = vadd.f32 %v9221, %v9309
        %9311 = vmatmul.bf16.gmra.mxu0 %v8987
        %v9312 = vpop.f32.mrf.mxu0
        %v9313 = vadd.f32 %v9224, %v9312
        %v9314 = vpop.f32.mrf.mxu0
        %v9315 = vadd.f32 %v9226, %v9314
        %9316 = vdwg.mxu0
        %9317 = vmatpush.bf16.msra.mxu0 %v9114
        %9318 = vmatpush.bf16.msra.mxu0 %v9113
        %9319 = vmatpush.bf16.msra.mxu0 %v9112
        %9320 = vmatpush.bf16.msra.mxu0 %v9111
        %9321 = vmatpush.bf16.msra.mxu0 %v9110
        %9322 = vmatpush.bf16.msra.mxu0 %v9109
        %9323 = vmatpush.bf16.msra.mxu0 %v9108
        %9324 = vmatpush.bf16.msra.mxu0 %v9107
        %9325 = vmatmul.bf16.gmra.mxu0 %v6091
        %v9326 = vpop.f32.mrf.mxu0
        %v9327 = vadd.f32 %v9238, %v9326
        %v9328 = vpop.f32.mrf.mxu0
        %v9329 = vadd.f32 %v9240, %v9328
        %9330 = vmatmul.bf16.gmra.mxu0 %v6094
        %v9331 = vpop.f32.mrf.mxu0
        %v9332 = vadd.f32 %v9243, %v9331
        %v9333 = vpop.f32.mrf.mxu0
        %v9334 = vadd.f32 %v9245, %v9333
        %9335 = vmatmul.bf16.gmra.mxu0 %v6097
        %v9336 = vpop.f32.mrf.mxu0
        %v9337 = vadd.f32 %v9248, %v9336
        %v9338 = vpop.f32.mrf.mxu0
        %v9339 = vadd.f32 %v9250, %v9338
        %9340 = vmatmul.bf16.gmra.mxu0 %v6100
        %v9341 = vpop.f32.mrf.mxu0
        %v9342 = vadd.f32 %v9253, %v9341
        %v9343 = vpop.f32.mrf.mxu0
        %v9344 = vadd.f32 %v9255, %v9343
        %9345 = vmatmul.bf16.gmra.mxu0 %v6103
        %v9346 = vpop.f32.mrf.mxu0
        %v9347 = vadd.f32 %v9258, %v9346
        %v9348 = vpop.f32.mrf.mxu0
        %v9349 = vadd.f32 %v9260, %v9348
        %9350 = vmatmul.bf16.gmra.mxu0 %v6106
        %v9351 = vpop.f32.mrf.mxu0
        %v9352 = vadd.f32 %v9263, %v9351
        %v9353 = vpop.f32.mrf.mxu0
        %v9354 = vadd.f32 %v9265, %v9353
        %9355 = vmatmul.bf16.gmra.mxu0 %v6109
        %v9356 = vpop.f32.mrf.mxu0
        %v9357 = vadd.f32 %v9268, %v9356
        %v9358 = vpop.f32.mrf.mxu0
        %v9359 = vadd.f32 %v9270, %v9358
        %9360 = vmatmul.bf16.gmra.mxu0 %v6112
        %v9361 = vpop.f32.mrf.mxu0
        %v9362 = vadd.f32 %v9273, %v9361
        %v9363 = vpop.f32.mrf.mxu0
        %v9364 = vadd.f32 %v9275, %v9363
        %9365 = vmatmul.bf16.gmra.mxu0 %v6115
        %v9366 = vpop.f32.mrf.mxu0
        %v9367 = vadd.f32 %v9278, %v9366
        %v9368 = vpop.f32.mrf.mxu0
        %v9369 = vadd.f32 %v9280, %v9368
        %9370 = vmatmul.bf16.gmra.mxu0 %v6118
        %v9371 = vpop.f32.mrf.mxu0
        %v9372 = vadd.f32 %v9283, %v9371
        %v9373 = vpop.f32.mrf.mxu0
        %v9374 = vadd.f32 %v9285, %v9373
        %9375 = vmatmul.bf16.gmra.mxu0 %v6121
        %v9376 = vpop.f32.mrf.mxu0
        %v9377 = vadd.f32 %v9288, %v9376
        %v9378 = vpop.f32.mrf.mxu0
        %v9379 = vadd.f32 %v9290, %v9378
        %9380 = vmatmul.bf16.gmra.mxu0 %v6124
        %v9381 = vpop.f32.mrf.mxu0
        %v9382 = vadd.f32 %v9293, %v9381
        %v9383 = vpop.f32.mrf.mxu0
        %v9384 = vadd.f32 %v9295, %v9383
        %9385 = vmatmul.bf16.gmra.mxu0 %v7969
        %v9386 = vpop.f32.mrf.mxu0
        %v9387 = vadd.f32 %v9298, %v9386
        %v9388 = vpop.f32.mrf.mxu0
        %v9389 = vadd.f32 %v9300, %v9388
        %9390 = vmatmul.bf16.gmra.mxu0 %v7972
        %v9391 = vpop.f32.mrf.mxu0
        %v9392 = vadd.f32 %v9303, %v9391
        %v9393 = vpop.f32.mrf.mxu0
        %v9394 = vadd.f32 %v9305, %v9393
        %9395 = vmatmul.bf16.gmra.mxu0 %v8985
        %v9396 = vpop.f32.mrf.mxu0
        %v9397 = vadd.f32 %v9308, %v9396
        %v9398 = vpop.f32.mrf.mxu0
        %v9399 = vadd.f32 %v9310, %v9398
        %9400 = vmatmul.bf16.gmra.mxu0 %v8988
        %v9401 = vpop.f32.mrf.mxu0
        %v9402 = vadd.f32 %v9313, %v9401
        %v9403 = vpop.f32.mrf.mxu0
        %v9404 = vadd.f32 %v9315, %v9403
        %9405 = vdwg.mxu0
        %v9406 = vadd.f32 %v8390, %v9327
        %v9407 = vadd.f32 %v8391, %v9329
        %v9408 = vadd.f32 %v8392, %v9332
        %v9409 = vadd.f32 %v8393, %v9334
        %v9410 = vadd.f32 %v8394, %v9337
        %v9411 = vadd.f32 %v8395, %v9339
        %v9412 = vadd.f32 %v8396, %v9342
        %v9413 = vadd.f32 %v8397, %v9344
        %v9414 = vadd.f32 %v8398, %v9347
        %v9415 = vadd.f32 %v8399, %v9349
        %v9416 = vadd.f32 %v8400, %v9352
        %v9417 = vadd.f32 %v8401, %v9354
        %v9418 = vadd.f32 %v8402, %v9357
        %v9419 = vadd.f32 %v8403, %v9359
        %v9420 = vadd.f32 %v8404, %v9362
        %v9421 = vadd.f32 %v8405, %v9364
        %v9422 = vadd.f32 %v8406, %v9367
        %v9423 = vadd.f32 %v8407, %v9369
        %v9424 = vadd.f32 %v8408, %v9372
        %v9425 = vadd.f32 %v8409, %v9374
        %v9426 = vadd.f32 %v8410, %v9377
        %v9427 = vadd.f32 %v8411, %v9379
        %v9428 = vadd.f32 %v8412, %v9382
        %v9429 = vadd.f32 %v8413, %v9384
        %v9430 = vadd.f32 %v8414, %v9387
        %v9431 = vadd.f32 %v8415, %v9389
        %v9432 = vadd.f32 %v8416, %v9392
        %v9433 = vadd.f32 %v8417, %v9394
        %v9434 = vadd.f32 %v8418, %v9397
        %v9435 = vadd.f32 %v8419, %v9399
        %v9436 = vadd.f32 %v8420, %v9402
        %v9437 = vadd.f32 %v8421, %v9404
        %s9438 = scalar_lea.vmem %s5, 576
        %v9439 = vld [vmem:[%s9438] sm:$0xf]
        %v9440 = vld [vmem:[%s9438 + $0x4] sm:$0xf]
        %v9441 = vld [vmem:[%s9438 + $0x8] sm:$0xf]
        %v9442 = vld [vmem:[%s9438 + $0xc] sm:$0xf]
        %v9443 = vld [vmem:[%s9438 + $0x10] sm:$0xf]
        %v9444 = vld [vmem:[%s9438 + $0x14] sm:$0xf]
        %v9445 = vld [vmem:[%s9438 + $0x18] sm:$0xf]
        %v9446 = vld [vmem:[%s9438 + $0x1c] sm:$0xf]
        %v9447 = vld [vmem:[%s9438 + $0x20] sm:$0xf]
        %v9448 = vld [vmem:[%s9438 + $0x24] sm:$0xf]
        %v9449 = vld [vmem:[%s9438 + $0x28] sm:$0xf]
        %v9450 = vld [vmem:[%s9438 + $0x2c] sm:$0xf]
        %v9451 = vld [vmem:[%s9438 + $0x30] sm:$0xf]
        %v9452 = vld [vmem:[%s9438 + $0x34] sm:$0xf]
        %v9453 = vld [vmem:[%s9438 + $0x38] sm:$0xf]
        %v9454 = vld [vmem:[%s9438 + $0x3c] sm:$0xf]
        %v9455 = vld [vmem:[%s9438 + $0x40] sm:$0xf]
        %v9456 = vld [vmem:[%s9438 + $0x44] sm:$0xf]
        %v9457 = vld [vmem:[%s9438 + $0x48] sm:$0xf]
        %v9458 = vld [vmem:[%s9438 + $0x4c] sm:$0xf]
        %v9459 = vld [vmem:[%s9438 + $0x50] sm:$0xf]
        %v9460 = vld [vmem:[%s9438 + $0x54] sm:$0xf]
        %v9461 = vld [vmem:[%s9438 + $0x58] sm:$0xf]
        %v9462 = vld [vmem:[%s9438 + $0x5c] sm:$0xf]
        %v9463 = vld [vmem:[%s9438 + $0x60] sm:$0xf]
        %v9464 = vld [vmem:[%s9438 + $0x64] sm:$0xf]
        %v9465 = vld [vmem:[%s9438 + $0x68] sm:$0xf]
        %v9466 = vld [vmem:[%s9438 + $0x6c] sm:$0xf]
        %v9467 = vld [vmem:[%s9438 + $0x70] sm:$0xf]
        %v9468 = vld [vmem:[%s9438 + $0x74] sm:$0xf]
        %v9469 = vld [vmem:[%s9438 + $0x78] sm:$0xf]
        %v9470 = vld [vmem:[%s9438 + $0x7c] sm:$0xf]
        %v9471 = vld [vmem:[%s9438 + $0x80] sm:$0xf]
        %v9472 = vld [vmem:[%s9438 + $0x84] sm:$0xf]
        %v9473 = vld [vmem:[%s9438 + $0x88] sm:$0xf]
        %v9474 = vld [vmem:[%s9438 + $0x8c] sm:$0xf]
        %v9475 = vld [vmem:[%s9438 + $0x90] sm:$0xf]
        %v9476 = vld [vmem:[%s9438 + $0x94] sm:$0xf]
        %v9477 = vld [vmem:[%s9438 + $0x98] sm:$0xf]
        %v9478 = vld [vmem:[%s9438 + $0x9c] sm:$0xf]
        %v9479 = vld [vmem:[%s9438 + $0xa0] sm:$0xf]
        %v9480 = vld [vmem:[%s9438 + $0xa4] sm:$0xf]
        %v9481 = vld [vmem:[%s9438 + $0xa8] sm:$0xf]
        %v9482 = vld [vmem:[%s9438 + $0xac] sm:$0xf]
        %v9483 = vld [vmem:[%s9438 + $0xb0] sm:$0xf]
        %v9484 = vld [vmem:[%s9438 + $0xb4] sm:$0xf]
        %v9485 = vld [vmem:[%s9438 + $0xb8] sm:$0xf]
        %v9486 = vld [vmem:[%s9438 + $0xbc] sm:$0xf]
        %v9535 = vunpack.c.l.b16 %v9439
        %v9536 = vunpack.c.l.b16 %v9440
        %v9537 = vunpack.c.l.b16 %v9441
        %v9538 = vunpack.c.l.b16 %v9442
        %v9539 = vunpack.c.l.b16 %v9443
        %v9540 = vunpack.c.l.b16 %v9444
        %v9541 = vunpack.c.l.b16 %v9445
        %v9542 = vunpack.c.l.b16 %v9446
        %v9543 = vunpack.c.l.b16 %v9447
        %v9544 = vunpack.c.l.b16 %v9448
        %v9545 = vunpack.c.l.b16 %v9449
        %v9546 = vunpack.c.l.b16 %v9450
        %v9547 = vunpack.c.l.b16 %v9451
        %v9548 = vunpack.c.l.b16 %v9452
        %v9549 = vunpack.c.l.b16 %v9453
        %v9550 = vunpack.c.l.b16 %v9454
        %v9551 = vunpack.c.l.b16 %v9455
        %v9552 = vunpack.c.l.b16 %v9456
        %v9553 = vunpack.c.l.b16 %v9457
        %v9554 = vunpack.c.l.b16 %v9458
        %v9555 = vunpack.c.l.b16 %v9459
        %v9556 = vunpack.c.l.b16 %v9460
        %v9557 = vunpack.c.l.b16 %v9461
        %v9558 = vunpack.c.l.b16 %v9462
        %v9559 = vunpack.c.l.b16 %v9463
        %v9560 = vunpack.c.l.b16 %v9464
        %v9561 = vunpack.c.l.b16 %v9465
        %v9562 = vunpack.c.l.b16 %v9466
        %v9563 = vunpack.c.l.b16 %v9467
        %v9564 = vunpack.c.l.b16 %v9468
        %v9565 = vunpack.c.l.b16 %v9469
        %v9566 = vunpack.c.l.b16 %v9470
        %v9567 = vunpack.c.l.b16 %v9471
        %v9568 = vunpack.c.l.b16 %v9472
        %v9569 = vunpack.c.l.b16 %v9473
        %v9570 = vunpack.c.l.b16 %v9474
        %v9571 = vunpack.c.l.b16 %v9475
        %v9572 = vunpack.c.l.b16 %v9476
        %v9573 = vunpack.c.l.b16 %v9477
        %v9574 = vunpack.c.l.b16 %v9478
        %v9575 = vunpack.c.l.b16 %v9479
        %v9576 = vunpack.c.l.b16 %v9480
        %v9577 = vunpack.c.l.b16 %v9481
        %v9578 = vunpack.c.l.b16 %v9482
        %v9579 = vunpack.c.l.b16 %v9483
        %v9580 = vunpack.c.l.b16 %v9484
        %v9581 = vunpack.c.l.b16 %v9485
        %v9582 = vunpack.c.l.b16 %v9486
        %v9583 = vpack.c.b16 %v9536, %v9535
        %v9584 = vpack.c.b16 %v9538, %v9537
        %v9585 = vpack.c.b16 %v9540, %v9539
        %v9586 = vpack.c.b16 %v9542, %v9541
        %v9587 = vpack.c.b16 %v9544, %v9543
        %v9588 = vpack.c.b16 %v9546, %v9545
        %v9589 = vpack.c.b16 %v9548, %v9547
        %v9590 = vpack.c.b16 %v9550, %v9549
        %v9591 = vpack.c.b16 %v9552, %v9551
        %v9592 = vpack.c.b16 %v9554, %v9553
        %v9593 = vpack.c.b16 %v9556, %v9555
        %v9594 = vpack.c.b16 %v9558, %v9557
        %v9595 = vpack.c.b16 %v9560, %v9559
        %v9596 = vpack.c.b16 %v9562, %v9561
        %v9597 = vpack.c.b16 %v9564, %v9563
        %v9598 = vpack.c.b16 %v9566, %v9565
        %v9599 = vpack.c.b16 %v9568, %v9567
        %v9600 = vpack.c.b16 %v9570, %v9569
        %v9601 = vpack.c.b16 %v9572, %v9571
        %v9602 = vpack.c.b16 %v9574, %v9573
        %v9603 = vpack.c.b16 %v9576, %v9575
        %v9604 = vpack.c.b16 %v9578, %v9577
        %v9605 = vpack.c.b16 %v9580, %v9579
        %v9606 = vpack.c.b16 %v9582, %v9581
        %9631 = vmatpush.bf16.msra.mxu0 %v9590
        %9632 = vmatpush.bf16.msra.mxu0 %v9589
        %9633 = vmatpush.bf16.msra.mxu0 %v9588
        %9634 = vmatpush.bf16.msra.mxu0 %v9587
        %9635 = vmatpush.bf16.msra.mxu0 %v9586
        %9636 = vmatpush.bf16.msra.mxu0 %v9585
        %9637 = vmatpush.bf16.msra.mxu0 %v9584
        %9638 = vmatpush.bf16.msra.mxu0 %v9583
        %9639 = vmatmul.bf16.gmra.mxu0 %v6089
        %v9640 = vpop.f32.mrf.mxu0
        %v9641 = vadd.f32 0.0, %v9640
        %v9642 = vpop.f32.mrf.mxu0
        %v9643 = vadd.f32 0.0, %v9642
        %9644 = vmatmul.bf16.gmra.mxu0 %v6092
        %v9645 = vpop.f32.mrf.mxu0
        %v9646 = vadd.f32 0.0, %v9645
        %v9647 = vpop.f32.mrf.mxu0
        %v9648 = vadd.f32 0.0, %v9647
        %9649 = vmatmul.bf16.gmra.mxu0 %v6095
        %v9650 = vpop.f32.mrf.mxu0
        %v9651 = vadd.f32 0.0, %v9650
        %v9652 = vpop.f32.mrf.mxu0
        %v9653 = vadd.f32 0.0, %v9652
        %9654 = vmatmul.bf16.gmra.mxu0 %v6098
        %v9655 = vpop.f32.mrf.mxu0
        %v9656 = vadd.f32 0.0, %v9655
        %v9657 = vpop.f32.mrf.mxu0
        %v9658 = vadd.f32 0.0, %v9657
        %9659 = vmatmul.bf16.gmra.mxu0 %v6101
        %v9660 = vpop.f32.mrf.mxu0
        %v9661 = vadd.f32 0.0, %v9660
        %v9662 = vpop.f32.mrf.mxu0
        %v9663 = vadd.f32 0.0, %v9662
        %9664 = vmatmul.bf16.gmra.mxu0 %v6104
        %v9665 = vpop.f32.mrf.mxu0
        %v9666 = vadd.f32 0.0, %v9665
        %v9667 = vpop.f32.mrf.mxu0
        %v9668 = vadd.f32 0.0, %v9667
        %9669 = vmatmul.bf16.gmra.mxu0 %v6107
        %v9670 = vpop.f32.mrf.mxu0
        %v9671 = vadd.f32 0.0, %v9670
        %v9672 = vpop.f32.mrf.mxu0
        %v9673 = vadd.f32 0.0, %v9672
        %9674 = vmatmul.bf16.gmra.mxu0 %v6110
        %v9675 = vpop.f32.mrf.mxu0
        %v9676 = vadd.f32 0.0, %v9675
        %v9677 = vpop.f32.mrf.mxu0
        %v9678 = vadd.f32 0.0, %v9677
        %9679 = vmatmul.bf16.gmra.mxu0 %v6113
        %v9680 = vpop.f32.mrf.mxu0
        %v9681 = vadd.f32 0.0, %v9680
        %v9682 = vpop.f32.mrf.mxu0
        %v9683 = vadd.f32 0.0, %v9682
        %9684 = vmatmul.bf16.gmra.mxu0 %v6116
        %v9685 = vpop.f32.mrf.mxu0
        %v9686 = vadd.f32 0.0, %v9685
        %v9687 = vpop.f32.mrf.mxu0
        %v9688 = vadd.f32 0.0, %v9687
        %9689 = vmatmul.bf16.gmra.mxu0 %v6119
        %v9690 = vpop.f32.mrf.mxu0
        %v9691 = vadd.f32 0.0, %v9690
        %v9692 = vpop.f32.mrf.mxu0
        %v9693 = vadd.f32 0.0, %v9692
        %9694 = vmatmul.bf16.gmra.mxu0 %v6122
        %v9695 = vpop.f32.mrf.mxu0
        %v9696 = vadd.f32 0.0, %v9695
        %v9697 = vpop.f32.mrf.mxu0
        %v9698 = vadd.f32 0.0, %v9697
        %9699 = vmatmul.bf16.gmra.mxu0 %v7967
        %v9700 = vpop.f32.mrf.mxu0
        %v9701 = vadd.f32 0.0, %v9700
        %v9702 = vpop.f32.mrf.mxu0
        %v9703 = vadd.f32 0.0, %v9702
        %9704 = vmatmul.bf16.gmra.mxu0 %v7970
        %v9705 = vpop.f32.mrf.mxu0
        %v9706 = vadd.f32 0.0, %v9705
        %v9707 = vpop.f32.mrf.mxu0
        %v9708 = vadd.f32 0.0, %v9707
        %9709 = vmatmul.bf16.gmra.mxu0 %v8983
        %v9710 = vpop.f32.mrf.mxu0
        %v9711 = vadd.f32 0.0, %v9710
        %v9712 = vpop.f32.mrf.mxu0
        %v9713 = vadd.f32 0.0, %v9712
        %9714 = vmatmul.bf16.gmra.mxu0 %v8986
        %v9715 = vpop.f32.mrf.mxu0
        %v9716 = vadd.f32 0.0, %v9715
        %v9717 = vpop.f32.mrf.mxu0
        %v9718 = vadd.f32 0.0, %v9717
        %9719 = vdwg.mxu0
        %9720 = vmatpush.bf16.msra.mxu0 %v9598
        %9721 = vmatpush.bf16.msra.mxu0 %v9597
        %9722 = vmatpush.bf16.msra.mxu0 %v9596
        %9723 = vmatpush.bf16.msra.mxu0 %v9595
        %9724 = vmatpush.bf16.msra.mxu0 %v9594
        %9725 = vmatpush.bf16.msra.mxu0 %v9593
        %9726 = vmatpush.bf16.msra.mxu0 %v9592
        %9727 = vmatpush.bf16.msra.mxu0 %v9591
        %9728 = vmatmul.bf16.gmra.mxu0 %v6090
        %v9729 = vpop.f32.mrf.mxu0
        %v9730 = vadd.f32 %v9641, %v9729
        %v9731 = vpop.f32.mrf.mxu0
        %v9732 = vadd.f32 %v9643, %v9731
        %9733 = vmatmul.bf16.gmra.mxu0 %v6093
        %v9734 = vpop.f32.mrf.mxu0
        %v9735 = vadd.f32 %v9646, %v9734
        %v9736 = vpop.f32.mrf.mxu0
        %v9737 = vadd.f32 %v9648, %v9736
        %9738 = vmatmul.bf16.gmra.mxu0 %v6096
        %v9739 = vpop.f32.mrf.mxu0
        %v9740 = vadd.f32 %v9651, %v9739
        %v9741 = vpop.f32.mrf.mxu0
        %v9742 = vadd.f32 %v9653, %v9741
        %9743 = vmatmul.bf16.gmra.mxu0 %v6099
        %v9744 = vpop.f32.mrf.mxu0
        %v9745 = vadd.f32 %v9656, %v9744
        %v9746 = vpop.f32.mrf.mxu0
        %v9747 = vadd.f32 %v9658, %v9746
        %9748 = vmatmul.bf16.gmra.mxu0 %v6102
        %v9749 = vpop.f32.mrf.mxu0
        %v9750 = vadd.f32 %v9661, %v9749
        %v9751 = vpop.f32.mrf.mxu0
        %v9752 = vadd.f32 %v9663, %v9751
        %9753 = vmatmul.bf16.gmra.mxu0 %v6105
        %v9754 = vpop.f32.mrf.mxu0
        %v9755 = vadd.f32 %v9666, %v9754
        %v9756 = vpop.f32.mrf.mxu0
        %v9757 = vadd.f32 %v9668, %v9756
        %9758 = vmatmul.bf16.gmra.mxu0 %v6108
        %v9759 = vpop.f32.mrf.mxu0
        %v9760 = vadd.f32 %v9671, %v9759
        %v9761 = vpop.f32.mrf.mxu0
        %v9762 = vadd.f32 %v9673, %v9761
        %9763 = vmatmul.bf16.gmra.mxu0 %v6111
        %v9764 = vpop.f32.mrf.mxu0
        %v9765 = vadd.f32 %v9676, %v9764
        %v9766 = vpop.f32.mrf.mxu0
        %v9767 = vadd.f32 %v9678, %v9766
        %9768 = vmatmul.bf16.gmra.mxu0 %v6114
        %v9769 = vpop.f32.mrf.mxu0
        %v9770 = vadd.f32 %v9681, %v9769
        %v9771 = vpop.f32.mrf.mxu0
        %v9772 = vadd.f32 %v9683, %v9771
        %9773 = vmatmul.bf16.gmra.mxu0 %v6117
        %v9774 = vpop.f32.mrf.mxu0
        %v9775 = vadd.f32 %v9686, %v9774
        %v9776 = vpop.f32.mrf.mxu0
        %v9777 = vadd.f32 %v9688, %v9776
        %9778 = vmatmul.bf16.gmra.mxu0 %v6120
        %v9779 = vpop.f32.mrf.mxu0
        %v9780 = vadd.f32 %v9691, %v9779
        %v9781 = vpop.f32.mrf.mxu0
        %v9782 = vadd.f32 %v9693, %v9781
        %9783 = vmatmul.bf16.gmra.mxu0 %v6123
        %v9784 = vpop.f32.mrf.mxu0
        %v9785 = vadd.f32 %v9696, %v9784
        %v9786 = vpop.f32.mrf.mxu0
        %v9787 = vadd.f32 %v9698, %v9786
        %9788 = vmatmul.bf16.gmra.mxu0 %v7968
        %v9789 = vpop.f32.mrf.mxu0
        %v9790 = vadd.f32 %v9701, %v9789
        %v9791 = vpop.f32.mrf.mxu0
        %v9792 = vadd.f32 %v9703, %v9791
        %9793 = vmatmul.bf16.gmra.mxu0 %v7971
        %v9794 = vpop.f32.mrf.mxu0
        %v9795 = vadd.f32 %v9706, %v9794
        %v9796 = vpop.f32.mrf.mxu0
        %v9797 = vadd.f32 %v9708, %v9796
        %9798 = vmatmul.bf16.gmra.mxu0 %v8984
        %v9799 = vpop.f32.mrf.mxu0
        %v9800 = vadd.f32 %v9711, %v9799
        %v9801 = vpop.f32.mrf.mxu0
        %v9802 = vadd.f32 %v9713, %v9801
        %9803 = vmatmul.bf16.gmra.mxu0 %v8987
        %v9804 = vpop.f32.mrf.mxu0
        %v9805 = vadd.f32 %v9716, %v9804
        %v9806 = vpop.f32.mrf.mxu0
        %v9807 = vadd.f32 %v9718, %v9806
        %9808 = vdwg.mxu0
        %9809 = vmatpush.bf16.msra.mxu0 %v9606
        %9810 = vmatpush.bf16.msra.mxu0 %v9605
        %9811 = vmatpush.bf16.msra.mxu0 %v9604
        %9812 = vmatpush.bf16.msra.mxu0 %v9603
        %9813 = vmatpush.bf16.msra.mxu0 %v9602
        %9814 = vmatpush.bf16.msra.mxu0 %v9601
        %9815 = vmatpush.bf16.msra.mxu0 %v9600
        %9816 = vmatpush.bf16.msra.mxu0 %v9599
        %9817 = vmatmul.bf16.gmra.mxu0 %v6091
        %v9818 = vpop.f32.mrf.mxu0
        %v9819 = vadd.f32 %v9730, %v9818
        %v9820 = vpop.f32.mrf.mxu0
        %v9821 = vadd.f32 %v9732, %v9820
        %9822 = vmatmul.bf16.gmra.mxu0 %v6094
        %v9823 = vpop.f32.mrf.mxu0
        %v9824 = vadd.f32 %v9735, %v9823
        %v9825 = vpop.f32.mrf.mxu0
        %v9826 = vadd.f32 %v9737, %v9825
        %9827 = vmatmul.bf16.gmra.mxu0 %v6097
        %v9828 = vpop.f32.mrf.mxu0
        %v9829 = vadd.f32 %v9740, %v9828
        %v9830 = vpop.f32.mrf.mxu0
        %v9831 = vadd.f32 %v9742, %v9830
        %9832 = vmatmul.bf16.gmra.mxu0 %v6100
        %v9833 = vpop.f32.mrf.mxu0
        %v9834 = vadd.f32 %v9745, %v9833
        %v9835 = vpop.f32.mrf.mxu0
        %v9836 = vadd.f32 %v9747, %v9835
        %9837 = vmatmul.bf16.gmra.mxu0 %v6103
        %v9838 = vpop.f32.mrf.mxu0
        %v9839 = vadd.f32 %v9750, %v9838
        %v9840 = vpop.f32.mrf.mxu0
        %v9841 = vadd.f32 %v9752, %v9840
        %9842 = vmatmul.bf16.gmra.mxu0 %v6106
        %v9843 = vpop.f32.mrf.mxu0
        %v9844 = vadd.f32 %v9755, %v9843
        %v9845 = vpop.f32.mrf.mxu0
        %v9846 = vadd.f32 %v9757, %v9845
        %9847 = vmatmul.bf16.gmra.mxu0 %v6109
        %v9848 = vpop.f32.mrf.mxu0
        %v9849 = vadd.f32 %v9760, %v9848
        %v9850 = vpop.f32.mrf.mxu0
        %v9851 = vadd.f32 %v9762, %v9850
        %9852 = vmatmul.bf16.gmra.mxu0 %v6112
        %v9853 = vpop.f32.mrf.mxu0
        %v9854 = vadd.f32 %v9765, %v9853
        %v9855 = vpop.f32.mrf.mxu0
        %v9856 = vadd.f32 %v9767, %v9855
        %9857 = vmatmul.bf16.gmra.mxu0 %v6115
        %v9858 = vpop.f32.mrf.mxu0
        %v9859 = vadd.f32 %v9770, %v9858
        %v9860 = vpop.f32.mrf.mxu0
        %v9861 = vadd.f32 %v9772, %v9860
        %9862 = vmatmul.bf16.gmra.mxu0 %v6118
        %v9863 = vpop.f32.mrf.mxu0
        %v9864 = vadd.f32 %v9775, %v9863
        %v9865 = vpop.f32.mrf.mxu0
        %v9866 = vadd.f32 %v9777, %v9865
        %9867 = vmatmul.bf16.gmra.mxu0 %v6121
        %v9868 = vpop.f32.mrf.mxu0
        %v9869 = vadd.f32 %v9780, %v9868
        %v9870 = vpop.f32.mrf.mxu0
        %v9871 = vadd.f32 %v9782, %v9870
        %9872 = vmatmul.bf16.gmra.mxu0 %v6124
        %v9873 = vpop.f32.mrf.mxu0
        %v9874 = vadd.f32 %v9785, %v9873
        %v9875 = vpop.f32.mrf.mxu0
        %v9876 = vadd.f32 %v9787, %v9875
        %9877 = vmatmul.bf16.gmra.mxu0 %v7969
        %v9878 = vpop.f32.mrf.mxu0
        %v9879 = vadd.f32 %v9790, %v9878
        %v9880 = vpop.f32.mrf.mxu0
        %v9881 = vadd.f32 %v9792, %v9880
        %9882 = vmatmul.bf16.gmra.mxu0 %v7972
        %v9883 = vpop.f32.mrf.mxu0
        %v9884 = vadd.f32 %v9795, %v9883
        %v9885 = vpop.f32.mrf.mxu0
        %v9886 = vadd.f32 %v9797, %v9885
        %9887 = vmatmul.bf16.gmra.mxu0 %v8985
        %v9888 = vpop.f32.mrf.mxu0
        %v9889 = vadd.f32 %v9800, %v9888
        %v9890 = vpop.f32.mrf.mxu0
        %v9891 = vadd.f32 %v9802, %v9890
        %9892 = vmatmul.bf16.gmra.mxu0 %v8988
        %v9893 = vpop.f32.mrf.mxu0
        %v9894 = vadd.f32 %v9805, %v9893
        %v9895 = vpop.f32.mrf.mxu0
        %v9896 = vadd.f32 %v9807, %v9895
        %9897 = vdwg.mxu0
        %v9898 = vadd.f32 %v8882, %v9819
        %v9899 = vadd.f32 %v8883, %v9821
        %v9900 = vadd.f32 %v8884, %v9824
        %v9901 = vadd.f32 %v8885, %v9826
        %v9902 = vadd.f32 %v8886, %v9829
        %v9903 = vadd.f32 %v8887, %v9831
        %v9904 = vadd.f32 %v8888, %v9834
        %v9905 = vadd.f32 %v8889, %v9836
        %v9906 = vadd.f32 %v8890, %v9839
        %v9907 = vadd.f32 %v8891, %v9841
        %v9908 = vadd.f32 %v8892, %v9844
        %v9909 = vadd.f32 %v8893, %v9846
        %v9910 = vadd.f32 %v8894, %v9849
        %v9911 = vadd.f32 %v8895, %v9851
        %v9912 = vadd.f32 %v8896, %v9854
        %v9913 = vadd.f32 %v8897, %v9856
        %v9914 = vadd.f32 %v8898, %v9859
        %v9915 = vadd.f32 %v8899, %v9861
        %v9916 = vadd.f32 %v8900, %v9864
        %v9917 = vadd.f32 %v8901, %v9866
        %v9918 = vadd.f32 %v8902, %v9869
        %v9919 = vadd.f32 %v8903, %v9871
        %v9920 = vadd.f32 %v8904, %v9874
        %v9921 = vadd.f32 %v8905, %v9876
        %v9922 = vadd.f32 %v8906, %v9879
        %v9923 = vadd.f32 %v8907, %v9881
        %v9924 = vadd.f32 %v8908, %v9884
        %v9925 = vadd.f32 %v8909, %v9886
        %v9926 = vadd.f32 %v8910, %v9889
        %v9927 = vadd.f32 %v8911, %v9891
        %v9928 = vadd.f32 %v8912, %v9894
        %v9929 = vadd.f32 %v8913, %v9896
        %s9930 = scalar_lea.vmem %s4, 768
        %v9931 = vld [vmem:[%s9930] sm:$0xf]
        %v9932 = vld [vmem:[%s9930 + $0x4] sm:$0xf]
        %v9933 = vld [vmem:[%s9930 + $0x8] sm:$0xf]
        %v9934 = vld [vmem:[%s9930 + $0xc] sm:$0xf]
        %v9935 = vld [vmem:[%s9930 + $0x10] sm:$0xf]
        %v9936 = vld [vmem:[%s9930 + $0x14] sm:$0xf]
        %v9937 = vld [vmem:[%s9930 + $0x18] sm:$0xf]
        %v9938 = vld [vmem:[%s9930 + $0x1c] sm:$0xf]
        %v9939 = vld [vmem:[%s9930 + $0x20] sm:$0xf]
        %v9940 = vld [vmem:[%s9930 + $0x24] sm:$0xf]
        %v9941 = vld [vmem:[%s9930 + $0x28] sm:$0xf]
        %v9942 = vld [vmem:[%s9930 + $0x2c] sm:$0xf]
        %v9943 = vld [vmem:[%s9930 + $0x30] sm:$0xf]
        %v9944 = vld [vmem:[%s9930 + $0x34] sm:$0xf]
        %v9945 = vld [vmem:[%s9930 + $0x38] sm:$0xf]
        %v9946 = vld [vmem:[%s9930 + $0x3c] sm:$0xf]
        %v9947 = vld [vmem:[%s9930 + $0x40] sm:$0xf]
        %v9948 = vld [vmem:[%s9930 + $0x44] sm:$0xf]
        %v9949 = vld [vmem:[%s9930 + $0x48] sm:$0xf]
        %v9950 = vld [vmem:[%s9930 + $0x4c] sm:$0xf]
        %v9951 = vld [vmem:[%s9930 + $0x50] sm:$0xf]
        %v9952 = vld [vmem:[%s9930 + $0x54] sm:$0xf]
        %v9953 = vld [vmem:[%s9930 + $0x58] sm:$0xf]
        %v9954 = vld [vmem:[%s9930 + $0x5c] sm:$0xf]
        %v9955 = vld [vmem:[%s9930 + $0x60] sm:$0xf]
        %v9956 = vld [vmem:[%s9930 + $0x64] sm:$0xf]
        %v9957 = vld [vmem:[%s9930 + $0x68] sm:$0xf]
        %v9958 = vld [vmem:[%s9930 + $0x6c] sm:$0xf]
        %v9959 = vld [vmem:[%s9930 + $0x70] sm:$0xf]
        %v9960 = vld [vmem:[%s9930 + $0x74] sm:$0xf]
        %v9961 = vld [vmem:[%s9930 + $0x78] sm:$0xf]
        %v9962 = vld [vmem:[%s9930 + $0x7c] sm:$0xf]
        %v9963 = vld [vmem:[%s9930 + $0x80] sm:$0xf]
        %v9964 = vld [vmem:[%s9930 + $0x84] sm:$0xf]
        %v9965 = vld [vmem:[%s9930 + $0x88] sm:$0xf]
        %v9966 = vld [vmem:[%s9930 + $0x8c] sm:$0xf]
        %v9967 = vld [vmem:[%s9930 + $0x90] sm:$0xf]
        %v9968 = vld [vmem:[%s9930 + $0x94] sm:$0xf]
        %v9969 = vld [vmem:[%s9930 + $0x98] sm:$0xf]
        %v9970 = vld [vmem:[%s9930 + $0x9c] sm:$0xf]
        %v9971 = vld [vmem:[%s9930 + $0xa0] sm:$0xf]
        %v9972 = vld [vmem:[%s9930 + $0xa4] sm:$0xf]
        %v9973 = vld [vmem:[%s9930 + $0xa8] sm:$0xf]
        %v9974 = vld [vmem:[%s9930 + $0xac] sm:$0xf]
        %v9975 = vld [vmem:[%s9930 + $0xb0] sm:$0xf]
        %v9976 = vld [vmem:[%s9930 + $0xb4] sm:$0xf]
        %v9977 = vld [vmem:[%s9930 + $0xb8] sm:$0xf]
        %v9978 = vld [vmem:[%s9930 + $0xbc] sm:$0xf]
        %v9987 = vunpack.c.l.b16 %v5764
        %v9988 = vunpack.c.h.b16 %v5764
        %v9989 = vunpack.c.l.b16 %v5765
        %v9990 = vunpack.c.l.b16 %v5766
        %v9991 = vunpack.c.h.b16 %v5766
        %v9992 = vunpack.c.l.b16 %v5767
        %v9993 = vunpack.c.l.b16 %v5768
        %v9994 = vunpack.c.h.b16 %v5768
        %v9995 = vunpack.c.l.b16 %v5769
        %v9996 = vunpack.c.l.b16 %v5770
        %v9997 = vunpack.c.h.b16 %v5770
        %v9998 = vunpack.c.l.b16 %v5771
        %v9999 = vpack.c.b16 %v9990, %v9987
        %v10000 = vpack.c.b16 %v9991, %v9988
        %v10001 = vpack.c.b16 %v9992, %v9989
        %v10002 = vpack.c.b16 %v9996, %v9993
        %v10003 = vpack.c.b16 %v9997, %v9994
        %v10004 = vpack.c.b16 %v9998, %v9995
        %v10059 = vunpack.c.l.b16 %v9931
        %v10060 = vunpack.c.l.b16 %v9932
        %v10061 = vunpack.c.l.b16 %v9933
        %v10062 = vunpack.c.l.b16 %v9934
        %v10063 = vunpack.c.l.b16 %v9935
        %v10064 = vunpack.c.l.b16 %v9936
        %v10065 = vunpack.c.l.b16 %v9937
        %v10066 = vunpack.c.l.b16 %v9938
        %v10067 = vunpack.c.l.b16 %v9939
        %v10068 = vunpack.c.l.b16 %v9940
        %v10069 = vunpack.c.l.b16 %v9941
        %v10070 = vunpack.c.l.b16 %v9942
        %v10071 = vunpack.c.l.b16 %v9943
        %v10072 = vunpack.c.l.b16 %v9944
        %v10073 = vunpack.c.l.b16 %v9945
        %v10074 = vunpack.c.l.b16 %v9946
        %v10075 = vunpack.c.l.b16 %v9947
        %v10076 = vunpack.c.l.b16 %v9948
        %v10077 = vunpack.c.l.b16 %v9949
        %v10078 = vunpack.c.l.b16 %v9950
        %v10079 = vunpack.c.l.b16 %v9951
        %v10080 = vunpack.c.l.b16 %v9952
        %v10081 = vunpack.c.l.b16 %v9953
        %v10082 = vunpack.c.l.b16 %v9954
        %v10083 = vunpack.c.l.b16 %v9955
        %v10084 = vunpack.c.l.b16 %v9956
        %v10085 = vunpack.c.l.b16 %v9957
        %v10086 = vunpack.c.l.b16 %v9958
        %v10087 = vunpack.c.l.b16 %v9959
        %v10088 = vunpack.c.l.b16 %v9960
        %v10089 = vunpack.c.l.b16 %v9961
        %v10090 = vunpack.c.l.b16 %v9962
        %v10091 = vunpack.c.l.b16 %v9963
        %v10092 = vunpack.c.l.b16 %v9964
        %v10093 = vunpack.c.l.b16 %v9965
        %v10094 = vunpack.c.l.b16 %v9966
        %v10095 = vunpack.c.l.b16 %v9967
        %v10096 = vunpack.c.l.b16 %v9968
        %v10097 = vunpack.c.l.b16 %v9969
        %v10098 = vunpack.c.l.b16 %v9970
        %v10099 = vunpack.c.l.b16 %v9971
        %v10100 = vunpack.c.l.b16 %v9972
        %v10101 = vunpack.c.l.b16 %v9973
        %v10102 = vunpack.c.l.b16 %v9974
        %v10103 = vunpack.c.l.b16 %v9975
        %v10104 = vunpack.c.l.b16 %v9976
        %v10105 = vunpack.c.l.b16 %v9977
        %v10106 = vunpack.c.l.b16 %v9978
        %v10107 = vpack.c.b16 %v10060, %v10059
        %v10108 = vpack.c.b16 %v10062, %v10061
        %v10109 = vpack.c.b16 %v10064, %v10063
        %v10110 = vpack.c.b16 %v10066, %v10065
        %v10111 = vpack.c.b16 %v10068, %v10067
        %v10112 = vpack.c.b16 %v10070, %v10069
        %v10113 = vpack.c.b16 %v10072, %v10071
        %v10114 = vpack.c.b16 %v10074, %v10073
        %v10115 = vpack.c.b16 %v10076, %v10075
        %v10116 = vpack.c.b16 %v10078, %v10077
        %v10117 = vpack.c.b16 %v10080, %v10079
        %v10118 = vpack.c.b16 %v10082, %v10081
        %v10119 = vpack.c.b16 %v10084, %v10083
        %v10120 = vpack.c.b16 %v10086, %v10085
        %v10121 = vpack.c.b16 %v10088, %v10087
        %v10122 = vpack.c.b16 %v10090, %v10089
        %v10123 = vpack.c.b16 %v10092, %v10091
        %v10124 = vpack.c.b16 %v10094, %v10093
        %v10125 = vpack.c.b16 %v10096, %v10095
        %v10126 = vpack.c.b16 %v10098, %v10097
        %v10127 = vpack.c.b16 %v10100, %v10099
        %v10128 = vpack.c.b16 %v10102, %v10101
        %v10129 = vpack.c.b16 %v10104, %v10103
        %v10130 = vpack.c.b16 %v10106, %v10105
        %10155 = vmatpush.bf16.msra.mxu0 %v10114
        %10156 = vmatpush.bf16.msra.mxu0 %v10113
        %10157 = vmatpush.bf16.msra.mxu0 %v10112
        %10158 = vmatpush.bf16.msra.mxu0 %v10111
        %10159 = vmatpush.bf16.msra.mxu0 %v10110
        %10160 = vmatpush.bf16.msra.mxu0 %v10109
        %10161 = vmatpush.bf16.msra.mxu0 %v10108
        %10162 = vmatpush.bf16.msra.mxu0 %v10107
        %10163 = vmatmul.bf16.gmra.mxu0 %v6095
        %v10164 = vpop.f32.mrf.mxu0
        %v10165 = vadd.f32 0.0, %v10164
        %v10166 = vpop.f32.mrf.mxu0
        %v10167 = vadd.f32 0.0, %v10166
        %10168 = vmatmul.bf16.gmra.mxu0 %v6098
        %v10169 = vpop.f32.mrf.mxu0
        %v10170 = vadd.f32 0.0, %v10169
        %v10171 = vpop.f32.mrf.mxu0
        %v10172 = vadd.f32 0.0, %v10171
        %10173 = vmatmul.bf16.gmra.mxu0 %v6101
        %v10174 = vpop.f32.mrf.mxu0
        %v10175 = vadd.f32 0.0, %v10174
        %v10176 = vpop.f32.mrf.mxu0
        %v10177 = vadd.f32 0.0, %v10176
        %10178 = vmatmul.bf16.gmra.mxu0 %v6104
        %v10179 = vpop.f32.mrf.mxu0
        %v10180 = vadd.f32 0.0, %v10179
        %v10181 = vpop.f32.mrf.mxu0
        %v10182 = vadd.f32 0.0, %v10181
        %10183 = vmatmul.bf16.gmra.mxu0 %v6107
        %v10184 = vpop.f32.mrf.mxu0
        %v10185 = vadd.f32 0.0, %v10184
        %v10186 = vpop.f32.mrf.mxu0
        %v10187 = vadd.f32 0.0, %v10186
        %10188 = vmatmul.bf16.gmra.mxu0 %v6110
        %v10189 = vpop.f32.mrf.mxu0
        %v10190 = vadd.f32 0.0, %v10189
        %v10191 = vpop.f32.mrf.mxu0
        %v10192 = vadd.f32 0.0, %v10191
        %10193 = vmatmul.bf16.gmra.mxu0 %v6113
        %v10194 = vpop.f32.mrf.mxu0
        %v10195 = vadd.f32 0.0, %v10194
        %v10196 = vpop.f32.mrf.mxu0
        %v10197 = vadd.f32 0.0, %v10196
        %10198 = vmatmul.bf16.gmra.mxu0 %v6116
        %v10199 = vpop.f32.mrf.mxu0
        %v10200 = vadd.f32 0.0, %v10199
        %v10201 = vpop.f32.mrf.mxu0
        %v10202 = vadd.f32 0.0, %v10201
        %10203 = vmatmul.bf16.gmra.mxu0 %v6119
        %v10204 = vpop.f32.mrf.mxu0
        %v10205 = vadd.f32 0.0, %v10204
        %v10206 = vpop.f32.mrf.mxu0
        %v10207 = vadd.f32 0.0, %v10206
        %10208 = vmatmul.bf16.gmra.mxu0 %v6122
        %v10209 = vpop.f32.mrf.mxu0
        %v10210 = vadd.f32 0.0, %v10209
        %v10211 = vpop.f32.mrf.mxu0
        %v10212 = vadd.f32 0.0, %v10211
        %10213 = vmatmul.bf16.gmra.mxu0 %v7967
        %v10214 = vpop.f32.mrf.mxu0
        %v10215 = vadd.f32 0.0, %v10214
        %v10216 = vpop.f32.mrf.mxu0
        %v10217 = vadd.f32 0.0, %v10216
        %10218 = vmatmul.bf16.gmra.mxu0 %v7970
        %v10219 = vpop.f32.mrf.mxu0
        %v10220 = vadd.f32 0.0, %v10219
        %v10221 = vpop.f32.mrf.mxu0
        %v10222 = vadd.f32 0.0, %v10221
        %10223 = vmatmul.bf16.gmra.mxu0 %v8983
        %v10224 = vpop.f32.mrf.mxu0
        %v10225 = vadd.f32 0.0, %v10224
        %v10226 = vpop.f32.mrf.mxu0
        %v10227 = vadd.f32 0.0, %v10226
        %10228 = vmatmul.bf16.gmra.mxu0 %v8986
        %v10229 = vpop.f32.mrf.mxu0
        %v10230 = vadd.f32 0.0, %v10229
        %v10231 = vpop.f32.mrf.mxu0
        %v10232 = vadd.f32 0.0, %v10231
        %10233 = vmatmul.bf16.gmra.mxu0 %v9999
        %v10234 = vpop.f32.mrf.mxu0
        %v10235 = vadd.f32 0.0, %v10234
        %v10236 = vpop.f32.mrf.mxu0
        %v10237 = vadd.f32 0.0, %v10236
        %10238 = vmatmul.bf16.gmra.mxu0 %v10002
        %v10239 = vpop.f32.mrf.mxu0
        %v10240 = vadd.f32 0.0, %v10239
        %v10241 = vpop.f32.mrf.mxu0
        %v10242 = vadd.f32 0.0, %v10241
        %10243 = vdwg.mxu0
        %10244 = vmatpush.bf16.msra.mxu0 %v10122
        %10245 = vmatpush.bf16.msra.mxu0 %v10121
        %10246 = vmatpush.bf16.msra.mxu0 %v10120
        %10247 = vmatpush.bf16.msra.mxu0 %v10119
        %10248 = vmatpush.bf16.msra.mxu0 %v10118
        %10249 = vmatpush.bf16.msra.mxu0 %v10117
        %10250 = vmatpush.bf16.msra.mxu0 %v10116
        %10251 = vmatpush.bf16.msra.mxu0 %v10115
        %10252 = vmatmul.bf16.gmra.mxu0 %v6096
        %v10253 = vpop.f32.mrf.mxu0
        %v10254 = vadd.f32 %v10165, %v10253
        %v10255 = vpop.f32.mrf.mxu0
        %v10256 = vadd.f32 %v10167, %v10255
        %10257 = vmatmul.bf16.gmra.mxu0 %v6099
        %v10258 = vpop.f32.mrf.mxu0
        %v10259 = vadd.f32 %v10170, %v10258
        %v10260 = vpop.f32.mrf.mxu0
        %v10261 = vadd.f32 %v10172, %v10260
        %10262 = vmatmul.bf16.gmra.mxu0 %v6102
        %v10263 = vpop.f32.mrf.mxu0
        %v10264 = vadd.f32 %v10175, %v10263
        %v10265 = vpop.f32.mrf.mxu0
        %v10266 = vadd.f32 %v10177, %v10265
        %10267 = vmatmul.bf16.gmra.mxu0 %v6105
        %v10268 = vpop.f32.mrf.mxu0
        %v10269 = vadd.f32 %v10180, %v10268
        %v10270 = vpop.f32.mrf.mxu0
        %v10271 = vadd.f32 %v10182, %v10270
        %10272 = vmatmul.bf16.gmra.mxu0 %v6108
        %v10273 = vpop.f32.mrf.mxu0
        %v10274 = vadd.f32 %v10185, %v10273
        %v10275 = vpop.f32.mrf.mxu0
        %v10276 = vadd.f32 %v10187, %v10275
        %10277 = vmatmul.bf16.gmra.mxu0 %v6111
        %v10278 = vpop.f32.mrf.mxu0
        %v10279 = vadd.f32 %v10190, %v10278
        %v10280 = vpop.f32.mrf.mxu0
        %v10281 = vadd.f32 %v10192, %v10280
        %10282 = vmatmul.bf16.gmra.mxu0 %v6114
        %v10283 = vpop.f32.mrf.mxu0
        %v10284 = vadd.f32 %v10195, %v10283
        %v10285 = vpop.f32.mrf.mxu0
        %v10286 = vadd.f32 %v10197, %v10285
        %10287 = vmatmul.bf16.gmra.mxu0 %v6117
        %v10288 = vpop.f32.mrf.mxu0
        %v10289 = vadd.f32 %v10200, %v10288
        %v10290 = vpop.f32.mrf.mxu0
        %v10291 = vadd.f32 %v10202, %v10290
        %10292 = vmatmul.bf16.gmra.mxu0 %v6120
        %v10293 = vpop.f32.mrf.mxu0
        %v10294 = vadd.f32 %v10205, %v10293
        %v10295 = vpop.f32.mrf.mxu0
        %v10296 = vadd.f32 %v10207, %v10295
        %10297 = vmatmul.bf16.gmra.mxu0 %v6123
        %v10298 = vpop.f32.mrf.mxu0
        %v10299 = vadd.f32 %v10210, %v10298
        %v10300 = vpop.f32.mrf.mxu0
        %v10301 = vadd.f32 %v10212, %v10300
        %10302 = vmatmul.bf16.gmra.mxu0 %v7968
        %v10303 = vpop.f32.mrf.mxu0
        %v10304 = vadd.f32 %v10215, %v10303
        %v10305 = vpop.f32.mrf.mxu0
        %v10306 = vadd.f32 %v10217, %v10305
        %10307 = vmatmul.bf16.gmra.mxu0 %v7971
        %v10308 = vpop.f32.mrf.mxu0
        %v10309 = vadd.f32 %v10220, %v10308
        %v10310 = vpop.f32.mrf.mxu0
        %v10311 = vadd.f32 %v10222, %v10310
        %10312 = vmatmul.bf16.gmra.mxu0 %v8984
        %v10313 = vpop.f32.mrf.mxu0
        %v10314 = vadd.f32 %v10225, %v10313
        %v10315 = vpop.f32.mrf.mxu0
        %v10316 = vadd.f32 %v10227, %v10315
        %10317 = vmatmul.bf16.gmra.mxu0 %v8987
        %v10318 = vpop.f32.mrf.mxu0
        %v10319 = vadd.f32 %v10230, %v10318
        %v10320 = vpop.f32.mrf.mxu0
        %v10321 = vadd.f32 %v10232, %v10320
        %10322 = vmatmul.bf16.gmra.mxu0 %v10000
        %v10323 = vpop.f32.mrf.mxu0
        %v10324 = vadd.f32 %v10235, %v10323
        %v10325 = vpop.f32.mrf.mxu0
        %v10326 = vadd.f32 %v10237, %v10325
        %10327 = vmatmul.bf16.gmra.mxu0 %v10003
        %v10328 = vpop.f32.mrf.mxu0
        %v10329 = vadd.f32 %v10240, %v10328
        %v10330 = vpop.f32.mrf.mxu0
        %v10331 = vadd.f32 %v10242, %v10330
        %10332 = vdwg.mxu0
        %10333 = vmatpush.bf16.msra.mxu0 %v10130
        %10334 = vmatpush.bf16.msra.mxu0 %v10129
        %10335 = vmatpush.bf16.msra.mxu0 %v10128
        %10336 = vmatpush.bf16.msra.mxu0 %v10127
        %10337 = vmatpush.bf16.msra.mxu0 %v10126
        %10338 = vmatpush.bf16.msra.mxu0 %v10125
        %10339 = vmatpush.bf16.msra.mxu0 %v10124
        %10340 = vmatpush.bf16.msra.mxu0 %v10123
        %10341 = vmatmul.bf16.gmra.mxu0 %v6097
        %v10342 = vpop.f32.mrf.mxu0
        %v10343 = vadd.f32 %v10254, %v10342
        %v10344 = vpop.f32.mrf.mxu0
        %v10345 = vadd.f32 %v10256, %v10344
        %10346 = vmatmul.bf16.gmra.mxu0 %v6100
        %v10347 = vpop.f32.mrf.mxu0
        %v10348 = vadd.f32 %v10259, %v10347
        %v10349 = vpop.f32.mrf.mxu0
        %v10350 = vadd.f32 %v10261, %v10349
        %10351 = vmatmul.bf16.gmra.mxu0 %v6103
        %v10352 = vpop.f32.mrf.mxu0
        %v10353 = vadd.f32 %v10264, %v10352
        %v10354 = vpop.f32.mrf.mxu0
        %v10355 = vadd.f32 %v10266, %v10354
        %10356 = vmatmul.bf16.gmra.mxu0 %v6106
        %v10357 = vpop.f32.mrf.mxu0
        %v10358 = vadd.f32 %v10269, %v10357
        %v10359 = vpop.f32.mrf.mxu0
        %v10360 = vadd.f32 %v10271, %v10359
        %10361 = vmatmul.bf16.gmra.mxu0 %v6109
        %v10362 = vpop.f32.mrf.mxu0
        %v10363 = vadd.f32 %v10274, %v10362
        %v10364 = vpop.f32.mrf.mxu0
        %v10365 = vadd.f32 %v10276, %v10364
        %10366 = vmatmul.bf16.gmra.mxu0 %v6112
        %v10367 = vpop.f32.mrf.mxu0
        %v10368 = vadd.f32 %v10279, %v10367
        %v10369 = vpop.f32.mrf.mxu0
        %v10370 = vadd.f32 %v10281, %v10369
        %10371 = vmatmul.bf16.gmra.mxu0 %v6115
        %v10372 = vpop.f32.mrf.mxu0
        %v10373 = vadd.f32 %v10284, %v10372
        %v10374 = vpop.f32.mrf.mxu0
        %v10375 = vadd.f32 %v10286, %v10374
        %10376 = vmatmul.bf16.gmra.mxu0 %v6118
        %v10377 = vpop.f32.mrf.mxu0
        %v10378 = vadd.f32 %v10289, %v10377
        %v10379 = vpop.f32.mrf.mxu0
        %v10380 = vadd.f32 %v10291, %v10379
        %10381 = vmatmul.bf16.gmra.mxu0 %v6121
        %v10382 = vpop.f32.mrf.mxu0
        %v10383 = vadd.f32 %v10294, %v10382
        %v10384 = vpop.f32.mrf.mxu0
        %v10385 = vadd.f32 %v10296, %v10384
        %10386 = vmatmul.bf16.gmra.mxu0 %v6124
        %v10387 = vpop.f32.mrf.mxu0
        %v10388 = vadd.f32 %v10299, %v10387
        %v10389 = vpop.f32.mrf.mxu0
        %v10390 = vadd.f32 %v10301, %v10389
        %10391 = vmatmul.bf16.gmra.mxu0 %v7969
        %v10392 = vpop.f32.mrf.mxu0
        %v10393 = vadd.f32 %v10304, %v10392
        %v10394 = vpop.f32.mrf.mxu0
        %v10395 = vadd.f32 %v10306, %v10394
        %10396 = vmatmul.bf16.gmra.mxu0 %v7972
        %v10397 = vpop.f32.mrf.mxu0
        %v10398 = vadd.f32 %v10309, %v10397
        %v10399 = vpop.f32.mrf.mxu0
        %v10400 = vadd.f32 %v10311, %v10399
        %10401 = vmatmul.bf16.gmra.mxu0 %v8985
        %v10402 = vpop.f32.mrf.mxu0
        %v10403 = vadd.f32 %v10314, %v10402
        %v10404 = vpop.f32.mrf.mxu0
        %v10405 = vadd.f32 %v10316, %v10404
        %10406 = vmatmul.bf16.gmra.mxu0 %v8988
        %v10407 = vpop.f32.mrf.mxu0
        %v10408 = vadd.f32 %v10319, %v10407
        %v10409 = vpop.f32.mrf.mxu0
        %v10410 = vadd.f32 %v10321, %v10409
        %10411 = vmatmul.bf16.gmra.mxu0 %v10001
        %v10412 = vpop.f32.mrf.mxu0
        %v10413 = vadd.f32 %v10324, %v10412
        %v10414 = vpop.f32.mrf.mxu0
        %v10415 = vadd.f32 %v10326, %v10414
        %10416 = vmatmul.bf16.gmra.mxu0 %v10004
        %v10417 = vpop.f32.mrf.mxu0
        %v10418 = vadd.f32 %v10329, %v10417
        %v10419 = vpop.f32.mrf.mxu0
        %v10420 = vadd.f32 %v10331, %v10419
        %10421 = vdwg.mxu0
        %v10422 = vadd.f32 %v9406, %v10343
        %v10423 = vadd.f32 %v9407, %v10345
        %v10424 = vadd.f32 %v9408, %v10348
        %v10425 = vadd.f32 %v9409, %v10350
        %v10426 = vadd.f32 %v9410, %v10353
        %v10427 = vadd.f32 %v9411, %v10355
        %v10428 = vadd.f32 %v9412, %v10358
        %v10429 = vadd.f32 %v9413, %v10360
        %v10430 = vadd.f32 %v9414, %v10363
        %v10431 = vadd.f32 %v9415, %v10365
        %v10432 = vadd.f32 %v9416, %v10368
        %v10433 = vadd.f32 %v9417, %v10370
        %v10434 = vadd.f32 %v9418, %v10373
        %v10435 = vadd.f32 %v9419, %v10375
        %v10436 = vadd.f32 %v9420, %v10378
        %v10437 = vadd.f32 %v9421, %v10380
        %v10438 = vadd.f32 %v9422, %v10383
        %v10439 = vadd.f32 %v9423, %v10385
        %v10440 = vadd.f32 %v9424, %v10388
        %v10441 = vadd.f32 %v9425, %v10390
        %v10442 = vadd.f32 %v9426, %v10393
        %v10443 = vadd.f32 %v9427, %v10395
        %v10444 = vadd.f32 %v9428, %v10398
        %v10445 = vadd.f32 %v9429, %v10400
        %v10446 = vadd.f32 %v9430, %v10403
        %v10447 = vadd.f32 %v9431, %v10405
        %v10448 = vadd.f32 %v9432, %v10408
        %v10449 = vadd.f32 %v9433, %v10410
        %v10450 = vadd.f32 %v9434, %v10413
        %v10451 = vadd.f32 %v9435, %v10415
        %v10452 = vadd.f32 %v9436, %v10418
        %v10453 = vadd.f32 %v9437, %v10420
        %s10454 = scalar_lea.vmem %s5, 768
        %v10455 = vld [vmem:[%s10454] sm:$0xf]
        %v10456 = vld [vmem:[%s10454 + $0x4] sm:$0xf]
        %v10457 = vld [vmem:[%s10454 + $0x8] sm:$0xf]
        %v10458 = vld [vmem:[%s10454 + $0xc] sm:$0xf]
        %v10459 = vld [vmem:[%s10454 + $0x10] sm:$0xf]
        %v10460 = vld [vmem:[%s10454 + $0x14] sm:$0xf]
        %v10461 = vld [vmem:[%s10454 + $0x18] sm:$0xf]
        %v10462 = vld [vmem:[%s10454 + $0x1c] sm:$0xf]
        %v10463 = vld [vmem:[%s10454 + $0x20] sm:$0xf]
        %v10464 = vld [vmem:[%s10454 + $0x24] sm:$0xf]
        %v10465 = vld [vmem:[%s10454 + $0x28] sm:$0xf]
        %v10466 = vld [vmem:[%s10454 + $0x2c] sm:$0xf]
        %v10467 = vld [vmem:[%s10454 + $0x30] sm:$0xf]
        %v10468 = vld [vmem:[%s10454 + $0x34] sm:$0xf]
        %v10469 = vld [vmem:[%s10454 + $0x38] sm:$0xf]
        %v10470 = vld [vmem:[%s10454 + $0x3c] sm:$0xf]
        %v10471 = vld [vmem:[%s10454 + $0x40] sm:$0xf]
        %v10472 = vld [vmem:[%s10454 + $0x44] sm:$0xf]
        %v10473 = vld [vmem:[%s10454 + $0x48] sm:$0xf]
        %v10474 = vld [vmem:[%s10454 + $0x4c] sm:$0xf]
        %v10475 = vld [vmem:[%s10454 + $0x50] sm:$0xf]
        %v10476 = vld [vmem:[%s10454 + $0x54] sm:$0xf]
        %v10477 = vld [vmem:[%s10454 + $0x58] sm:$0xf]
        %v10478 = vld [vmem:[%s10454 + $0x5c] sm:$0xf]
        %v10479 = vld [vmem:[%s10454 + $0x60] sm:$0xf]
        %v10480 = vld [vmem:[%s10454 + $0x64] sm:$0xf]
        %v10481 = vld [vmem:[%s10454 + $0x68] sm:$0xf]
        %v10482 = vld [vmem:[%s10454 + $0x6c] sm:$0xf]
        %v10483 = vld [vmem:[%s10454 + $0x70] sm:$0xf]
        %v10484 = vld [vmem:[%s10454 + $0x74] sm:$0xf]
        %v10485 = vld [vmem:[%s10454 + $0x78] sm:$0xf]
        %v10486 = vld [vmem:[%s10454 + $0x7c] sm:$0xf]
        %v10487 = vld [vmem:[%s10454 + $0x80] sm:$0xf]
        %v10488 = vld [vmem:[%s10454 + $0x84] sm:$0xf]
        %v10489 = vld [vmem:[%s10454 + $0x88] sm:$0xf]
        %v10490 = vld [vmem:[%s10454 + $0x8c] sm:$0xf]
        %v10491 = vld [vmem:[%s10454 + $0x90] sm:$0xf]
        %v10492 = vld [vmem:[%s10454 + $0x94] sm:$0xf]
        %v10493 = vld [vmem:[%s10454 + $0x98] sm:$0xf]
        %v10494 = vld [vmem:[%s10454 + $0x9c] sm:$0xf]
        %v10495 = vld [vmem:[%s10454 + $0xa0] sm:$0xf]
        %v10496 = vld [vmem:[%s10454 + $0xa4] sm:$0xf]
        %v10497 = vld [vmem:[%s10454 + $0xa8] sm:$0xf]
        %v10498 = vld [vmem:[%s10454 + $0xac] sm:$0xf]
        %v10499 = vld [vmem:[%s10454 + $0xb0] sm:$0xf]
        %v10500 = vld [vmem:[%s10454 + $0xb4] sm:$0xf]
        %v10501 = vld [vmem:[%s10454 + $0xb8] sm:$0xf]
        %v10502 = vld [vmem:[%s10454 + $0xbc] sm:$0xf]
        %v10551 = vunpack.c.l.b16 %v10455
        %v10552 = vunpack.c.l.b16 %v10456
        %v10553 = vunpack.c.l.b16 %v10457
        %v10554 = vunpack.c.l.b16 %v10458
        %v10555 = vunpack.c.l.b16 %v10459
        %v10556 = vunpack.c.l.b16 %v10460
        %v10557 = vunpack.c.l.b16 %v10461
        %v10558 = vunpack.c.l.b16 %v10462
        %v10559 = vunpack.c.l.b16 %v10463
        %v10560 = vunpack.c.l.b16 %v10464
        %v10561 = vunpack.c.l.b16 %v10465
        %v10562 = vunpack.c.l.b16 %v10466
        %v10563 = vunpack.c.l.b16 %v10467
        %v10564 = vunpack.c.l.b16 %v10468
        %v10565 = vunpack.c.l.b16 %v10469
        %v10566 = vunpack.c.l.b16 %v10470
        %v10567 = vunpack.c.l.b16 %v10471
        %v10568 = vunpack.c.l.b16 %v10472
        %v10569 = vunpack.c.l.b16 %v10473
        %v10570 = vunpack.c.l.b16 %v10474
        %v10571 = vunpack.c.l.b16 %v10475
        %v10572 = vunpack.c.l.b16 %v10476
        %v10573 = vunpack.c.l.b16 %v10477
        %v10574 = vunpack.c.l.b16 %v10478
        %v10575 = vunpack.c.l.b16 %v10479
        %v10576 = vunpack.c.l.b16 %v10480
        %v10577 = vunpack.c.l.b16 %v10481
        %v10578 = vunpack.c.l.b16 %v10482
        %v10579 = vunpack.c.l.b16 %v10483
        %v10580 = vunpack.c.l.b16 %v10484
        %v10581 = vunpack.c.l.b16 %v10485
        %v10582 = vunpack.c.l.b16 %v10486
        %v10583 = vunpack.c.l.b16 %v10487
        %v10584 = vunpack.c.l.b16 %v10488
        %v10585 = vunpack.c.l.b16 %v10489
        %v10586 = vunpack.c.l.b16 %v10490
        %v10587 = vunpack.c.l.b16 %v10491
        %v10588 = vunpack.c.l.b16 %v10492
        %v10589 = vunpack.c.l.b16 %v10493
        %v10590 = vunpack.c.l.b16 %v10494
        %v10591 = vunpack.c.l.b16 %v10495
        %v10592 = vunpack.c.l.b16 %v10496
        %v10593 = vunpack.c.l.b16 %v10497
        %v10594 = vunpack.c.l.b16 %v10498
        %v10595 = vunpack.c.l.b16 %v10499
        %v10596 = vunpack.c.l.b16 %v10500
        %v10597 = vunpack.c.l.b16 %v10501
        %v10598 = vunpack.c.l.b16 %v10502
        %v10599 = vpack.c.b16 %v10552, %v10551
        %v10600 = vpack.c.b16 %v10554, %v10553
        %v10601 = vpack.c.b16 %v10556, %v10555
        %v10602 = vpack.c.b16 %v10558, %v10557
        %v10603 = vpack.c.b16 %v10560, %v10559
        %v10604 = vpack.c.b16 %v10562, %v10561
        %v10605 = vpack.c.b16 %v10564, %v10563
        %v10606 = vpack.c.b16 %v10566, %v10565
        %v10607 = vpack.c.b16 %v10568, %v10567
        %v10608 = vpack.c.b16 %v10570, %v10569
        %v10609 = vpack.c.b16 %v10572, %v10571
        %v10610 = vpack.c.b16 %v10574, %v10573
        %v10611 = vpack.c.b16 %v10576, %v10575
        %v10612 = vpack.c.b16 %v10578, %v10577
        %v10613 = vpack.c.b16 %v10580, %v10579
        %v10614 = vpack.c.b16 %v10582, %v10581
        %v10615 = vpack.c.b16 %v10584, %v10583
        %v10616 = vpack.c.b16 %v10586, %v10585
        %v10617 = vpack.c.b16 %v10588, %v10587
        %v10618 = vpack.c.b16 %v10590, %v10589
        %v10619 = vpack.c.b16 %v10592, %v10591
        %v10620 = vpack.c.b16 %v10594, %v10593
        %v10621 = vpack.c.b16 %v10596, %v10595
        %v10622 = vpack.c.b16 %v10598, %v10597
        %10647 = vmatpush.bf16.msra.mxu0 %v10606
        %10648 = vmatpush.bf16.msra.mxu0 %v10605
        %10649 = vmatpush.bf16.msra.mxu0 %v10604
        %10650 = vmatpush.bf16.msra.mxu0 %v10603
        %10651 = vmatpush.bf16.msra.mxu0 %v10602
        %10652 = vmatpush.bf16.msra.mxu0 %v10601
        %10653 = vmatpush.bf16.msra.mxu0 %v10600
        %10654 = vmatpush.bf16.msra.mxu0 %v10599
        %10655 = vmatmul.bf16.gmra.mxu0 %v6095
        %v10656 = vpop.f32.mrf.mxu0
        %v10657 = vadd.f32 0.0, %v10656
        %v10658 = vpop.f32.mrf.mxu0
        %v10659 = vadd.f32 0.0, %v10658
        %10660 = vmatmul.bf16.gmra.mxu0 %v6098
        %v10661 = vpop.f32.mrf.mxu0
        %v10662 = vadd.f32 0.0, %v10661
        %v10663 = vpop.f32.mrf.mxu0
        %v10664 = vadd.f32 0.0, %v10663
        %10665 = vmatmul.bf16.gmra.mxu0 %v6101
        %v10666 = vpop.f32.mrf.mxu0
        %v10667 = vadd.f32 0.0, %v10666
        %v10668 = vpop.f32.mrf.mxu0
        %v10669 = vadd.f32 0.0, %v10668
        %10670 = vmatmul.bf16.gmra.mxu0 %v6104
        %v10671 = vpop.f32.mrf.mxu0
        %v10672 = vadd.f32 0.0, %v10671
        %v10673 = vpop.f32.mrf.mxu0
        %v10674 = vadd.f32 0.0, %v10673
        %10675 = vmatmul.bf16.gmra.mxu0 %v6107
        %v10676 = vpop.f32.mrf.mxu0
        %v10677 = vadd.f32 0.0, %v10676
        %v10678 = vpop.f32.mrf.mxu0
        %v10679 = vadd.f32 0.0, %v10678
        %10680 = vmatmul.bf16.gmra.mxu0 %v6110
        %v10681 = vpop.f32.mrf.mxu0
        %v10682 = vadd.f32 0.0, %v10681
        %v10683 = vpop.f32.mrf.mxu0
        %v10684 = vadd.f32 0.0, %v10683
        %10685 = vmatmul.bf16.gmra.mxu0 %v6113
        %v10686 = vpop.f32.mrf.mxu0
        %v10687 = vadd.f32 0.0, %v10686
        %v10688 = vpop.f32.mrf.mxu0
        %v10689 = vadd.f32 0.0, %v10688
        %10690 = vmatmul.bf16.gmra.mxu0 %v6116
        %v10691 = vpop.f32.mrf.mxu0
        %v10692 = vadd.f32 0.0, %v10691
        %v10693 = vpop.f32.mrf.mxu0
        %v10694 = vadd.f32 0.0, %v10693
        %10695 = vmatmul.bf16.gmra.mxu0 %v6119
        %v10696 = vpop.f32.mrf.mxu0
        %v10697 = vadd.f32 0.0, %v10696
        %v10698 = vpop.f32.mrf.mxu0
        %v10699 = vadd.f32 0.0, %v10698
        %10700 = vmatmul.bf16.gmra.mxu0 %v6122
        %v10701 = vpop.f32.mrf.mxu0
        %v10702 = vadd.f32 0.0, %v10701
        %v10703 = vpop.f32.mrf.mxu0
        %v10704 = vadd.f32 0.0, %v10703
        %10705 = vmatmul.bf16.gmra.mxu0 %v7967
        %v10706 = vpop.f32.mrf.mxu0
        %v10707 = vadd.f32 0.0, %v10706
        %v10708 = vpop.f32.mrf.mxu0
        %v10709 = vadd.f32 0.0, %v10708
        %10710 = vmatmul.bf16.gmra.mxu0 %v7970
        %v10711 = vpop.f32.mrf.mxu0
        %v10712 = vadd.f32 0.0, %v10711
        %v10713 = vpop.f32.mrf.mxu0
        %v10714 = vadd.f32 0.0, %v10713
        %10715 = vmatmul.bf16.gmra.mxu0 %v8983
        %v10716 = vpop.f32.mrf.mxu0
        %v10717 = vadd.f32 0.0, %v10716
        %v10718 = vpop.f32.mrf.mxu0
        %v10719 = vadd.f32 0.0, %v10718
        %10720 = vmatmul.bf16.gmra.mxu0 %v8986
        %v10721 = vpop.f32.mrf.mxu0
        %v10722 = vadd.f32 0.0, %v10721
        %v10723 = vpop.f32.mrf.mxu0
        %v10724 = vadd.f32 0.0, %v10723
        %10725 = vmatmul.bf16.gmra.mxu0 %v9999
        %v10726 = vpop.f32.mrf.mxu0
        %v10727 = vadd.f32 0.0, %v10726
        %v10728 = vpop.f32.mrf.mxu0
        %v10729 = vadd.f32 0.0, %v10728
        %10730 = vmatmul.bf16.gmra.mxu0 %v10002
        %v10731 = vpop.f32.mrf.mxu0
        %v10732 = vadd.f32 0.0, %v10731
        %v10733 = vpop.f32.mrf.mxu0
        %v10734 = vadd.f32 0.0, %v10733
        %10735 = vdwg.mxu0
        %10736 = vmatpush.bf16.msra.mxu0 %v10614
        %10737 = vmatpush.bf16.msra.mxu0 %v10613
        %10738 = vmatpush.bf16.msra.mxu0 %v10612
        %10739 = vmatpush.bf16.msra.mxu0 %v10611
        %10740 = vmatpush.bf16.msra.mxu0 %v10610
        %10741 = vmatpush.bf16.msra.mxu0 %v10609
        %10742 = vmatpush.bf16.msra.mxu0 %v10608
        %10743 = vmatpush.bf16.msra.mxu0 %v10607
        %10744 = vmatmul.bf16.gmra.mxu0 %v6096
        %v10745 = vpop.f32.mrf.mxu0
        %v10746 = vadd.f32 %v10657, %v10745
        %v10747 = vpop.f32.mrf.mxu0
        %v10748 = vadd.f32 %v10659, %v10747
        %10749 = vmatmul.bf16.gmra.mxu0 %v6099
        %v10750 = vpop.f32.mrf.mxu0
        %v10751 = vadd.f32 %v10662, %v10750
        %v10752 = vpop.f32.mrf.mxu0
        %v10753 = vadd.f32 %v10664, %v10752
        %10754 = vmatmul.bf16.gmra.mxu0 %v6102
        %v10755 = vpop.f32.mrf.mxu0
        %v10756 = vadd.f32 %v10667, %v10755
        %v10757 = vpop.f32.mrf.mxu0
        %v10758 = vadd.f32 %v10669, %v10757
        %10759 = vmatmul.bf16.gmra.mxu0 %v6105
        %v10760 = vpop.f32.mrf.mxu0
        %v10761 = vadd.f32 %v10672, %v10760
        %v10762 = vpop.f32.mrf.mxu0
        %v10763 = vadd.f32 %v10674, %v10762
        %10764 = vmatmul.bf16.gmra.mxu0 %v6108
        %v10765 = vpop.f32.mrf.mxu0
        %v10766 = vadd.f32 %v10677, %v10765
        %v10767 = vpop.f32.mrf.mxu0
        %v10768 = vadd.f32 %v10679, %v10767
        %10769 = vmatmul.bf16.gmra.mxu0 %v6111
        %v10770 = vpop.f32.mrf.mxu0
        %v10771 = vadd.f32 %v10682, %v10770
        %v10772 = vpop.f32.mrf.mxu0
        %v10773 = vadd.f32 %v10684, %v10772
        %10774 = vmatmul.bf16.gmra.mxu0 %v6114
        %v10775 = vpop.f32.mrf.mxu0
        %v10776 = vadd.f32 %v10687, %v10775
        %v10777 = vpop.f32.mrf.mxu0
        %v10778 = vadd.f32 %v10689, %v10777
        %10779 = vmatmul.bf16.gmra.mxu0 %v6117
        %v10780 = vpop.f32.mrf.mxu0
        %v10781 = vadd.f32 %v10692, %v10780
        %v10782 = vpop.f32.mrf.mxu0
        %v10783 = vadd.f32 %v10694, %v10782
        %10784 = vmatmul.bf16.gmra.mxu0 %v6120
        %v10785 = vpop.f32.mrf.mxu0
        %v10786 = vadd.f32 %v10697, %v10785
        %v10787 = vpop.f32.mrf.mxu0
        %v10788 = vadd.f32 %v10699, %v10787
        %10789 = vmatmul.bf16.gmra.mxu0 %v6123
        %v10790 = vpop.f32.mrf.mxu0
        %v10791 = vadd.f32 %v10702, %v10790
        %v10792 = vpop.f32.mrf.mxu0
        %v10793 = vadd.f32 %v10704, %v10792
        %10794 = vmatmul.bf16.gmra.mxu0 %v7968
        %v10795 = vpop.f32.mrf.mxu0
        %v10796 = vadd.f32 %v10707, %v10795
        %v10797 = vpop.f32.mrf.mxu0
        %v10798 = vadd.f32 %v10709, %v10797
        %10799 = vmatmul.bf16.gmra.mxu0 %v7971
        %v10800 = vpop.f32.mrf.mxu0
        %v10801 = vadd.f32 %v10712, %v10800
        %v10802 = vpop.f32.mrf.mxu0
        %v10803 = vadd.f32 %v10714, %v10802
        %10804 = vmatmul.bf16.gmra.mxu0 %v8984
        %v10805 = vpop.f32.mrf.mxu0
        %v10806 = vadd.f32 %v10717, %v10805
        %v10807 = vpop.f32.mrf.mxu0
        %v10808 = vadd.f32 %v10719, %v10807
        %10809 = vmatmul.bf16.gmra.mxu0 %v8987
        %v10810 = vpop.f32.mrf.mxu0
        %v10811 = vadd.f32 %v10722, %v10810
        %v10812 = vpop.f32.mrf.mxu0
        %v10813 = vadd.f32 %v10724, %v10812
        %10814 = vmatmul.bf16.gmra.mxu0 %v10000
        %v10815 = vpop.f32.mrf.mxu0
        %v10816 = vadd.f32 %v10727, %v10815
        %v10817 = vpop.f32.mrf.mxu0
        %v10818 = vadd.f32 %v10729, %v10817
        %10819 = vmatmul.bf16.gmra.mxu0 %v10003
        %v10820 = vpop.f32.mrf.mxu0
        %v10821 = vadd.f32 %v10732, %v10820
        %v10822 = vpop.f32.mrf.mxu0
        %v10823 = vadd.f32 %v10734, %v10822
        %10824 = vdwg.mxu0
        %10825 = vmatpush.bf16.msra.mxu0 %v10622
        %10826 = vmatpush.bf16.msra.mxu0 %v10621
        %10827 = vmatpush.bf16.msra.mxu0 %v10620
        %10828 = vmatpush.bf16.msra.mxu0 %v10619
        %10829 = vmatpush.bf16.msra.mxu0 %v10618
        %10830 = vmatpush.bf16.msra.mxu0 %v10617
        %10831 = vmatpush.bf16.msra.mxu0 %v10616
        %10832 = vmatpush.bf16.msra.mxu0 %v10615
        %10833 = vmatmul.bf16.gmra.mxu0 %v6097
        %v10834 = vpop.f32.mrf.mxu0
        %v10835 = vadd.f32 %v10746, %v10834
        %v10836 = vpop.f32.mrf.mxu0
        %v10837 = vadd.f32 %v10748, %v10836
        %10838 = vmatmul.bf16.gmra.mxu0 %v6100
        %v10839 = vpop.f32.mrf.mxu0
        %v10840 = vadd.f32 %v10751, %v10839
        %v10841 = vpop.f32.mrf.mxu0
        %v10842 = vadd.f32 %v10753, %v10841
        %10843 = vmatmul.bf16.gmra.mxu0 %v6103
        %v10844 = vpop.f32.mrf.mxu0
        %v10845 = vadd.f32 %v10756, %v10844
        %v10846 = vpop.f32.mrf.mxu0
        %v10847 = vadd.f32 %v10758, %v10846
        %10848 = vmatmul.bf16.gmra.mxu0 %v6106
        %v10849 = vpop.f32.mrf.mxu0
        %v10850 = vadd.f32 %v10761, %v10849
        %v10851 = vpop.f32.mrf.mxu0
        %v10852 = vadd.f32 %v10763, %v10851
        %10853 = vmatmul.bf16.gmra.mxu0 %v6109
        %v10854 = vpop.f32.mrf.mxu0
        %v10855 = vadd.f32 %v10766, %v10854
        %v10856 = vpop.f32.mrf.mxu0
        %v10857 = vadd.f32 %v10768, %v10856
        %10858 = vmatmul.bf16.gmra.mxu0 %v6112
        %v10859 = vpop.f32.mrf.mxu0
        %v10860 = vadd.f32 %v10771, %v10859
        %v10861 = vpop.f32.mrf.mxu0
        %v10862 = vadd.f32 %v10773, %v10861
        %10863 = vmatmul.bf16.gmra.mxu0 %v6115
        %v10864 = vpop.f32.mrf.mxu0
        %v10865 = vadd.f32 %v10776, %v10864
        %v10866 = vpop.f32.mrf.mxu0
        %v10867 = vadd.f32 %v10778, %v10866
        %10868 = vmatmul.bf16.gmra.mxu0 %v6118
        %v10869 = vpop.f32.mrf.mxu0
        %v10870 = vadd.f32 %v10781, %v10869
        %v10871 = vpop.f32.mrf.mxu0
        %v10872 = vadd.f32 %v10783, %v10871
        %10873 = vmatmul.bf16.gmra.mxu0 %v6121
        %v10874 = vpop.f32.mrf.mxu0
        %v10875 = vadd.f32 %v10786, %v10874
        %v10876 = vpop.f32.mrf.mxu0
        %v10877 = vadd.f32 %v10788, %v10876
        %10878 = vmatmul.bf16.gmra.mxu0 %v6124
        %v10879 = vpop.f32.mrf.mxu0
        %v10880 = vadd.f32 %v10791, %v10879
        %v10881 = vpop.f32.mrf.mxu0
        %v10882 = vadd.f32 %v10793, %v10881
        %10883 = vmatmul.bf16.gmra.mxu0 %v7969
        %v10884 = vpop.f32.mrf.mxu0
        %v10885 = vadd.f32 %v10796, %v10884
        %v10886 = vpop.f32.mrf.mxu0
        %v10887 = vadd.f32 %v10798, %v10886
        %10888 = vmatmul.bf16.gmra.mxu0 %v7972
        %v10889 = vpop.f32.mrf.mxu0
        %v10890 = vadd.f32 %v10801, %v10889
        %v10891 = vpop.f32.mrf.mxu0
        %v10892 = vadd.f32 %v10803, %v10891
        %10893 = vmatmul.bf16.gmra.mxu0 %v8985
        %v10894 = vpop.f32.mrf.mxu0
        %v10895 = vadd.f32 %v10806, %v10894
        %v10896 = vpop.f32.mrf.mxu0
        %v10897 = vadd.f32 %v10808, %v10896
        %10898 = vmatmul.bf16.gmra.mxu0 %v8988
        %v10899 = vpop.f32.mrf.mxu0
        %v10900 = vadd.f32 %v10811, %v10899
        %v10901 = vpop.f32.mrf.mxu0
        %v10902 = vadd.f32 %v10813, %v10901
        %10903 = vmatmul.bf16.gmra.mxu0 %v10001
        %v10904 = vpop.f32.mrf.mxu0
        %v10905 = vadd.f32 %v10816, %v10904
        %v10906 = vpop.f32.mrf.mxu0
        %v10907 = vadd.f32 %v10818, %v10906
        %10908 = vmatmul.bf16.gmra.mxu0 %v10004
        %v10909 = vpop.f32.mrf.mxu0
        %v10910 = vadd.f32 %v10821, %v10909
        %v10911 = vpop.f32.mrf.mxu0
        %v10912 = vadd.f32 %v10823, %v10911
        %10913 = vdwg.mxu0
        %v10914 = vadd.f32 %v9898, %v10835
        %v10915 = vadd.f32 %v9899, %v10837
        %v10916 = vadd.f32 %v9900, %v10840
        %v10917 = vadd.f32 %v9901, %v10842
        %v10918 = vadd.f32 %v9902, %v10845
        %v10919 = vadd.f32 %v9903, %v10847
        %v10920 = vadd.f32 %v9904, %v10850
        %v10921 = vadd.f32 %v9905, %v10852
        %v10922 = vadd.f32 %v9906, %v10855
        %v10923 = vadd.f32 %v9907, %v10857
        %v10924 = vadd.f32 %v9908, %v10860
        %v10925 = vadd.f32 %v9909, %v10862
        %v10926 = vadd.f32 %v9910, %v10865
        %v10927 = vadd.f32 %v9911, %v10867
        %v10928 = vadd.f32 %v9912, %v10870
        %v10929 = vadd.f32 %v9913, %v10872
        %v10930 = vadd.f32 %v9914, %v10875
        %v10931 = vadd.f32 %v9915, %v10877
        %v10932 = vadd.f32 %v9916, %v10880
        %v10933 = vadd.f32 %v9917, %v10882
        %v10934 = vadd.f32 %v9918, %v10885
        %v10935 = vadd.f32 %v9919, %v10887
        %v10936 = vadd.f32 %v9920, %v10890
        %v10937 = vadd.f32 %v9921, %v10892
        %v10938 = vadd.f32 %v9922, %v10895
        %v10939 = vadd.f32 %v9923, %v10897
        %v10940 = vadd.f32 %v9924, %v10900
        %v10941 = vadd.f32 %v9925, %v10902
        %v10942 = vadd.f32 %v9926, %v10905
        %v10943 = vadd.f32 %v9927, %v10907
        %v10944 = vadd.f32 %v9928, %v10910
        %v10945 = vadd.f32 %v9929, %v10912
        %v10946 = vmax.f32 %v10422, %v10914
        %v10947 = vmax.f32 %v10423, %v10915
        %v10948 = vmax.f32 %v10424, %v10916
        %v10949 = vmax.f32 %v10425, %v10917
        %v10950 = vmax.f32 %v10426, %v10918
        %v10951 = vmax.f32 %v10427, %v10919
        %v10952 = vmax.f32 %v10428, %v10920
        %v10953 = vmax.f32 %v10429, %v10921
        %v10954 = vmax.f32 %v10430, %v10922
        %v10955 = vmax.f32 %v10431, %v10923
        %v10956 = vmax.f32 %v10432, %v10924
        %v10957 = vmax.f32 %v10433, %v10925
        %v10958 = vmax.f32 %v10434, %v10926
        %v10959 = vmax.f32 %v10435, %v10927
        %v10960 = vmax.f32 %v10436, %v10928
        %v10961 = vmax.f32 %v10437, %v10929
        %v10962 = vmax.f32 %v10438, %v10930
        %v10963 = vmax.f32 %v10439, %v10931
        %v10964 = vmax.f32 %v10440, %v10932
        %v10965 = vmax.f32 %v10441, %v10933
        %v10966 = vmax.f32 %v10442, %v10934
        %v10967 = vmax.f32 %v10443, %v10935
        %v10968 = vmax.f32 %v10444, %v10936
        %v10969 = vmax.f32 %v10445, %v10937
        %v10970 = vmax.f32 %v10446, %v10938
        %v10971 = vmax.f32 %v10447, %v10939
        %v10972 = vmax.f32 %v10448, %v10940
        %v10973 = vmax.f32 %v10449, %v10941
        %v10974 = vmax.f32 %v10450, %v10942
        %v10975 = vmax.f32 %v10451, %v10943
        %v10976 = vmax.f32 %v10452, %v10944
        %v10977 = vmax.f32 %v10453, %v10945
        %v10978 = vld [vmem:[%s6] sm:$0x1]
        %v10980 = vperm.slane %v10978, 0
        %v10982 = vadd.f32 %v10946, %v10980
        %v10983 = vadd.f32 %v10947, %v10980
        %v10984 = vadd.f32 %v10948, %v10980
        %v10985 = vadd.f32 %v10949, %v10980
        %v10986 = vadd.f32 %v10950, %v10980
        %v10987 = vadd.f32 %v10951, %v10980
        %v10988 = vadd.f32 %v10952, %v10980
        %v10989 = vadd.f32 %v10953, %v10980
        %v10990 = vadd.f32 %v10954, %v10980
        %v10991 = vadd.f32 %v10955, %v10980
        %v10992 = vadd.f32 %v10956, %v10980
        %v10993 = vadd.f32 %v10957, %v10980
        %v10994 = vadd.f32 %v10958, %v10980
        %v10995 = vadd.f32 %v10959, %v10980
        %v10996 = vadd.f32 %v10960, %v10980
        %v10997 = vadd.f32 %v10961, %v10980
        %v10998 = vadd.f32 %v10962, %v10980
        %v10999 = vadd.f32 %v10963, %v10980
        %v11000 = vadd.f32 %v10964, %v10980
        %v11001 = vadd.f32 %v10965, %v10980
        %v11002 = vadd.f32 %v10966, %v10980
        %v11003 = vadd.f32 %v10967, %v10980
        %v11004 = vadd.f32 %v10968, %v10980
        %v11005 = vadd.f32 %v10969, %v10980
        %v11006 = vadd.f32 %v10970, %v10980
        %v11007 = vadd.f32 %v10971, %v10980
        %v11008 = vadd.f32 %v10972, %v10980
        %v11009 = vadd.f32 %v10973, %v10980
        %v11010 = vadd.f32 %v10974, %v10980
        %v11011 = vadd.f32 %v10975, %v10980
        %v11012 = vadd.f32 %v10976, %v10980
        %v11013 = vadd.f32 %v10977, %v10980
        %v11014 = vmax.f32 %v10982, 0.0
        %v11015 = vmax.f32 %v10983, 0.0
        %v11016 = vmax.f32 %v10984, 0.0
        %v11017 = vmax.f32 %v10985, 0.0
        %v11018 = vmax.f32 %v10986, 0.0
        %v11019 = vmax.f32 %v10987, 0.0
        %v11020 = vmax.f32 %v10988, 0.0
        %v11021 = vmax.f32 %v10989, 0.0
        %v11022 = vmax.f32 %v10990, 0.0
        %v11023 = vmax.f32 %v10991, 0.0
        %v11024 = vmax.f32 %v10992, 0.0
        %v11025 = vmax.f32 %v10993, 0.0
        %v11026 = vmax.f32 %v10994, 0.0
        %v11027 = vmax.f32 %v10995, 0.0
        %v11028 = vmax.f32 %v10996, 0.0
        %v11029 = vmax.f32 %v10997, 0.0
        %v11030 = vmax.f32 %v10998, 0.0
        %v11031 = vmax.f32 %v10999, 0.0
        %v11032 = vmax.f32 %v11000, 0.0
        %v11033 = vmax.f32 %v11001, 0.0
        %v11034 = vmax.f32 %v11002, 0.0
        %v11035 = vmax.f32 %v11003, 0.0
        %v11036 = vmax.f32 %v11004, 0.0
        %v11037 = vmax.f32 %v11005, 0.0
        %v11038 = vmax.f32 %v11006, 0.0
        %v11039 = vmax.f32 %v11007, 0.0
        %v11040 = vmax.f32 %v11008, 0.0
        %v11041 = vmax.f32 %v11009, 0.0
        %v11042 = vmax.f32 %v11010, 0.0
        %v11043 = vmax.f32 %v11011, 0.0
        %v11044 = vmax.f32 %v11012, 0.0
        %v11045 = vmax.f32 %v11013, 0.0
        %v11046 = vmax.f32 %v11014, %v11018
        %v11047 = vmax.f32 %v11015, %v11019
        %v11048 = vmax.f32 %v11016, %v11020
        %v11049 = vmax.f32 %v11017, %v11021
        %v11050 = vmax.f32 %v11022, %v11026
        %v11051 = vmax.f32 %v11023, %v11027
        %v11052 = vmax.f32 %v11024, %v11028
        %v11053 = vmax.f32 %v11025, %v11029
        %v11054 = vmax.f32 %v11030, %v11034
        %v11055 = vmax.f32 %v11031, %v11035
        %v11056 = vmax.f32 %v11032, %v11036
        %v11057 = vmax.f32 %v11033, %v11037
        %v11058 = vmax.f32 %v11038, %v11042
        %v11059 = vmax.f32 %v11039, %v11043
        %v11060 = vmax.f32 %v11040, %v11044
        %v11061 = vmax.f32 %v11041, %v11045
        %v11062 = vpack.c.bf16 %v11047, %v11046
        %v11063 = vpack.c.bf16 %v11051, %v11050
        %v11064 = vpack.c.bf16 %v11055, %v11054
        %v11065 = vpack.c.bf16 %v11059, %v11058
        %v11066 = vpack.c.bf16 %v11049, %v11048
        %v11067 = vpack.c.bf16 %v11053, %v11052
        %v11068 = vpack.c.bf16 %v11057, %v11056
        %v11069 = vpack.c.bf16 %v11061, %v11060
        %v11070 = vld [vmem:[%s7] sm:$0xf]
        %v11071 = vld [vmem:[%s7 + $0x4] sm:$0xf]
        %v11072 = vld [vmem:[%s7 + $0x8] sm:$0xf]
        %v11073 = vld [vmem:[%s7 + $0xc] sm:$0xf]
        %v11074 = vld [vmem:[%s7 + $0x10] sm:$0xf]
        %v11075 = vld [vmem:[%s7 + $0x14] sm:$0xf]
        %v11076 = vld [vmem:[%s7 + $0x18] sm:$0xf]
        %v11077 = vld [vmem:[%s7 + $0x1c] sm:$0xf]
        %v11078 = vld [vmem:[%s7 + $0x20] sm:$0xf]
        %v11079 = vld [vmem:[%s7 + $0x24] sm:$0xf]
        %v11080 = vld [vmem:[%s7 + $0x28] sm:$0xf]
        %v11081 = vld [vmem:[%s7 + $0x2c] sm:$0xf]
        %v11082 = vld [vmem:[%s7 + $0x30] sm:$0xf]
        %v11083 = vld [vmem:[%s7 + $0x34] sm:$0xf]
        %v11084 = vld [vmem:[%s7 + $0x38] sm:$0xf]
        %v11085 = vld [vmem:[%s7 + $0x3c] sm:$0xf]
        %v11086 = vld [vmem:[%s7 + $0x40] sm:$0xf]
        %v11087 = vld [vmem:[%s7 + $0x44] sm:$0xf]
        %v11088 = vld [vmem:[%s7 + $0x48] sm:$0xf]
        %v11089 = vld [vmem:[%s7 + $0x4c] sm:$0xf]
        %v11090 = vld [vmem:[%s7 + $0x50] sm:$0xf]
        %v11091 = vld [vmem:[%s7 + $0x54] sm:$0xf]
        %v11092 = vld [vmem:[%s7 + $0x58] sm:$0xf]
        %v11093 = vld [vmem:[%s7 + $0x5c] sm:$0xf]
        %v11094 = vld [vmem:[%s7 + $0x60] sm:$0xf]
        %v11095 = vld [vmem:[%s7 + $0x64] sm:$0xf]
        %v11096 = vld [vmem:[%s7 + $0x68] sm:$0xf]
        %v11097 = vld [vmem:[%s7 + $0x6c] sm:$0xf]
        %v11098 = vld [vmem:[%s7 + $0x70] sm:$0xf]
        %v11099 = vld [vmem:[%s7 + $0x74] sm:$0xf]
        %v11100 = vld [vmem:[%s7 + $0x78] sm:$0xf]
        %v11101 = vld [vmem:[%s7 + $0x7c] sm:$0xf]
        %v11102 = vld [vmem:[%s7 + $0x80] sm:$0xf]
        %v11103 = vld [vmem:[%s7 + $0x84] sm:$0xf]
        %v11104 = vld [vmem:[%s7 + $0x88] sm:$0xf]
        %v11105 = vld [vmem:[%s7 + $0x8c] sm:$0xf]
        %v11106 = vld [vmem:[%s7 + $0x90] sm:$0xf]
        %v11107 = vld [vmem:[%s7 + $0x94] sm:$0xf]
        %v11108 = vld [vmem:[%s7 + $0x98] sm:$0xf]
        %v11109 = vld [vmem:[%s7 + $0x9c] sm:$0xf]
        %v11110 = vld [vmem:[%s7 + $0xa0] sm:$0xf]
        %v11111 = vld [vmem:[%s7 + $0xa4] sm:$0xf]
        %v11112 = vld [vmem:[%s7 + $0xa8] sm:$0xf]
        %v11113 = vld [vmem:[%s7 + $0xac] sm:$0xf]
        %v11114 = vld [vmem:[%s7 + $0xb0] sm:$0xf]
        %v11115 = vld [vmem:[%s7 + $0xb4] sm:$0xf]
        %v11116 = vld [vmem:[%s7 + $0xb8] sm:$0xf]
        %v11117 = vld [vmem:[%s7 + $0xbc] sm:$0xf]
        %v11118 = vld [vmem:[%s7 + $0xc0] sm:$0xf]
        %v11119 = vld [vmem:[%s7 + $0xc4] sm:$0xf]
        %v11120 = vld [vmem:[%s7 + $0xc8] sm:$0xf]
        %v11121 = vld [vmem:[%s7 + $0xcc] sm:$0xf]
        %v11122 = vld [vmem:[%s7 + $0xd0] sm:$0xf]
        %v11123 = vld [vmem:[%s7 + $0xd4] sm:$0xf]
        %v11124 = vld [vmem:[%s7 + $0xd8] sm:$0xf]
        %v11125 = vld [vmem:[%s7 + $0xdc] sm:$0xf]
        %v11126 = vld [vmem:[%s7 + $0xe0] sm:$0xf]
        %v11127 = vld [vmem:[%s7 + $0xe4] sm:$0xf]
        %v11128 = vld [vmem:[%s7 + $0xe8] sm:$0xf]
        %v11129 = vld [vmem:[%s7 + $0xec] sm:$0xf]
        %v11130 = vld [vmem:[%s7 + $0xf0] sm:$0xf]
        %v11131 = vld [vmem:[%s7 + $0xf4] sm:$0xf]
        %v11132 = vld [vmem:[%s7 + $0xf8] sm:$0xf]
        %v11133 = vld [vmem:[%s7 + $0xfc] sm:$0xf]
        %v11134 = vld [vmem:[%s8] sm:$0x1]
        %v11136 = vperm.slane %v11134, 0
        %v11202 = vunpack.c.l.b16 %v11070
        %v11203 = vunpack.c.l.b16 %v11071
        %v11204 = vunpack.c.l.b16 %v11072
        %v11205 = vunpack.c.l.b16 %v11073
        %v11206 = vunpack.c.l.b16 %v11074
        %v11207 = vunpack.c.l.b16 %v11075
        %v11208 = vunpack.c.l.b16 %v11076
        %v11209 = vunpack.c.l.b16 %v11077
        %v11210 = vunpack.c.l.b16 %v11078
        %v11211 = vunpack.c.l.b16 %v11079
        %v11212 = vunpack.c.l.b16 %v11080
        %v11213 = vunpack.c.l.b16 %v11081
        %v11214 = vunpack.c.l.b16 %v11082
        %v11215 = vunpack.c.l.b16 %v11083
        %v11216 = vunpack.c.l.b16 %v11084
        %v11217 = vunpack.c.l.b16 %v11085
        %v11218 = vunpack.c.l.b16 %v11086
        %v11219 = vunpack.c.l.b16 %v11087
        %v11220 = vunpack.c.l.b16 %v11088
        %v11221 = vunpack.c.l.b16 %v11089
        %v11222 = vunpack.c.l.b16 %v11090
        %v11223 = vunpack.c.l.b16 %v11091
        %v11224 = vunpack.c.l.b16 %v11092
        %v11225 = vunpack.c.l.b16 %v11093
        %v11226 = vunpack.c.l.b16 %v11094
        %v11227 = vunpack.c.l.b16 %v11095
        %v11228 = vunpack.c.l.b16 %v11096
        %v11229 = vunpack.c.l.b16 %v11097
        %v11230 = vunpack.c.l.b16 %v11098
        %v11231 = vunpack.c.l.b16 %v11099
        %v11232 = vunpack.c.l.b16 %v11100
        %v11233 = vunpack.c.l.b16 %v11101
        %v11234 = vunpack.c.l.b16 %v11102
        %v11235 = vunpack.c.l.b16 %v11103
        %v11236 = vunpack.c.l.b16 %v11104
        %v11237 = vunpack.c.l.b16 %v11105
        %v11238 = vunpack.c.l.b16 %v11106
        %v11239 = vunpack.c.l.b16 %v11107
        %v11240 = vunpack.c.l.b16 %v11108
        %v11241 = vunpack.c.l.b16 %v11109
        %v11242 = vunpack.c.l.b16 %v11110
        %v11243 = vunpack.c.l.b16 %v11111
        %v11244 = vunpack.c.l.b16 %v11112
        %v11245 = vunpack.c.l.b16 %v11113
        %v11246 = vunpack.c.l.b16 %v11114
        %v11247 = vunpack.c.l.b16 %v11115
        %v11248 = vunpack.c.l.b16 %v11116
        %v11249 = vunpack.c.l.b16 %v11117
        %v11250 = vunpack.c.l.b16 %v11118
        %v11251 = vunpack.c.l.b16 %v11119
        %v11252 = vunpack.c.l.b16 %v11120
        %v11253 = vunpack.c.l.b16 %v11121
        %v11254 = vunpack.c.l.b16 %v11122
        %v11255 = vunpack.c.l.b16 %v11123
        %v11256 = vunpack.c.l.b16 %v11124
        %v11257 = vunpack.c.l.b16 %v11125
        %v11258 = vunpack.c.l.b16 %v11126
        %v11259 = vunpack.c.l.b16 %v11127
        %v11260 = vunpack.c.l.b16 %v11128
        %v11261 = vunpack.c.l.b16 %v11129
        %v11262 = vunpack.c.l.b16 %v11130
        %v11263 = vunpack.c.l.b16 %v11131
        %v11264 = vunpack.c.l.b16 %v11132
        %v11265 = vunpack.c.l.b16 %v11133
        %v11266 = vpack.c.b16 %v11203, %v11202
        %v11267 = vpack.c.b16 %v11205, %v11204
        %v11268 = vpack.c.b16 %v11207, %v11206
        %v11269 = vpack.c.b16 %v11209, %v11208
        %v11270 = vpack.c.b16 %v11211, %v11210
        %v11271 = vpack.c.b16 %v11213, %v11212
        %v11272 = vpack.c.b16 %v11215, %v11214
        %v11273 = vpack.c.b16 %v11217, %v11216
        %v11274 = vpack.c.b16 %v11219, %v11218
        %v11275 = vpack.c.b16 %v11221, %v11220
        %v11276 = vpack.c.b16 %v11223, %v11222
        %v11277 = vpack.c.b16 %v11225, %v11224
        %v11278 = vpack.c.b16 %v11227, %v11226
        %v11279 = vpack.c.b16 %v11229, %v11228
        %v11280 = vpack.c.b16 %v11231, %v11230
        %v11281 = vpack.c.b16 %v11233, %v11232
        %v11282 = vpack.c.b16 %v11235, %v11234
        %v11283 = vpack.c.b16 %v11237, %v11236
        %v11284 = vpack.c.b16 %v11239, %v11238
        %v11285 = vpack.c.b16 %v11241, %v11240
        %v11286 = vpack.c.b16 %v11243, %v11242
        %v11287 = vpack.c.b16 %v11245, %v11244
        %v11288 = vpack.c.b16 %v11247, %v11246
        %v11289 = vpack.c.b16 %v11249, %v11248
        %v11290 = vpack.c.b16 %v11251, %v11250
        %v11291 = vpack.c.b16 %v11253, %v11252
        %v11292 = vpack.c.b16 %v11255, %v11254
        %v11293 = vpack.c.b16 %v11257, %v11256
        %v11294 = vpack.c.b16 %v11259, %v11258
        %v11295 = vpack.c.b16 %v11261, %v11260
        %v11296 = vpack.c.b16 %v11263, %v11262
        %v11297 = vpack.c.b16 %v11265, %v11264
        %11330 = vmatpush.bf16.msra.mxu0 %v11273
        %11331 = vmatpush.bf16.msra.mxu0 %v11272
        %11332 = vmatpush.bf16.msra.mxu0 %v11271
        %11333 = vmatpush.bf16.msra.mxu0 %v11270
        %11334 = vmatpush.bf16.msra.mxu0 %v11269
        %11335 = vmatpush.bf16.msra.mxu0 %v11268
        %11336 = vmatpush.bf16.msra.mxu0 %v11267
        %11337 = vmatpush.bf16.msra.mxu0 %v11266
        %11338 = vmatmul.bf16.gmra.mxu0 %v11062
        %v11339 = vpop.f32.mrf.mxu0
        %v11340 = vadd.f32 %v11136, %v11339
        %v11341 = vpop.f32.mrf.mxu0
        %v11342 = vadd.f32 %v11136, %v11341
        %11343 = vmatmul.bf16.gmra.mxu0 %v11066
        %v11344 = vpop.f32.mrf.mxu0
        %v11345 = vadd.f32 %v11136, %v11344
        %v11346 = vpop.f32.mrf.mxu0
        %v11347 = vadd.f32 %v11136, %v11346
        %11348 = vdwg.mxu0
        %11349 = vmatpush.bf16.msra.mxu0 %v11281
        %11350 = vmatpush.bf16.msra.mxu0 %v11280
        %11351 = vmatpush.bf16.msra.mxu0 %v11279
        %11352 = vmatpush.bf16.msra.mxu0 %v11278
        %11353 = vmatpush.bf16.msra.mxu0 %v11277
        %11354 = vmatpush.bf16.msra.mxu0 %v11276
        %11355 = vmatpush.bf16.msra.mxu0 %v11275
        %11356 = vmatpush.bf16.msra.mxu0 %v11274
        %11357 = vmatmul.bf16.gmra.mxu0 %v11063
        %v11358 = vpop.f32.mrf.mxu0
        %v11359 = vadd.f32 %v11340, %v11358
        %v11360 = vpop.f32.mrf.mxu0
        %v11361 = vadd.f32 %v11342, %v11360
        %11362 = vmatmul.bf16.gmra.mxu0 %v11067
        %v11363 = vpop.f32.mrf.mxu0
        %v11364 = vadd.f32 %v11345, %v11363
        %v11365 = vpop.f32.mrf.mxu0
        %v11366 = vadd.f32 %v11347, %v11365
        %11367 = vdwg.mxu0
        %11368 = vmatpush.bf16.msra.mxu0 %v11289
        %11369 = vmatpush.bf16.msra.mxu0 %v11288
        %11370 = vmatpush.bf16.msra.mxu0 %v11287
        %11371 = vmatpush.bf16.msra.mxu0 %v11286
        %11372 = vmatpush.bf16.msra.mxu0 %v11285
        %11373 = vmatpush.bf16.msra.mxu0 %v11284
        %11374 = vmatpush.bf16.msra.mxu0 %v11283
        %11375 = vmatpush.bf16.msra.mxu0 %v11282
        %11376 = vmatmul.bf16.gmra.mxu0 %v11064
        %v11377 = vpop.f32.mrf.mxu0
        %v11378 = vadd.f32 %v11359, %v11377
        %v11379 = vpop.f32.mrf.mxu0
        %v11380 = vadd.f32 %v11361, %v11379
        %11381 = vmatmul.bf16.gmra.mxu0 %v11068
        %v11382 = vpop.f32.mrf.mxu0
        %v11383 = vadd.f32 %v11364, %v11382
        %v11384 = vpop.f32.mrf.mxu0
        %v11385 = vadd.f32 %v11366, %v11384
        %11386 = vdwg.mxu0
        %11387 = vmatpush.bf16.msra.mxu0 %v11297
        %11388 = vmatpush.bf16.msra.mxu0 %v11296
        %11389 = vmatpush.bf16.msra.mxu0 %v11295
        %11390 = vmatpush.bf16.msra.mxu0 %v11294
        %11391 = vmatpush.bf16.msra.mxu0 %v11293
        %11392 = vmatpush.bf16.msra.mxu0 %v11292
        %11393 = vmatpush.bf16.msra.mxu0 %v11291
        %11394 = vmatpush.bf16.msra.mxu0 %v11290
        %11395 = vmatmul.bf16.gmra.mxu0 %v11065
        %v11396 = vpop.f32.mrf.mxu0
        %v11397 = vadd.f32 %v11378, %v11396
        %v11398 = vpop.f32.mrf.mxu0
        %v11399 = vadd.f32 %v11380, %v11398
        %11400 = vmatmul.bf16.gmra.mxu0 %v11069
        %v11401 = vpop.f32.mrf.mxu0
        %v11402 = vadd.f32 %v11383, %v11401
        %v11403 = vpop.f32.mrf.mxu0
        %v11404 = vadd.f32 %v11385, %v11403
        %11405 = vdwg.mxu0
        %v11406 = vmax.f32 %v11397, 0.0
        %v11407 = vmax.f32 %v11399, 0.0
        %v11408 = vmax.f32 %v11402, 0.0
        %v11409 = vmax.f32 %v11404, 0.0
        %v11410 = vpack.c.bf16 %v11407, %v11406
        %v11411 = vpack.c.bf16 %v11409, %v11408
        %v11412 = vld [vmem:[%s9] sm:$0xf]
        %v11413 = vld [vmem:[%s9 + $0x4] sm:$0xf]
        %v11414 = vld [vmem:[%s9 + $0x8] sm:$0xf]
        %v11415 = vld [vmem:[%s9 + $0xc] sm:$0xf]
        %v11416 = vld [vmem:[%s9 + $0x10] sm:$0xf]
        %v11417 = vld [vmem:[%s9 + $0x14] sm:$0xf]
        %v11418 = vld [vmem:[%s9 + $0x18] sm:$0xf]
        %v11419 = vld [vmem:[%s9 + $0x1c] sm:$0xf]
        %v11420 = vld [vmem:[%s9 + $0x20] sm:$0xf]
        %v11421 = vld [vmem:[%s9 + $0x24] sm:$0xf]
        %v11422 = vld [vmem:[%s9 + $0x28] sm:$0xf]
        %v11423 = vld [vmem:[%s9 + $0x2c] sm:$0xf]
        %v11424 = vld [vmem:[%s9 + $0x30] sm:$0xf]
        %v11425 = vld [vmem:[%s9 + $0x34] sm:$0xf]
        %v11426 = vld [vmem:[%s9 + $0x38] sm:$0xf]
        %v11427 = vld [vmem:[%s9 + $0x3c] sm:$0xf]
        %v11428 = vld [vmem:[%s10] sm:$0x1]
        %v11430 = vperm.slane %v11428, 0
        %v11448 = vunpack.c.l.b16 %v11412
        %v11449 = vunpack.c.l.b16 %v11413
        %v11450 = vunpack.c.l.b16 %v11414
        %v11451 = vunpack.c.l.b16 %v11415
        %v11452 = vunpack.c.l.b16 %v11416
        %v11453 = vunpack.c.l.b16 %v11417
        %v11454 = vunpack.c.l.b16 %v11418
        %v11455 = vunpack.c.l.b16 %v11419
        %v11456 = vunpack.c.l.b16 %v11420
        %v11457 = vunpack.c.l.b16 %v11421
        %v11458 = vunpack.c.l.b16 %v11422
        %v11459 = vunpack.c.l.b16 %v11423
        %v11460 = vunpack.c.l.b16 %v11424
        %v11461 = vunpack.c.l.b16 %v11425
        %v11462 = vunpack.c.l.b16 %v11426
        %v11463 = vunpack.c.l.b16 %v11427
        %v11464 = vpack.c.b16 %v11449, %v11448
        %v11465 = vpack.c.b16 %v11451, %v11450
        %v11466 = vpack.c.b16 %v11453, %v11452
        %v11467 = vpack.c.b16 %v11455, %v11454
        %v11468 = vpack.c.b16 %v11457, %v11456
        %v11469 = vpack.c.b16 %v11459, %v11458
        %v11470 = vpack.c.b16 %v11461, %v11460
        %v11471 = vpack.c.b16 %v11463, %v11462
        %11480 = vmatpush.bf16.msra.mxu0 %v11471
        %11481 = vmatpush.bf16.msra.mxu0 %v11470
        %11482 = vmatpush.bf16.msra.mxu0 %v11469
        %11483 = vmatpush.bf16.msra.mxu0 %v11468
        %11484 = vmatpush.bf16.msra.mxu0 %v11467
        %11485 = vmatpush.bf16.msra.mxu0 %v11466
        %11486 = vmatpush.bf16.msra.mxu0 %v11465
        %11487 = vmatpush.bf16.msra.mxu0 %v11464
        %11488 = vmatmul.bf16.gmra.mxu0 %v11410
        %v11489 = vpop.f32.mrf.mxu0
        %v11490 = vadd.f32 %v11430, %v11489
        %v11491 = vpop.f32.mrf.mxu0
        %v11492 = vadd.f32 %v11430, %v11491
        %11493 = vmatmul.bf16.gmra.mxu0 %v11411
        %v11494 = vpop.f32.mrf.mxu0
        %v11495 = vadd.f32 %v11430, %v11494
        %v11496 = vpop.f32.mrf.mxu0
        %v11497 = vadd.f32 %v11430, %v11496
        %11498 = vdwg.mxu0
        %11499 = vmax.xlane.f32.xlu0 %v11490
        %v11500 = vpop.xlane.xlu0 %11499
        %11501 = vmax.xlane.f32.xlu0 %v11492
        %v11502 = vpop.xlane.xlu0 %11501
        %11503 = vmax.xlane.f32.xlu0 %v11495
        %v11504 = vpop.xlane.xlu0 %11503
        %11505 = vmax.xlane.f32.xlu0 %v11497
        %v11506 = vpop.xlane.xlu0 %11505
        %v11507 = vsub.f32 %v11490, %v11500
        %v11508 = vsub.f32 %v11492, %v11502
        %v11509 = vsub.f32 %v11495, %v11504
        %v11510 = vsub.f32 %v11497, %v11506
        %v11511 = vmul.f32 %v11507, 1.442695
        %v11512 = vpow.pop %v11511
        %v11513 = vmul.f32 %v11508, 1.442695
        %v11514 = vpow.pop %v11513
        %v11515 = vmul.f32 %v11509, 1.442695
        %v11516 = vpow.pop %v11515
        %v11517 = vmul.f32 %v11510, 1.442695
        %v11518 = vpow.pop %v11517
        %11519 = vadd.xlane.f32.xlu0 %v11512
        %v11520 = vpop.xlane.xlu0 %11519
        %11521 = vadd.xlane.f32.xlu0 %v11514
        %v11522 = vpop.xlane.xlu0 %11521
        %11523 = vadd.xlane.f32.xlu0 %v11516
        %v11524 = vpop.xlane.xlu0 %11523
        %11525 = vadd.xlane.f32.xlu0 %v11518
        %v11526 = vpop.xlane.xlu0 %11525
        %v11527 = vlog2.pop %v11520
        %v11528 = vmul.f32 %v11527, 0.6931472
        %v11529 = vlog2.pop %v11522
        %v11530 = vmul.f32 %v11529, 0.6931472
        %v11531 = vlog2.pop %v11524
        %v11532 = vmul.f32 %v11531, 0.6931472
        %v11533 = vlog2.pop %v11526
        %v11534 = vmul.f32 %v11533, 0.6931472
        %v11535 = vadd.f32 %v11500, %v11528
        %v11536 = vadd.f32 %v11502, %v11530
        %v11537 = vadd.f32 %v11504, %v11532
        %v11538 = vadd.f32 %v11506, %v11534
        %v11539 = vsub.f32 %v11490, %v11535
        %v11540 = vsub.f32 %v11492, %v11536
        %v11541 = vsub.f32 %v11495, %v11537
        %v11542 = vsub.f32 %v11497, %v11538
        %11543 = vst [vmem:[%s802] sm:$0xff] %v11539
        %11544 = vst [vmem:[%s802 + $0x8] sm:$0xff] %v11540
        %11545 = vst [vmem:[%s802 + $0x10] sm:$0xff] %v11541
        %11546 = vst [vmem:[%s802 + $0x18] sm:$0xff] %v11542
        %s11547 = smul.u32 4, %s22
        %p11548 = scmp.lt.s32.totalorder %s11547, 11
        %s11549 = scalar_select %p11548, %s11547, 11
        %s11550 = smul.addr %s11549, 8
        %s11551 = scalar_lea.vmem %s11, %s11550
        // Predicated region
        $region103: #{pallas_forward.1} parent=97 // pred_check
          %p11552 = pneg %p276
        $region104: #{pallas_forward.1} parent=97 // pred_check_branch
          %11554 = sbr.rel (%p11552) target = $region106
        $region105: #{pallas_forward.1} parent=97 // pred_region
          %s11555 = smul.u32 4, %s22
        $region106: #{pallas_forward.1} parent=97 // pred_fallthru
          _
      $region98: #{pallas_forward.1} parent=5 // pred_fallthru
        _
      %p11556 = scmp.le.s32.totalorder 2, %s17
      // Predicated region
      $region107: #{pallas_forward.1} parent=5 // pred_check
        %p11557 = pneg %p11556
      $region108: #{pallas_forward.1} parent=5 // pred_check_branch
        %11559 = sbr.rel (%p11557) target = $region110
      $region109: #{pallas_forward.1} parent=5 // pred_region
        %s11560 = ssub.s32 %s17, 2
        // Predicated region
        $region111: #{pallas_forward.1} parent=109 // pred_check
          %p11561 = pneg %p282
        $region112: #{pallas_forward.1} parent=109 // pred_check_branch
          %11563 = sbr.rel (%p11561) target = $region114
        $region113: #{pallas_forward.1} parent=109 // pred_region
          %s11564 = smul.u32 4, %s23
          %p11565 = scmp.lt.s32.totalorder %s11564, 11
          %s11566 = scalar_select %p11565, %s11564, 11
          %s11567 = smul.addr %s11566, 8
          %s11568 = scalar_lea.vmem %s11, %s11567
        $region114: #{pallas_forward.1} parent=109 // pred_fallthru
          _
      $region110: #{pallas_forward.1} parent=5 // pred_fallthru
        _
    $region6: #{pallas_forward.1} parent=1 // loop_footer
      %s21 = sadd.s32 1, %s17
    $region7: #{pallas_forward.1} parent=1 // loop_footer_branch
      %16 = sbr.rel target = $region3
    $region8: #{pallas_forward.1} parent=1 // loop_exit
      _

</llo_original>
